<compile_context>
chip_gen: v7x
topology: tpu7x:2x2x1
jax: 0.10.0
libtpu: 0.0.40
codegen_flags: <defaults>
</compile_context>

<pallas_src>
import functools

import numpy as np
import jax
import jax.numpy as jnp
from jax import lax
from jax.experimental import pallas as pl
from jax.experimental.pallas import tpu as pltpu

_KSIZE = 5    # conv kernel size
TILE_B = 8    # images per grid step (stacked along sublanes)


# --------------------------- static helper matrices --------------------------

def _band_mask(n_in, n_out, offset, k=_KSIZE):
    # M[kw, c, w] = 1  iff  c == w + kw + offset
    kw = np.arange(k)[:, None, None]
    c = np.arange(n_in)[None, :, None]
    w = np.arange(n_out)[None, None, :]
    return (c == w + kw + offset).astype(np.float32)


@functools.lru_cache(maxsize=None)
def _batched_row_shift(tb, n_out, n_in, offset, k=_KSIZE):
    # (k*tb*n_out, tb*n_in): row (kh, i, h) selects input row (i, h+kh+offset),
    # or is all-zero when that row falls in the conv's zero padding.
    m = np.zeros((k * tb * n_out, tb * n_in), np.float32)
    for kh in range(k):
        for i in range(tb):
            for h in range(n_out):
                r = h + kh + offset
                if 0 <= r < n_in:
                    m[(kh * tb + i) * n_out + h, i * n_in + r] = 1.0
    return m


@functools.lru_cache(maxsize=None)
def _batched_row_pool(tb, n_in, h_major=False):
    # (2*tb*n_out, tb*n_in), n_out = n_in // 2.  Top half selects even rows,
    # bottom half odd rows.  Output row order inside each half is (image, j)
    # by default, or (j, image) when h_major=True.
    n_out = n_in // 2
    m = np.zeros((2 * tb * n_out, tb * n_in), np.float32)
    for phase in range(2):
        for i in range(tb):
            for j in range(n_out):
                row = j * tb + i if h_major else i * n_out + j
                m[phase * tb * n_out + row, i * n_in + 2 * j + phase] = 1.0
    return m


@functools.lru_cache(maxsize=None)
def _col_phase_pair(n_ch, n_in):
    # (n_ch*n_in, 2*n_ch*n_out): left half selects even cols, right half odd,
    # per channel block (column layout: ch*n_in + w  ->  ch*n_out + j).
    n_out = n_in // 2
    c = np.zeros((n_ch * n_in, 2 * n_ch * n_out), np.float32)
    for ch in range(n_ch):
        for j in range(n_out):
            c[ch * n_in + 2 * j, ch * n_out + j] = 1.0
            c[ch * n_in + 2 * j + 1, n_ch * n_out + ch * n_out + j] = 1.0
    return c


_M1 = _band_mask(32, 28, 0)    # conv1 band mask (padded width 32 -> 28)
_M2 = _band_mask(14, 14, -2)   # conv2 band mask (width padding folded in)


# --------------------------------- the kernel --------------------------------

def _fused_cnn_kernel(x_ref, hs1_ref, t1_ref, b1_ref, rp1_ref, cp1_ref,
                      hs2_ref, t2_ref, b2_ref, rp2_ref, cp2_ref,
                      fw1_ref, fb1_ref, fw2_ref, fb2_ref, fw3_ref, fb3_ref,
                      o_ref):
    f32 = jnp.float32
    ktaps = t1_ref.shape[0]            # 5 conv kernel rows
    rows1 = rp1_ref.shape[1]           # TB*28  conv1 output rows
    half1 = rp1_ref.shape[0] // 2      # TB*14
    rows2 = rp2_ref.shape[1]           # TB*14  conv2 output rows
    half2 = rp2_ref.shape[0] // 2      # TB*7
    p1w = cp1_ref.shape[1] // 2        # nf*14
    p2w = cp2_ref.shape[1] // 2        # 2nf*7
    tb = o_ref.shape[0]                # images per tile
    n_h = fw1_ref.shape[0]             # 7 feature rows per image

    def mm(a, b):
        return jnp.dot(a, b, preferred_element_type=f32)

    # ---- conv1 + bias + ReLU over the whole tile ------------------------------
    hp = mm(hs1_ref[...], x_ref[...])                    # (5*TB*28, 32) shifted rows
    acc = mm(hp[0:rows1, :], t1_ref[0])
    for kh in range(1, ktaps):
        acc += mm(hp[kh * rows1:(kh + 1) * rows1, :], t1_ref[kh])
    y1 = jnp.maximum(acc + b1_ref[...], 0.0)             # (TB*28, nf*28)

    # ---- 2x2 max-pool #1 : 0/1 selection GEMMs + elementwise max --------------
    z = mm(rp1_ref[...], y1)                             # (2*TB*14, nf*28)
    rmax = jnp.maximum(z[0:half1, :], z[half1:2 * half1, :])
    z = mm(rmax, cp1_ref[...])                           # (TB*14, 2*nf*14)
    p1 = jnp.maximum(z[:, 0:p1w], z[:, p1w:2 * p1w])     # (TB*14, nf*14), rows (i, h)

    # ---- conv2 + bias + ReLU ---------------------------------------------------
    hp = mm(hs2_ref[...], p1)                            # (5*TB*14, nf*14)
    acc = mm(hp[0:rows2, :], t2_ref[0])
    for kh in range(1, ktaps):
        acc += mm(hp[kh * rows2:(kh + 1) * rows2, :], t2_ref[kh])
    y2 = jnp.maximum(acc + b2_ref[...], 0.0)             # (TB*14, 2nf*14)

    # ---- 2x2 max-pool #2 (rows come out in (h, image) order for fc1) ----------
    z = mm(rp2_ref[...], y2)                             # (2*TB*7, 2nf*14)
    rmax = jnp.maximum(z[0:half2, :], z[half2:2 * half2, :])
    z = mm(rmax, cp2_ref[...])                           # (TB*7, 2*2nf*7)
    p2 = jnp.maximum(z[:, 0:p2w], z[:, p2w:2 * p2w])     # (TB*7, 2nf*7), rows h*TB+i

    # ---- MLP head, batched over the tile (M = TB sublanes) --------------------
    acc = mm(p2[0:tb, :], fw1_ref[0])
    for h in range(1, n_h):
        acc += mm(p2[h * tb:(h + 1) * tb, :], fw1_ref[h])
    h1 = jnp.maximum(acc + fb1_ref[...], 0.0)                          # (TB, 120)
    h2 = jnp.maximum(mm(h1, fw2_ref[...]) + fb2_ref[...], 0.0)         # (TB, 84)
    o_ref[...] = mm(h2, fw3_ref[...]) + fb3_ref[...]                   # (TB, 10)


# --------------------------------- wrapper ------------------------------------

@functools.partial(jax.jit, static_argnames=("block_b",))
def fashion_mnist_cnn_forward(x_nchw, params, block_b=TILE_B):
    # x_nchw: (B, 1, 28, 28) float32 -- same interface as the PyTorch module.
    B = x_nchw.shape[0]
    nf = params["w1"].shape[0]
    nf2 = 2 * nf
    n_out = params["fw3"].shape[1]
    tb = block_b
    b_pad = ((B + tb - 1) // tb) * tb
    grid_b = b_pad // tb

    # Only activation-side glue: pad batch to a tile multiple, add the conv's
    # "same" padding of 2, and stack the padded 32x32 images along rows.
    x = jnp.pad(x_nchw[:, 0], ((0, b_pad - B), (2, 2), (2, 2)))
    x = x.reshape(b_pad * 32, 32)

    hi = lax.Precision.HIGHEST  # exact (tiny) weight-prep transforms

    # conv1 weights -> 5 banded (32, nf*28) right-multiply matrices.
    t1 = jnp.einsum("okv,vcw->kcow", params["w1"][:, 0], jnp.asarray(_M1),
                    precision=hi).reshape(_KSIZE, 32, nf * 28)
    b1row = jnp.repeat(params["b1"], 28)[None, :]
    # conv2 weights -> 5 banded (nf*14, 2nf*14) right-multiply matrices.
    t2 = jnp.einsum("oikv,vcw->kicow", params["w2"], jnp.asarray(_M2),
                    precision=hi).reshape(_KSIZE, nf * 14, nf2 * 14)
    b2row = jnp.repeat(params["b2"], 14)[None, :]

    # Constant 0/1 selection matrices, block-diagonal over the batch tile.
    hs1 = jnp.asarray(_batched_row_shift(tb, 28, 32, 0))    # conv1 row shifts
    hs2 = jnp.asarray(_batched_row_shift(tb, 14, 14, -2))   # conv2 row shifts (+pad)
    rp1 = jnp.asarray(_batched_row_pool(tb, 28, False))     # pool1 rows, (i, h) order
    rp2 = jnp.asarray(_batched_row_pool(tb, 14, True))      # pool2 rows, (h, i) order
    cp1 = jnp.asarray(_col_phase_pair(nf, 28))
    cp2 = jnp.asarray(_col_phase_pair(nf2, 14))

    # fc1 rows: PyTorch (c, h, w) flatten order -> kernel's (h; c*7+w) layout.
    fw1r = params["fw1"].reshape(nf2, 7, 7, -1).transpose(1, 0, 2, 3)
    fw1r = fw1r.reshape(7, nf2 * 7, -1)
    fb1 = params["fb1"][None, :]
    fb2 = params["fb2"][None, :]
    fb3 = params["fb3"][None, :]

    def _resident(a):
        zeros = (0,) * a.ndim
        return pl.BlockSpec(tuple(a.shape), lambda i: zeros)

    out = pl.pallas_call(
        _fused_cnn_kernel,
        out_shape=jax.ShapeDtypeStruct((b_pad, n_out), jnp.float32),
        grid=(grid_b,),
        in_specs=[
            pl.BlockSpec((tb * 32, 32), lambda i: (i, 0)),
            _resident(hs1), _resident(t1), _resident(b1row),
            _resident(rp1), _resident(cp1),
            _resident(hs2), _resident(t2), _resident(b2row),
            _resident(rp2), _resident(cp2),
            _resident(fw1r), _resident(fb1),
            _resident(params["fw2"]), _resident(fb2),
            _resident(params["fw3"]), _resident(fb3),
        ],
        out_specs=pl.BlockSpec((tb, n_out), lambda i: (i, 0)),
        compiler_params=pltpu.CompilerParams(dimension_semantics=("parallel",)),
    )(x, hs1, t1, b1row, rp1, cp1, hs2, t2, b2row, rp2, cp2,
      fw1r, fb1, params["fw2"], fb2, params["fw3"], fb3)
    return out[:B]


# ----------------------------- params / reference -----------------------------

def init_params(key, num_filters=8):
    ks = jax.random.split(key, 10)

    def rnd(k, shape, scale):
        return (scale * jax.random.normal(k, shape)).astype(jnp.float32)

    return {
        # conv weights kept in PyTorch OIHW convention (Cout, Cin, kh, kw)
        "w1": rnd(ks[0], (num_filters, 1, 5, 5), 0.2),
        "b1": rnd(ks[1], (num_filters,), 0.1),
        "w2": rnd(ks[2], (num_filters * 2, num_filters, 5, 5), 0.1),
        "b2": rnd(ks[3], (num_filters * 2,), 0.1),
        # linear weights stored as (in, out) == torch weight.T
        "fw1": rnd(ks[4], (num_filters * 2 * 7 * 7, 120), 0.05),
        "fb1": rnd(ks[5], (120,), 0.1),
        "fw2": rnd(ks[6], (120, 84), 0.05),
        "fb2": rnd(ks[7], (84,), 0.1),
        "fw3": rnd(ks[8], (84, 10), 0.05),
        "fb3": rnd(ks[9], (10,), 0.1),
    }


def reference_forward(x_nchw, params):
    # pure-JAX reference (XLA conv / reduce_window), same math as the PyTorch module
    y = lax.conv_general_dilated(x_nchw, params["w1"], (1, 1), ((2, 2), (2, 2)),
                                 dimension_numbers=("NCHW", "OIHW", "NCHW"))
    y = jax.nn.relu(y + params["b1"][None, :, None, None])
    y = lax.reduce_window(y, -jnp.inf, lax.max, (1, 1, 2, 2), (1, 1, 2, 2), "VALID")
    y = lax.conv_general_dilated(y, params["w2"], (1, 1), ((2, 2), (2, 2)),
                                 dimension_numbers=("NCHW", "OIHW", "NCHW"))
    y = jax.nn.relu(y + params["b2"][None, :, None, None])
    y = lax.reduce_window(y, -jnp.inf, lax.max, (1, 1, 2, 2), (1, 1, 2, 2), "VALID")
    f = y.reshape(y.shape[0], -1)
    f = jax.nn.relu(f @ params["fw1"] + params["fb1"])
    f = jax.nn.relu(f @ params["fw2"] + params["fb2"])
    return f @ params["fw3"] + params["fb3"]


if __name__ == "__main__":
    key = jax.random.PRNGKey(0)
    pkey, xkey = jax.random.split(key)
    params = init_params(pkey, num_filters=8)
    x = jax.random.normal(xkey, (2, 1, 28, 28), dtype=jnp.float32)

    out = jax.block_until_ready(fashion_mnist_cnn_forward(x, params))
    assert out.shape == (2, 10), out.shape

    ref = reference_forward(x, params)
    max_err = float(jnp.max(jnp.abs(out - ref)))
    scale = float(jnp.max(jnp.abs(ref)))
    tol = 2e-2 * (1.0 + scale)  # both paths use default (bf16-pass) MXU precision
    if not bool(jnp.all(jnp.isfinite(out))) or max_err > tol:
        raise AssertionError(
            f"Pallas output mismatch vs reference: max_err={max_err}, tol={tol}")

    print("KERNEL_OK")
</pallas_src>

<mosaic_0001>
module attributes {stable_mosaic.version = 11 : i64} {
  func.func @_fused_cnn_kernel(%arg0: i32, %arg1: memref<256x32xf32, #tpu.memory_space<vmem>>, %arg2: memref<1120x256xf32, #tpu.memory_space<vmem>>, %arg3: memref<5x32x224xf32, #tpu.memory_space<vmem>>, %arg4: memref<1x224xf32, #tpu.memory_space<vmem>>, %arg5: memref<224x224xf32, #tpu.memory_space<vmem>>, %arg6: memref<224x224xf32, #tpu.memory_space<vmem>>, %arg7: memref<560x112xf32, #tpu.memory_space<vmem>>, %arg8: memref<5x112x224xf32, #tpu.memory_space<vmem>>, %arg9: memref<1x224xf32, #tpu.memory_space<vmem>>, %arg10: memref<112x112xf32, #tpu.memory_space<vmem>>, %arg11: memref<224x224xf32, #tpu.memory_space<vmem>>, %arg12: memref<7x112x120xf32, #tpu.memory_space<vmem>>, %arg13: memref<1x120xf32, #tpu.memory_space<vmem>>, %arg14: memref<120x84xf32, #tpu.memory_space<vmem>>, %arg15: memref<1x84xf32, #tpu.memory_space<vmem>>, %arg16: memref<84x10xf32, #tpu.memory_space<vmem>>, %arg17: memref<1x10xf32, #tpu.memory_space<vmem>>, %arg18: memref<8x10xf32, #tpu.memory_space<vmem>>) attributes {dimension_semantics = [#tpu.dimension_semantics<parallel>], iteration_bounds = array<i64: 1>, scalar_prefetch = 0 : i64, scratch_operands = 0 : i64, tpu.core_type = #tpu.core_type<tc>, window_params = [{transform_indices = @transform_0, window_bounds = array<i64: 256, 32>}, {pipeline_mode = #tpu.pipeline_mode<synchronous>, transform_indices = @transform_1, window_bounds = array<i64: 1120, 256>}, {pipeline_mode = #tpu.pipeline_mode<synchronous>, transform_indices = @transform_2, window_bounds = array<i64: 5, 32, 224>}, {pipeline_mode = #tpu.pipeline_mode<synchronous>, transform_indices = @transform_3, window_bounds = array<i64: 1, 224>}, {pipeline_mode = #tpu.pipeline_mode<synchronous>, transform_indices = @transform_4, window_bounds = array<i64: 224, 224>}, {pipeline_mode = #tpu.pipeline_mode<synchronous>, transform_indices = @transform_5, window_bounds = array<i64: 224, 224>}, {pipeline_mode = #tpu.pipeline_mode<synchronous>, transform_indices = @transform_6, window_bounds = array<i64: 560, 112>}, {pipeline_mode = #tpu.pipeline_mode<synchronous>, transform_indices = @transform_7, window_bounds = array<i64: 5, 112, 224>}, {pipeline_mode = #tpu.pipeline_mode<synchronous>, transform_indices = @transform_8, window_bounds = array<i64: 1, 224>}, {pipeline_mode = #tpu.pipeline_mode<synchronous>, transform_indices = @transform_9, window_bounds = array<i64: 112, 112>}, {pipeline_mode = #tpu.pipeline_mode<synchronous>, transform_indices = @transform_10, window_bounds = array<i64: 224, 224>}, {pipeline_mode = #tpu.pipeline_mode<synchronous>, transform_indices = @transform_11, window_bounds = array<i64: 7, 112, 120>}, {pipeline_mode = #tpu.pipeline_mode<synchronous>, transform_indices = @transform_12, window_bounds = array<i64: 1, 120>}, {pipeline_mode = #tpu.pipeline_mode<synchronous>, transform_indices = @transform_13, window_bounds = array<i64: 120, 84>}, {pipeline_mode = #tpu.pipeline_mode<synchronous>, transform_indices = @transform_14, window_bounds = array<i64: 1, 84>}, {pipeline_mode = #tpu.pipeline_mode<synchronous>, transform_indices = @transform_15, window_bounds = array<i64: 84, 10>}, {pipeline_mode = #tpu.pipeline_mode<synchronous>, transform_indices = @transform_16, window_bounds = array<i64: 1, 10>}, {transform_indices = @transform_17, window_bounds = array<i64: 8, 10>}]} {
    %c0 = arith.constant 0 : index
    %c0_0 = arith.constant 0 : index
    %0 = vector.load %arg2[%c0, %c0_0] : memref<1120x256xf32, #tpu.memory_space<vmem>>, vector<1120x256xf32>
    %c0_1 = arith.constant 0 : index
    %c0_2 = arith.constant 0 : index
    %1 = vector.load %arg1[%c0_1, %c0_2] : memref<256x32xf32, #tpu.memory_space<vmem>>, vector<256x32xf32>
    %cst = arith.constant dense<0.000000e+00> : vector<1120x32xf32>
    %2 = tpu.matmul %0, %1, %cst {dimension_numbers = #tpu.dot_dimension_numbers<[1], [0], [0], [1], [0, 0, 1, 1], [], []>} : vector<1120x256xf32>, vector<256x32xf32>, vector<1120x32xf32> -> vector<1120x32xf32>
    %3 = vector.extract_strided_slice %2 {offsets = [0, 0], sizes = [224, 32], strides = [1, 1]} : vector<1120x32xf32> to vector<224x32xf32>
    %c0_3 = arith.constant 0 : index
    %c0_4 = arith.constant 0 : index
    %c0_5 = arith.constant 0 : index
    %4 = vector.load %arg3[%c0_3, %c0_4, %c0_5] : memref<5x32x224xf32, #tpu.memory_space<vmem>>, vector<1x32x224xf32>
    %5 = vector.shape_cast %4 : vector<1x32x224xf32> to vector<32x224xf32>
    %cst_6 = arith.constant dense<0.000000e+00> : vector<224x224xf32>
    %6 = tpu.matmul %3, %5, %cst_6 {dimension_numbers = #tpu.dot_dimension_numbers<[1], [0], [0], [1], [0, 0, 1, 1], [], []>} : vector<224x32xf32>, vector<32x224xf32>, vector<224x224xf32> -> vector<224x224xf32>
    %7 = vector.extract_strided_slice %2 {offsets = [224, 0], sizes = [224, 32], strides = [1, 1]} : vector<1120x32xf32> to vector<224x32xf32>
    %c1 = arith.constant 1 : index
    %c0_7 = arith.constant 0 : index
    %c0_8 = arith.constant 0 : index
    %8 = vector.load %arg3[%c1, %c0_7, %c0_8] : memref<5x32x224xf32, #tpu.memory_space<vmem>>, vector<1x32x224xf32>
    %9 = vector.shape_cast %8 : vector<1x32x224xf32> to vector<32x224xf32>
    %cst_9 = arith.constant dense<0.000000e+00> : vector<224x224xf32>
    %10 = tpu.matmul %7, %9, %cst_9 {dimension_numbers = #tpu.dot_dimension_numbers<[1], [0], [0], [1], [0, 0, 1, 1], [], []>} : vector<224x32xf32>, vector<32x224xf32>, vector<224x224xf32> -> vector<224x224xf32>
    %11 = arith.addf %6, %10 : vector<224x224xf32>
    %12 = vector.extract_strided_slice %2 {offsets = [448, 0], sizes = [224, 32], strides = [1, 1]} : vector<1120x32xf32> to vector<224x32xf32>
    %c2 = arith.constant 2 : index
    %c0_10 = arith.constant 0 : index
    %c0_11 = arith.constant 0 : index
    %13 = vector.load %arg3[%c2, %c0_10, %c0_11] : memref<5x32x224xf32, #tpu.memory_space<vmem>>, vector<1x32x224xf32>
    %14 = vector.shape_cast %13 : vector<1x32x224xf32> to vector<32x224xf32>
    %cst_12 = arith.constant dense<0.000000e+00> : vector<224x224xf32>
    %15 = tpu.matmul %12, %14, %cst_12 {dimension_numbers = #tpu.dot_dimension_numbers<[1], [0], [0], [1], [0, 0, 1, 1], [], []>} : vector<224x32xf32>, vector<32x224xf32>, vector<224x224xf32> -> vector<224x224xf32>
    %16 = arith.addf %11, %15 : vector<224x224xf32>
    %17 = vector.extract_strided_slice %2 {offsets = [672, 0], sizes = [224, 32], strides = [1, 1]} : vector<1120x32xf32> to vector<224x32xf32>
    %c3 = arith.constant 3 : index
    %c0_13 = arith.constant 0 : index
    %c0_14 = arith.constant 0 : index
    %18 = vector.load %arg3[%c3, %c0_13, %c0_14] : memref<5x32x224xf32, #tpu.memory_space<vmem>>, vector<1x32x224xf32>
    %19 = vector.shape_cast %18 : vector<1x32x224xf32> to vector<32x224xf32>
    %cst_15 = arith.constant dense<0.000000e+00> : vector<224x224xf32>
    %20 = tpu.matmul %17, %19, %cst_15 {dimension_numbers = #tpu.dot_dimension_numbers<[1], [0], [0], [1], [0, 0, 1, 1], [], []>} : vector<224x32xf32>, vector<32x224xf32>, vector<224x224xf32> -> vector<224x224xf32>
    %21 = arith.addf %16, %20 : vector<224x224xf32>
    %22 = vector.extract_strided_slice %2 {offsets = [896, 0], sizes = [224, 32], strides = [1, 1]} : vector<1120x32xf32> to vector<224x32xf32>
    %c4 = arith.constant 4 : index
    %c0_16 = arith.constant 0 : index
    %c0_17 = arith.constant 0 : index
    %23 = vector.load %arg3[%c4, %c0_16, %c0_17] : memref<5x32x224xf32, #tpu.memory_space<vmem>>, vector<1x32x224xf32>
    %24 = vector.shape_cast %23 : vector<1x32x224xf32> to vector<32x224xf32>
    %cst_18 = arith.constant dense<0.000000e+00> : vector<224x224xf32>
    %25 = tpu.matmul %22, %24, %cst_18 {dimension_numbers = #tpu.dot_dimension_numbers<[1], [0], [0], [1], [0, 0, 1, 1], [], []>} : vector<224x32xf32>, vector<32x224xf32>, vector<224x224xf32> -> vector<224x224xf32>
    %26 = arith.addf %21, %25 : vector<224x224xf32>
    %c0_19 = arith.constant 0 : index
    %c0_20 = arith.constant 0 : index
    %27 = vector.load %arg4[%c0_19, %c0_20] : memref<1x224xf32, #tpu.memory_space<vmem>>, vector<1x224xf32>
    %28 = vector.broadcast %27 : vector<1x224xf32> to vector<224x224xf32>
    %29 = arith.addf %26, %28 : vector<224x224xf32>
    %cst_21 = arith.constant 0.000000e+00 : f32
    %30 = vector.broadcast %cst_21 : f32 to vector<224x224xf32>
    %31 = arith.maximumf %29, %30 : vector<224x224xf32>
    %c0_22 = arith.constant 0 : index
    %c0_23 = arith.constant 0 : index
    %32 = vector.load %arg5[%c0_22, %c0_23] : memref<224x224xf32, #tpu.memory_space<vmem>>, vector<224x224xf32>
    %cst_24 = arith.constant dense<0.000000e+00> : vector<224x224xf32>
    %33 = tpu.matmul %32, %31, %cst_24 {dimension_numbers = #tpu.dot_dimension_numbers<[1], [0], [0], [1], [0, 0, 1, 1], [], []>} : vector<224x224xf32>, vector<224x224xf32>, vector<224x224xf32> -> vector<224x224xf32>
    %34 = vector.extract_strided_slice %33 {offsets = [0, 0], sizes = [112, 224], strides = [1, 1]} : vector<224x224xf32> to vector<112x224xf32>
    %35 = vector.extract_strided_slice %33 {offsets = [112, 0], sizes = [112, 224], strides = [1, 1]} : vector<224x224xf32> to vector<112x224xf32>
    %36 = arith.maximumf %34, %35 : vector<112x224xf32>
    %c0_25 = arith.constant 0 : index
    %c0_26 = arith.constant 0 : index
    %37 = vector.load %arg6[%c0_25, %c0_26] : memref<224x224xf32, #tpu.memory_space<vmem>>, vector<224x224xf32>
    %cst_27 = arith.constant dense<0.000000e+00> : vector<112x224xf32>
    %38 = tpu.matmul %36, %37, %cst_27 {dimension_numbers = #tpu.dot_dimension_numbers<[1], [0], [0], [1], [0, 0, 1, 1], [], []>} : vector<112x224xf32>, vector<224x224xf32>, vector<112x224xf32> -> vector<112x224xf32>
    %39 = vector.extract_strided_slice %38 {offsets = [0, 0], sizes = [112, 112], strides = [1, 1]} : vector<112x224xf32> to vector<112x112xf32>
    %40 = vector.extract_strided_slice %38 {offsets = [0, 112], sizes = [112, 112], strides = [1, 1]} : vector<112x224xf32> to vector<112x112xf32>
    %41 = arith.maximumf %39, %40 : vector<112x112xf32>
    %c0_28 = arith.constant 0 : index
    %c0_29 = arith.constant 0 : index
    %42 = vector.load %arg7[%c0_28, %c0_29] : memref<560x112xf32, #tpu.memory_space<vmem>>, vector<560x112xf32>
    %cst_30 = arith.constant dense<0.000000e+00> : vector<560x112xf32>
    %43 = tpu.matmul %42, %41, %cst_30 {dimension_numbers = #tpu.dot_dimension_numbers<[1], [0], [0], [1], [0, 0, 1, 1], [], []>} : vector<560x112xf32>, vector<112x112xf32>, vector<560x112xf32> -> vector<560x112xf32>
    %44 = vector.extract_strided_slice %43 {offsets = [0, 0], sizes = [112, 112], strides = [1, 1]} : vector<560x112xf32> to vector<112x112xf32>
    %c0_31 = arith.constant 0 : index
    %c0_32 = arith.constant 0 : index
    %c0_33 = arith.constant 0 : index
    %45 = vector.load %arg8[%c0_31, %c0_32, %c0_33] : memref<5x112x224xf32, #tpu.memory_space<vmem>>, vector<1x112x224xf32>
    %46 = vector.shape_cast %45 : vector<1x112x224xf32> to vector<112x224xf32>
    %cst_34 = arith.constant dense<0.000000e+00> : vector<112x224xf32>
    %47 = tpu.matmul %44, %46, %cst_34 {dimension_numbers = #tpu.dot_dimension_numbers<[1], [0], [0], [1], [0, 0, 1, 1], [], []>} : vector<112x112xf32>, vector<112x224xf32>, vector<112x224xf32> -> vector<112x224xf32>
    %48 = vector.extract_strided_slice %43 {offsets = [112, 0], sizes = [112, 112], strides = [1, 1]} : vector<560x112xf32> to vector<112x112xf32>
    %c1_35 = arith.constant 1 : index
    %c0_36 = arith.constant 0 : index
    %c0_37 = arith.constant 0 : index
    %49 = vector.load %arg8[%c1_35, %c0_36, %c0_37] : memref<5x112x224xf32, #tpu.memory_space<vmem>>, vector<1x112x224xf32>
    %50 = vector.shape_cast %49 : vector<1x112x224xf32> to vector<112x224xf32>
    %cst_38 = arith.constant dense<0.000000e+00> : vector<112x224xf32>
    %51 = tpu.matmul %48, %50, %cst_38 {dimension_numbers = #tpu.dot_dimension_numbers<[1], [0], [0], [1], [0, 0, 1, 1], [], []>} : vector<112x112xf32>, vector<112x224xf32>, vector<112x224xf32> -> vector<112x224xf32>
    %52 = arith.addf %47, %51 : vector<112x224xf32>
    %53 = vector.extract_strided_slice %43 {offsets = [224, 0], sizes = [112, 112], strides = [1, 1]} : vector<560x112xf32> to vector<112x112xf32>
    %c2_39 = arith.constant 2 : index
    %c0_40 = arith.constant 0 : index
    %c0_41 = arith.constant 0 : index
    %54 = vector.load %arg8[%c2_39, %c0_40, %c0_41] : memref<5x112x224xf32, #tpu.memory_space<vmem>>, vector<1x112x224xf32>
    %55 = vector.shape_cast %54 : vector<1x112x224xf32> to vector<112x224xf32>
    %cst_42 = arith.constant dense<0.000000e+00> : vector<112x224xf32>
    %56 = tpu.matmul %53, %55, %cst_42 {dimension_numbers = #tpu.dot_dimension_numbers<[1], [0], [0], [1], [0, 0, 1, 1], [], []>} : vector<112x112xf32>, vector<112x224xf32>, vector<112x224xf32> -> vector<112x224xf32>
    %57 = arith.addf %52, %56 : vector<112x224xf32>
    %58 = vector.extract_strided_slice %43 {offsets = [336, 0], sizes = [112, 112], strides = [1, 1]} : vector<560x112xf32> to vector<112x112xf32>
    %c3_43 = arith.constant 3 : index
    %c0_44 = arith.constant 0 : index
    %c0_45 = arith.constant 0 : index
    %59 = vector.load %arg8[%c3_43, %c0_44, %c0_45] : memref<5x112x224xf32, #tpu.memory_space<vmem>>, vector<1x112x224xf32>
    %60 = vector.shape_cast %59 : vector<1x112x224xf32> to vector<112x224xf32>
    %cst_46 = arith.constant dense<0.000000e+00> : vector<112x224xf32>
    %61 = tpu.matmul %58, %60, %cst_46 {dimension_numbers = #tpu.dot_dimension_numbers<[1], [0], [0], [1], [0, 0, 1, 1], [], []>} : vector<112x112xf32>, vector<112x224xf32>, vector<112x224xf32> -> vector<112x224xf32>
    %62 = arith.addf %57, %61 : vector<112x224xf32>
    %63 = vector.extract_strided_slice %43 {offsets = [448, 0], sizes = [112, 112], strides = [1, 1]} : vector<560x112xf32> to vector<112x112xf32>
    %c4_47 = arith.constant 4 : index
    %c0_48 = arith.constant 0 : index
    %c0_49 = arith.constant 0 : index
    %64 = vector.load %arg8[%c4_47, %c0_48, %c0_49] : memref<5x112x224xf32, #tpu.memory_space<vmem>>, vector<1x112x224xf32>
    %65 = vector.shape_cast %64 : vector<1x112x224xf32> to vector<112x224xf32>
    %cst_50 = arith.constant dense<0.000000e+00> : vector<112x224xf32>
    %66 = tpu.matmul %63, %65, %cst_50 {dimension_numbers = #tpu.dot_dimension_numbers<[1], [0], [0], [1], [0, 0, 1, 1], [], []>} : vector<112x112xf32>, vector<112x224xf32>, vector<112x224xf32> -> vector<112x224xf32>
    %67 = arith.addf %62, %66 : vector<112x224xf32>
    %c0_51 = arith.constant 0 : index
    %c0_52 = arith.constant 0 : index
    %68 = vector.load %arg9[%c0_51, %c0_52] : memref<1x224xf32, #tpu.memory_space<vmem>>, vector<1x224xf32>
    %69 = vector.broadcast %68 : vector<1x224xf32> to vector<112x224xf32>
    %70 = arith.addf %67, %69 : vector<112x224xf32>
    %cst_53 = arith.constant 0.000000e+00 : f32
    %71 = vector.broadcast %cst_53 : f32 to vector<112x224xf32>
    %72 = arith.maximumf %70, %71 : vector<112x224xf32>
    %c0_54 = arith.constant 0 : index
    %c0_55 = arith.constant 0 : index
    %73 = vector.load %arg10[%c0_54, %c0_55] : memref<112x112xf32, #tpu.memory_space<vmem>>, vector<112x112xf32>
    %cst_56 = arith.constant dense<0.000000e+00> : vector<112x224xf32>
    %74 = tpu.matmul %73, %72, %cst_56 {dimension_numbers = #tpu.dot_dimension_numbers<[1], [0], [0], [1], [0, 0, 1, 1], [], []>} : vector<112x112xf32>, vector<112x224xf32>, vector<112x224xf32> -> vector<112x224xf32>
    %75 = vector.extract_strided_slice %74 {offsets = [0, 0], sizes = [56, 224], strides = [1, 1]} : vector<112x224xf32> to vector<56x224xf32>
    %76 = vector.extract_strided_slice %74 {offsets = [56, 0], sizes = [56, 224], strides = [1, 1]} : vector<112x224xf32> to vector<56x224xf32>
    %77 = arith.maximumf %75, %76 : vector<56x224xf32>
    %c0_57 = arith.constant 0 : index
    %c0_58 = arith.constant 0 : index
    %78 = vector.load %arg11[%c0_57, %c0_58] : memref<224x224xf32, #tpu.memory_space<vmem>>, vector<224x224xf32>
    %cst_59 = arith.constant dense<0.000000e+00> : vector<56x224xf32>
    %79 = tpu.matmul %77, %78, %cst_59 {dimension_numbers = #tpu.dot_dimension_numbers<[1], [0], [0], [1], [0, 0, 1, 1], [], []>} : vector<56x224xf32>, vector<224x224xf32>, vector<56x224xf32> -> vector<56x224xf32>
    %80 = vector.extract_strided_slice %79 {offsets = [0, 0], sizes = [56, 112], strides = [1, 1]} : vector<56x224xf32> to vector<56x112xf32>
    %81 = vector.extract_strided_slice %79 {offsets = [0, 112], sizes = [56, 112], strides = [1, 1]} : vector<56x224xf32> to vector<56x112xf32>
    %82 = arith.maximumf %80, %81 : vector<56x112xf32>
    %83 = vector.extract_strided_slice %82 {offsets = [0, 0], sizes = [8, 112], strides = [1, 1]} : vector<56x112xf32> to vector<8x112xf32>
    %c0_60 = arith.constant 0 : index
    %c0_61 = arith.constant 0 : index
    %c0_62 = arith.constant 0 : index
    %84 = vector.load %arg12[%c0_60, %c0_61, %c0_62] : memref<7x112x120xf32, #tpu.memory_space<vmem>>, vector<1x112x120xf32>
    %85 = vector.shape_cast %84 : vector<1x112x120xf32> to vector<112x120xf32>
    %cst_63 = arith.constant dense<0.000000e+00> : vector<8x120xf32>
    %86 = tpu.matmul %83, %85, %cst_63 {dimension_numbers = #tpu.dot_dimension_numbers<[1], [0], [0], [1], [0, 0, 1, 1], [], []>} : vector<8x112xf32>, vector<112x120xf32>, vector<8x120xf32> -> vector<8x120xf32>
    %87 = vector.extract_strided_slice %82 {offsets = [8, 0], sizes = [8, 112], strides = [1, 1]} : vector<56x112xf32> to vector<8x112xf32>
    %c1_64 = arith.constant 1 : index
    %c0_65 = arith.constant 0 : index
    %c0_66 = arith.constant 0 : index
    %88 = vector.load %arg12[%c1_64, %c0_65, %c0_66] : memref<7x112x120xf32, #tpu.memory_space<vmem>>, vector<1x112x120xf32>
    %89 = vector.shape_cast %88 : vector<1x112x120xf32> to vector<112x120xf32>
    %cst_67 = arith.constant dense<0.000000e+00> : vector<8x120xf32>
    %90 = tpu.matmul %87, %89, %cst_67 {dimension_numbers = #tpu.dot_dimension_numbers<[1], [0], [0], [1], [0, 0, 1, 1], [], []>} : vector<8x112xf32>, vector<112x120xf32>, vector<8x120xf32> -> vector<8x120xf32>
    %91 = arith.addf %86, %90 : vector<8x120xf32>
    %92 = vector.extract_strided_slice %82 {offsets = [16, 0], sizes = [8, 112], strides = [1, 1]} : vector<56x112xf32> to vector<8x112xf32>
    %c2_68 = arith.constant 2 : index
    %c0_69 = arith.constant 0 : index
    %c0_70 = arith.constant 0 : index
    %93 = vector.load %arg12[%c2_68, %c0_69, %c0_70] : memref<7x112x120xf32, #tpu.memory_space<vmem>>, vector<1x112x120xf32>
    %94 = vector.shape_cast %93 : vector<1x112x120xf32> to vector<112x120xf32>
    %cst_71 = arith.constant dense<0.000000e+00> : vector<8x120xf32>
    %95 = tpu.matmul %92, %94, %cst_71 {dimension_numbers = #tpu.dot_dimension_numbers<[1], [0], [0], [1], [0, 0, 1, 1], [], []>} : vector<8x112xf32>, vector<112x120xf32>, vector<8x120xf32> -> vector<8x120xf32>
    %96 = arith.addf %91, %95 : vector<8x120xf32>
    %97 = vector.extract_strided_slice %82 {offsets = [24, 0], sizes = [8, 112], strides = [1, 1]} : vector<56x112xf32> to vector<8x112xf32>
    %c3_72 = arith.constant 3 : index
    %c0_73 = arith.constant 0 : index
    %c0_74 = arith.constant 0 : index
    %98 = vector.load %arg12[%c3_72, %c0_73, %c0_74] : memref<7x112x120xf32, #tpu.memory_space<vmem>>, vector<1x112x120xf32>
    %99 = vector.shape_cast %98 : vector<1x112x120xf32> to vector<112x120xf32>
    %cst_75 = arith.constant dense<0.000000e+00> : vector<8x120xf32>
    %100 = tpu.matmul %97, %99, %cst_75 {dimension_numbers = #tpu.dot_dimension_numbers<[1], [0], [0], [1], [0, 0, 1, 1], [], []>} : vector<8x112xf32>, vector<112x120xf32>, vector<8x120xf32> -> vector<8x120xf32>
    %101 = arith.addf %96, %100 : vector<8x120xf32>
    %102 = vector.extract_strided_slice %82 {offsets = [32, 0], sizes = [8, 112], strides = [1, 1]} : vector<56x112xf32> to vector<8x112xf32>
    %c4_76 = arith.constant 4 : index
    %c0_77 = arith.constant 0 : index
    %c0_78 = arith.constant 0 : index
    %103 = vector.load %arg12[%c4_76, %c0_77, %c0_78] : memref<7x112x120xf32, #tpu.memory_space<vmem>>, vector<1x112x120xf32>
    %104 = vector.shape_cast %103 : vector<1x112x120xf32> to vector<112x120xf32>
    %cst_79 = arith.constant dense<0.000000e+00> : vector<8x120xf32>
    %105 = tpu.matmul %102, %104, %cst_79 {dimension_numbers = #tpu.dot_dimension_numbers<[1], [0], [0], [1], [0, 0, 1, 1], [], []>} : vector<8x112xf32>, vector<112x120xf32>, vector<8x120xf32> -> vector<8x120xf32>
    %106 = arith.addf %101, %105 : vector<8x120xf32>
    %107 = vector.extract_strided_slice %82 {offsets = [40, 0], sizes = [8, 112], strides = [1, 1]} : vector<56x112xf32> to vector<8x112xf32>
    %c5 = arith.constant 5 : index
    %c0_80 = arith.constant 0 : index
    %c0_81 = arith.constant 0 : index
    %108 = vector.load %arg12[%c5, %c0_80, %c0_81] : memref<7x112x120xf32, #tpu.memory_space<vmem>>, vector<1x112x120xf32>
    %109 = vector.shape_cast %108 : vector<1x112x120xf32> to vector<112x120xf32>
    %cst_82 = arith.constant dense<0.000000e+00> : vector<8x120xf32>
    %110 = tpu.matmul %107, %109, %cst_82 {dimension_numbers = #tpu.dot_dimension_numbers<[1], [0], [0], [1], [0, 0, 1, 1], [], []>} : vector<8x112xf32>, vector<112x120xf32>, vector<8x120xf32> -> vector<8x120xf32>
    %111 = arith.addf %106, %110 : vector<8x120xf32>
    %112 = vector.extract_strided_slice %82 {offsets = [48, 0], sizes = [8, 112], strides = [1, 1]} : vector<56x112xf32> to vector<8x112xf32>
    %c6 = arith.constant 6 : index
    %c0_83 = arith.constant 0 : index
    %c0_84 = arith.constant 0 : index
    %113 = vector.load %arg12[%c6, %c0_83, %c0_84] : memref<7x112x120xf32, #tpu.memory_space<vmem>>, vector<1x112x120xf32>
    %114 = vector.shape_cast %113 : vector<1x112x120xf32> to vector<112x120xf32>
    %cst_85 = arith.constant dense<0.000000e+00> : vector<8x120xf32>
    %115 = tpu.matmul %112, %114, %cst_85 {dimension_numbers = #tpu.dot_dimension_numbers<[1], [0], [0], [1], [0, 0, 1, 1], [], []>} : vector<8x112xf32>, vector<112x120xf32>, vector<8x120xf32> -> vector<8x120xf32>
    %116 = arith.addf %111, %115 : vector<8x120xf32>
    %c0_86 = arith.constant 0 : index
    %c0_87 = arith.constant 0 : index
    %117 = vector.load %arg13[%c0_86, %c0_87] : memref<1x120xf32, #tpu.memory_space<vmem>>, vector<1x120xf32>
    %118 = vector.broadcast %117 : vector<1x120xf32> to vector<8x120xf32>
    %119 = arith.addf %116, %118 : vector<8x120xf32>
    %cst_88 = arith.constant 0.000000e+00 : f32
    %120 = vector.broadcast %cst_88 : f32 to vector<8x120xf32>
    %121 = arith.maximumf %119, %120 : vector<8x120xf32>
    %c0_89 = arith.constant 0 : index
    %c0_90 = arith.constant 0 : index
    %122 = vector.load %arg14[%c0_89, %c0_90] : memref<120x84xf32, #tpu.memory_space<vmem>>, vector<120x84xf32>
    %cst_91 = arith.constant dense<0.000000e+00> : vector<8x84xf32>
    %123 = tpu.matmul %121, %122, %cst_91 {dimension_numbers = #tpu.dot_dimension_numbers<[1], [0], [0], [1], [0, 0, 1, 1], [], []>} : vector<8x120xf32>, vector<120x84xf32>, vector<8x84xf32> -> vector<8x84xf32>
    %c0_92 = arith.constant 0 : index
    %c0_93 = arith.constant 0 : index
    %124 = vector.load %arg15[%c0_92, %c0_93] : memref<1x84xf32, #tpu.memory_space<vmem>>, vector<1x84xf32>
    %125 = vector.broadcast %124 : vector<1x84xf32> to vector<8x84xf32>
    %126 = arith.addf %123, %125 : vector<8x84xf32>
    %cst_94 = arith.constant 0.000000e+00 : f32
    %127 = vector.broadcast %cst_94 : f32 to vector<8x84xf32>
    %128 = arith.maximumf %126, %127 : vector<8x84xf32>
    %c0_95 = arith.constant 0 : index
    %c0_96 = arith.constant 0 : index
    %129 = vector.load %arg16[%c0_95, %c0_96] : memref<84x10xf32, #tpu.memory_space<vmem>>, vector<84x10xf32>
    %cst_97 = arith.constant dense<0.000000e+00> : vector<8x10xf32>
    %130 = tpu.matmul %128, %129, %cst_97 {dimension_numbers = #tpu.dot_dimension_numbers<[1], [0], [0], [1], [0, 0, 1, 1], [], []>} : vector<8x84xf32>, vector<84x10xf32>, vector<8x10xf32> -> vector<8x10xf32>
    %c0_98 = arith.constant 0 : index
    %c0_99 = arith.constant 0 : index
    %131 = vector.load %arg17[%c0_98, %c0_99] : memref<1x10xf32, #tpu.memory_space<vmem>>, vector<1x10xf32>
    %132 = vector.broadcast %131 : vector<1x10xf32> to vector<8x10xf32>
    %133 = arith.addf %130, %132 : vector<8x10xf32>
    %c0_100 = arith.constant 0 : index
    %c0_101 = arith.constant 0 : index
    %134 = vector.load %arg18[%c0_100, %c0_101] : memref<8x10xf32, #tpu.memory_space<vmem>>, vector<8x10xf32>
    tpu.vector_store %arg18[%c0_100, %c0_101], %133 {strides = array<i32>} : memref<8x10xf32, #tpu.memory_space<vmem>>, vector<8x10xf32>,
    return
  }
  func.func @transform_0(%arg0: i32) -> (i32, i32) {
    %c0_i32 = arith.constant 0 : i32
    %c0_i32_0 = arith.constant 0 : i32
    return %arg0, %c0_i32 : i32, i32
  }
  func.func @transform_1(%arg0: i32) -> (i32, i32) {
    %c0_i32 = arith.constant 0 : i32
    %c0_i32_0 = arith.constant 0 : i32
    %c0_i32_1 = arith.constant 0 : i32
    return %c0_i32, %c0_i32_0 : i32, i32
  }
  func.func @transform_2(%arg0: i32) -> (i32, i32, i32) {
    %c0_i32 = arith.constant 0 : i32
    %c0_i32_0 = arith.constant 0 : i32
    %c0_i32_1 = arith.constant 0 : i32
    %c0_i32_2 = arith.constant 0 : i32
    return %c0_i32, %c0_i32_0, %c0_i32_1 : i32, i32, i32
  }
  func.func @transform_3(%arg0: i32) -> (i32, i32) {
    %c0_i32 = arith.constant 0 : i32
    %c0_i32_0 = arith.constant 0 : i32
    %c0_i32_1 = arith.constant 0 : i32
    return %c0_i32, %c0_i32_0 : i32, i32
  }
  func.func @transform_4(%arg0: i32) -> (i32, i32) {
    %c0_i32 = arith.constant 0 : i32
    %c0_i32_0 = arith.constant 0 : i32
    %c0_i32_1 = arith.constant 0 : i32
    return %c0_i32, %c0_i32_0 : i32, i32
  }
  func.func @transform_5(%arg0: i32) -> (i32, i32) {
    %c0_i32 = arith.constant 0 : i32
    %c0_i32_0 = arith.constant 0 : i32
    %c0_i32_1 = arith.constant 0 : i32
    return %c0_i32, %c0_i32_0 : i32, i32
  }
  func.func @transform_6(%arg0: i32) -> (i32, i32) {
    %c0_i32 = arith.constant 0 : i32
    %c0_i32_0 = arith.constant 0 : i32
    %c0_i32_1 = arith.constant 0 : i32
    return %c0_i32, %c0_i32_0 : i32, i32
  }
  func.func @transform_7(%arg0: i32) -> (i32, i32, i32) {
    %c0_i32 = arith.constant 0 : i32
    %c0_i32_0 = arith.constant 0 : i32
    %c0_i32_1 = arith.constant 0 : i32
    %c0_i32_2 = arith.constant 0 : i32
    return %c0_i32, %c0_i32_0, %c0_i32_1 : i32, i32, i32
  }
  func.func @transform_8(%arg0: i32) -> (i32, i32) {
    %c0_i32 = arith.constant 0 : i32
    %c0_i32_0 = arith.constant 0 : i32
    %c0_i32_1 = arith.constant 0 : i32
    return %c0_i32, %c0_i32_0 : i32, i32
  }
  func.func @transform_9(%arg0: i32) -> (i32, i32) {
    %c0_i32 = arith.constant 0 : i32
    %c0_i32_0 = arith.constant 0 : i32
    %c0_i32_1 = arith.constant 0 : i32
    return %c0_i32, %c0_i32_0 : i32, i32
  }
  func.func @transform_10(%arg0: i32) -> (i32, i32) {
    %c0_i32 = arith.constant 0 : i32
    %c0_i32_0 = arith.constant 0 : i32
    %c0_i32_1 = arith.constant 0 : i32
    return %c0_i32, %c0_i32_0 : i32, i32
  }
  func.func @transform_11(%arg0: i32) -> (i32, i32, i32) {
    %c0_i32 = arith.constant 0 : i32
    %c0_i32_0 = arith.constant 0 : i32
    %c0_i32_1 = arith.constant 0 : i32
    %c0_i32_2 = arith.constant 0 : i32
    return %c0_i32, %c0_i32_0, %c0_i32_1 : i32, i32, i32
  }
  func.func @transform_12(%arg0: i32) -> (i32, i32) {
    %c0_i32 = arith.constant 0 : i32
    %c0_i32_0 = arith.constant 0 : i32
    %c0_i32_1 = arith.constant 0 : i32
    return %c0_i32, %c0_i32_0 : i32, i32
  }
  func.func @transform_13(%arg0: i32) -> (i32, i32) {
    %c0_i32 = arith.constant 0 : i32
    %c0_i32_0 = arith.constant 0 : i32
    %c0_i32_1 = arith.constant 0 : i32
    return %c0_i32, %c0_i32_0 : i32, i32
  }
  func.func @transform_14(%arg0: i32) -> (i32, i32) {
    %c0_i32 = arith.constant 0 : i32
    %c0_i32_0 = arith.constant 0 : i32
    %c0_i32_1 = arith.constant 0 : i32
    return %c0_i32, %c0_i32_0 : i32, i32
  }
  func.func @transform_15(%arg0: i32) -> (i32, i32) {
    %c0_i32 = arith.constant 0 : i32
    %c0_i32_0 = arith.constant 0 : i32
    %c0_i32_1 = arith.constant 0 : i32
    return %c0_i32, %c0_i32_0 : i32, i32
  }
  func.func @transform_16(%arg0: i32) -> (i32, i32) {
    %c0_i32 = arith.constant 0 : i32
    %c0_i32_0 = arith.constant 0 : i32
    %c0_i32_1 = arith.constant 0 : i32
    return %c0_i32, %c0_i32_0 : i32, i32
  }
  func.func @transform_17(%arg0: i32) -> (i32, i32) {
    %c0_i32 = arith.constant 0 : i32
    %c0_i32_0 = arith.constant 0 : i32
    return %arg0, %c0_i32 : i32, i32
  }
}

</mosaic_0001>

<llo_original>
// kernel: fashion_mnist_cnn_forward.1
$region0: #{fashion_mnist_cnn_forward.1}
  #allocation0 [shape = 'u32[]', space=smem, size = 0x4, offset = 0x4, fixed_abs, tag = 'smem constant byte address 0x4 - core index']
  #allocation1 [shape = 'u32[144,128]{1,0:T(1,128)}', space=vmem, size = 0x12000, scoped, tag = 'internal scratch']
  %s0 = inlined_call_operand.vmem [shape: f32[256,32], index: 0, kind: input, shape index: {}]
  %s1 = inlined_call_operand.vmem [shape: f32[1120,256], index: 1, kind: input, shape index: {}]
  %s2 = inlined_call_operand.vmem [shape: f32[5,32,224], index: 2, kind: input, shape index: {}]
  %s3 = inlined_call_operand.vmem [shape: f32[1,224], index: 3, kind: input, shape index: {}]
  %s4 = inlined_call_operand.vmem [shape: f32[224,224], index: 4, kind: input, shape index: {}]
  %s5 = inlined_call_operand.vmem [shape: f32[224,224], index: 5, kind: input, shape index: {}, may-alias: {5,10}]
  %s6 = inlined_call_operand.vmem [shape: f32[560,112], index: 6, kind: input, shape index: {}]
  %s7 = inlined_call_operand.vmem [shape: f32[5,112,224], index: 7, kind: input, shape index: {}]
  %s8 = inlined_call_operand.vmem [shape: f32[1,224], index: 8, kind: input, shape index: {}]
  %s9 = inlined_call_operand.vmem [shape: f32[112,112], index: 9, kind: input, shape index: {}]
  %s10 = inlined_call_operand.vmem [shape: f32[224,224], index: 10, kind: input, shape index: {}, may-alias: {5,10}]
  %s11 = inlined_call_operand.vmem [shape: f32[7,112,120], index: 11, kind: input, shape index: {}]
  %s12 = inlined_call_operand.vmem [shape: f32[1,120], index: 12, kind: input, shape index: {}]
  %s13 = inlined_call_operand.vmem [shape: f32[120,84], index: 13, kind: input, shape index: {}]
  %s14 = inlined_call_operand.vmem [shape: f32[1,84], index: 14, kind: input, shape index: {}]
  %s15 = inlined_call_operand.vmem [shape: f32[84,10], index: 15, kind: input, shape index: {}]
  %s16 = inlined_call_operand.vmem [shape: f32[1,10], index: 16, kind: input, shape index: {}]
  %s17 = inlined_call_operand.vmem [shape: f32[8,10], index: 17, kind: output, shape index: {}]
  %s18 = sld [smem:[#allocation0]]
  $region78: #{fashion_mnist_cnn_forward.1} parent=0
    _
  %s20 = ssub.s32 1, %s18
  %s21 = scalar_select 0, %s20, %s18
  // Predicated region
  $region2: #{fashion_mnist_cnn_forward.1} parent=0 // pred_check
    _
  $region3: #{fashion_mnist_cnn_forward.1} parent=0 // pred_check_branch
    %23 = sbr.rel (0) target = $region5
  $region4: #{fashion_mnist_cnn_forward.1} parent=0 // pred_region
    _
  $region5: #{fashion_mnist_cnn_forward.1} parent=0 // pred_fallthru
    _
  // Predicated region
  $region6: #{fashion_mnist_cnn_forward.1} parent=0 // pred_check
    _
  $region7: #{fashion_mnist_cnn_forward.1} parent=0 // pred_check_branch
    %25 = sbr.rel (0) target = $region9
  $region8: #{fashion_mnist_cnn_forward.1} parent=0 // pred_region
    _
  $region9: #{fashion_mnist_cnn_forward.1} parent=0 // pred_fallthru
    _
  // Predicated region
  $region10: #{fashion_mnist_cnn_forward.1} parent=0 // pred_check
    _
  $region11: #{fashion_mnist_cnn_forward.1} parent=0 // pred_check_branch
    %27 = sbr.rel (0) target = $region13
  $region12: #{fashion_mnist_cnn_forward.1} parent=0 // pred_region
    _
  $region13: #{fashion_mnist_cnn_forward.1} parent=0 // pred_fallthru
    _
  // Predicated region
  $region14: #{fashion_mnist_cnn_forward.1} parent=0 // pred_check
    _
  $region15: #{fashion_mnist_cnn_forward.1} parent=0 // pred_check_branch
    %29 = sbr.rel (0) target = $region17
  $region16: #{fashion_mnist_cnn_forward.1} parent=0 // pred_region
    _
  $region17: #{fashion_mnist_cnn_forward.1} parent=0 // pred_fallthru
    _
  // Predicated region
  $region18: #{fashion_mnist_cnn_forward.1} parent=0 // pred_check
    _
  $region19: #{fashion_mnist_cnn_forward.1} parent=0 // pred_check_branch
    %31 = sbr.rel (0) target = $region21
  $region20: #{fashion_mnist_cnn_forward.1} parent=0 // pred_region
    _
  $region21: #{fashion_mnist_cnn_forward.1} parent=0 // pred_fallthru
    _
  // Predicated region
  $region22: #{fashion_mnist_cnn_forward.1} parent=0 // pred_check
    _
  $region23: #{fashion_mnist_cnn_forward.1} parent=0 // pred_check_branch
    %33 = sbr.rel (0) target = $region25
  $region24: #{fashion_mnist_cnn_forward.1} parent=0 // pred_region
    _
  $region25: #{fashion_mnist_cnn_forward.1} parent=0 // pred_fallthru
    _
  // Predicated region
  $region26: #{fashion_mnist_cnn_forward.1} parent=0 // pred_check
    _
  $region27: #{fashion_mnist_cnn_forward.1} parent=0 // pred_check_branch
    %35 = sbr.rel (0) target = $region29
  $region28: #{fashion_mnist_cnn_forward.1} parent=0 // pred_region
    _
  $region29: #{fashion_mnist_cnn_forward.1} parent=0 // pred_fallthru
    _
  // Predicated region
  $region30: #{fashion_mnist_cnn_forward.1} parent=0 // pred_check
    _
  $region31: #{fashion_mnist_cnn_forward.1} parent=0 // pred_check_branch
    %37 = sbr.rel (0) target = $region33
  $region32: #{fashion_mnist_cnn_forward.1} parent=0 // pred_region
    _
  $region33: #{fashion_mnist_cnn_forward.1} parent=0 // pred_fallthru
    _
  // Predicated region
  $region34: #{fashion_mnist_cnn_forward.1} parent=0 // pred_check
    _
  $region35: #{fashion_mnist_cnn_forward.1} parent=0 // pred_check_branch
    %39 = sbr.rel (0) target = $region37
  $region36: #{fashion_mnist_cnn_forward.1} parent=0 // pred_region
    _
  $region37: #{fashion_mnist_cnn_forward.1} parent=0 // pred_fallthru
    _
  // Predicated region
  $region38: #{fashion_mnist_cnn_forward.1} parent=0 // pred_check
    _
  $region39: #{fashion_mnist_cnn_forward.1} parent=0 // pred_check_branch
    %41 = sbr.rel (0) target = $region41
  $region40: #{fashion_mnist_cnn_forward.1} parent=0 // pred_region
    _
  $region41: #{fashion_mnist_cnn_forward.1} parent=0 // pred_fallthru
    _
  // Predicated region
  $region42: #{fashion_mnist_cnn_forward.1} parent=0 // pred_check
    _
  $region43: #{fashion_mnist_cnn_forward.1} parent=0 // pred_check_branch
    %43 = sbr.rel (0) target = $region45
  $region44: #{fashion_mnist_cnn_forward.1} parent=0 // pred_region
    _
  $region45: #{fashion_mnist_cnn_forward.1} parent=0 // pred_fallthru
    _
  // Predicated region
  $region46: #{fashion_mnist_cnn_forward.1} parent=0 // pred_check
    _
  $region47: #{fashion_mnist_cnn_forward.1} parent=0 // pred_check_branch
    %45 = sbr.rel (0) target = $region49
  $region48: #{fashion_mnist_cnn_forward.1} parent=0 // pred_region
    _
  $region49: #{fashion_mnist_cnn_forward.1} parent=0 // pred_fallthru
    _
  // Predicated region
  $region50: #{fashion_mnist_cnn_forward.1} parent=0 // pred_check
    _
  $region51: #{fashion_mnist_cnn_forward.1} parent=0 // pred_check_branch
    %47 = sbr.rel (0) target = $region53
  $region52: #{fashion_mnist_cnn_forward.1} parent=0 // pred_region
    _
  $region53: #{fashion_mnist_cnn_forward.1} parent=0 // pred_fallthru
    _
  // Predicated region
  $region54: #{fashion_mnist_cnn_forward.1} parent=0 // pred_check
    _
  $region55: #{fashion_mnist_cnn_forward.1} parent=0 // pred_check_branch
    %49 = sbr.rel (0) target = $region57
  $region56: #{fashion_mnist_cnn_forward.1} parent=0 // pred_region
    _
  $region57: #{fashion_mnist_cnn_forward.1} parent=0 // pred_fallthru
    _
  // Predicated region
  $region58: #{fashion_mnist_cnn_forward.1} parent=0 // pred_check
    _
  $region59: #{fashion_mnist_cnn_forward.1} parent=0 // pred_check_branch
    %51 = sbr.rel (0) target = $region61
  $region60: #{fashion_mnist_cnn_forward.1} parent=0 // pred_region
    _
  $region61: #{fashion_mnist_cnn_forward.1} parent=0 // pred_fallthru
    _
  // Predicated region
  $region62: #{fashion_mnist_cnn_forward.1} parent=0 // pred_check
    _
  $region63: #{fashion_mnist_cnn_forward.1} parent=0 // pred_check_branch
    %53 = sbr.rel (0) target = $region65
  $region64: #{fashion_mnist_cnn_forward.1} parent=0 // pred_region
    _
  $region65: #{fashion_mnist_cnn_forward.1} parent=0 // pred_fallthru
    _
  // Predicated region
  $region66: #{fashion_mnist_cnn_forward.1} parent=0 // pred_check
    _
  $region67: #{fashion_mnist_cnn_forward.1} parent=0 // pred_check_branch
    %55 = sbr.rel (0) target = $region69
  $region68: #{fashion_mnist_cnn_forward.1} parent=0 // pred_region
    _
  $region69: #{fashion_mnist_cnn_forward.1} parent=0 // pred_fallthru
    _
  %v56 = vld [vmem:[%s1] sm:$0xff]
  %v57 = vld [vmem:[%s1 + $0x8] sm:$0xff]
  %v58 = vld [vmem:[%s1 + $0x10] sm:$0xff]
  %v59 = vld [vmem:[%s1 + $0x18] sm:$0xff]
  %v60 = vld [vmem:[%s1 + $0x20] sm:$0xff]
  %v61 = vld [vmem:[%s1 + $0x28] sm:$0xff]
  %v62 = vld [vmem:[%s1 + $0x30] sm:$0xff]
  %v63 = vld [vmem:[%s1 + $0x38] sm:$0xff]
  %v64 = vld [vmem:[%s1 + $0x40] sm:$0xff]
  %v65 = vld [vmem:[%s1 + $0x48] sm:$0xff]
  %v66 = vld [vmem:[%s1 + $0x50] sm:$0xff]
  %v67 = vld [vmem:[%s1 + $0x58] sm:$0xff]
  %v68 = vld [vmem:[%s1 + $0x60] sm:$0xff]
  %v69 = vld [vmem:[%s1 + $0x68] sm:$0xff]
  %v70 = vld [vmem:[%s1 + $0x70] sm:$0xff]
  %v71 = vld [vmem:[%s1 + $0x78] sm:$0xff]
  %v72 = vld [vmem:[%s1 + $0x80] sm:$0xff]
  %v73 = vld [vmem:[%s1 + $0x88] sm:$0xff]
  %v74 = vld [vmem:[%s1 + $0x90] sm:$0xff]
  %v75 = vld [vmem:[%s1 + $0x98] sm:$0xff]
  %v76 = vld [vmem:[%s1 + $0xa0] sm:$0xff]
  %v77 = vld [vmem:[%s1 + $0xa8] sm:$0xff]
  %v78 = vld [vmem:[%s1 + $0xb0] sm:$0xff]
  %v79 = vld [vmem:[%s1 + $0xb8] sm:$0xff]
  %v80 = vld [vmem:[%s1 + $0xc0] sm:$0xff]
  %v81 = vld [vmem:[%s1 + $0xc8] sm:$0xff]
  %v82 = vld [vmem:[%s1 + $0xd0] sm:$0xff]
  %v83 = vld [vmem:[%s1 + $0xd8] sm:$0xff]
  %v84 = vld [vmem:[%s1 + $0xe0] sm:$0xff]
  %v85 = vld [vmem:[%s1 + $0xe8] sm:$0xff]
  %v86 = vld [vmem:[%s1 + $0xf0] sm:$0xff]
  %v87 = vld [vmem:[%s1 + $0xf8] sm:$0xff]
  %v88 = vld [vmem:[%s1 + $0x100] sm:$0xff]
  %v89 = vld [vmem:[%s1 + $0x108] sm:$0xff]
  %v90 = vld [vmem:[%s1 + $0x110] sm:$0xff]
  %v91 = vld [vmem:[%s1 + $0x118] sm:$0xff]
  %v92 = vld [vmem:[%s1 + $0x120] sm:$0xff]
  %v93 = vld [vmem:[%s1 + $0x128] sm:$0xff]
  %v94 = vld [vmem:[%s1 + $0x130] sm:$0xff]
  %v95 = vld [vmem:[%s1 + $0x138] sm:$0xff]
  %v96 = vld [vmem:[%s1 + $0x140] sm:$0xff]
  %v97 = vld [vmem:[%s1 + $0x148] sm:$0xff]
  %v98 = vld [vmem:[%s1 + $0x150] sm:$0xff]
  %v99 = vld [vmem:[%s1 + $0x158] sm:$0xff]
  %v100 = vld [vmem:[%s1 + $0x160] sm:$0xff]
  %v101 = vld [vmem:[%s1 + $0x168] sm:$0xff]
  %v102 = vld [vmem:[%s1 + $0x170] sm:$0xff]
  %v103 = vld [vmem:[%s1 + $0x178] sm:$0xff]
  %v104 = vld [vmem:[%s1 + $0x180] sm:$0xff]
  %v105 = vld [vmem:[%s1 + $0x188] sm:$0xff]
  %v106 = vld [vmem:[%s1 + $0x190] sm:$0xff]
  %v107 = vld [vmem:[%s1 + $0x198] sm:$0xff]
  %v108 = vld [vmem:[%s1 + $0x1a0] sm:$0xff]
  %v109 = vld [vmem:[%s1 + $0x1a8] sm:$0xff]
  %v110 = vld [vmem:[%s1 + $0x1b0] sm:$0xff]
  %v111 = vld [vmem:[%s1 + $0x1b8] sm:$0xff]
  %v112 = vld [vmem:[%s1 + $0x1c0] sm:$0xff]
  %v113 = vld [vmem:[%s1 + $0x1c8] sm:$0xff]
  %v114 = vld [vmem:[%s1 + $0x1d0] sm:$0xff]
  %v115 = vld [vmem:[%s1 + $0x1d8] sm:$0xff]
  %v116 = vld [vmem:[%s1 + $0x1e0] sm:$0xff]
  %v117 = vld [vmem:[%s1 + $0x1e8] sm:$0xff]
  %v118 = vld [vmem:[%s1 + $0x1f0] sm:$0xff]
  %v119 = vld [vmem:[%s1 + $0x1f8] sm:$0xff]
  %v120 = vld [vmem:[%s1 + $0x200] sm:$0xff]
  %v121 = vld [vmem:[%s1 + $0x208] sm:$0xff]
  %v122 = vld [vmem:[%s1 + $0x210] sm:$0xff]
  %v123 = vld [vmem:[%s1 + $0x218] sm:$0xff]
  %v124 = vld [vmem:[%s1 + $0x220] sm:$0xff]
  %v125 = vld [vmem:[%s1 + $0x228] sm:$0xff]
  %v126 = vld [vmem:[%s1 + $0x230] sm:$0xff]
  %v127 = vld [vmem:[%s1 + $0x238] sm:$0xff]
  %v128 = vld [vmem:[%s1 + $0x240] sm:$0xff]
  %v129 = vld [vmem:[%s1 + $0x248] sm:$0xff]
  %v130 = vld [vmem:[%s1 + $0x250] sm:$0xff]
  %v131 = vld [vmem:[%s1 + $0x258] sm:$0xff]
  %v132 = vld [vmem:[%s1 + $0x260] sm:$0xff]
  %v133 = vld [vmem:[%s1 + $0x268] sm:$0xff]
  %v134 = vld [vmem:[%s1 + $0x270] sm:$0xff]
  %v135 = vld [vmem:[%s1 + $0x278] sm:$0xff]
  %v136 = vld [vmem:[%s1 + $0x280] sm:$0xff]
  %v137 = vld [vmem:[%s1 + $0x288] sm:$0xff]
  %v138 = vld [vmem:[%s1 + $0x290] sm:$0xff]
  %v139 = vld [vmem:[%s1 + $0x298] sm:$0xff]
  %v140 = vld [vmem:[%s1 + $0x2a0] sm:$0xff]
  %v141 = vld [vmem:[%s1 + $0x2a8] sm:$0xff]
  %v142 = vld [vmem:[%s1 + $0x2b0] sm:$0xff]
  %v143 = vld [vmem:[%s1 + $0x2b8] sm:$0xff]
  %v144 = vld [vmem:[%s1 + $0x2c0] sm:$0xff]
  %v145 = vld [vmem:[%s1 + $0x2c8] sm:$0xff]
  %v146 = vld [vmem:[%s1 + $0x2d0] sm:$0xff]
  %v147 = vld [vmem:[%s1 + $0x2d8] sm:$0xff]
  %v148 = vld [vmem:[%s1 + $0x2e0] sm:$0xff]
  %v149 = vld [vmem:[%s1 + $0x2e8] sm:$0xff]
  %v150 = vld [vmem:[%s1 + $0x2f0] sm:$0xff]
  %v151 = vld [vmem:[%s1 + $0x2f8] sm:$0xff]
  %v152 = vld [vmem:[%s1 + $0x300] sm:$0xff]
  %v153 = vld [vmem:[%s1 + $0x308] sm:$0xff]
  %v154 = vld [vmem:[%s1 + $0x310] sm:$0xff]
  %v155 = vld [vmem:[%s1 + $0x318] sm:$0xff]
  %v156 = vld [vmem:[%s1 + $0x320] sm:$0xff]
  %v157 = vld [vmem:[%s1 + $0x328] sm:$0xff]
  %v158 = vld [vmem:[%s1 + $0x330] sm:$0xff]
  %v159 = vld [vmem:[%s1 + $0x338] sm:$0xff]
  %v160 = vld [vmem:[%s1 + $0x340] sm:$0xff]
  %v161 = vld [vmem:[%s1 + $0x348] sm:$0xff]
  %v162 = vld [vmem:[%s1 + $0x350] sm:$0xff]
  %v163 = vld [vmem:[%s1 + $0x358] sm:$0xff]
  %v164 = vld [vmem:[%s1 + $0x360] sm:$0xff]
  %v165 = vld [vmem:[%s1 + $0x368] sm:$0xff]
  %v166 = vld [vmem:[%s1 + $0x370] sm:$0xff]
  %v167 = vld [vmem:[%s1 + $0x378] sm:$0xff]
  %v168 = vld [vmem:[%s1 + $0x380] sm:$0xff]
  %v169 = vld [vmem:[%s1 + $0x388] sm:$0xff]
  %v170 = vld [vmem:[%s1 + $0x390] sm:$0xff]
  %v171 = vld [vmem:[%s1 + $0x398] sm:$0xff]
  %v172 = vld [vmem:[%s1 + $0x3a0] sm:$0xff]
  %v173 = vld [vmem:[%s1 + $0x3a8] sm:$0xff]
  %v174 = vld [vmem:[%s1 + $0x3b0] sm:$0xff]
  %v175 = vld [vmem:[%s1 + $0x3b8] sm:$0xff]
  %v176 = vld [vmem:[%s1 + $0x3c0] sm:$0xff]
  %v177 = vld [vmem:[%s1 + $0x3c8] sm:$0xff]
  %v178 = vld [vmem:[%s1 + $0x3d0] sm:$0xff]
  %v179 = vld [vmem:[%s1 + $0x3d8] sm:$0xff]
  %v180 = vld [vmem:[%s1 + $0x3e0] sm:$0xff]
  %v181 = vld [vmem:[%s1 + $0x3e8] sm:$0xff]
  %v182 = vld [vmem:[%s1 + $0x3f0] sm:$0xff]
  %v183 = vld [vmem:[%s1 + $0x3f8] sm:$0xff]
  %v184 = vld [vmem:[%s1 + $0x400] sm:$0xff]
  %v185 = vld [vmem:[%s1 + $0x408] sm:$0xff]
  %v186 = vld [vmem:[%s1 + $0x410] sm:$0xff]
  %v187 = vld [vmem:[%s1 + $0x418] sm:$0xff]
  %v188 = vld [vmem:[%s1 + $0x420] sm:$0xff]
  %v189 = vld [vmem:[%s1 + $0x428] sm:$0xff]
  %v190 = vld [vmem:[%s1 + $0x430] sm:$0xff]
  %v191 = vld [vmem:[%s1 + $0x438] sm:$0xff]
  %v192 = vld [vmem:[%s1 + $0x440] sm:$0xff]
  %v193 = vld [vmem:[%s1 + $0x448] sm:$0xff]
  %v194 = vld [vmem:[%s1 + $0x450] sm:$0xff]
  %v195 = vld [vmem:[%s1 + $0x458] sm:$0xff]
  %v196 = vld [vmem:[%s1 + $0x460] sm:$0xff]
  %v197 = vld [vmem:[%s1 + $0x468] sm:$0xff]
  %v198 = vld [vmem:[%s1 + $0x470] sm:$0xff]
  %v199 = vld [vmem:[%s1 + $0x478] sm:$0xff]
  %v200 = vld [vmem:[%s1 + $0x480] sm:$0xff]
  %v201 = vld [vmem:[%s1 + $0x488] sm:$0xff]
  %v202 = vld [vmem:[%s1 + $0x490] sm:$0xff]
  %v203 = vld [vmem:[%s1 + $0x498] sm:$0xff]
  %v204 = vld [vmem:[%s1 + $0x4a0] sm:$0xff]
  %v205 = vld [vmem:[%s1 + $0x4a8] sm:$0xff]
  %v206 = vld [vmem:[%s1 + $0x4b0] sm:$0xff]
  %v207 = vld [vmem:[%s1 + $0x4b8] sm:$0xff]
  %v208 = vld [vmem:[%s1 + $0x4c0] sm:$0xff]
  %v209 = vld [vmem:[%s1 + $0x4c8] sm:$0xff]
  %v210 = vld [vmem:[%s1 + $0x4d0] sm:$0xff]
  %v211 = vld [vmem:[%s1 + $0x4d8] sm:$0xff]
  %v212 = vld [vmem:[%s1 + $0x4e0] sm:$0xff]
  %v213 = vld [vmem:[%s1 + $0x4e8] sm:$0xff]
  %v214 = vld [vmem:[%s1 + $0x4f0] sm:$0xff]
  %v215 = vld [vmem:[%s1 + $0x4f8] sm:$0xff]
  %v216 = vld [vmem:[%s1 + $0x500] sm:$0xff]
  %v217 = vld [vmem:[%s1 + $0x508] sm:$0xff]
  %v218 = vld [vmem:[%s1 + $0x510] sm:$0xff]
  %v219 = vld [vmem:[%s1 + $0x518] sm:$0xff]
  %v220 = vld [vmem:[%s1 + $0x520] sm:$0xff]
  %v221 = vld [vmem:[%s1 + $0x528] sm:$0xff]
  %v222 = vld [vmem:[%s1 + $0x530] sm:$0xff]
  %v223 = vld [vmem:[%s1 + $0x538] sm:$0xff]
  %v224 = vld [vmem:[%s1 + $0x540] sm:$0xff]
  %v225 = vld [vmem:[%s1 + $0x548] sm:$0xff]
  %v226 = vld [vmem:[%s1 + $0x550] sm:$0xff]
  %v227 = vld [vmem:[%s1 + $0x558] sm:$0xff]
  %v228 = vld [vmem:[%s1 + $0x560] sm:$0xff]
  %v229 = vld [vmem:[%s1 + $0x568] sm:$0xff]
  %v230 = vld [vmem:[%s1 + $0x570] sm:$0xff]
  %v231 = vld [vmem:[%s1 + $0x578] sm:$0xff]
  %v232 = vld [vmem:[%s1 + $0x580] sm:$0xff]
  %v233 = vld [vmem:[%s1 + $0x588] sm:$0xff]
  %v234 = vld [vmem:[%s1 + $0x590] sm:$0xff]
  %v235 = vld [vmem:[%s1 + $0x598] sm:$0xff]
  %v236 = vld [vmem:[%s1 + $0x5a0] sm:$0xff]
  %v237 = vld [vmem:[%s1 + $0x5a8] sm:$0xff]
  %v238 = vld [vmem:[%s1 + $0x5b0] sm:$0xff]
  %v239 = vld [vmem:[%s1 + $0x5b8] sm:$0xff]
  %v240 = vld [vmem:[%s1 + $0x5c0] sm:$0xff]
  %v241 = vld [vmem:[%s1 + $0x5c8] sm:$0xff]
  %v242 = vld [vmem:[%s1 + $0x5d0] sm:$0xff]
  %v243 = vld [vmem:[%s1 + $0x5d8] sm:$0xff]
  %v244 = vld [vmem:[%s1 + $0x5e0] sm:$0xff]
  %v245 = vld [vmem:[%s1 + $0x5e8] sm:$0xff]
  %v246 = vld [vmem:[%s1 + $0x5f0] sm:$0xff]
  %v247 = vld [vmem:[%s1 + $0x5f8] sm:$0xff]
  %v248 = vld [vmem:[%s1 + $0x600] sm:$0xff]
  %v249 = vld [vmem:[%s1 + $0x608] sm:$0xff]
  %v250 = vld [vmem:[%s1 + $0x610] sm:$0xff]
  %v251 = vld [vmem:[%s1 + $0x618] sm:$0xff]
  %v252 = vld [vmem:[%s1 + $0x620] sm:$0xff]
  %v253 = vld [vmem:[%s1 + $0x628] sm:$0xff]
  %v254 = vld [vmem:[%s1 + $0x630] sm:$0xff]
  %v255 = vld [vmem:[%s1 + $0x638] sm:$0xff]
  %v256 = vld [vmem:[%s1 + $0x640] sm:$0xff]
  %v257 = vld [vmem:[%s1 + $0x648] sm:$0xff]
  %v258 = vld [vmem:[%s1 + $0x650] sm:$0xff]
  %v259 = vld [vmem:[%s1 + $0x658] sm:$0xff]
  %v260 = vld [vmem:[%s1 + $0x660] sm:$0xff]
  %v261 = vld [vmem:[%s1 + $0x668] sm:$0xff]
  %v262 = vld [vmem:[%s1 + $0x670] sm:$0xff]
  %v263 = vld [vmem:[%s1 + $0x678] sm:$0xff]
  %v264 = vld [vmem:[%s1 + $0x680] sm:$0xff]
  %v265 = vld [vmem:[%s1 + $0x688] sm:$0xff]
  %v266 = vld [vmem:[%s1 + $0x690] sm:$0xff]
  %v267 = vld [vmem:[%s1 + $0x698] sm:$0xff]
  %v268 = vld [vmem:[%s1 + $0x6a0] sm:$0xff]
  %v269 = vld [vmem:[%s1 + $0x6a8] sm:$0xff]
  %v270 = vld [vmem:[%s1 + $0x6b0] sm:$0xff]
  %v271 = vld [vmem:[%s1 + $0x6b8] sm:$0xff]
  %v272 = vld [vmem:[%s1 + $0x6c0] sm:$0xff]
  %v273 = vld [vmem:[%s1 + $0x6c8] sm:$0xff]
  %v274 = vld [vmem:[%s1 + $0x6d0] sm:$0xff]
  %v275 = vld [vmem:[%s1 + $0x6d8] sm:$0xff]
  %v276 = vld [vmem:[%s1 + $0x6e0] sm:$0xff]
  %v277 = vld [vmem:[%s1 + $0x6e8] sm:$0xff]
  %v278 = vld [vmem:[%s1 + $0x6f0] sm:$0xff]
  %v279 = vld [vmem:[%s1 + $0x6f8] sm:$0xff]
  %v280 = vld [vmem:[%s1 + $0x700] sm:$0xff]
  %v281 = vld [vmem:[%s1 + $0x708] sm:$0xff]
  %v282 = vld [vmem:[%s1 + $0x710] sm:$0xff]
  %v283 = vld [vmem:[%s1 + $0x718] sm:$0xff]
  %v284 = vld [vmem:[%s1 + $0x720] sm:$0xff]
  %v285 = vld [vmem:[%s1 + $0x728] sm:$0xff]
  %v286 = vld [vmem:[%s1 + $0x730] sm:$0xff]
  %v287 = vld [vmem:[%s1 + $0x738] sm:$0xff]
  %v288 = vld [vmem:[%s1 + $0x740] sm:$0xff]
  %v289 = vld [vmem:[%s1 + $0x748] sm:$0xff]
  %v290 = vld [vmem:[%s1 + $0x750] sm:$0xff]
  %v291 = vld [vmem:[%s1 + $0x758] sm:$0xff]
  %v292 = vld [vmem:[%s1 + $0x760] sm:$0xff]
  %v293 = vld [vmem:[%s1 + $0x768] sm:$0xff]
  %v294 = vld [vmem:[%s1 + $0x770] sm:$0xff]
  %v295 = vld [vmem:[%s1 + $0x778] sm:$0xff]
  %v296 = vld [vmem:[%s1 + $0x780] sm:$0xff]
  %v297 = vld [vmem:[%s1 + $0x788] sm:$0xff]
  %v298 = vld [vmem:[%s1 + $0x790] sm:$0xff]
  %v299 = vld [vmem:[%s1 + $0x798] sm:$0xff]
  %v300 = vld [vmem:[%s1 + $0x7a0] sm:$0xff]
  %v301 = vld [vmem:[%s1 + $0x7a8] sm:$0xff]
  %v302 = vld [vmem:[%s1 + $0x7b0] sm:$0xff]
  %v303 = vld [vmem:[%s1 + $0x7b8] sm:$0xff]
  %v304 = vld [vmem:[%s1 + $0x7c0] sm:$0xff]
  %v305 = vld [vmem:[%s1 + $0x7c8] sm:$0xff]
  %v306 = vld [vmem:[%s1 + $0x7d0] sm:$0xff]
  %v307 = vld [vmem:[%s1 + $0x7d8] sm:$0xff]
  %v308 = vld [vmem:[%s1 + $0x7e0] sm:$0xff]
  %v309 = vld [vmem:[%s1 + $0x7e8] sm:$0xff]
  %v310 = vld [vmem:[%s1 + $0x7f0] sm:$0xff]
  %v311 = vld [vmem:[%s1 + $0x7f8] sm:$0xff]
  %v312 = vld [vmem:[%s1 + $0x800] sm:$0xff]
  %v313 = vld [vmem:[%s1 + $0x808] sm:$0xff]
  %v314 = vld [vmem:[%s1 + $0x810] sm:$0xff]
  %v315 = vld [vmem:[%s1 + $0x818] sm:$0xff]
  %v316 = vld [vmem:[%s1 + $0x820] sm:$0xff]
  %v317 = vld [vmem:[%s1 + $0x828] sm:$0xff]
  %v318 = vld [vmem:[%s1 + $0x830] sm:$0xff]
  %v319 = vld [vmem:[%s1 + $0x838] sm:$0xff]
  %v320 = vld [vmem:[%s1 + $0x840] sm:$0xff]
  %v321 = vld [vmem:[%s1 + $0x848] sm:$0xff]
  %v322 = vld [vmem:[%s1 + $0x850] sm:$0xff]
  %v323 = vld [vmem:[%s1 + $0x858] sm:$0xff]
  %v324 = vld [vmem:[%s1 + $0x860] sm:$0xff]
  %v325 = vld [vmem:[%s1 + $0x868] sm:$0xff]
  %v326 = vld [vmem:[%s1 + $0x870] sm:$0xff]
  %v327 = vld [vmem:[%s1 + $0x878] sm:$0xff]
  %v328 = vld [vmem:[%s1 + $0x880] sm:$0xff]
  %v329 = vld [vmem:[%s1 + $0x888] sm:$0xff]
  %v330 = vld [vmem:[%s1 + $0x890] sm:$0xff]
  %v331 = vld [vmem:[%s1 + $0x898] sm:$0xff]
  %v332 = vld [vmem:[%s1 + $0x8a0] sm:$0xff]
  %v333 = vld [vmem:[%s1 + $0x8a8] sm:$0xff]
  %v334 = vld [vmem:[%s1 + $0x8b0] sm:$0xff]
  %v335 = vld [vmem:[%s1 + $0x8b8] sm:$0xff]
  %v336 = vld [vmem:[%s0] sm:$0xff]
  %v337 = vld [vmem:[%s0 + $0x8] sm:$0xff]
  %v338 = vld [vmem:[%s0 + $0x10] sm:$0xff]
  %v339 = vld [vmem:[%s0 + $0x18] sm:$0xff]
  %v340 = vld [vmem:[%s0 + $0x20] sm:$0xff]
  %v341 = vld [vmem:[%s0 + $0x28] sm:$0xff]
  %v342 = vld [vmem:[%s0 + $0x30] sm:$0xff]
  %v343 = vld [vmem:[%s0 + $0x38] sm:$0xff]
  %v344 = vld [vmem:[%s0 + $0x40] sm:$0xff]
  %v345 = vld [vmem:[%s0 + $0x48] sm:$0xff]
  %v346 = vld [vmem:[%s0 + $0x50] sm:$0xff]
  %v347 = vld [vmem:[%s0 + $0x58] sm:$0xff]
  %v348 = vld [vmem:[%s0 + $0x60] sm:$0xff]
  %v349 = vld [vmem:[%s0 + $0x68] sm:$0xff]
  %v350 = vld [vmem:[%s0 + $0x70] sm:$0xff]
  %v351 = vld [vmem:[%s0 + $0x78] sm:$0xff]
  %v352 = vld [vmem:[%s0 + $0x80] sm:$0xff]
  %v353 = vld [vmem:[%s0 + $0x88] sm:$0xff]
  %v354 = vld [vmem:[%s0 + $0x90] sm:$0xff]
  %v355 = vld [vmem:[%s0 + $0x98] sm:$0xff]
  %v356 = vld [vmem:[%s0 + $0xa0] sm:$0xff]
  %v357 = vld [vmem:[%s0 + $0xa8] sm:$0xff]
  %v358 = vld [vmem:[%s0 + $0xb0] sm:$0xff]
  %v359 = vld [vmem:[%s0 + $0xb8] sm:$0xff]
  %v360 = vld [vmem:[%s0 + $0xc0] sm:$0xff]
  %v361 = vld [vmem:[%s0 + $0xc8] sm:$0xff]
  %v362 = vld [vmem:[%s0 + $0xd0] sm:$0xff]
  %v363 = vld [vmem:[%s0 + $0xd8] sm:$0xff]
  %v364 = vld [vmem:[%s0 + $0xe0] sm:$0xff]
  %v365 = vld [vmem:[%s0 + $0xe8] sm:$0xff]
  %v366 = vld [vmem:[%s0 + $0xf0] sm:$0xff]
  %v367 = vld [vmem:[%s0 + $0xf8] sm:$0xff]
  %368 = vmatprep.subr.mxu0 0.0
  %369 = vmatpush1.msra.mxu0 %v336
  %370 = vmatprep.subr.mxu0 0.0
  %371 = vmatpush1.msra.mxu0 %v337
  %372 = vmatprep.subr.mxu0 0.0
  %373 = vmatpush1.msra.mxu0 %v338
  %374 = vmatprep.subr.mxu0 0.0
  %375 = vmatpush1.msra.mxu0 %v339
  %376 = vmatprep.subr.mxu0 0.0
  %377 = vmatpush1.msra.mxu0 %v340
  %378 = vmatprep.subr.mxu0 0.0
  %379 = vmatpush1.msra.mxu0 %v341
  %380 = vmatprep.subr.mxu0 0.0
  %381 = vmatpush1.msra.mxu0 %v342
  %382 = vmatprep.subr.mxu0 0.0
  %383 = vmatpush1.msra.mxu0 %v343
  %384 = vmatprep.subr.mxu0 0.0
  %385 = vmatpush1.msra.mxu0 %v344
  %386 = vmatprep.subr.mxu0 0.0
  %387 = vmatpush1.msra.mxu0 %v345
  %388 = vmatprep.subr.mxu0 0.0
  %389 = vmatpush1.msra.mxu0 %v346
  %390 = vmatprep.subr.mxu0 0.0
  %391 = vmatpush1.msra.mxu0 %v347
  %392 = vmatprep.subr.mxu0 0.0
  %393 = vmatpush1.msra.mxu0 %v348
  %394 = vmatprep.subr.mxu0 0.0
  %395 = vmatpush1.msra.mxu0 %v349
  %396 = vmatprep.subr.mxu0 0.0
  %397 = vmatpush1.msra.mxu0 %v350
  %398 = vmatprep.subr.mxu0 0.0
  %399 = vmatpush1.msra.mxu0 %v351
  %400 = vmatprep.subr.mxu0 0.0
  %401 = vmatpush1.msra.mxu0 %v352
  %402 = vmatprep.subr.mxu0 0.0
  %403 = vmatpush1.msra.mxu0 %v353
  %404 = vmatprep.subr.mxu0 0.0
  %405 = vmatpush1.msra.mxu0 %v354
  %406 = vmatprep.subr.mxu0 0.0
  %407 = vmatpush1.msra.mxu0 %v355
  %408 = vmatprep.subr.mxu0 0.0
  %409 = vmatpush1.msra.mxu0 %v356
  %410 = vmatprep.subr.mxu0 0.0
  %411 = vmatpush1.msra.mxu0 %v357
  %412 = vmatprep.subr.mxu0 0.0
  %413 = vmatpush1.msra.mxu0 %v358
  %414 = vmatprep.subr.mxu0 0.0
  %415 = vmatpush1.msra.mxu0 %v359
  %416 = vmatprep.subr.mxu0 0.0
  %417 = vmatpush1.msra.mxu0 %v360
  %418 = vmatprep.subr.mxu0 0.0
  %419 = vmatpush1.msra.mxu0 %v361
  %420 = vmatprep.subr.mxu0 0.0
  %421 = vmatpush1.msra.mxu0 %v362
  %422 = vmatprep.subr.mxu0 0.0
  %423 = vmatpush1.msra.mxu0 %v363
  %424 = vmatprep.subr.mxu0 0.0
  %425 = vmatpush1.msra.mxu0 %v364
  %426 = vmatprep.subr.mxu0 0.0
  %427 = vmatpush1.msra.mxu0 %v365
  %428 = vmatprep.subr.mxu0 0.0
  %429 = vmatpush1.msra.mxu0 %v366
  %430 = vmatprep.subr.mxu0 0.0
  %431 = vmatpush1.msra.mxu0 %v367
  %432 = vmatprep.mubr.f32.mxu0 %v57
  %433 = vmatmul.mubr.f32.gmra.mrb[0].mxu0 %v56
  %v434 = vpop.f32.mrb[0].mxu0
  %v435 = vadd.f32 0.0, %v434
  %v436 = vpop.f32.mrb[0].mxu0
  %437 = vmatprep.mubr.f32.mxu0 %v59
  %438 = vmatmul.mubr.f32.gmra.mrb[0].mxu0 %v58
  %v439 = vpop.f32.mrb[0].mxu0
  %v440 = vadd.f32 0.0, %v439
  %v441 = vpop.f32.mrb[0].mxu0
  %442 = vmatprep.mubr.f32.mxu0 %v61
  %443 = vmatmul.mubr.f32.gmra.mrb[0].mxu0 %v60
  %v444 = vpop.f32.mrb[0].mxu0
  %v445 = vadd.f32 0.0, %v444
  %v446 = vpop.f32.mrb[0].mxu0
  %447 = vmatprep.mubr.f32.mxu0 %v63
  %448 = vmatmul.mubr.f32.gmra.mrb[0].mxu0 %v62
  %v449 = vpop.f32.mrb[0].mxu0
  %v450 = vadd.f32 0.0, %v449
  %v451 = vpop.f32.mrb[0].mxu0
  %452 = vmatprep.mubr.f32.mxu0 %v65
  %453 = vmatmul.mubr.f32.gmra.mrb[0].mxu0 %v64
  %v454 = vpop.f32.mrb[0].mxu0
  %v455 = vadd.f32 0.0, %v454
  %v456 = vpop.f32.mrb[0].mxu0
  %457 = vmatprep.mubr.f32.mxu0 %v67
  %458 = vmatmul.mubr.f32.gmra.mrb[0].mxu0 %v66
  %v459 = vpop.f32.mrb[0].mxu0
  %v460 = vadd.f32 0.0, %v459
  %v461 = vpop.f32.mrb[0].mxu0
  %462 = vmatprep.mubr.f32.mxu0 %v69
  %463 = vmatmul.mubr.f32.gmra.mrb[0].mxu0 %v68
  %v464 = vpop.f32.mrb[0].mxu0
  %v465 = vadd.f32 0.0, %v464
  %v466 = vpop.f32.mrb[0].mxu0
  %467 = vmatprep.mubr.f32.mxu0 %v71
  %468 = vmatmul.mubr.f32.gmra.mrb[0].mxu0 %v70
  %v469 = vpop.f32.mrb[0].mxu0
  %v470 = vadd.f32 0.0, %v469
  %v471 = vpop.f32.mrb[0].mxu0
  %472 = vmatprep.mubr.f32.mxu0 %v73
  %473 = vmatmul.mubr.f32.gmra.mrb[0].mxu0 %v72
  %v474 = vpop.f32.mrb[0].mxu0
  %v475 = vadd.f32 0.0, %v474
  %v476 = vpop.f32.mrb[0].mxu0
  %477 = vmatprep.mubr.f32.mxu0 %v75
  %478 = vmatmul.mubr.f32.gmra.mrb[0].mxu0 %v74
  %v479 = vpop.f32.mrb[0].mxu0
  %v480 = vadd.f32 0.0, %v479
  %v481 = vpop.f32.mrb[0].mxu0
  %482 = vmatprep.mubr.f32.mxu0 %v77
  %483 = vmatmul.mubr.f32.gmra.mrb[0].mxu0 %v76
  %v484 = vpop.f32.mrb[0].mxu0
  %v485 = vadd.f32 0.0, %v484
  %v486 = vpop.f32.mrb[0].mxu0
  %487 = vmatprep.mubr.f32.mxu0 %v79
  %488 = vmatmul.mubr.f32.gmra.mrb[0].mxu0 %v78
  %v489 = vpop.f32.mrb[0].mxu0
  %v490 = vadd.f32 0.0, %v489
  %v491 = vpop.f32.mrb[0].mxu0
  %492 = vmatprep.mubr.f32.mxu0 %v81
  %493 = vmatmul.mubr.f32.gmra.mrb[0].mxu0 %v80
  %v494 = vpop.f32.mrb[0].mxu0
  %v495 = vadd.f32 0.0, %v494
  %v496 = vpop.f32.mrb[0].mxu0
  %497 = vmatprep.mubr.f32.mxu0 %v83
  %498 = vmatmul.mubr.f32.gmra.mrb[0].mxu0 %v82
  %v499 = vpop.f32.mrb[0].mxu0
  %v500 = vadd.f32 0.0, %v499
  %v501 = vpop.f32.mrb[0].mxu0
  %502 = vmatprep.mubr.f32.mxu0 %v85
  %503 = vmatmul.mubr.f32.gmra.mrb[0].mxu0 %v84
  %v504 = vpop.f32.mrb[0].mxu0
  %v505 = vadd.f32 0.0, %v504
  %v506 = vpop.f32.mrb[0].mxu0
  %507 = vmatprep.mubr.f32.mxu0 %v87
  %508 = vmatmul.mubr.f32.gmra.mrb[0].mxu0 %v86
  %v509 = vpop.f32.mrb[0].mxu0
  %v510 = vadd.f32 0.0, %v509
  %v511 = vpop.f32.mrb[0].mxu0
  %512 = vmatprep.mubr.f32.mxu0 %v89
  %513 = vmatmul.mubr.f32.gmra.mrb[0].mxu0 %v88
  %v514 = vpop.f32.mrb[0].mxu0
  %v515 = vadd.f32 0.0, %v514
  %v516 = vpop.f32.mrb[0].mxu0
  %517 = vmatprep.mubr.f32.mxu0 %v91
  %518 = vmatmul.mubr.f32.gmra.mrb[0].mxu0 %v90
  %v519 = vpop.f32.mrb[0].mxu0
  %v520 = vadd.f32 0.0, %v519
  %v521 = vpop.f32.mrb[0].mxu0
  %522 = vmatprep.mubr.f32.mxu0 %v93
  %523 = vmatmul.mubr.f32.gmra.mrb[0].mxu0 %v92
  %v524 = vpop.f32.mrb[0].mxu0
  %v525 = vadd.f32 0.0, %v524
  %v526 = vpop.f32.mrb[0].mxu0
  %527 = vmatprep.mubr.f32.mxu0 %v95
  %528 = vmatmul.mubr.f32.gmra.mrb[0].mxu0 %v94
  %v529 = vpop.f32.mrb[0].mxu0
  %v530 = vadd.f32 0.0, %v529
  %v531 = vpop.f32.mrb[0].mxu0
  %532 = vmatprep.mubr.f32.mxu0 %v97
  %533 = vmatmul.mubr.f32.gmra.mrb[0].mxu0 %v96
  %v534 = vpop.f32.mrb[0].mxu0
  %v535 = vadd.f32 0.0, %v534
  %v536 = vpop.f32.mrb[0].mxu0
  %537 = vmatprep.mubr.f32.mxu0 %v99
  %538 = vmatmul.mubr.f32.gmra.mrb[0].mxu0 %v98
  %v539 = vpop.f32.mrb[0].mxu0
  %v540 = vadd.f32 0.0, %v539
  %v541 = vpop.f32.mrb[0].mxu0
  %542 = vmatprep.mubr.f32.mxu0 %v101
  %543 = vmatmul.mubr.f32.gmra.mrb[0].mxu0 %v100
  %v544 = vpop.f32.mrb[0].mxu0
  %v545 = vadd.f32 0.0, %v544
  %v546 = vpop.f32.mrb[0].mxu0
  %547 = vmatprep.mubr.f32.mxu0 %v103
  %548 = vmatmul.mubr.f32.gmra.mrb[0].mxu0 %v102
  %v549 = vpop.f32.mrb[0].mxu0
  %v550 = vadd.f32 0.0, %v549
  %v551 = vpop.f32.mrb[0].mxu0
  %552 = vmatprep.mubr.f32.mxu0 %v105
  %553 = vmatmul.mubr.f32.gmra.mrb[0].mxu0 %v104
  %v554 = vpop.f32.mrb[0].mxu0
  %v555 = vadd.f32 0.0, %v554
  %v556 = vpop.f32.mrb[0].mxu0
  %557 = vmatprep.mubr.f32.mxu0 %v107
  %558 = vmatmul.mubr.f32.gmra.mrb[0].mxu0 %v106
  %v559 = vpop.f32.mrb[0].mxu0
  %v560 = vadd.f32 0.0, %v559
  %v561 = vpop.f32.mrb[0].mxu0
  %562 = vmatprep.mubr.f32.mxu0 %v109
  %563 = vmatmul.mubr.f32.gmra.mrb[0].mxu0 %v108
  %v564 = vpop.f32.mrb[0].mxu0
  %v565 = vadd.f32 0.0, %v564
  %v566 = vpop.f32.mrb[0].mxu0
  %567 = vmatprep.mubr.f32.mxu0 %v111
  %568 = vmatmul.mubr.f32.gmra.mrb[0].mxu0 %v110
  %v569 = vpop.f32.mrb[0].mxu0
  %v570 = vadd.f32 0.0, %v569
  %v571 = vpop.f32.mrb[0].mxu0
  %572 = vmatprep.mubr.f32.mxu0 %v113
  %573 = vmatmul.mubr.f32.gmra.mrb[0].mxu0 %v112
  %v574 = vpop.f32.mrb[0].mxu0
  %v575 = vadd.f32 0.0, %v574
  %v576 = vpop.f32.mrb[0].mxu0
  %577 = vmatprep.mubr.f32.mxu0 %v115
  %578 = vmatmul.mubr.f32.gmra.mrb[0].mxu0 %v114
  %v579 = vpop.f32.mrb[0].mxu0
  %v580 = vadd.f32 0.0, %v579
  %v581 = vpop.f32.mrb[0].mxu0
  %582 = vmatprep.mubr.f32.mxu0 %v117
  %583 = vmatmul.mubr.f32.gmra.mrb[0].mxu0 %v116
  %v584 = vpop.f32.mrb[0].mxu0
  %v585 = vadd.f32 0.0, %v584
  %v586 = vpop.f32.mrb[0].mxu0
  %587 = vmatprep.mubr.f32.mxu0 %v119
  %588 = vmatmul.mubr.f32.gmra.mrb[0].mxu0 %v118
  %v589 = vpop.f32.mrb[0].mxu0
  %v590 = vadd.f32 0.0, %v589
  %v591 = vpop.f32.mrb[0].mxu0
  %592 = vmatprep.mubr.f32.mxu0 %v121
  %593 = vmatmul.mubr.f32.gmra.mrb[0].mxu0 %v120
  %v594 = vpop.f32.mrb[0].mxu0
  %v595 = vadd.f32 0.0, %v594
  %v596 = vpop.f32.mrb[0].mxu0
  %597 = vmatprep.mubr.f32.mxu0 %v123
  %598 = vmatmul.mubr.f32.gmra.mrb[0].mxu0 %v122
  %v599 = vpop.f32.mrb[0].mxu0
  %v600 = vadd.f32 0.0, %v599
  %v601 = vpop.f32.mrb[0].mxu0
  %602 = vmatprep.mubr.f32.mxu0 %v125
  %603 = vmatmul.mubr.f32.gmra.mrb[0].mxu0 %v124
  %v604 = vpop.f32.mrb[0].mxu0
  %v605 = vadd.f32 0.0, %v604
  %v606 = vpop.f32.mrb[0].mxu0
  %607 = vmatprep.mubr.f32.mxu0 %v127
  %608 = vmatmul.mubr.f32.gmra.mrb[0].mxu0 %v126
  %v609 = vpop.f32.mrb[0].mxu0
  %v610 = vadd.f32 0.0, %v609
  %v611 = vpop.f32.mrb[0].mxu0
  %612 = vmatprep.mubr.f32.mxu0 %v129
  %613 = vmatmul.mubr.f32.gmra.mrb[0].mxu0 %v128
  %v614 = vpop.f32.mrb[0].mxu0
  %v615 = vadd.f32 0.0, %v614
  %v616 = vpop.f32.mrb[0].mxu0
  %617 = vmatprep.mubr.f32.mxu0 %v131
  %618 = vmatmul.mubr.f32.gmra.mrb[0].mxu0 %v130
  %v619 = vpop.f32.mrb[0].mxu0
  %v620 = vadd.f32 0.0, %v619
  %v621 = vpop.f32.mrb[0].mxu0
  %622 = vmatprep.mubr.f32.mxu0 %v133
  %623 = vmatmul.mubr.f32.gmra.mrb[0].mxu0 %v132
  %v624 = vpop.f32.mrb[0].mxu0
  %v625 = vadd.f32 0.0, %v624
  %v626 = vpop.f32.mrb[0].mxu0
  %627 = vmatprep.mubr.f32.mxu0 %v135
  %628 = vmatmul.mubr.f32.gmra.mrb[0].mxu0 %v134
  %v629 = vpop.f32.mrb[0].mxu0
  %v630 = vadd.f32 0.0, %v629
  %v631 = vpop.f32.mrb[0].mxu0
  %632 = vmatprep.mubr.f32.mxu0 %v137
  %633 = vmatmul.mubr.f32.gmra.mrb[0].mxu0 %v136
  %v634 = vpop.f32.mrb[0].mxu0
  %v635 = vadd.f32 0.0, %v634
  %v636 = vpop.f32.mrb[0].mxu0
  %637 = vmatprep.mubr.f32.mxu0 %v139
  %638 = vmatmul.mubr.f32.gmra.mrb[0].mxu0 %v138
  %v639 = vpop.f32.mrb[0].mxu0
  %v640 = vadd.f32 0.0, %v639
  %v641 = vpop.f32.mrb[0].mxu0
  %642 = vmatprep.mubr.f32.mxu0 %v141
  %643 = vmatmul.mubr.f32.gmra.mrb[0].mxu0 %v140
  %v644 = vpop.f32.mrb[0].mxu0
  %v645 = vadd.f32 0.0, %v644
  %v646 = vpop.f32.mrb[0].mxu0
  %647 = vmatprep.mubr.f32.mxu0 %v143
  %648 = vmatmul.mubr.f32.gmra.mrb[0].mxu0 %v142
  %v649 = vpop.f32.mrb[0].mxu0
  %v650 = vadd.f32 0.0, %v649
  %v651 = vpop.f32.mrb[0].mxu0
  %652 = vmatprep.mubr.f32.mxu0 %v145
  %653 = vmatmul.mubr.f32.gmra.mrb[0].mxu0 %v144
  %v654 = vpop.f32.mrb[0].mxu0
  %v655 = vadd.f32 0.0, %v654
  %v656 = vpop.f32.mrb[0].mxu0
  %657 = vmatprep.mubr.f32.mxu0 %v147
  %658 = vmatmul.mubr.f32.gmra.mrb[0].mxu0 %v146
  %v659 = vpop.f32.mrb[0].mxu0
  %v660 = vadd.f32 0.0, %v659
  %v661 = vpop.f32.mrb[0].mxu0
  %662 = vmatprep.mubr.f32.mxu0 %v149
  %663 = vmatmul.mubr.f32.gmra.mrb[0].mxu0 %v148
  %v664 = vpop.f32.mrb[0].mxu0
  %v665 = vadd.f32 0.0, %v664
  %v666 = vpop.f32.mrb[0].mxu0
  %667 = vmatprep.mubr.f32.mxu0 %v151
  %668 = vmatmul.mubr.f32.gmra.mrb[0].mxu0 %v150
  %v669 = vpop.f32.mrb[0].mxu0
  %v670 = vadd.f32 0.0, %v669
  %v671 = vpop.f32.mrb[0].mxu0
  %672 = vmatprep.mubr.f32.mxu0 %v153
  %673 = vmatmul.mubr.f32.gmra.mrb[0].mxu0 %v152
  %v674 = vpop.f32.mrb[0].mxu0
  %v675 = vadd.f32 0.0, %v674
  %v676 = vpop.f32.mrb[0].mxu0
  %677 = vmatprep.mubr.f32.mxu0 %v155
  %678 = vmatmul.mubr.f32.gmra.mrb[0].mxu0 %v154
  %v679 = vpop.f32.mrb[0].mxu0
  %v680 = vadd.f32 0.0, %v679
  %v681 = vpop.f32.mrb[0].mxu0
  %682 = vmatprep.mubr.f32.mxu0 %v157
  %683 = vmatmul.mubr.f32.gmra.mrb[0].mxu0 %v156
  %v684 = vpop.f32.mrb[0].mxu0
  %v685 = vadd.f32 0.0, %v684
  %v686 = vpop.f32.mrb[0].mxu0
  %687 = vmatprep.mubr.f32.mxu0 %v159
  %688 = vmatmul.mubr.f32.gmra.mrb[0].mxu0 %v158
  %v689 = vpop.f32.mrb[0].mxu0
  %v690 = vadd.f32 0.0, %v689
  %v691 = vpop.f32.mrb[0].mxu0
  %692 = vmatprep.mubr.f32.mxu0 %v161
  %693 = vmatmul.mubr.f32.gmra.mrb[0].mxu0 %v160
  %v694 = vpop.f32.mrb[0].mxu0
  %v695 = vadd.f32 0.0, %v694
  %v696 = vpop.f32.mrb[0].mxu0
  %697 = vmatprep.mubr.f32.mxu0 %v163
  %698 = vmatmul.mubr.f32.gmra.mrb[0].mxu0 %v162
  %v699 = vpop.f32.mrb[0].mxu0
  %v700 = vadd.f32 0.0, %v699
  %v701 = vpop.f32.mrb[0].mxu0
  %702 = vmatprep.mubr.f32.mxu0 %v165
  %703 = vmatmul.mubr.f32.gmra.mrb[0].mxu0 %v164
  %v704 = vpop.f32.mrb[0].mxu0
  %v705 = vadd.f32 0.0, %v704
  %v706 = vpop.f32.mrb[0].mxu0
  %707 = vmatprep.mubr.f32.mxu0 %v167
  %708 = vmatmul.mubr.f32.gmra.mrb[0].mxu0 %v166
  %v709 = vpop.f32.mrb[0].mxu0
  %v710 = vadd.f32 0.0, %v709
  %v711 = vpop.f32.mrb[0].mxu0
  %712 = vmatprep.mubr.f32.mxu0 %v169
  %713 = vmatmul.mubr.f32.gmra.mrb[0].mxu0 %v168
  %v714 = vpop.f32.mrb[0].mxu0
  %v715 = vadd.f32 0.0, %v714
  %v716 = vpop.f32.mrb[0].mxu0
  %717 = vmatprep.mubr.f32.mxu0 %v171
  %718 = vmatmul.mubr.f32.gmra.mrb[0].mxu0 %v170
  %v719 = vpop.f32.mrb[0].mxu0
  %v720 = vadd.f32 0.0, %v719
  %v721 = vpop.f32.mrb[0].mxu0
  %722 = vmatprep.mubr.f32.mxu0 %v173
  %723 = vmatmul.mubr.f32.gmra.mrb[0].mxu0 %v172
  %v724 = vpop.f32.mrb[0].mxu0
  %v725 = vadd.f32 0.0, %v724
  %v726 = vpop.f32.mrb[0].mxu0
  %727 = vmatprep.mubr.f32.mxu0 %v175
  %728 = vmatmul.mubr.f32.gmra.mrb[0].mxu0 %v174
  %v729 = vpop.f32.mrb[0].mxu0
  %v730 = vadd.f32 0.0, %v729
  %v731 = vpop.f32.mrb[0].mxu0
  %732 = vmatprep.mubr.f32.mxu0 %v177
  %733 = vmatmul.mubr.f32.gmra.mrb[0].mxu0 %v176
  %v734 = vpop.f32.mrb[0].mxu0
  %v735 = vadd.f32 0.0, %v734
  %v736 = vpop.f32.mrb[0].mxu0
  %737 = vmatprep.mubr.f32.mxu0 %v179
  %738 = vmatmul.mubr.f32.gmra.mrb[0].mxu0 %v178
  %v739 = vpop.f32.mrb[0].mxu0
  %v740 = vadd.f32 0.0, %v739
  %v741 = vpop.f32.mrb[0].mxu0
  %742 = vmatprep.mubr.f32.mxu0 %v181
  %743 = vmatmul.mubr.f32.gmra.mrb[0].mxu0 %v180
  %v744 = vpop.f32.mrb[0].mxu0
  %v745 = vadd.f32 0.0, %v744
  %v746 = vpop.f32.mrb[0].mxu0
  %747 = vmatprep.mubr.f32.mxu0 %v183
  %748 = vmatmul.mubr.f32.gmra.mrb[0].mxu0 %v182
  %v749 = vpop.f32.mrb[0].mxu0
  %v750 = vadd.f32 0.0, %v749
  %v751 = vpop.f32.mrb[0].mxu0
  %752 = vmatprep.mubr.f32.mxu0 %v185
  %753 = vmatmul.mubr.f32.gmra.mrb[0].mxu0 %v184
  %v754 = vpop.f32.mrb[0].mxu0
  %v755 = vadd.f32 0.0, %v754
  %v756 = vpop.f32.mrb[0].mxu0
  %757 = vmatprep.mubr.f32.mxu0 %v187
  %758 = vmatmul.mubr.f32.gmra.mrb[0].mxu0 %v186
  %v759 = vpop.f32.mrb[0].mxu0
  %v760 = vadd.f32 0.0, %v759
  %v761 = vpop.f32.mrb[0].mxu0
  %762 = vmatprep.mubr.f32.mxu0 %v189
  %763 = vmatmul.mubr.f32.gmra.mrb[0].mxu0 %v188
  %v764 = vpop.f32.mrb[0].mxu0
  %v765 = vadd.f32 0.0, %v764
  %v766 = vpop.f32.mrb[0].mxu0
  %767 = vmatprep.mubr.f32.mxu0 %v191
  %768 = vmatmul.mubr.f32.gmra.mrb[0].mxu0 %v190
  %v769 = vpop.f32.mrb[0].mxu0
  %v770 = vadd.f32 0.0, %v769
  %v771 = vpop.f32.mrb[0].mxu0
  %772 = vmatprep.mubr.f32.mxu0 %v193
  %773 = vmatmul.mubr.f32.gmra.mrb[0].mxu0 %v192
  %v774 = vpop.f32.mrb[0].mxu0
  %v775 = vadd.f32 0.0, %v774
  %v776 = vpop.f32.mrb[0].mxu0
  %777 = vmatprep.mubr.f32.mxu0 %v195
  %778 = vmatmul.mubr.f32.gmra.mrb[0].mxu0 %v194
  %v779 = vpop.f32.mrb[0].mxu0
  %v780 = vadd.f32 0.0, %v779
  %v781 = vpop.f32.mrb[0].mxu0
  %782 = vmatprep.mubr.f32.mxu0 %v197
  %783 = vmatmul.mubr.f32.gmra.mrb[0].mxu0 %v196
  %v784 = vpop.f32.mrb[0].mxu0
  %v785 = vadd.f32 0.0, %v784
  %v786 = vpop.f32.mrb[0].mxu0
  %787 = vmatprep.mubr.f32.mxu0 %v199
  %788 = vmatmul.mubr.f32.gmra.mrb[0].mxu0 %v198
  %v789 = vpop.f32.mrb[0].mxu0
  %v790 = vadd.f32 0.0, %v789
  %v791 = vpop.f32.mrb[0].mxu0
  %792 = vmatprep.mubr.f32.mxu0 %v201
  %793 = vmatmul.mubr.f32.gmra.mrb[0].mxu0 %v200
  %v794 = vpop.f32.mrb[0].mxu0
  %v795 = vadd.f32 0.0, %v794
  %v796 = vpop.f32.mrb[0].mxu0
  %797 = vmatprep.mubr.f32.mxu0 %v203
  %798 = vmatmul.mubr.f32.gmra.mrb[0].mxu0 %v202
  %v799 = vpop.f32.mrb[0].mxu0
  %v800 = vadd.f32 0.0, %v799
  %v801 = vpop.f32.mrb[0].mxu0
  %802 = vmatprep.mubr.f32.mxu0 %v205
  %803 = vmatmul.mubr.f32.gmra.mrb[0].mxu0 %v204
  %v804 = vpop.f32.mrb[0].mxu0
  %v805 = vadd.f32 0.0, %v804
  %v806 = vpop.f32.mrb[0].mxu0
  %807 = vmatprep.mubr.f32.mxu0 %v207
  %808 = vmatmul.mubr.f32.gmra.mrb[0].mxu0 %v206
  %v809 = vpop.f32.mrb[0].mxu0
  %v810 = vadd.f32 0.0, %v809
  %v811 = vpop.f32.mrb[0].mxu0
  %812 = vmatprep.mubr.f32.mxu0 %v209
  %813 = vmatmul.mubr.f32.gmra.mrb[0].mxu0 %v208
  %v814 = vpop.f32.mrb[0].mxu0
  %v815 = vadd.f32 0.0, %v814
  %v816 = vpop.f32.mrb[0].mxu0
  %817 = vmatprep.mubr.f32.mxu0 %v211
  %818 = vmatmul.mubr.f32.gmra.mrb[0].mxu0 %v210
  %v819 = vpop.f32.mrb[0].mxu0
  %v820 = vadd.f32 0.0, %v819
  %v821 = vpop.f32.mrb[0].mxu0
  %822 = vmatprep.mubr.f32.mxu0 %v213
  %823 = vmatmul.mubr.f32.gmra.mrb[0].mxu0 %v212
  %v824 = vpop.f32.mrb[0].mxu0
  %v825 = vadd.f32 0.0, %v824
  %v826 = vpop.f32.mrb[0].mxu0
  %827 = vmatprep.mubr.f32.mxu0 %v215
  %828 = vmatmul.mubr.f32.gmra.mrb[0].mxu0 %v214
  %v829 = vpop.f32.mrb[0].mxu0
  %v830 = vadd.f32 0.0, %v829
  %v831 = vpop.f32.mrb[0].mxu0
  %832 = vmatprep.mubr.f32.mxu0 %v217
  %833 = vmatmul.mubr.f32.gmra.mrb[0].mxu0 %v216
  %v834 = vpop.f32.mrb[0].mxu0
  %v835 = vadd.f32 0.0, %v834
  %v836 = vpop.f32.mrb[0].mxu0
  %837 = vmatprep.mubr.f32.mxu0 %v219
  %838 = vmatmul.mubr.f32.gmra.mrb[0].mxu0 %v218
  %v839 = vpop.f32.mrb[0].mxu0
  %v840 = vadd.f32 0.0, %v839
  %v841 = vpop.f32.mrb[0].mxu0
  %842 = vmatprep.mubr.f32.mxu0 %v221
  %843 = vmatmul.mubr.f32.gmra.mrb[0].mxu0 %v220
  %v844 = vpop.f32.mrb[0].mxu0
  %v845 = vadd.f32 0.0, %v844
  %v846 = vpop.f32.mrb[0].mxu0
  %847 = vmatprep.mubr.f32.mxu0 %v223
  %848 = vmatmul.mubr.f32.gmra.mrb[0].mxu0 %v222
  %v849 = vpop.f32.mrb[0].mxu0
  %v850 = vadd.f32 0.0, %v849
  %v851 = vpop.f32.mrb[0].mxu0
  %852 = vmatprep.mubr.f32.mxu0 %v225
  %853 = vmatmul.mubr.f32.gmra.mrb[0].mxu0 %v224
  %v854 = vpop.f32.mrb[0].mxu0
  %v855 = vadd.f32 0.0, %v854
  %v856 = vpop.f32.mrb[0].mxu0
  %857 = vmatprep.mubr.f32.mxu0 %v227
  %858 = vmatmul.mubr.f32.gmra.mrb[0].mxu0 %v226
  %v859 = vpop.f32.mrb[0].mxu0
  %v860 = vadd.f32 0.0, %v859
  %v861 = vpop.f32.mrb[0].mxu0
  %862 = vmatprep.mubr.f32.mxu0 %v229
  %863 = vmatmul.mubr.f32.gmra.mrb[0].mxu0 %v228
  %v864 = vpop.f32.mrb[0].mxu0
  %v865 = vadd.f32 0.0, %v864
  %v866 = vpop.f32.mrb[0].mxu0
  %867 = vmatprep.mubr.f32.mxu0 %v231
  %868 = vmatmul.mubr.f32.gmra.mrb[0].mxu0 %v230
  %v869 = vpop.f32.mrb[0].mxu0
  %v870 = vadd.f32 0.0, %v869
  %v871 = vpop.f32.mrb[0].mxu0
  %872 = vmatprep.mubr.f32.mxu0 %v233
  %873 = vmatmul.mubr.f32.gmra.mrb[0].mxu0 %v232
  %v874 = vpop.f32.mrb[0].mxu0
  %v875 = vadd.f32 0.0, %v874
  %v876 = vpop.f32.mrb[0].mxu0
  %877 = vmatprep.mubr.f32.mxu0 %v235
  %878 = vmatmul.mubr.f32.gmra.mrb[0].mxu0 %v234
  %v879 = vpop.f32.mrb[0].mxu0
  %v880 = vadd.f32 0.0, %v879
  %v881 = vpop.f32.mrb[0].mxu0
  %882 = vmatprep.mubr.f32.mxu0 %v237
  %883 = vmatmul.mubr.f32.gmra.mrb[0].mxu0 %v236
  %v884 = vpop.f32.mrb[0].mxu0
  %v885 = vadd.f32 0.0, %v884
  %v886 = vpop.f32.mrb[0].mxu0
  %887 = vmatprep.mubr.f32.mxu0 %v239
  %888 = vmatmul.mubr.f32.gmra.mrb[0].mxu0 %v238
  %v889 = vpop.f32.mrb[0].mxu0
  %v890 = vadd.f32 0.0, %v889
  %v891 = vpop.f32.mrb[0].mxu0
  %892 = vmatprep.mubr.f32.mxu0 %v241
  %893 = vmatmul.mubr.f32.gmra.mrb[0].mxu0 %v240
  %v894 = vpop.f32.mrb[0].mxu0
  %v895 = vadd.f32 0.0, %v894
  %v896 = vpop.f32.mrb[0].mxu0
  %897 = vmatprep.mubr.f32.mxu0 %v243
  %898 = vmatmul.mubr.f32.gmra.mrb[0].mxu0 %v242
  %v899 = vpop.f32.mrb[0].mxu0
  %v900 = vadd.f32 0.0, %v899
  %v901 = vpop.f32.mrb[0].mxu0
  %902 = vmatprep.mubr.f32.mxu0 %v245
  %903 = vmatmul.mubr.f32.gmra.mrb[0].mxu0 %v244
  %v904 = vpop.f32.mrb[0].mxu0
  %v905 = vadd.f32 0.0, %v904
  %v906 = vpop.f32.mrb[0].mxu0
  %907 = vmatprep.mubr.f32.mxu0 %v247
  %908 = vmatmul.mubr.f32.gmra.mrb[0].mxu0 %v246
  %v909 = vpop.f32.mrb[0].mxu0
  %v910 = vadd.f32 0.0, %v909
  %v911 = vpop.f32.mrb[0].mxu0
  %912 = vmatprep.mubr.f32.mxu0 %v249
  %913 = vmatmul.mubr.f32.gmra.mrb[0].mxu0 %v248
  %v914 = vpop.f32.mrb[0].mxu0
  %v915 = vadd.f32 0.0, %v914
  %v916 = vpop.f32.mrb[0].mxu0
  %917 = vmatprep.mubr.f32.mxu0 %v251
  %918 = vmatmul.mubr.f32.gmra.mrb[0].mxu0 %v250
  %v919 = vpop.f32.mrb[0].mxu0
  %v920 = vadd.f32 0.0, %v919
  %v921 = vpop.f32.mrb[0].mxu0
  %922 = vmatprep.mubr.f32.mxu0 %v253
  %923 = vmatmul.mubr.f32.gmra.mrb[0].mxu0 %v252
  %v924 = vpop.f32.mrb[0].mxu0
  %v925 = vadd.f32 0.0, %v924
  %v926 = vpop.f32.mrb[0].mxu0
  %927 = vmatprep.mubr.f32.mxu0 %v255
  %928 = vmatmul.mubr.f32.gmra.mrb[0].mxu0 %v254
  %v929 = vpop.f32.mrb[0].mxu0
  %v930 = vadd.f32 0.0, %v929
  %v931 = vpop.f32.mrb[0].mxu0
  %932 = vmatprep.mubr.f32.mxu0 %v257
  %933 = vmatmul.mubr.f32.gmra.mrb[0].mxu0 %v256
  %v934 = vpop.f32.mrb[0].mxu0
  %v935 = vadd.f32 0.0, %v934
  %v936 = vpop.f32.mrb[0].mxu0
  %937 = vmatprep.mubr.f32.mxu0 %v259
  %938 = vmatmul.mubr.f32.gmra.mrb[0].mxu0 %v258
  %v939 = vpop.f32.mrb[0].mxu0
  %v940 = vadd.f32 0.0, %v939
  %v941 = vpop.f32.mrb[0].mxu0
  %942 = vmatprep.mubr.f32.mxu0 %v261
  %943 = vmatmul.mubr.f32.gmra.mrb[0].mxu0 %v260
  %v944 = vpop.f32.mrb[0].mxu0
  %v945 = vadd.f32 0.0, %v944
  %v946 = vpop.f32.mrb[0].mxu0
  %947 = vmatprep.mubr.f32.mxu0 %v263
  %948 = vmatmul.mubr.f32.gmra.mrb[0].mxu0 %v262
  %v949 = vpop.f32.mrb[0].mxu0
  %v950 = vadd.f32 0.0, %v949
  %v951 = vpop.f32.mrb[0].mxu0
  %952 = vmatprep.mubr.f32.mxu0 %v265
  %953 = vmatmul.mubr.f32.gmra.mrb[0].mxu0 %v264
  %v954 = vpop.f32.mrb[0].mxu0
  %v955 = vadd.f32 0.0, %v954
  %v956 = vpop.f32.mrb[0].mxu0
  %957 = vmatprep.mubr.f32.mxu0 %v267
  %958 = vmatmul.mubr.f32.gmra.mrb[0].mxu0 %v266
  %v959 = vpop.f32.mrb[0].mxu0
  %v960 = vadd.f32 0.0, %v959
  %v961 = vpop.f32.mrb[0].mxu0
  %962 = vmatprep.mubr.f32.mxu0 %v269
  %963 = vmatmul.mubr.f32.gmra.mrb[0].mxu0 %v268
  %v964 = vpop.f32.mrb[0].mxu0
  %v965 = vadd.f32 0.0, %v964
  %v966 = vpop.f32.mrb[0].mxu0
  %967 = vmatprep.mubr.f32.mxu0 %v271
  %968 = vmatmul.mubr.f32.gmra.mrb[0].mxu0 %v270
  %v969 = vpop.f32.mrb[0].mxu0
  %v970 = vadd.f32 0.0, %v969
  %v971 = vpop.f32.mrb[0].mxu0
  %972 = vmatprep.mubr.f32.mxu0 %v273
  %973 = vmatmul.mubr.f32.gmra.mrb[0].mxu0 %v272
  %v974 = vpop.f32.mrb[0].mxu0
  %v975 = vadd.f32 0.0, %v974
  %v976 = vpop.f32.mrb[0].mxu0
  %977 = vmatprep.mubr.f32.mxu0 %v275
  %978 = vmatmul.mubr.f32.gmra.mrb[0].mxu0 %v274
  %v979 = vpop.f32.mrb[0].mxu0
  %v980 = vadd.f32 0.0, %v979
  %v981 = vpop.f32.mrb[0].mxu0
  %982 = vmatprep.mubr.f32.mxu0 %v277
  %983 = vmatmul.mubr.f32.gmra.mrb[0].mxu0 %v276
  %v984 = vpop.f32.mrb[0].mxu0
  %v985 = vadd.f32 0.0, %v984
  %v986 = vpop.f32.mrb[0].mxu0
  %987 = vmatprep.mubr.f32.mxu0 %v279
  %988 = vmatmul.mubr.f32.gmra.mrb[0].mxu0 %v278
  %v989 = vpop.f32.mrb[0].mxu0
  %v990 = vadd.f32 0.0, %v989
  %v991 = vpop.f32.mrb[0].mxu0
  %992 = vmatprep.mubr.f32.mxu0 %v281
  %993 = vmatmul.mubr.f32.gmra.mrb[0].mxu0 %v280
  %v994 = vpop.f32.mrb[0].mxu0
  %v995 = vadd.f32 0.0, %v994
  %v996 = vpop.f32.mrb[0].mxu0
  %997 = vmatprep.mubr.f32.mxu0 %v283
  %998 = vmatmul.mubr.f32.gmra.mrb[0].mxu0 %v282
  %v999 = vpop.f32.mrb[0].mxu0
  %v1000 = vadd.f32 0.0, %v999
  %v1001 = vpop.f32.mrb[0].mxu0
  %1002 = vmatprep.mubr.f32.mxu0 %v285
  %1003 = vmatmul.mubr.f32.gmra.mrb[0].mxu0 %v284
  %v1004 = vpop.f32.mrb[0].mxu0
  %v1005 = vadd.f32 0.0, %v1004
  %v1006 = vpop.f32.mrb[0].mxu0
  %1007 = vmatprep.mubr.f32.mxu0 %v287
  %1008 = vmatmul.mubr.f32.gmra.mrb[0].mxu0 %v286
  %v1009 = vpop.f32.mrb[0].mxu0
  %v1010 = vadd.f32 0.0, %v1009
  %v1011 = vpop.f32.mrb[0].mxu0
  %1012 = vmatprep.mubr.f32.mxu0 %v289
  %1013 = vmatmul.mubr.f32.gmra.mrb[0].mxu0 %v288
  %v1014 = vpop.f32.mrb[0].mxu0
  %v1015 = vadd.f32 0.0, %v1014
  %v1016 = vpop.f32.mrb[0].mxu0
  %1017 = vmatprep.mubr.f32.mxu0 %v291
  %1018 = vmatmul.mubr.f32.gmra.mrb[0].mxu0 %v290
  %v1019 = vpop.f32.mrb[0].mxu0
  %v1020 = vadd.f32 0.0, %v1019
  %v1021 = vpop.f32.mrb[0].mxu0
  %1022 = vmatprep.mubr.f32.mxu0 %v293
  %1023 = vmatmul.mubr.f32.gmra.mrb[0].mxu0 %v292
  %v1024 = vpop.f32.mrb[0].mxu0
  %v1025 = vadd.f32 0.0, %v1024
  %v1026 = vpop.f32.mrb[0].mxu0
  %1027 = vmatprep.mubr.f32.mxu0 %v295
  %1028 = vmatmul.mubr.f32.gmra.mrb[0].mxu0 %v294
  %v1029 = vpop.f32.mrb[0].mxu0
  %v1030 = vadd.f32 0.0, %v1029
  %v1031 = vpop.f32.mrb[0].mxu0
  %1032 = vmatprep.mubr.f32.mxu0 %v297
  %1033 = vmatmul.mubr.f32.gmra.mrb[0].mxu0 %v296
  %v1034 = vpop.f32.mrb[0].mxu0
  %v1035 = vadd.f32 0.0, %v1034
  %v1036 = vpop.f32.mrb[0].mxu0
  %1037 = vmatprep.mubr.f32.mxu0 %v299
  %1038 = vmatmul.mubr.f32.gmra.mrb[0].mxu0 %v298
  %v1039 = vpop.f32.mrb[0].mxu0
  %v1040 = vadd.f32 0.0, %v1039
  %v1041 = vpop.f32.mrb[0].mxu0
  %1042 = vmatprep.mubr.f32.mxu0 %v301
  %1043 = vmatmul.mubr.f32.gmra.mrb[0].mxu0 %v300
  %v1044 = vpop.f32.mrb[0].mxu0
  %v1045 = vadd.f32 0.0, %v1044
  %v1046 = vpop.f32.mrb[0].mxu0
  %1047 = vmatprep.mubr.f32.mxu0 %v303
  %1048 = vmatmul.mubr.f32.gmra.mrb[0].mxu0 %v302
  %v1049 = vpop.f32.mrb[0].mxu0
  %v1050 = vadd.f32 0.0, %v1049
  %v1051 = vpop.f32.mrb[0].mxu0
  %1052 = vmatprep.mubr.f32.mxu0 %v305
  %1053 = vmatmul.mubr.f32.gmra.mrb[0].mxu0 %v304
  %v1054 = vpop.f32.mrb[0].mxu0
  %v1055 = vadd.f32 0.0, %v1054
  %v1056 = vpop.f32.mrb[0].mxu0
  %1057 = vmatprep.mubr.f32.mxu0 %v307
  %1058 = vmatmul.mubr.f32.gmra.mrb[0].mxu0 %v306
  %v1059 = vpop.f32.mrb[0].mxu0
  %v1060 = vadd.f32 0.0, %v1059
  %v1061 = vpop.f32.mrb[0].mxu0
  %1062 = vmatprep.mubr.f32.mxu0 %v309
  %1063 = vmatmul.mubr.f32.gmra.mrb[0].mxu0 %v308
  %v1064 = vpop.f32.mrb[0].mxu0
  %v1065 = vadd.f32 0.0, %v1064
  %v1066 = vpop.f32.mrb[0].mxu0
  %1067 = vmatprep.mubr.f32.mxu0 %v311
  %1068 = vmatmul.mubr.f32.gmra.mrb[0].mxu0 %v310
  %v1069 = vpop.f32.mrb[0].mxu0
  %v1070 = vadd.f32 0.0, %v1069
  %v1071 = vpop.f32.mrb[0].mxu0
  %1072 = vmatprep.mubr.f32.mxu0 %v313
  %1073 = vmatmul.mubr.f32.gmra.mrb[0].mxu0 %v312
  %v1074 = vpop.f32.mrb[0].mxu0
  %v1075 = vadd.f32 0.0, %v1074
  %v1076 = vpop.f32.mrb[0].mxu0
  %1077 = vmatprep.mubr.f32.mxu0 %v315
  %1078 = vmatmul.mubr.f32.gmra.mrb[0].mxu0 %v314
  %v1079 = vpop.f32.mrb[0].mxu0
  %v1080 = vadd.f32 0.0, %v1079
  %v1081 = vpop.f32.mrb[0].mxu0
  %1082 = vmatprep.mubr.f32.mxu0 %v317
  %1083 = vmatmul.mubr.f32.gmra.mrb[0].mxu0 %v316
  %v1084 = vpop.f32.mrb[0].mxu0
  %v1085 = vadd.f32 0.0, %v1084
  %v1086 = vpop.f32.mrb[0].mxu0
  %1087 = vmatprep.mubr.f32.mxu0 %v319
  %1088 = vmatmul.mubr.f32.gmra.mrb[0].mxu0 %v318
  %v1089 = vpop.f32.mrb[0].mxu0
  %v1090 = vadd.f32 0.0, %v1089
  %v1091 = vpop.f32.mrb[0].mxu0
  %1092 = vmatprep.mubr.f32.mxu0 %v321
  %1093 = vmatmul.mubr.f32.gmra.mrb[0].mxu0 %v320
  %v1094 = vpop.f32.mrb[0].mxu0
  %v1095 = vadd.f32 0.0, %v1094
  %v1096 = vpop.f32.mrb[0].mxu0
  %1097 = vmatprep.mubr.f32.mxu0 %v323
  %1098 = vmatmul.mubr.f32.gmra.mrb[0].mxu0 %v322
  %v1099 = vpop.f32.mrb[0].mxu0
  %v1100 = vadd.f32 0.0, %v1099
  %v1101 = vpop.f32.mrb[0].mxu0
  %1102 = vmatprep.mubr.f32.mxu0 %v325
  %1103 = vmatmul.mubr.f32.gmra.mrb[0].mxu0 %v324
  %v1104 = vpop.f32.mrb[0].mxu0
  %v1105 = vadd.f32 0.0, %v1104
  %v1106 = vpop.f32.mrb[0].mxu0
  %1107 = vmatprep.mubr.f32.mxu0 %v327
  %1108 = vmatmul.mubr.f32.gmra.mrb[0].mxu0 %v326
  %v1109 = vpop.f32.mrb[0].mxu0
  %v1110 = vadd.f32 0.0, %v1109
  %v1111 = vpop.f32.mrb[0].mxu0
  %1112 = vmatprep.mubr.f32.mxu0 %v329
  %1113 = vmatmul.mubr.f32.gmra.mrb[0].mxu0 %v328
  %v1114 = vpop.f32.mrb[0].mxu0
  %v1115 = vadd.f32 0.0, %v1114
  %v1116 = vpop.f32.mrb[0].mxu0
  %1117 = vmatprep.mubr.f32.mxu0 %v331
  %1118 = vmatmul.mubr.f32.gmra.mrb[0].mxu0 %v330
  %v1119 = vpop.f32.mrb[0].mxu0
  %v1120 = vadd.f32 0.0, %v1119
  %v1121 = vpop.f32.mrb[0].mxu0
  %1122 = vmatprep.mubr.f32.mxu0 %v333
  %1123 = vmatmul.mubr.f32.gmra.mrb[0].mxu0 %v332
  %v1124 = vpop.f32.mrb[0].mxu0
  %v1125 = vadd.f32 0.0, %v1124
  %v1126 = vpop.f32.mrb[0].mxu0
  %1127 = vmatprep.mubr.f32.mxu0 %v335
  %1128 = vmatmul.mubr.f32.gmra.mrb[0].mxu0 %v334
  %v1129 = vpop.f32.mrb[0].mxu0
  %v1130 = vadd.f32 0.0, %v1129
  %v1131 = vpop.f32.mrb[0].mxu0
  %1132 = vdwg.mxu0
  %v1133 = vld [vmem:[%s2] sm:$0xff]
  %v1134 = vld [vmem:[%s2 + $0x8] sm:$0xff]
  %v1135 = vld [vmem:[%s2 + $0x10] sm:$0xff]
  %v1136 = vld [vmem:[%s2 + $0x18] sm:$0xff]
  %v1137 = vld [vmem:[%s2 + $0x20] sm:$0xff]
  %v1138 = vld [vmem:[%s2 + $0x28] sm:$0xff]
  %v1139 = vld [vmem:[%s2 + $0x30] sm:$0xff]
  %v1140 = vld [vmem:[%s2 + $0x38] sm:$0xff]
  %s1141 = scalar_lea.vmem %s2, 64
  %v1142 = vld [vmem:[%s1141] sm:$0xff]
  %v1143 = vld [vmem:[%s1141 + $0x8] sm:$0xff]
  %v1144 = vld [vmem:[%s1141 + $0x10] sm:$0xff]
  %v1145 = vld [vmem:[%s1141 + $0x18] sm:$0xff]
  %v1146 = vld [vmem:[%s1141 + $0x20] sm:$0xff]
  %v1147 = vld [vmem:[%s1141 + $0x28] sm:$0xff]
  %v1148 = vld [vmem:[%s1141 + $0x30] sm:$0xff]
  %v1149 = vld [vmem:[%s1141 + $0x38] sm:$0xff]
  %vm1150 = vcmask 261120
  %v1152 = vsel %vm1150, %v575, 0
  %v1155 = vsel %vm1150, %v580, 0
  %v1158 = vsel %vm1150, %v585, 0
  %v1161 = vsel %vm1150, %v590, 0
  %v1164 = vsel %vm1150, %v595, 0
  %v1167 = vsel %vm1150, %v600, 0
  %v1170 = vsel %vm1150, %v605, 0
  %v1173 = vsel %vm1150, %v610, 0
  %v1176 = vsel %vm1150, %v615, 0
  %v1179 = vsel %vm1150, %v620, 0
  %v1182 = vsel %vm1150, %v625, 0
  %v1185 = vsel %vm1150, %v630, 0
  %v1188 = vsel %vm1150, %v635, 0
  %v1191 = vsel %vm1150, %v640, 0
  %v1194 = vsel %vm1150, %v645, 0
  %v1197 = vsel %vm1150, %v650, 0
  %v1200 = vsel %vm1150, %v655, 0
  %v1203 = vsel %vm1150, %v660, 0
  %v1206 = vsel %vm1150, %v665, 0
  %v1209 = vsel %vm1150, %v670, 0
  %v1212 = vsel %vm1150, %v675, 0
  %v1215 = vsel %vm1150, %v680, 0
  %v1218 = vsel %vm1150, %v685, 0
  %v1221 = vsel %vm1150, %v690, 0
  %v1224 = vsel %vm1150, %v695, 0
  %v1227 = vsel %vm1150, %v700, 0
  %v1230 = vsel %vm1150, %v705, 0
  %v1233 = vsel %vm1150, %v710, 0
  %1235 = vmatprep.subr.mxu0 %v1143
  %1236 = vmatpush1.msra.mxu0 %v1142
  %1237 = vmatprep.subr.mxu0 %v1145
  %1238 = vmatpush1.msra.mxu0 %v1144
  %1239 = vmatprep.subr.mxu0 %v1147
  %1240 = vmatpush1.msra.mxu0 %v1146
  %1241 = vmatprep.subr.mxu0 %v1149
  %1242 = vmatpush1.msra.mxu0 %v1148
  %1243 = vmatprep.subr.mxu0 0.0
  %1244 = vmatpush1.msra.mxu0 0.0
  %1245 = vmatprep.subr.mxu0 0.0
  %1246 = vmatpush1.msra.mxu0 0.0
  %1247 = vmatprep.subr.mxu0 0.0
  %1248 = vmatpush1.msra.mxu0 0.0
  %1249 = vmatprep.subr.mxu0 0.0
  %1250 = vmatpush1.msra.mxu0 0.0
  %1251 = vmatprep.subr.mxu0 0.0
  %1252 = vmatpush1.msra.mxu0 0.0
  %1253 = vmatprep.subr.mxu0 0.0
  %1254 = vmatpush1.msra.mxu0 0.0
  %1255 = vmatprep.subr.mxu0 0.0
  %1256 = vmatpush1.msra.mxu0 0.0
  %1257 = vmatprep.subr.mxu0 0.0
  %1258 = vmatpush1.msra.mxu0 0.0
  %1259 = vmatprep.subr.mxu0 0.0
  %1260 = vmatpush1.msra.mxu0 0.0
  %1261 = vmatprep.subr.mxu0 0.0
  %1262 = vmatpush1.msra.mxu0 0.0
  %1263 = vmatprep.subr.mxu0 0.0
  %1264 = vmatpush1.msra.mxu0 0.0
  %1265 = vmatprep.subr.mxu0 0.0
  %1266 = vmatpush1.msra.mxu0 0.0
  %1267 = vmatprep.subr.mxu0 0.0
  %1268 = vmatpush1.msra.mxu0 0.0
  %1269 = vmatprep.subr.mxu0 0.0
  %1270 = vmatpush1.msra.mxu0 0.0
  %1271 = vmatprep.subr.mxu0 0.0
  %1272 = vmatpush1.msra.mxu0 0.0
  %1273 = vmatprep.subr.mxu0 0.0
  %1274 = vmatpush1.msra.mxu0 0.0
  %1275 = vmatprep.subr.mxu0 0.0
  %1276 = vmatpush1.msra.mxu0 0.0
  %1277 = vmatprep.subr.mxu0 0.0
  %1278 = vmatpush1.msra.mxu0 0.0
  %1279 = vmatprep.subr.mxu0 0.0
  %1280 = vmatpush1.msra.mxu0 0.0
  %1281 = vmatprep.subr.mxu0 0.0
  %1282 = vmatpush1.msra.mxu0 0.0
  %1283 = vmatprep.subr.mxu0 0.0
  %1284 = vmatpush1.msra.mxu0 0.0
  %1285 = vmatprep.subr.mxu0 0.0
  %1286 = vmatpush1.msra.mxu0 0.0
  %1287 = vmatprep.subr.mxu0 0.0
  %1288 = vmatpush1.msra.mxu0 0.0
  %1289 = vmatprep.subr.mxu0 0.0
  %1290 = vmatpush1.msra.mxu0 0.0
  %1291 = vmatprep.subr.mxu0 0.0
  %1292 = vmatpush1.msra.mxu0 0.0
  %1293 = vmatprep.subr.mxu0 0.0
  %1294 = vmatpush1.msra.mxu0 0.0
  %1295 = vmatprep.subr.mxu0 0.0
  %1296 = vmatpush1.msra.mxu0 0.0
  %1297 = vmatprep.subr.mxu0 0.0
  %1298 = vmatpush1.msra.mxu0 0.0
  %1299 = vmatprep.mubr.f32.mxu0 0.0
  %1300 = vmatmul.mubr.f32.gmra.mrb[0].mxu0 %v1152
  %v1301 = vpop.f32.mrb[0].mxu0
  %v1302 = vadd.f32 0.0, %v1301
  %v1303 = vpop.f32.mrb[0].mxu0
  %v1304 = vadd.f32 0.0, %v1303
  %1305 = vmatprep.mubr.f32.mxu0 0.0
  %1306 = vmatmul.mubr.f32.gmra.mrb[0].mxu0 %v1155
  %v1307 = vpop.f32.mrb[0].mxu0
  %v1308 = vadd.f32 0.0, %v1307
  %v1309 = vpop.f32.mrb[0].mxu0
  %v1310 = vadd.f32 0.0, %v1309
  %1311 = vmatprep.mubr.f32.mxu0 0.0
  %1312 = vmatmul.mubr.f32.gmra.mrb[0].mxu0 %v1158
  %v1313 = vpop.f32.mrb[0].mxu0
  %v1314 = vadd.f32 0.0, %v1313
  %v1315 = vpop.f32.mrb[0].mxu0
  %v1316 = vadd.f32 0.0, %v1315
  %1317 = vmatprep.mubr.f32.mxu0 0.0
  %1318 = vmatmul.mubr.f32.gmra.mrb[0].mxu0 %v1161
  %v1319 = vpop.f32.mrb[0].mxu0
  %v1320 = vadd.f32 0.0, %v1319
  %v1321 = vpop.f32.mrb[0].mxu0
  %v1322 = vadd.f32 0.0, %v1321
  %1323 = vmatprep.mubr.f32.mxu0 0.0
  %1324 = vmatmul.mubr.f32.gmra.mrb[0].mxu0 %v1164
  %v1325 = vpop.f32.mrb[0].mxu0
  %v1326 = vadd.f32 0.0, %v1325
  %v1327 = vpop.f32.mrb[0].mxu0
  %v1328 = vadd.f32 0.0, %v1327
  %1329 = vmatprep.mubr.f32.mxu0 0.0
  %1330 = vmatmul.mubr.f32.gmra.mrb[0].mxu0 %v1167
  %v1331 = vpop.f32.mrb[0].mxu0
  %v1332 = vadd.f32 0.0, %v1331
  %v1333 = vpop.f32.mrb[0].mxu0
  %v1334 = vadd.f32 0.0, %v1333
  %1335 = vmatprep.mubr.f32.mxu0 0.0
  %1336 = vmatmul.mubr.f32.gmra.mrb[0].mxu0 %v1170
  %v1337 = vpop.f32.mrb[0].mxu0
  %v1338 = vadd.f32 0.0, %v1337
  %v1339 = vpop.f32.mrb[0].mxu0
  %v1340 = vadd.f32 0.0, %v1339
  %1341 = vmatprep.mubr.f32.mxu0 0.0
  %1342 = vmatmul.mubr.f32.gmra.mrb[0].mxu0 %v1173
  %v1343 = vpop.f32.mrb[0].mxu0
  %v1344 = vadd.f32 0.0, %v1343
  %v1345 = vpop.f32.mrb[0].mxu0
  %v1346 = vadd.f32 0.0, %v1345
  %1347 = vmatprep.mubr.f32.mxu0 0.0
  %1348 = vmatmul.mubr.f32.gmra.mrb[0].mxu0 %v1176
  %v1349 = vpop.f32.mrb[0].mxu0
  %v1350 = vadd.f32 0.0, %v1349
  %v1351 = vpop.f32.mrb[0].mxu0
  %v1352 = vadd.f32 0.0, %v1351
  %1353 = vmatprep.mubr.f32.mxu0 0.0
  %1354 = vmatmul.mubr.f32.gmra.mrb[0].mxu0 %v1179
  %v1355 = vpop.f32.mrb[0].mxu0
  %v1356 = vadd.f32 0.0, %v1355
  %v1357 = vpop.f32.mrb[0].mxu0
  %v1358 = vadd.f32 0.0, %v1357
  %1359 = vmatprep.mubr.f32.mxu0 0.0
  %1360 = vmatmul.mubr.f32.gmra.mrb[0].mxu0 %v1182
  %v1361 = vpop.f32.mrb[0].mxu0
  %v1362 = vadd.f32 0.0, %v1361
  %v1363 = vpop.f32.mrb[0].mxu0
  %v1364 = vadd.f32 0.0, %v1363
  %1365 = vmatprep.mubr.f32.mxu0 0.0
  %1366 = vmatmul.mubr.f32.gmra.mrb[0].mxu0 %v1185
  %v1367 = vpop.f32.mrb[0].mxu0
  %v1368 = vadd.f32 0.0, %v1367
  %v1369 = vpop.f32.mrb[0].mxu0
  %v1370 = vadd.f32 0.0, %v1369
  %1371 = vmatprep.mubr.f32.mxu0 0.0
  %1372 = vmatmul.mubr.f32.gmra.mrb[0].mxu0 %v1188
  %v1373 = vpop.f32.mrb[0].mxu0
  %v1374 = vadd.f32 0.0, %v1373
  %v1375 = vpop.f32.mrb[0].mxu0
  %v1376 = vadd.f32 0.0, %v1375
  %1377 = vmatprep.mubr.f32.mxu0 0.0
  %1378 = vmatmul.mubr.f32.gmra.mrb[0].mxu0 %v1191
  %v1379 = vpop.f32.mrb[0].mxu0
  %v1380 = vadd.f32 0.0, %v1379
  %v1381 = vpop.f32.mrb[0].mxu0
  %v1382 = vadd.f32 0.0, %v1381
  %1383 = vmatprep.mubr.f32.mxu0 0.0
  %1384 = vmatmul.mubr.f32.gmra.mrb[0].mxu0 %v1194
  %v1385 = vpop.f32.mrb[0].mxu0
  %v1386 = vadd.f32 0.0, %v1385
  %v1387 = vpop.f32.mrb[0].mxu0
  %v1388 = vadd.f32 0.0, %v1387
  %1389 = vmatprep.mubr.f32.mxu0 0.0
  %1390 = vmatmul.mubr.f32.gmra.mrb[0].mxu0 %v1197
  %v1391 = vpop.f32.mrb[0].mxu0
  %v1392 = vadd.f32 0.0, %v1391
  %v1393 = vpop.f32.mrb[0].mxu0
  %v1394 = vadd.f32 0.0, %v1393
  %1395 = vmatprep.mubr.f32.mxu0 0.0
  %1396 = vmatmul.mubr.f32.gmra.mrb[0].mxu0 %v1200
  %v1397 = vpop.f32.mrb[0].mxu0
  %v1398 = vadd.f32 0.0, %v1397
  %v1399 = vpop.f32.mrb[0].mxu0
  %v1400 = vadd.f32 0.0, %v1399
  %1401 = vmatprep.mubr.f32.mxu0 0.0
  %1402 = vmatmul.mubr.f32.gmra.mrb[0].mxu0 %v1203
  %v1403 = vpop.f32.mrb[0].mxu0
  %v1404 = vadd.f32 0.0, %v1403
  %v1405 = vpop.f32.mrb[0].mxu0
  %v1406 = vadd.f32 0.0, %v1405
  %1407 = vmatprep.mubr.f32.mxu0 0.0
  %1408 = vmatmul.mubr.f32.gmra.mrb[0].mxu0 %v1206
  %v1409 = vpop.f32.mrb[0].mxu0
  %v1410 = vadd.f32 0.0, %v1409
  %v1411 = vpop.f32.mrb[0].mxu0
  %v1412 = vadd.f32 0.0, %v1411
  %1413 = vmatprep.mubr.f32.mxu0 0.0
  %1414 = vmatmul.mubr.f32.gmra.mrb[0].mxu0 %v1209
  %v1415 = vpop.f32.mrb[0].mxu0
  %v1416 = vadd.f32 0.0, %v1415
  %v1417 = vpop.f32.mrb[0].mxu0
  %v1418 = vadd.f32 0.0, %v1417
  %1419 = vmatprep.mubr.f32.mxu0 0.0
  %1420 = vmatmul.mubr.f32.gmra.mrb[0].mxu0 %v1212
  %v1421 = vpop.f32.mrb[0].mxu0
  %v1422 = vadd.f32 0.0, %v1421
  %v1423 = vpop.f32.mrb[0].mxu0
  %v1424 = vadd.f32 0.0, %v1423
  %1425 = vmatprep.mubr.f32.mxu0 0.0
  %1426 = vmatmul.mubr.f32.gmra.mrb[0].mxu0 %v1215
  %v1427 = vpop.f32.mrb[0].mxu0
  %v1428 = vadd.f32 0.0, %v1427
  %v1429 = vpop.f32.mrb[0].mxu0
  %v1430 = vadd.f32 0.0, %v1429
  %1431 = vmatprep.mubr.f32.mxu0 0.0
  %1432 = vmatmul.mubr.f32.gmra.mrb[0].mxu0 %v1218
  %v1433 = vpop.f32.mrb[0].mxu0
  %v1434 = vadd.f32 0.0, %v1433
  %v1435 = vpop.f32.mrb[0].mxu0
  %v1436 = vadd.f32 0.0, %v1435
  %1437 = vmatprep.mubr.f32.mxu0 0.0
  %1438 = vmatmul.mubr.f32.gmra.mrb[0].mxu0 %v1221
  %v1439 = vpop.f32.mrb[0].mxu0
  %v1440 = vadd.f32 0.0, %v1439
  %v1441 = vpop.f32.mrb[0].mxu0
  %v1442 = vadd.f32 0.0, %v1441
  %1443 = vmatprep.mubr.f32.mxu0 0.0
  %1444 = vmatmul.mubr.f32.gmra.mrb[0].mxu0 %v1224
  %v1445 = vpop.f32.mrb[0].mxu0
  %v1446 = vadd.f32 0.0, %v1445
  %v1447 = vpop.f32.mrb[0].mxu0
  %v1448 = vadd.f32 0.0, %v1447
  %1449 = vmatprep.mubr.f32.mxu0 0.0
  %1450 = vmatmul.mubr.f32.gmra.mrb[0].mxu0 %v1227
  %v1451 = vpop.f32.mrb[0].mxu0
  %v1452 = vadd.f32 0.0, %v1451
  %v1453 = vpop.f32.mrb[0].mxu0
  %v1454 = vadd.f32 0.0, %v1453
  %1455 = vmatprep.mubr.f32.mxu0 0.0
  %1456 = vmatmul.mubr.f32.gmra.mrb[0].mxu0 %v1230
  %v1457 = vpop.f32.mrb[0].mxu0
  %v1458 = vadd.f32 0.0, %v1457
  %v1459 = vpop.f32.mrb[0].mxu0
  %v1460 = vadd.f32 0.0, %v1459
  %1461 = vmatprep.mubr.f32.mxu0 0.0
  %1462 = vmatmul.mubr.f32.gmra.mrb[0].mxu0 %v1233
  %v1463 = vpop.f32.mrb[0].mxu0
  %v1464 = vadd.f32 0.0, %v1463
  %v1465 = vpop.f32.mrb[0].mxu0
  %v1466 = vadd.f32 0.0, %v1465
  %1467 = vdwg.mxu0
  %v1469 = vsel %vm1150, %v435, 0
  %v1472 = vsel %vm1150, %v440, 0
  %v1475 = vsel %vm1150, %v445, 0
  %v1478 = vsel %vm1150, %v450, 0
  %v1481 = vsel %vm1150, %v455, 0
  %v1484 = vsel %vm1150, %v460, 0
  %v1487 = vsel %vm1150, %v465, 0
  %v1490 = vsel %vm1150, %v470, 0
  %v1493 = vsel %vm1150, %v475, 0
  %v1496 = vsel %vm1150, %v480, 0
  %v1499 = vsel %vm1150, %v485, 0
  %v1502 = vsel %vm1150, %v490, 0
  %v1505 = vsel %vm1150, %v495, 0
  %v1508 = vsel %vm1150, %v500, 0
  %v1511 = vsel %vm1150, %v505, 0
  %v1514 = vsel %vm1150, %v510, 0
  %v1517 = vsel %vm1150, %v515, 0
  %v1520 = vsel %vm1150, %v520, 0
  %v1523 = vsel %vm1150, %v525, 0
  %v1526 = vsel %vm1150, %v530, 0
  %v1529 = vsel %vm1150, %v535, 0
  %v1532 = vsel %vm1150, %v540, 0
  %v1535 = vsel %vm1150, %v545, 0
  %v1538 = vsel %vm1150, %v550, 0
  %v1541 = vsel %vm1150, %v555, 0
  %v1544 = vsel %vm1150, %v560, 0
  %v1547 = vsel %vm1150, %v565, 0
  %v1550 = vsel %vm1150, %v570, 0
  %1552 = vmatprep.subr.mxu0 %v1134
  %1553 = vmatpush1.msra.mxu0 %v1133
  %1554 = vmatprep.subr.mxu0 %v1136
  %1555 = vmatpush1.msra.mxu0 %v1135
  %1556 = vmatprep.subr.mxu0 %v1138
  %1557 = vmatpush1.msra.mxu0 %v1137
  %1558 = vmatprep.subr.mxu0 %v1140
  %1559 = vmatpush1.msra.mxu0 %v1139
  %1560 = vmatprep.subr.mxu0 0.0
  %1561 = vmatpush1.msra.mxu0 0.0
  %1562 = vmatprep.subr.mxu0 0.0
  %1563 = vmatpush1.msra.mxu0 0.0
  %1564 = vmatprep.subr.mxu0 0.0
  %1565 = vmatpush1.msra.mxu0 0.0
  %1566 = vmatprep.subr.mxu0 0.0
  %1567 = vmatpush1.msra.mxu0 0.0
  %1568 = vmatprep.subr.mxu0 0.0
  %1569 = vmatpush1.msra.mxu0 0.0
  %1570 = vmatprep.subr.mxu0 0.0
  %1571 = vmatpush1.msra.mxu0 0.0
  %1572 = vmatprep.subr.mxu0 0.0
  %1573 = vmatpush1.msra.mxu0 0.0
  %1574 = vmatprep.subr.mxu0 0.0
  %1575 = vmatpush1.msra.mxu0 0.0
  %1576 = vmatprep.subr.mxu0 0.0
  %1577 = vmatpush1.msra.mxu0 0.0
  %1578 = vmatprep.subr.mxu0 0.0
  %1579 = vmatpush1.msra.mxu0 0.0
  %1580 = vmatprep.subr.mxu0 0.0
  %1581 = vmatpush1.msra.mxu0 0.0
  %1582 = vmatprep.subr.mxu0 0.0
  %1583 = vmatpush1.msra.mxu0 0.0
  %1584 = vmatprep.subr.mxu0 0.0
  %1585 = vmatpush1.msra.mxu0 0.0
  %1586 = vmatprep.subr.mxu0 0.0
  %1587 = vmatpush1.msra.mxu0 0.0
  %1588 = vmatprep.subr.mxu0 0.0
  %1589 = vmatpush1.msra.mxu0 0.0
  %1590 = vmatprep.subr.mxu0 0.0
  %1591 = vmatpush1.msra.mxu0 0.0
  %1592 = vmatprep.subr.mxu0 0.0
  %1593 = vmatpush1.msra.mxu0 0.0
  %1594 = vmatprep.subr.mxu0 0.0
  %1595 = vmatpush1.msra.mxu0 0.0
  %1596 = vmatprep.subr.mxu0 0.0
  %1597 = vmatpush1.msra.mxu0 0.0
  %1598 = vmatprep.subr.mxu0 0.0
  %1599 = vmatpush1.msra.mxu0 0.0
  %1600 = vmatprep.subr.mxu0 0.0
  %1601 = vmatpush1.msra.mxu0 0.0
  %1602 = vmatprep.subr.mxu0 0.0
  %1603 = vmatpush1.msra.mxu0 0.0
  %1604 = vmatprep.subr.mxu0 0.0
  %1605 = vmatpush1.msra.mxu0 0.0
  %1606 = vmatprep.subr.mxu0 0.0
  %1607 = vmatpush1.msra.mxu0 0.0
  %1608 = vmatprep.subr.mxu0 0.0
  %1609 = vmatpush1.msra.mxu0 0.0
  %1610 = vmatprep.subr.mxu0 0.0
  %1611 = vmatpush1.msra.mxu0 0.0
  %1612 = vmatprep.subr.mxu0 0.0
  %1613 = vmatpush1.msra.mxu0 0.0
  %1614 = vmatprep.subr.mxu0 0.0
  %1615 = vmatpush1.msra.mxu0 0.0
  %1616 = vmatprep.mubr.f32.mxu0 0.0
  %1617 = vmatmul.mubr.f32.gmra.mrb[0].mxu0 %v1469
  %v1618 = vpop.f32.mrb[0].mxu0
  %v1619 = vadd.f32 %v1302, %v1618
  %v1620 = vpop.f32.mrb[0].mxu0
  %v1621 = vadd.f32 %v1304, %v1620
  %1622 = vmatprep.mubr.f32.mxu0 0.0
  %1623 = vmatmul.mubr.f32.gmra.mrb[0].mxu0 %v1472
  %v1624 = vpop.f32.mrb[0].mxu0
  %v1625 = vadd.f32 %v1308, %v1624
  %v1626 = vpop.f32.mrb[0].mxu0
  %v1627 = vadd.f32 %v1310, %v1626
  %1628 = vmatprep.mubr.f32.mxu0 0.0
  %1629 = vmatmul.mubr.f32.gmra.mrb[0].mxu0 %v1475
  %v1630 = vpop.f32.mrb[0].mxu0
  %v1631 = vadd.f32 %v1314, %v1630
  %v1632 = vpop.f32.mrb[0].mxu0
  %v1633 = vadd.f32 %v1316, %v1632
  %1634 = vmatprep.mubr.f32.mxu0 0.0
  %1635 = vmatmul.mubr.f32.gmra.mrb[0].mxu0 %v1478
  %v1636 = vpop.f32.mrb[0].mxu0
  %v1637 = vadd.f32 %v1320, %v1636
  %v1638 = vpop.f32.mrb[0].mxu0
  %v1639 = vadd.f32 %v1322, %v1638
  %1640 = vmatprep.mubr.f32.mxu0 0.0
  %1641 = vmatmul.mubr.f32.gmra.mrb[0].mxu0 %v1481
  %v1642 = vpop.f32.mrb[0].mxu0
  %v1643 = vadd.f32 %v1326, %v1642
  %v1644 = vpop.f32.mrb[0].mxu0
  %v1645 = vadd.f32 %v1328, %v1644
  %1646 = vmatprep.mubr.f32.mxu0 0.0
  %1647 = vmatmul.mubr.f32.gmra.mrb[0].mxu0 %v1484
  %v1648 = vpop.f32.mrb[0].mxu0
  %v1649 = vadd.f32 %v1332, %v1648
  %v1650 = vpop.f32.mrb[0].mxu0
  %v1651 = vadd.f32 %v1334, %v1650
  %1652 = vmatprep.mubr.f32.mxu0 0.0
  %1653 = vmatmul.mubr.f32.gmra.mrb[0].mxu0 %v1487
  %v1654 = vpop.f32.mrb[0].mxu0
  %v1655 = vadd.f32 %v1338, %v1654
  %v1656 = vpop.f32.mrb[0].mxu0
  %v1657 = vadd.f32 %v1340, %v1656
  %1658 = vmatprep.mubr.f32.mxu0 0.0
  %1659 = vmatmul.mubr.f32.gmra.mrb[0].mxu0 %v1490
  %v1660 = vpop.f32.mrb[0].mxu0
  %v1661 = vadd.f32 %v1344, %v1660
  %v1662 = vpop.f32.mrb[0].mxu0
  %v1663 = vadd.f32 %v1346, %v1662
  %1664 = vmatprep.mubr.f32.mxu0 0.0
  %1665 = vmatmul.mubr.f32.gmra.mrb[0].mxu0 %v1493
  %v1666 = vpop.f32.mrb[0].mxu0
  %v1667 = vadd.f32 %v1350, %v1666
  %v1668 = vpop.f32.mrb[0].mxu0
  %v1669 = vadd.f32 %v1352, %v1668
  %1670 = vmatprep.mubr.f32.mxu0 0.0
  %1671 = vmatmul.mubr.f32.gmra.mrb[0].mxu0 %v1496
  %v1672 = vpop.f32.mrb[0].mxu0
  %v1673 = vadd.f32 %v1356, %v1672
  %v1674 = vpop.f32.mrb[0].mxu0
  %v1675 = vadd.f32 %v1358, %v1674
  %1676 = vmatprep.mubr.f32.mxu0 0.0
  %1677 = vmatmul.mubr.f32.gmra.mrb[0].mxu0 %v1499
  %v1678 = vpop.f32.mrb[0].mxu0
  %v1679 = vadd.f32 %v1362, %v1678
  %v1680 = vpop.f32.mrb[0].mxu0
  %v1681 = vadd.f32 %v1364, %v1680
  %1682 = vmatprep.mubr.f32.mxu0 0.0
  %1683 = vmatmul.mubr.f32.gmra.mrb[0].mxu0 %v1502
  %v1684 = vpop.f32.mrb[0].mxu0
  %v1685 = vadd.f32 %v1368, %v1684
  %v1686 = vpop.f32.mrb[0].mxu0
  %v1687 = vadd.f32 %v1370, %v1686
  %1688 = vmatprep.mubr.f32.mxu0 0.0
  %1689 = vmatmul.mubr.f32.gmra.mrb[0].mxu0 %v1505
  %v1690 = vpop.f32.mrb[0].mxu0
  %v1691 = vadd.f32 %v1374, %v1690
  %v1692 = vpop.f32.mrb[0].mxu0
  %v1693 = vadd.f32 %v1376, %v1692
  %1694 = vmatprep.mubr.f32.mxu0 0.0
  %1695 = vmatmul.mubr.f32.gmra.mrb[0].mxu0 %v1508
  %v1696 = vpop.f32.mrb[0].mxu0
  %v1697 = vadd.f32 %v1380, %v1696
  %v1698 = vpop.f32.mrb[0].mxu0
  %v1699 = vadd.f32 %v1382, %v1698
  %1700 = vmatprep.mubr.f32.mxu0 0.0
  %1701 = vmatmul.mubr.f32.gmra.mrb[0].mxu0 %v1511
  %v1702 = vpop.f32.mrb[0].mxu0
  %v1703 = vadd.f32 %v1386, %v1702
  %v1704 = vpop.f32.mrb[0].mxu0
  %v1705 = vadd.f32 %v1388, %v1704
  %1706 = vmatprep.mubr.f32.mxu0 0.0
  %1707 = vmatmul.mubr.f32.gmra.mrb[0].mxu0 %v1514
  %v1708 = vpop.f32.mrb[0].mxu0
  %v1709 = vadd.f32 %v1392, %v1708
  %v1710 = vpop.f32.mrb[0].mxu0
  %v1711 = vadd.f32 %v1394, %v1710
  %1712 = vmatprep.mubr.f32.mxu0 0.0
  %1713 = vmatmul.mubr.f32.gmra.mrb[0].mxu0 %v1517
  %v1714 = vpop.f32.mrb[0].mxu0
  %v1715 = vadd.f32 %v1398, %v1714
  %v1716 = vpop.f32.mrb[0].mxu0
  %v1717 = vadd.f32 %v1400, %v1716
  %1718 = vmatprep.mubr.f32.mxu0 0.0
  %1719 = vmatmul.mubr.f32.gmra.mrb[0].mxu0 %v1520
  %v1720 = vpop.f32.mrb[0].mxu0
  %v1721 = vadd.f32 %v1404, %v1720
  %v1722 = vpop.f32.mrb[0].mxu0
  %v1723 = vadd.f32 %v1406, %v1722
  %1724 = vmatprep.mubr.f32.mxu0 0.0
  %1725 = vmatmul.mubr.f32.gmra.mrb[0].mxu0 %v1523
  %v1726 = vpop.f32.mrb[0].mxu0
  %v1727 = vadd.f32 %v1410, %v1726
  %v1728 = vpop.f32.mrb[0].mxu0
  %v1729 = vadd.f32 %v1412, %v1728
  %1730 = vmatprep.mubr.f32.mxu0 0.0
  %1731 = vmatmul.mubr.f32.gmra.mrb[0].mxu0 %v1526
  %v1732 = vpop.f32.mrb[0].mxu0
  %v1733 = vadd.f32 %v1416, %v1732
  %v1734 = vpop.f32.mrb[0].mxu0
  %v1735 = vadd.f32 %v1418, %v1734
  %1736 = vmatprep.mubr.f32.mxu0 0.0
  %1737 = vmatmul.mubr.f32.gmra.mrb[0].mxu0 %v1529
  %v1738 = vpop.f32.mrb[0].mxu0
  %v1739 = vadd.f32 %v1422, %v1738
  %v1740 = vpop.f32.mrb[0].mxu0
  %v1741 = vadd.f32 %v1424, %v1740
  %1742 = vmatprep.mubr.f32.mxu0 0.0
  %1743 = vmatmul.mubr.f32.gmra.mrb[0].mxu0 %v1532
  %v1744 = vpop.f32.mrb[0].mxu0
  %v1745 = vadd.f32 %v1428, %v1744
  %v1746 = vpop.f32.mrb[0].mxu0
  %v1747 = vadd.f32 %v1430, %v1746
  %1748 = vmatprep.mubr.f32.mxu0 0.0
  %1749 = vmatmul.mubr.f32.gmra.mrb[0].mxu0 %v1535
  %v1750 = vpop.f32.mrb[0].mxu0
  %v1751 = vadd.f32 %v1434, %v1750
  %v1752 = vpop.f32.mrb[0].mxu0
  %v1753 = vadd.f32 %v1436, %v1752
  %1754 = vmatprep.mubr.f32.mxu0 0.0
  %1755 = vmatmul.mubr.f32.gmra.mrb[0].mxu0 %v1538
  %v1756 = vpop.f32.mrb[0].mxu0
  %v1757 = vadd.f32 %v1440, %v1756
  %v1758 = vpop.f32.mrb[0].mxu0
  %v1759 = vadd.f32 %v1442, %v1758
  %1760 = vmatprep.mubr.f32.mxu0 0.0
  %1761 = vmatmul.mubr.f32.gmra.mrb[0].mxu0 %v1541
  %v1762 = vpop.f32.mrb[0].mxu0
  %v1763 = vadd.f32 %v1446, %v1762
  %v1764 = vpop.f32.mrb[0].mxu0
  %v1765 = vadd.f32 %v1448, %v1764
  %1766 = vmatprep.mubr.f32.mxu0 0.0
  %1767 = vmatmul.mubr.f32.gmra.mrb[0].mxu0 %v1544
  %v1768 = vpop.f32.mrb[0].mxu0
  %v1769 = vadd.f32 %v1452, %v1768
  %v1770 = vpop.f32.mrb[0].mxu0
  %v1771 = vadd.f32 %v1454, %v1770
  %1772 = vmatprep.mubr.f32.mxu0 0.0
  %1773 = vmatmul.mubr.f32.gmra.mrb[0].mxu0 %v1547
  %v1774 = vpop.f32.mrb[0].mxu0
  %v1775 = vadd.f32 %v1458, %v1774
  %v1776 = vpop.f32.mrb[0].mxu0
  %v1777 = vadd.f32 %v1460, %v1776
  %1778 = vmatprep.mubr.f32.mxu0 0.0
  %1779 = vmatmul.mubr.f32.gmra.mrb[0].mxu0 %v1550
  %v1780 = vpop.f32.mrb[0].mxu0
  %v1781 = vadd.f32 %v1464, %v1780
  %v1782 = vpop.f32.mrb[0].mxu0
  %v1783 = vadd.f32 %v1466, %v1782
  %1784 = vdwg.mxu0
  %s1785 = scalar_lea.vmem %s2, 128
  %v1786 = vld [vmem:[%s1785] sm:$0xff]
  %v1787 = vld [vmem:[%s1785 + $0x8] sm:$0xff]
  %v1788 = vld [vmem:[%s1785 + $0x10] sm:$0xff]
  %v1789 = vld [vmem:[%s1785 + $0x18] sm:$0xff]
  %v1790 = vld [vmem:[%s1785 + $0x20] sm:$0xff]
  %v1791 = vld [vmem:[%s1785 + $0x28] sm:$0xff]
  %v1792 = vld [vmem:[%s1785 + $0x30] sm:$0xff]
  %v1793 = vld [vmem:[%s1785 + $0x38] sm:$0xff]
  %v1795 = vsel %vm1150, %v715, 0
  %v1798 = vsel %vm1150, %v720, 0
  %v1801 = vsel %vm1150, %v725, 0
  %v1804 = vsel %vm1150, %v730, 0
  %v1807 = vsel %vm1150, %v735, 0
  %v1810 = vsel %vm1150, %v740, 0
  %v1813 = vsel %vm1150, %v745, 0
  %v1816 = vsel %vm1150, %v750, 0
  %v1819 = vsel %vm1150, %v755, 0
  %v1822 = vsel %vm1150, %v760, 0
  %v1825 = vsel %vm1150, %v765, 0
  %v1828 = vsel %vm1150, %v770, 0
  %v1831 = vsel %vm1150, %v775, 0
  %v1834 = vsel %vm1150, %v780, 0
  %v1837 = vsel %vm1150, %v785, 0
  %v1840 = vsel %vm1150, %v790, 0
  %v1843 = vsel %vm1150, %v795, 0
  %v1846 = vsel %vm1150, %v800, 0
  %v1849 = vsel %vm1150, %v805, 0
  %v1852 = vsel %vm1150, %v810, 0
  %v1855 = vsel %vm1150, %v815, 0
  %v1858 = vsel %vm1150, %v820, 0
  %v1861 = vsel %vm1150, %v825, 0
  %v1864 = vsel %vm1150, %v830, 0
  %v1867 = vsel %vm1150, %v835, 0
  %v1870 = vsel %vm1150, %v840, 0
  %v1873 = vsel %vm1150, %v845, 0
  %v1876 = vsel %vm1150, %v850, 0
  %1878 = vmatprep.subr.mxu0 %v1787
  %1879 = vmatpush1.msra.mxu0 %v1786
  %1880 = vmatprep.subr.mxu0 %v1789
  %1881 = vmatpush1.msra.mxu0 %v1788
  %1882 = vmatprep.subr.mxu0 %v1791
  %1883 = vmatpush1.msra.mxu0 %v1790
  %1884 = vmatprep.subr.mxu0 %v1793
  %1885 = vmatpush1.msra.mxu0 %v1792
  %1886 = vmatprep.subr.mxu0 0.0
  %1887 = vmatpush1.msra.mxu0 0.0
  %1888 = vmatprep.subr.mxu0 0.0
  %1889 = vmatpush1.msra.mxu0 0.0
  %1890 = vmatprep.subr.mxu0 0.0
  %1891 = vmatpush1.msra.mxu0 0.0
  %1892 = vmatprep.subr.mxu0 0.0
  %1893 = vmatpush1.msra.mxu0 0.0
  %1894 = vmatprep.subr.mxu0 0.0
  %1895 = vmatpush1.msra.mxu0 0.0
  %1896 = vmatprep.subr.mxu0 0.0
  %1897 = vmatpush1.msra.mxu0 0.0
  %1898 = vmatprep.subr.mxu0 0.0
  %1899 = vmatpush1.msra.mxu0 0.0
  %1900 = vmatprep.subr.mxu0 0.0
  %1901 = vmatpush1.msra.mxu0 0.0
  %1902 = vmatprep.subr.mxu0 0.0
  %1903 = vmatpush1.msra.mxu0 0.0
  %1904 = vmatprep.subr.mxu0 0.0
  %1905 = vmatpush1.msra.mxu0 0.0
  %1906 = vmatprep.subr.mxu0 0.0
  %1907 = vmatpush1.msra.mxu0 0.0
  %1908 = vmatprep.subr.mxu0 0.0
  %1909 = vmatpush1.msra.mxu0 0.0
  %1910 = vmatprep.subr.mxu0 0.0
  %1911 = vmatpush1.msra.mxu0 0.0
  %1912 = vmatprep.subr.mxu0 0.0
  %1913 = vmatpush1.msra.mxu0 0.0
  %1914 = vmatprep.subr.mxu0 0.0
  %1915 = vmatpush1.msra.mxu0 0.0
  %1916 = vmatprep.subr.mxu0 0.0
  %1917 = vmatpush1.msra.mxu0 0.0
  %1918 = vmatprep.subr.mxu0 0.0
  %1919 = vmatpush1.msra.mxu0 0.0
  %1920 = vmatprep.subr.mxu0 0.0
  %1921 = vmatpush1.msra.mxu0 0.0
  %1922 = vmatprep.subr.mxu0 0.0
  %1923 = vmatpush1.msra.mxu0 0.0
  %1924 = vmatprep.subr.mxu0 0.0
  %1925 = vmatpush1.msra.mxu0 0.0
  %1926 = vmatprep.subr.mxu0 0.0
  %1927 = vmatpush1.msra.mxu0 0.0
  %1928 = vmatprep.subr.mxu0 0.0
  %1929 = vmatpush1.msra.mxu0 0.0
  %1930 = vmatprep.subr.mxu0 0.0
  %1931 = vmatpush1.msra.mxu0 0.0
  %1932 = vmatprep.subr.mxu0 0.0
  %1933 = vmatpush1.msra.mxu0 0.0
  %1934 = vmatprep.subr.mxu0 0.0
  %1935 = vmatpush1.msra.mxu0 0.0
  %1936 = vmatprep.subr.mxu0 0.0
  %1937 = vmatpush1.msra.mxu0 0.0
  %1938 = vmatprep.subr.mxu0 0.0
  %1939 = vmatpush1.msra.mxu0 0.0
  %1940 = vmatprep.subr.mxu0 0.0
  %1941 = vmatpush1.msra.mxu0 0.0
  %1942 = vmatprep.mubr.f32.mxu0 0.0
  %1943 = vmatmul.mubr.f32.gmra.mrb[0].mxu0 %v1795
  %v1944 = vpop.f32.mrb[0].mxu0
  %v1945 = vadd.f32 0.0, %v1944
  %v1946 = vpop.f32.mrb[0].mxu0
  %v1947 = vadd.f32 0.0, %v1946
  %1948 = vmatprep.mubr.f32.mxu0 0.0
  %1949 = vmatmul.mubr.f32.gmra.mrb[0].mxu0 %v1798
  %v1950 = vpop.f32.mrb[0].mxu0
  %v1951 = vadd.f32 0.0, %v1950
  %v1952 = vpop.f32.mrb[0].mxu0
  %v1953 = vadd.f32 0.0, %v1952
  %1954 = vmatprep.mubr.f32.mxu0 0.0
  %1955 = vmatmul.mubr.f32.gmra.mrb[0].mxu0 %v1801
  %v1956 = vpop.f32.mrb[0].mxu0
  %v1957 = vadd.f32 0.0, %v1956
  %v1958 = vpop.f32.mrb[0].mxu0
  %v1959 = vadd.f32 0.0, %v1958
  %1960 = vmatprep.mubr.f32.mxu0 0.0
  %1961 = vmatmul.mubr.f32.gmra.mrb[0].mxu0 %v1804
  %v1962 = vpop.f32.mrb[0].mxu0
  %v1963 = vadd.f32 0.0, %v1962
  %v1964 = vpop.f32.mrb[0].mxu0
  %v1965 = vadd.f32 0.0, %v1964
  %1966 = vmatprep.mubr.f32.mxu0 0.0
  %1967 = vmatmul.mubr.f32.gmra.mrb[0].mxu0 %v1807
  %v1968 = vpop.f32.mrb[0].mxu0
  %v1969 = vadd.f32 0.0, %v1968
  %v1970 = vpop.f32.mrb[0].mxu0
  %v1971 = vadd.f32 0.0, %v1970
  %1972 = vmatprep.mubr.f32.mxu0 0.0
  %1973 = vmatmul.mubr.f32.gmra.mrb[0].mxu0 %v1810
  %v1974 = vpop.f32.mrb[0].mxu0
  %v1975 = vadd.f32 0.0, %v1974
  %v1976 = vpop.f32.mrb[0].mxu0
  %v1977 = vadd.f32 0.0, %v1976
  %1978 = vmatprep.mubr.f32.mxu0 0.0
  %1979 = vmatmul.mubr.f32.gmra.mrb[0].mxu0 %v1813
  %v1980 = vpop.f32.mrb[0].mxu0
  %v1981 = vadd.f32 0.0, %v1980
  %v1982 = vpop.f32.mrb[0].mxu0
  %v1983 = vadd.f32 0.0, %v1982
  %1984 = vmatprep.mubr.f32.mxu0 0.0
  %1985 = vmatmul.mubr.f32.gmra.mrb[0].mxu0 %v1816
  %v1986 = vpop.f32.mrb[0].mxu0
  %v1987 = vadd.f32 0.0, %v1986
  %v1988 = vpop.f32.mrb[0].mxu0
  %v1989 = vadd.f32 0.0, %v1988
  %1990 = vmatprep.mubr.f32.mxu0 0.0
  %1991 = vmatmul.mubr.f32.gmra.mrb[0].mxu0 %v1819
  %v1992 = vpop.f32.mrb[0].mxu0
  %v1993 = vadd.f32 0.0, %v1992
  %v1994 = vpop.f32.mrb[0].mxu0
  %v1995 = vadd.f32 0.0, %v1994
  %1996 = vmatprep.mubr.f32.mxu0 0.0
  %1997 = vmatmul.mubr.f32.gmra.mrb[0].mxu0 %v1822
  %v1998 = vpop.f32.mrb[0].mxu0
  %v1999 = vadd.f32 0.0, %v1998
  %v2000 = vpop.f32.mrb[0].mxu0
  %v2001 = vadd.f32 0.0, %v2000
  %2002 = vmatprep.mubr.f32.mxu0 0.0
  %2003 = vmatmul.mubr.f32.gmra.mrb[0].mxu0 %v1825
  %v2004 = vpop.f32.mrb[0].mxu0
  %v2005 = vadd.f32 0.0, %v2004
  %v2006 = vpop.f32.mrb[0].mxu0
  %v2007 = vadd.f32 0.0, %v2006
  %2008 = vmatprep.mubr.f32.mxu0 0.0
  %2009 = vmatmul.mubr.f32.gmra.mrb[0].mxu0 %v1828
  %v2010 = vpop.f32.mrb[0].mxu0
  %v2011 = vadd.f32 0.0, %v2010
  %v2012 = vpop.f32.mrb[0].mxu0
  %v2013 = vadd.f32 0.0, %v2012
  %2014 = vmatprep.mubr.f32.mxu0 0.0
  %2015 = vmatmul.mubr.f32.gmra.mrb[0].mxu0 %v1831
  %v2016 = vpop.f32.mrb[0].mxu0
  %v2017 = vadd.f32 0.0, %v2016
  %v2018 = vpop.f32.mrb[0].mxu0
  %v2019 = vadd.f32 0.0, %v2018
  %2020 = vmatprep.mubr.f32.mxu0 0.0
  %2021 = vmatmul.mubr.f32.gmra.mrb[0].mxu0 %v1834
  %v2022 = vpop.f32.mrb[0].mxu0
  %v2023 = vadd.f32 0.0, %v2022
  %v2024 = vpop.f32.mrb[0].mxu0
  %v2025 = vadd.f32 0.0, %v2024
  %2026 = vmatprep.mubr.f32.mxu0 0.0
  %2027 = vmatmul.mubr.f32.gmra.mrb[0].mxu0 %v1837
  %v2028 = vpop.f32.mrb[0].mxu0
  %v2029 = vadd.f32 0.0, %v2028
  %v2030 = vpop.f32.mrb[0].mxu0
  %v2031 = vadd.f32 0.0, %v2030
  %2032 = vmatprep.mubr.f32.mxu0 0.0
  %2033 = vmatmul.mubr.f32.gmra.mrb[0].mxu0 %v1840
  %v2034 = vpop.f32.mrb[0].mxu0
  %v2035 = vadd.f32 0.0, %v2034
  %v2036 = vpop.f32.mrb[0].mxu0
  %v2037 = vadd.f32 0.0, %v2036
  %2038 = vmatprep.mubr.f32.mxu0 0.0
  %2039 = vmatmul.mubr.f32.gmra.mrb[0].mxu0 %v1843
  %v2040 = vpop.f32.mrb[0].mxu0
  %v2041 = vadd.f32 0.0, %v2040
  %v2042 = vpop.f32.mrb[0].mxu0
  %v2043 = vadd.f32 0.0, %v2042
  %2044 = vmatprep.mubr.f32.mxu0 0.0
  %2045 = vmatmul.mubr.f32.gmra.mrb[0].mxu0 %v1846
  %v2046 = vpop.f32.mrb[0].mxu0
  %v2047 = vadd.f32 0.0, %v2046
  %v2048 = vpop.f32.mrb[0].mxu0
  %v2049 = vadd.f32 0.0, %v2048
  %2050 = vmatprep.mubr.f32.mxu0 0.0
  %2051 = vmatmul.mubr.f32.gmra.mrb[0].mxu0 %v1849
  %v2052 = vpop.f32.mrb[0].mxu0
  %v2053 = vadd.f32 0.0, %v2052
  %v2054 = vpop.f32.mrb[0].mxu0
  %v2055 = vadd.f32 0.0, %v2054
  %2056 = vmatprep.mubr.f32.mxu0 0.0
  %2057 = vmatmul.mubr.f32.gmra.mrb[0].mxu0 %v1852
  %v2058 = vpop.f32.mrb[0].mxu0
  %v2059 = vadd.f32 0.0, %v2058
  %v2060 = vpop.f32.mrb[0].mxu0
  %v2061 = vadd.f32 0.0, %v2060
  %2062 = vmatprep.mubr.f32.mxu0 0.0
  %2063 = vmatmul.mubr.f32.gmra.mrb[0].mxu0 %v1855
  %v2064 = vpop.f32.mrb[0].mxu0
  %v2065 = vadd.f32 0.0, %v2064
  %v2066 = vpop.f32.mrb[0].mxu0
  %v2067 = vadd.f32 0.0, %v2066
  %2068 = vmatprep.mubr.f32.mxu0 0.0
  %2069 = vmatmul.mubr.f32.gmra.mrb[0].mxu0 %v1858
  %v2070 = vpop.f32.mrb[0].mxu0
  %v2071 = vadd.f32 0.0, %v2070
  %v2072 = vpop.f32.mrb[0].mxu0
  %v2073 = vadd.f32 0.0, %v2072
  %2074 = vmatprep.mubr.f32.mxu0 0.0
  %2075 = vmatmul.mubr.f32.gmra.mrb[0].mxu0 %v1861
  %v2076 = vpop.f32.mrb[0].mxu0
  %v2077 = vadd.f32 0.0, %v2076
  %v2078 = vpop.f32.mrb[0].mxu0
  %v2079 = vadd.f32 0.0, %v2078
  %2080 = vmatprep.mubr.f32.mxu0 0.0
  %2081 = vmatmul.mubr.f32.gmra.mrb[0].mxu0 %v1864
  %v2082 = vpop.f32.mrb[0].mxu0
  %v2083 = vadd.f32 0.0, %v2082
  %v2084 = vpop.f32.mrb[0].mxu0
  %v2085 = vadd.f32 0.0, %v2084
  %2086 = vmatprep.mubr.f32.mxu0 0.0
  %2087 = vmatmul.mubr.f32.gmra.mrb[0].mxu0 %v1867
  %v2088 = vpop.f32.mrb[0].mxu0
  %v2089 = vadd.f32 0.0, %v2088
  %v2090 = vpop.f32.mrb[0].mxu0
  %v2091 = vadd.f32 0.0, %v2090
  %2092 = vmatprep.mubr.f32.mxu0 0.0
  %2093 = vmatmul.mubr.f32.gmra.mrb[0].mxu0 %v1870
  %v2094 = vpop.f32.mrb[0].mxu0
  %v2095 = vadd.f32 0.0, %v2094
  %v2096 = vpop.f32.mrb[0].mxu0
  %v2097 = vadd.f32 0.0, %v2096
  %2098 = vmatprep.mubr.f32.mxu0 0.0
  %2099 = vmatmul.mubr.f32.gmra.mrb[0].mxu0 %v1873
  %v2100 = vpop.f32.mrb[0].mxu0
  %v2101 = vadd.f32 0.0, %v2100
  %v2102 = vpop.f32.mrb[0].mxu0
  %v2103 = vadd.f32 0.0, %v2102
  %2104 = vmatprep.mubr.f32.mxu0 0.0
  %2105 = vmatmul.mubr.f32.gmra.mrb[0].mxu0 %v1876
  %v2106 = vpop.f32.mrb[0].mxu0
  %v2107 = vadd.f32 0.0, %v2106
  %v2108 = vpop.f32.mrb[0].mxu0
  %v2109 = vadd.f32 0.0, %v2108
  %2110 = vdwg.mxu0
  %v2111 = vadd.f32 %v1619, %v1945
  %v2112 = vadd.f32 %v1621, %v1947
  %v2113 = vadd.f32 %v1625, %v1951
  %v2114 = vadd.f32 %v1627, %v1953
  %v2115 = vadd.f32 %v1631, %v1957
  %v2116 = vadd.f32 %v1633, %v1959
  %v2117 = vadd.f32 %v1637, %v1963
  %v2118 = vadd.f32 %v1639, %v1965
  %v2119 = vadd.f32 %v1643, %v1969
  %v2120 = vadd.f32 %v1645, %v1971
  %v2121 = vadd.f32 %v1649, %v1975
  %v2122 = vadd.f32 %v1651, %v1977
  %v2123 = vadd.f32 %v1655, %v1981
  %v2124 = vadd.f32 %v1657, %v1983
  %v2125 = vadd.f32 %v1661, %v1987
  %v2126 = vadd.f32 %v1663, %v1989
  %v2127 = vadd.f32 %v1667, %v1993
  %v2128 = vadd.f32 %v1669, %v1995
  %v2129 = vadd.f32 %v1673, %v1999
  %v2130 = vadd.f32 %v1675, %v2001
  %v2131 = vadd.f32 %v1679, %v2005
  %v2132 = vadd.f32 %v1681, %v2007
  %v2133 = vadd.f32 %v1685, %v2011
  %v2134 = vadd.f32 %v1687, %v2013
  %v2135 = vadd.f32 %v1691, %v2017
  %v2136 = vadd.f32 %v1693, %v2019
  %v2137 = vadd.f32 %v1697, %v2023
  %v2138 = vadd.f32 %v1699, %v2025
  %v2139 = vadd.f32 %v1703, %v2029
  %v2140 = vadd.f32 %v1705, %v2031
  %v2141 = vadd.f32 %v1709, %v2035
  %v2142 = vadd.f32 %v1711, %v2037
  %v2143 = vadd.f32 %v1715, %v2041
  %v2144 = vadd.f32 %v1717, %v2043
  %v2145 = vadd.f32 %v1721, %v2047
  %v2146 = vadd.f32 %v1723, %v2049
  %v2147 = vadd.f32 %v1727, %v2053
  %v2148 = vadd.f32 %v1729, %v2055
  %v2149 = vadd.f32 %v1733, %v2059
  %v2150 = vadd.f32 %v1735, %v2061
  %v2151 = vadd.f32 %v1739, %v2065
  %v2152 = vadd.f32 %v1741, %v2067
  %v2153 = vadd.f32 %v1745, %v2071
  %v2154 = vadd.f32 %v1747, %v2073
  %v2155 = vadd.f32 %v1751, %v2077
  %v2156 = vadd.f32 %v1753, %v2079
  %v2157 = vadd.f32 %v1757, %v2083
  %v2158 = vadd.f32 %v1759, %v2085
  %v2159 = vadd.f32 %v1763, %v2089
  %v2160 = vadd.f32 %v1765, %v2091
  %v2161 = vadd.f32 %v1769, %v2095
  %v2162 = vadd.f32 %v1771, %v2097
  %v2163 = vadd.f32 %v1775, %v2101
  %v2164 = vadd.f32 %v1777, %v2103
  %v2165 = vadd.f32 %v1781, %v2107
  %v2166 = vadd.f32 %v1783, %v2109
  %s2167 = scalar_lea.vmem %s2, 192
  %v2168 = vld [vmem:[%s2167] sm:$0xff]
  %v2169 = vld [vmem:[%s2167 + $0x8] sm:$0xff]
  %v2170 = vld [vmem:[%s2167 + $0x10] sm:$0xff]
  %v2171 = vld [vmem:[%s2167 + $0x18] sm:$0xff]
  %v2172 = vld [vmem:[%s2167 + $0x20] sm:$0xff]
  %v2173 = vld [vmem:[%s2167 + $0x28] sm:$0xff]
  %v2174 = vld [vmem:[%s2167 + $0x30] sm:$0xff]
  %v2175 = vld [vmem:[%s2167 + $0x38] sm:$0xff]
  %v2177 = vsel %vm1150, %v855, 0
  %v2180 = vsel %vm1150, %v860, 0
  %v2183 = vsel %vm1150, %v865, 0
  %v2186 = vsel %vm1150, %v870, 0
  %v2189 = vsel %vm1150, %v875, 0
  %v2192 = vsel %vm1150, %v880, 0
  %v2195 = vsel %vm1150, %v885, 0
  %v2198 = vsel %vm1150, %v890, 0
  %v2201 = vsel %vm1150, %v895, 0
  %v2204 = vsel %vm1150, %v900, 0
  %v2207 = vsel %vm1150, %v905, 0
  %v2210 = vsel %vm1150, %v910, 0
  %v2213 = vsel %vm1150, %v915, 0
  %v2216 = vsel %vm1150, %v920, 0
  %v2219 = vsel %vm1150, %v925, 0
  %v2222 = vsel %vm1150, %v930, 0
  %v2225 = vsel %vm1150, %v935, 0
  %v2228 = vsel %vm1150, %v940, 0
  %v2231 = vsel %vm1150, %v945, 0
  %v2234 = vsel %vm1150, %v950, 0
  %v2237 = vsel %vm1150, %v955, 0
  %v2240 = vsel %vm1150, %v960, 0
  %v2243 = vsel %vm1150, %v965, 0
  %v2246 = vsel %vm1150, %v970, 0
  %v2249 = vsel %vm1150, %v975, 0
  %v2252 = vsel %vm1150, %v980, 0
  %v2255 = vsel %vm1150, %v985, 0
  %v2258 = vsel %vm1150, %v990, 0
  %2260 = vmatprep.subr.mxu0 %v2169
  %2261 = vmatpush1.msra.mxu0 %v2168
  %2262 = vmatprep.subr.mxu0 %v2171
  %2263 = vmatpush1.msra.mxu0 %v2170
  %2264 = vmatprep.subr.mxu0 %v2173
  %2265 = vmatpush1.msra.mxu0 %v2172
  %2266 = vmatprep.subr.mxu0 %v2175
  %2267 = vmatpush1.msra.mxu0 %v2174
  %2268 = vmatprep.subr.mxu0 0.0
  %2269 = vmatpush1.msra.mxu0 0.0
  %2270 = vmatprep.subr.mxu0 0.0
  %2271 = vmatpush1.msra.mxu0 0.0
  %2272 = vmatprep.subr.mxu0 0.0
  %2273 = vmatpush1.msra.mxu0 0.0
  %2274 = vmatprep.subr.mxu0 0.0
  %2275 = vmatpush1.msra.mxu0 0.0
  %2276 = vmatprep.subr.mxu0 0.0
  %2277 = vmatpush1.msra.mxu0 0.0
  %2278 = vmatprep.subr.mxu0 0.0
  %2279 = vmatpush1.msra.mxu0 0.0
  %2280 = vmatprep.subr.mxu0 0.0
  %2281 = vmatpush1.msra.mxu0 0.0
  %2282 = vmatprep.subr.mxu0 0.0
  %2283 = vmatpush1.msra.mxu0 0.0
  %2284 = vmatprep.subr.mxu0 0.0
  %2285 = vmatpush1.msra.mxu0 0.0
  %2286 = vmatprep.subr.mxu0 0.0
  %2287 = vmatpush1.msra.mxu0 0.0
  %2288 = vmatprep.subr.mxu0 0.0
  %2289 = vmatpush1.msra.mxu0 0.0
  %2290 = vmatprep.subr.mxu0 0.0
  %2291 = vmatpush1.msra.mxu0 0.0
  %2292 = vmatprep.subr.mxu0 0.0
  %2293 = vmatpush1.msra.mxu0 0.0
  %2294 = vmatprep.subr.mxu0 0.0
  %2295 = vmatpush1.msra.mxu0 0.0
  %2296 = vmatprep.subr.mxu0 0.0
  %2297 = vmatpush1.msra.mxu0 0.0
  %2298 = vmatprep.subr.mxu0 0.0
  %2299 = vmatpush1.msra.mxu0 0.0
  %2300 = vmatprep.subr.mxu0 0.0
  %2301 = vmatpush1.msra.mxu0 0.0
  %2302 = vmatprep.subr.mxu0 0.0
  %2303 = vmatpush1.msra.mxu0 0.0
  %2304 = vmatprep.subr.mxu0 0.0
  %2305 = vmatpush1.msra.mxu0 0.0
  %2306 = vmatprep.subr.mxu0 0.0
  %2307 = vmatpush1.msra.mxu0 0.0
  %2308 = vmatprep.subr.mxu0 0.0
  %2309 = vmatpush1.msra.mxu0 0.0
  %2310 = vmatprep.subr.mxu0 0.0
  %2311 = vmatpush1.msra.mxu0 0.0
  %2312 = vmatprep.subr.mxu0 0.0
  %2313 = vmatpush1.msra.mxu0 0.0
  %2314 = vmatprep.subr.mxu0 0.0
  %2315 = vmatpush1.msra.mxu0 0.0
  %2316 = vmatprep.subr.mxu0 0.0
  %2317 = vmatpush1.msra.mxu0 0.0
  %2318 = vmatprep.subr.mxu0 0.0
  %2319 = vmatpush1.msra.mxu0 0.0
  %2320 = vmatprep.subr.mxu0 0.0
  %2321 = vmatpush1.msra.mxu0 0.0
  %2322 = vmatprep.subr.mxu0 0.0
  %2323 = vmatpush1.msra.mxu0 0.0
  %2324 = vmatprep.mubr.f32.mxu0 0.0
  %2325 = vmatmul.mubr.f32.gmra.mrb[0].mxu0 %v2177
  %v2326 = vpop.f32.mrb[0].mxu0
  %v2327 = vadd.f32 0.0, %v2326
  %v2328 = vpop.f32.mrb[0].mxu0
  %v2329 = vadd.f32 0.0, %v2328
  %2330 = vmatprep.mubr.f32.mxu0 0.0
  %2331 = vmatmul.mubr.f32.gmra.mrb[0].mxu0 %v2180
  %v2332 = vpop.f32.mrb[0].mxu0
  %v2333 = vadd.f32 0.0, %v2332
  %v2334 = vpop.f32.mrb[0].mxu0
  %v2335 = vadd.f32 0.0, %v2334
  %2336 = vmatprep.mubr.f32.mxu0 0.0
  %2337 = vmatmul.mubr.f32.gmra.mrb[0].mxu0 %v2183
  %v2338 = vpop.f32.mrb[0].mxu0
  %v2339 = vadd.f32 0.0, %v2338
  %v2340 = vpop.f32.mrb[0].mxu0
  %v2341 = vadd.f32 0.0, %v2340
  %2342 = vmatprep.mubr.f32.mxu0 0.0
  %2343 = vmatmul.mubr.f32.gmra.mrb[0].mxu0 %v2186
  %v2344 = vpop.f32.mrb[0].mxu0
  %v2345 = vadd.f32 0.0, %v2344
  %v2346 = vpop.f32.mrb[0].mxu0
  %v2347 = vadd.f32 0.0, %v2346
  %2348 = vmatprep.mubr.f32.mxu0 0.0
  %2349 = vmatmul.mubr.f32.gmra.mrb[0].mxu0 %v2189
  %v2350 = vpop.f32.mrb[0].mxu0
  %v2351 = vadd.f32 0.0, %v2350
  %v2352 = vpop.f32.mrb[0].mxu0
  %v2353 = vadd.f32 0.0, %v2352
  %2354 = vmatprep.mubr.f32.mxu0 0.0
  %2355 = vmatmul.mubr.f32.gmra.mrb[0].mxu0 %v2192
  %v2356 = vpop.f32.mrb[0].mxu0
  %v2357 = vadd.f32 0.0, %v2356
  %v2358 = vpop.f32.mrb[0].mxu0
  %v2359 = vadd.f32 0.0, %v2358
  %2360 = vmatprep.mubr.f32.mxu0 0.0
  %2361 = vmatmul.mubr.f32.gmra.mrb[0].mxu0 %v2195
  %v2362 = vpop.f32.mrb[0].mxu0
  %v2363 = vadd.f32 0.0, %v2362
  %v2364 = vpop.f32.mrb[0].mxu0
  %v2365 = vadd.f32 0.0, %v2364
  %2366 = vmatprep.mubr.f32.mxu0 0.0
  %2367 = vmatmul.mubr.f32.gmra.mrb[0].mxu0 %v2198
  %v2368 = vpop.f32.mrb[0].mxu0
  %v2369 = vadd.f32 0.0, %v2368
  %v2370 = vpop.f32.mrb[0].mxu0
  %v2371 = vadd.f32 0.0, %v2370
  %2372 = vmatprep.mubr.f32.mxu0 0.0
  %2373 = vmatmul.mubr.f32.gmra.mrb[0].mxu0 %v2201
  %v2374 = vpop.f32.mrb[0].mxu0
  %v2375 = vadd.f32 0.0, %v2374
  %v2376 = vpop.f32.mrb[0].mxu0
  %v2377 = vadd.f32 0.0, %v2376
  %2378 = vmatprep.mubr.f32.mxu0 0.0
  %2379 = vmatmul.mubr.f32.gmra.mrb[0].mxu0 %v2204
  %v2380 = vpop.f32.mrb[0].mxu0
  %v2381 = vadd.f32 0.0, %v2380
  %v2382 = vpop.f32.mrb[0].mxu0
  %v2383 = vadd.f32 0.0, %v2382
  %2384 = vmatprep.mubr.f32.mxu0 0.0
  %2385 = vmatmul.mubr.f32.gmra.mrb[0].mxu0 %v2207
  %v2386 = vpop.f32.mrb[0].mxu0
  %v2387 = vadd.f32 0.0, %v2386
  %v2388 = vpop.f32.mrb[0].mxu0
  %v2389 = vadd.f32 0.0, %v2388
  %2390 = vmatprep.mubr.f32.mxu0 0.0
  %2391 = vmatmul.mubr.f32.gmra.mrb[0].mxu0 %v2210
  %v2392 = vpop.f32.mrb[0].mxu0
  %v2393 = vadd.f32 0.0, %v2392
  %v2394 = vpop.f32.mrb[0].mxu0
  %v2395 = vadd.f32 0.0, %v2394
  %2396 = vmatprep.mubr.f32.mxu0 0.0
  %2397 = vmatmul.mubr.f32.gmra.mrb[0].mxu0 %v2213
  %v2398 = vpop.f32.mrb[0].mxu0
  %v2399 = vadd.f32 0.0, %v2398
  %v2400 = vpop.f32.mrb[0].mxu0
  %v2401 = vadd.f32 0.0, %v2400
  %2402 = vmatprep.mubr.f32.mxu0 0.0
  %2403 = vmatmul.mubr.f32.gmra.mrb[0].mxu0 %v2216
  %v2404 = vpop.f32.mrb[0].mxu0
  %v2405 = vadd.f32 0.0, %v2404
  %v2406 = vpop.f32.mrb[0].mxu0
  %v2407 = vadd.f32 0.0, %v2406
  %2408 = vmatprep.mubr.f32.mxu0 0.0
  %2409 = vmatmul.mubr.f32.gmra.mrb[0].mxu0 %v2219
  %v2410 = vpop.f32.mrb[0].mxu0
  %v2411 = vadd.f32 0.0, %v2410
  %v2412 = vpop.f32.mrb[0].mxu0
  %v2413 = vadd.f32 0.0, %v2412
  %2414 = vmatprep.mubr.f32.mxu0 0.0
  %2415 = vmatmul.mubr.f32.gmra.mrb[0].mxu0 %v2222
  %v2416 = vpop.f32.mrb[0].mxu0
  %v2417 = vadd.f32 0.0, %v2416
  %v2418 = vpop.f32.mrb[0].mxu0
  %v2419 = vadd.f32 0.0, %v2418
  %2420 = vmatprep.mubr.f32.mxu0 0.0
  %2421 = vmatmul.mubr.f32.gmra.mrb[0].mxu0 %v2225
  %v2422 = vpop.f32.mrb[0].mxu0
  %v2423 = vadd.f32 0.0, %v2422
  %v2424 = vpop.f32.mrb[0].mxu0
  %v2425 = vadd.f32 0.0, %v2424
  %2426 = vmatprep.mubr.f32.mxu0 0.0
  %2427 = vmatmul.mubr.f32.gmra.mrb[0].mxu0 %v2228
  %v2428 = vpop.f32.mrb[0].mxu0
  %v2429 = vadd.f32 0.0, %v2428
  %v2430 = vpop.f32.mrb[0].mxu0
  %v2431 = vadd.f32 0.0, %v2430
  %2432 = vmatprep.mubr.f32.mxu0 0.0
  %2433 = vmatmul.mubr.f32.gmra.mrb[0].mxu0 %v2231
  %v2434 = vpop.f32.mrb[0].mxu0
  %v2435 = vadd.f32 0.0, %v2434
  %v2436 = vpop.f32.mrb[0].mxu0
  %v2437 = vadd.f32 0.0, %v2436
  %2438 = vmatprep.mubr.f32.mxu0 0.0
  %2439 = vmatmul.mubr.f32.gmra.mrb[0].mxu0 %v2234
  %v2440 = vpop.f32.mrb[0].mxu0
  %v2441 = vadd.f32 0.0, %v2440
  %v2442 = vpop.f32.mrb[0].mxu0
  %v2443 = vadd.f32 0.0, %v2442
  %2444 = vmatprep.mubr.f32.mxu0 0.0
  %2445 = vmatmul.mubr.f32.gmra.mrb[0].mxu0 %v2237
  %v2446 = vpop.f32.mrb[0].mxu0
  %v2447 = vadd.f32 0.0, %v2446
  %v2448 = vpop.f32.mrb[0].mxu0
  %v2449 = vadd.f32 0.0, %v2448
  %2450 = vmatprep.mubr.f32.mxu0 0.0
  %2451 = vmatmul.mubr.f32.gmra.mrb[0].mxu0 %v2240
  %v2452 = vpop.f32.mrb[0].mxu0
  %v2453 = vadd.f32 0.0, %v2452
  %v2454 = vpop.f32.mrb[0].mxu0
  %v2455 = vadd.f32 0.0, %v2454
  %2456 = vmatprep.mubr.f32.mxu0 0.0
  %2457 = vmatmul.mubr.f32.gmra.mrb[0].mxu0 %v2243
  %v2458 = vpop.f32.mrb[0].mxu0
  %v2459 = vadd.f32 0.0, %v2458
  %v2460 = vpop.f32.mrb[0].mxu0
  %v2461 = vadd.f32 0.0, %v2460
  %2462 = vmatprep.mubr.f32.mxu0 0.0
  %2463 = vmatmul.mubr.f32.gmra.mrb[0].mxu0 %v2246
  %v2464 = vpop.f32.mrb[0].mxu0
  %v2465 = vadd.f32 0.0, %v2464
  %v2466 = vpop.f32.mrb[0].mxu0
  %v2467 = vadd.f32 0.0, %v2466
  %2468 = vmatprep.mubr.f32.mxu0 0.0
  %2469 = vmatmul.mubr.f32.gmra.mrb[0].mxu0 %v2249
  %v2470 = vpop.f32.mrb[0].mxu0
  %v2471 = vadd.f32 0.0, %v2470
  %v2472 = vpop.f32.mrb[0].mxu0
  %v2473 = vadd.f32 0.0, %v2472
  %2474 = vmatprep.mubr.f32.mxu0 0.0
  %2475 = vmatmul.mubr.f32.gmra.mrb[0].mxu0 %v2252
  %v2476 = vpop.f32.mrb[0].mxu0
  %v2477 = vadd.f32 0.0, %v2476
  %v2478 = vpop.f32.mrb[0].mxu0
  %v2479 = vadd.f32 0.0, %v2478
  %2480 = vmatprep.mubr.f32.mxu0 0.0
  %2481 = vmatmul.mubr.f32.gmra.mrb[0].mxu0 %v2255
  %v2482 = vpop.f32.mrb[0].mxu0
  %v2483 = vadd.f32 0.0, %v2482
  %v2484 = vpop.f32.mrb[0].mxu0
  %v2485 = vadd.f32 0.0, %v2484
  %2486 = vmatprep.mubr.f32.mxu0 0.0
  %2487 = vmatmul.mubr.f32.gmra.mrb[0].mxu0 %v2258
  %v2488 = vpop.f32.mrb[0].mxu0
  %v2489 = vadd.f32 0.0, %v2488
  %v2490 = vpop.f32.mrb[0].mxu0
  %v2491 = vadd.f32 0.0, %v2490
  %2492 = vdwg.mxu0
  %v2493 = vadd.f32 %v2111, %v2327
  %v2494 = vadd.f32 %v2112, %v2329
  %v2495 = vadd.f32 %v2113, %v2333
  %v2496 = vadd.f32 %v2114, %v2335
  %v2497 = vadd.f32 %v2115, %v2339
  %v2498 = vadd.f32 %v2116, %v2341
  %v2499 = vadd.f32 %v2117, %v2345
  %v2500 = vadd.f32 %v2118, %v2347
  %v2501 = vadd.f32 %v2119, %v2351
  %v2502 = vadd.f32 %v2120, %v2353
  %v2503 = vadd.f32 %v2121, %v2357
  %v2504 = vadd.f32 %v2122, %v2359
  %v2505 = vadd.f32 %v2123, %v2363
  %v2506 = vadd.f32 %v2124, %v2365
  %v2507 = vadd.f32 %v2125, %v2369
  %v2508 = vadd.f32 %v2126, %v2371
  %v2509 = vadd.f32 %v2127, %v2375
  %v2510 = vadd.f32 %v2128, %v2377
  %v2511 = vadd.f32 %v2129, %v2381
  %v2512 = vadd.f32 %v2130, %v2383
  %v2513 = vadd.f32 %v2131, %v2387
  %v2514 = vadd.f32 %v2132, %v2389
  %v2515 = vadd.f32 %v2133, %v2393
  %v2516 = vadd.f32 %v2134, %v2395
  %v2517 = vadd.f32 %v2135, %v2399
  %v2518 = vadd.f32 %v2136, %v2401
  %v2519 = vadd.f32 %v2137, %v2405
  %v2520 = vadd.f32 %v2138, %v2407
  %v2521 = vadd.f32 %v2139, %v2411
  %v2522 = vadd.f32 %v2140, %v2413
  %v2523 = vadd.f32 %v2141, %v2417
  %v2524 = vadd.f32 %v2142, %v2419
  %v2525 = vadd.f32 %v2143, %v2423
  %v2526 = vadd.f32 %v2144, %v2425
  %v2527 = vadd.f32 %v2145, %v2429
  %v2528 = vadd.f32 %v2146, %v2431
  %v2529 = vadd.f32 %v2147, %v2435
  %v2530 = vadd.f32 %v2148, %v2437
  %v2531 = vadd.f32 %v2149, %v2441
  %v2532 = vadd.f32 %v2150, %v2443
  %v2533 = vadd.f32 %v2151, %v2447
  %v2534 = vadd.f32 %v2152, %v2449
  %v2535 = vadd.f32 %v2153, %v2453
  %v2536 = vadd.f32 %v2154, %v2455
  %v2537 = vadd.f32 %v2155, %v2459
  %v2538 = vadd.f32 %v2156, %v2461
  %v2539 = vadd.f32 %v2157, %v2465
  %v2540 = vadd.f32 %v2158, %v2467
  %v2541 = vadd.f32 %v2159, %v2471
  %v2542 = vadd.f32 %v2160, %v2473
  %v2543 = vadd.f32 %v2161, %v2477
  %v2544 = vadd.f32 %v2162, %v2479
  %v2545 = vadd.f32 %v2163, %v2483
  %v2546 = vadd.f32 %v2164, %v2485
  %v2547 = vadd.f32 %v2165, %v2489
  %v2548 = vadd.f32 %v2166, %v2491
  %s2549 = scalar_lea.vmem %s2, 256
  %v2550 = vld [vmem:[%s2549] sm:$0xff]
  %v2551 = vld [vmem:[%s2549 + $0x8] sm:$0xff]
  %v2552 = vld [vmem:[%s2549 + $0x10] sm:$0xff]
  %v2553 = vld [vmem:[%s2549 + $0x18] sm:$0xff]
  %v2554 = vld [vmem:[%s2549 + $0x20] sm:$0xff]
  %v2555 = vld [vmem:[%s2549 + $0x28] sm:$0xff]
  %v2556 = vld [vmem:[%s2549 + $0x30] sm:$0xff]
  %v2557 = vld [vmem:[%s2549 + $0x38] sm:$0xff]
  %v2559 = vsel %vm1150, %v995, 0
  %v2562 = vsel %vm1150, %v1000, 0
  %v2565 = vsel %vm1150, %v1005, 0
  %v2568 = vsel %vm1150, %v1010, 0
  %v2571 = vsel %vm1150, %v1015, 0
  %v2574 = vsel %vm1150, %v1020, 0
  %v2577 = vsel %vm1150, %v1025, 0
  %v2580 = vsel %vm1150, %v1030, 0
  %v2583 = vsel %vm1150, %v1035, 0
  %v2586 = vsel %vm1150, %v1040, 0
  %v2589 = vsel %vm1150, %v1045, 0
  %v2592 = vsel %vm1150, %v1050, 0
  %v2595 = vsel %vm1150, %v1055, 0
  %v2598 = vsel %vm1150, %v1060, 0
  %v2601 = vsel %vm1150, %v1065, 0
  %v2604 = vsel %vm1150, %v1070, 0
  %v2607 = vsel %vm1150, %v1075, 0
  %v2610 = vsel %vm1150, %v1080, 0
  %v2613 = vsel %vm1150, %v1085, 0
  %v2616 = vsel %vm1150, %v1090, 0
  %v2619 = vsel %vm1150, %v1095, 0
  %v2622 = vsel %vm1150, %v1100, 0
  %v2625 = vsel %vm1150, %v1105, 0
  %v2628 = vsel %vm1150, %v1110, 0
  %v2631 = vsel %vm1150, %v1115, 0
  %v2634 = vsel %vm1150, %v1120, 0
  %v2637 = vsel %vm1150, %v1125, 0
  %v2640 = vsel %vm1150, %v1130, 0
  %2642 = vmatprep.subr.mxu0 %v2551
  %2643 = vmatpush1.msra.mxu0 %v2550
  %2644 = vmatprep.subr.mxu0 %v2553
  %2645 = vmatpush1.msra.mxu0 %v2552
  %2646 = vmatprep.subr.mxu0 %v2555
  %2647 = vmatpush1.msra.mxu0 %v2554
  %2648 = vmatprep.subr.mxu0 %v2557
  %2649 = vmatpush1.msra.mxu0 %v2556
  %2650 = vmatprep.subr.mxu0 0.0
  %2651 = vmatpush1.msra.mxu0 0.0
  %2652 = vmatprep.subr.mxu0 0.0
  %2653 = vmatpush1.msra.mxu0 0.0
  %2654 = vmatprep.subr.mxu0 0.0
  %2655 = vmatpush1.msra.mxu0 0.0
  %2656 = vmatprep.subr.mxu0 0.0
  %2657 = vmatpush1.msra.mxu0 0.0
  %2658 = vmatprep.subr.mxu0 0.0
  %2659 = vmatpush1.msra.mxu0 0.0
  %2660 = vmatprep.subr.mxu0 0.0
  %2661 = vmatpush1.msra.mxu0 0.0
  %2662 = vmatprep.subr.mxu0 0.0
  %2663 = vmatpush1.msra.mxu0 0.0
  %2664 = vmatprep.subr.mxu0 0.0
  %2665 = vmatpush1.msra.mxu0 0.0
  %2666 = vmatprep.subr.mxu0 0.0
  %2667 = vmatpush1.msra.mxu0 0.0
  %2668 = vmatprep.subr.mxu0 0.0
  %2669 = vmatpush1.msra.mxu0 0.0
  %2670 = vmatprep.subr.mxu0 0.0
  %2671 = vmatpush1.msra.mxu0 0.0
  %2672 = vmatprep.subr.mxu0 0.0
  %2673 = vmatpush1.msra.mxu0 0.0
  %2674 = vmatprep.subr.mxu0 0.0
  %2675 = vmatpush1.msra.mxu0 0.0
  %2676 = vmatprep.subr.mxu0 0.0
  %2677 = vmatpush1.msra.mxu0 0.0
  %2678 = vmatprep.subr.mxu0 0.0
  %2679 = vmatpush1.msra.mxu0 0.0
  %2680 = vmatprep.subr.mxu0 0.0
  %2681 = vmatpush1.msra.mxu0 0.0
  %2682 = vmatprep.subr.mxu0 0.0
  %2683 = vmatpush1.msra.mxu0 0.0
  %2684 = vmatprep.subr.mxu0 0.0
  %2685 = vmatpush1.msra.mxu0 0.0
  %2686 = vmatprep.subr.mxu0 0.0
  %2687 = vmatpush1.msra.mxu0 0.0
  %2688 = vmatprep.subr.mxu0 0.0
  %2689 = vmatpush1.msra.mxu0 0.0
  %2690 = vmatprep.subr.mxu0 0.0
  %2691 = vmatpush1.msra.mxu0 0.0
  %2692 = vmatprep.subr.mxu0 0.0
  %2693 = vmatpush1.msra.mxu0 0.0
  %2694 = vmatprep.subr.mxu0 0.0
  %2695 = vmatpush1.msra.mxu0 0.0
  %2696 = vmatprep.subr.mxu0 0.0
  %2697 = vmatpush1.msra.mxu0 0.0
  %2698 = vmatprep.subr.mxu0 0.0
  %2699 = vmatpush1.msra.mxu0 0.0
  %2700 = vmatprep.subr.mxu0 0.0
  %2701 = vmatpush1.msra.mxu0 0.0
  %2702 = vmatprep.subr.mxu0 0.0
  %2703 = vmatpush1.msra.mxu0 0.0
  %2704 = vmatprep.subr.mxu0 0.0
  %2705 = vmatpush1.msra.mxu0 0.0
  %2706 = vmatprep.mubr.f32.mxu0 0.0
  %2707 = vmatmul.mubr.f32.gmra.mrb[0].mxu0 %v2559
  %v2708 = vpop.f32.mrb[0].mxu0
  %v2709 = vadd.f32 0.0, %v2708
  %v2710 = vpop.f32.mrb[0].mxu0
  %v2711 = vadd.f32 0.0, %v2710
  %2712 = vmatprep.mubr.f32.mxu0 0.0
  %2713 = vmatmul.mubr.f32.gmra.mrb[0].mxu0 %v2562
  %v2714 = vpop.f32.mrb[0].mxu0
  %v2715 = vadd.f32 0.0, %v2714
  %v2716 = vpop.f32.mrb[0].mxu0
  %v2717 = vadd.f32 0.0, %v2716
  %2718 = vmatprep.mubr.f32.mxu0 0.0
  %2719 = vmatmul.mubr.f32.gmra.mrb[0].mxu0 %v2565
  %v2720 = vpop.f32.mrb[0].mxu0
  %v2721 = vadd.f32 0.0, %v2720
  %v2722 = vpop.f32.mrb[0].mxu0
  %v2723 = vadd.f32 0.0, %v2722
  %2724 = vmatprep.mubr.f32.mxu0 0.0
  %2725 = vmatmul.mubr.f32.gmra.mrb[0].mxu0 %v2568
  %v2726 = vpop.f32.mrb[0].mxu0
  %v2727 = vadd.f32 0.0, %v2726
  %v2728 = vpop.f32.mrb[0].mxu0
  %v2729 = vadd.f32 0.0, %v2728
  %2730 = vmatprep.mubr.f32.mxu0 0.0
  %2731 = vmatmul.mubr.f32.gmra.mrb[0].mxu0 %v2571
  %v2732 = vpop.f32.mrb[0].mxu0
  %v2733 = vadd.f32 0.0, %v2732
  %v2734 = vpop.f32.mrb[0].mxu0
  %v2735 = vadd.f32 0.0, %v2734
  %2736 = vmatprep.mubr.f32.mxu0 0.0
  %2737 = vmatmul.mubr.f32.gmra.mrb[0].mxu0 %v2574
  %v2738 = vpop.f32.mrb[0].mxu0
  %v2739 = vadd.f32 0.0, %v2738
  %v2740 = vpop.f32.mrb[0].mxu0
  %v2741 = vadd.f32 0.0, %v2740
  %2742 = vmatprep.mubr.f32.mxu0 0.0
  %2743 = vmatmul.mubr.f32.gmra.mrb[0].mxu0 %v2577
  %v2744 = vpop.f32.mrb[0].mxu0
  %v2745 = vadd.f32 0.0, %v2744
  %v2746 = vpop.f32.mrb[0].mxu0
  %v2747 = vadd.f32 0.0, %v2746
  %2748 = vmatprep.mubr.f32.mxu0 0.0
  %2749 = vmatmul.mubr.f32.gmra.mrb[0].mxu0 %v2580
  %v2750 = vpop.f32.mrb[0].mxu0
  %v2751 = vadd.f32 0.0, %v2750
  %v2752 = vpop.f32.mrb[0].mxu0
  %v2753 = vadd.f32 0.0, %v2752
  %2754 = vmatprep.mubr.f32.mxu0 0.0
  %2755 = vmatmul.mubr.f32.gmra.mrb[0].mxu0 %v2583
  %v2756 = vpop.f32.mrb[0].mxu0
  %v2757 = vadd.f32 0.0, %v2756
  %v2758 = vpop.f32.mrb[0].mxu0
  %v2759 = vadd.f32 0.0, %v2758
  %2760 = vmatprep.mubr.f32.mxu0 0.0
  %2761 = vmatmul.mubr.f32.gmra.mrb[0].mxu0 %v2586
  %v2762 = vpop.f32.mrb[0].mxu0
  %v2763 = vadd.f32 0.0, %v2762
  %v2764 = vpop.f32.mrb[0].mxu0
  %v2765 = vadd.f32 0.0, %v2764
  %2766 = vmatprep.mubr.f32.mxu0 0.0
  %2767 = vmatmul.mubr.f32.gmra.mrb[0].mxu0 %v2589
  %v2768 = vpop.f32.mrb[0].mxu0
  %v2769 = vadd.f32 0.0, %v2768
  %v2770 = vpop.f32.mrb[0].mxu0
  %v2771 = vadd.f32 0.0, %v2770
  %2772 = vmatprep.mubr.f32.mxu0 0.0
  %2773 = vmatmul.mubr.f32.gmra.mrb[0].mxu0 %v2592
  %v2774 = vpop.f32.mrb[0].mxu0
  %v2775 = vadd.f32 0.0, %v2774
  %v2776 = vpop.f32.mrb[0].mxu0
  %v2777 = vadd.f32 0.0, %v2776
  %2778 = vmatprep.mubr.f32.mxu0 0.0
  %2779 = vmatmul.mubr.f32.gmra.mrb[0].mxu0 %v2595
  %v2780 = vpop.f32.mrb[0].mxu0
  %v2781 = vadd.f32 0.0, %v2780
  %v2782 = vpop.f32.mrb[0].mxu0
  %v2783 = vadd.f32 0.0, %v2782
  %2784 = vmatprep.mubr.f32.mxu0 0.0
  %2785 = vmatmul.mubr.f32.gmra.mrb[0].mxu0 %v2598
  %v2786 = vpop.f32.mrb[0].mxu0
  %v2787 = vadd.f32 0.0, %v2786
  %v2788 = vpop.f32.mrb[0].mxu0
  %v2789 = vadd.f32 0.0, %v2788
  %2790 = vmatprep.mubr.f32.mxu0 0.0
  %2791 = vmatmul.mubr.f32.gmra.mrb[0].mxu0 %v2601
  %v2792 = vpop.f32.mrb[0].mxu0
  %v2793 = vadd.f32 0.0, %v2792
  %v2794 = vpop.f32.mrb[0].mxu0
  %v2795 = vadd.f32 0.0, %v2794
  %2796 = vmatprep.mubr.f32.mxu0 0.0
  %2797 = vmatmul.mubr.f32.gmra.mrb[0].mxu0 %v2604
  %v2798 = vpop.f32.mrb[0].mxu0
  %v2799 = vadd.f32 0.0, %v2798
  %v2800 = vpop.f32.mrb[0].mxu0
  %v2801 = vadd.f32 0.0, %v2800
  %2802 = vmatprep.mubr.f32.mxu0 0.0
  %2803 = vmatmul.mubr.f32.gmra.mrb[0].mxu0 %v2607
  %v2804 = vpop.f32.mrb[0].mxu0
  %v2805 = vadd.f32 0.0, %v2804
  %v2806 = vpop.f32.mrb[0].mxu0
  %v2807 = vadd.f32 0.0, %v2806
  %2808 = vmatprep.mubr.f32.mxu0 0.0
  %2809 = vmatmul.mubr.f32.gmra.mrb[0].mxu0 %v2610
  %v2810 = vpop.f32.mrb[0].mxu0
  %v2811 = vadd.f32 0.0, %v2810
  %v2812 = vpop.f32.mrb[0].mxu0
  %v2813 = vadd.f32 0.0, %v2812
  %2814 = vmatprep.mubr.f32.mxu0 0.0
  %2815 = vmatmul.mubr.f32.gmra.mrb[0].mxu0 %v2613
  %v2816 = vpop.f32.mrb[0].mxu0
  %v2817 = vadd.f32 0.0, %v2816
  %v2818 = vpop.f32.mrb[0].mxu0
  %v2819 = vadd.f32 0.0, %v2818
  %2820 = vmatprep.mubr.f32.mxu0 0.0
  %2821 = vmatmul.mubr.f32.gmra.mrb[0].mxu0 %v2616
  %v2822 = vpop.f32.mrb[0].mxu0
  %v2823 = vadd.f32 0.0, %v2822
  %v2824 = vpop.f32.mrb[0].mxu0
  %v2825 = vadd.f32 0.0, %v2824
  %2826 = vmatprep.mubr.f32.mxu0 0.0
  %2827 = vmatmul.mubr.f32.gmra.mrb[0].mxu0 %v2619
  %v2828 = vpop.f32.mrb[0].mxu0
  %v2829 = vadd.f32 0.0, %v2828
  %v2830 = vpop.f32.mrb[0].mxu0
  %v2831 = vadd.f32 0.0, %v2830
  %2832 = vmatprep.mubr.f32.mxu0 0.0
  %2833 = vmatmul.mubr.f32.gmra.mrb[0].mxu0 %v2622
  %v2834 = vpop.f32.mrb[0].mxu0
  %v2835 = vadd.f32 0.0, %v2834
  %v2836 = vpop.f32.mrb[0].mxu0
  %v2837 = vadd.f32 0.0, %v2836
  %2838 = vmatprep.mubr.f32.mxu0 0.0
  %2839 = vmatmul.mubr.f32.gmra.mrb[0].mxu0 %v2625
  %v2840 = vpop.f32.mrb[0].mxu0
  %v2841 = vadd.f32 0.0, %v2840
  %v2842 = vpop.f32.mrb[0].mxu0
  %v2843 = vadd.f32 0.0, %v2842
  %2844 = vmatprep.mubr.f32.mxu0 0.0
  %2845 = vmatmul.mubr.f32.gmra.mrb[0].mxu0 %v2628
  %v2846 = vpop.f32.mrb[0].mxu0
  %v2847 = vadd.f32 0.0, %v2846
  %v2848 = vpop.f32.mrb[0].mxu0
  %v2849 = vadd.f32 0.0, %v2848
  %2850 = vmatprep.mubr.f32.mxu0 0.0
  %2851 = vmatmul.mubr.f32.gmra.mrb[0].mxu0 %v2631
  %v2852 = vpop.f32.mrb[0].mxu0
  %v2853 = vadd.f32 0.0, %v2852
  %v2854 = vpop.f32.mrb[0].mxu0
  %v2855 = vadd.f32 0.0, %v2854
  %2856 = vmatprep.mubr.f32.mxu0 0.0
  %2857 = vmatmul.mubr.f32.gmra.mrb[0].mxu0 %v2634
  %v2858 = vpop.f32.mrb[0].mxu0
  %v2859 = vadd.f32 0.0, %v2858
  %v2860 = vpop.f32.mrb[0].mxu0
  %v2861 = vadd.f32 0.0, %v2860
  %2862 = vmatprep.mubr.f32.mxu0 0.0
  %2863 = vmatmul.mubr.f32.gmra.mrb[0].mxu0 %v2637
  %v2864 = vpop.f32.mrb[0].mxu0
  %v2865 = vadd.f32 0.0, %v2864
  %v2866 = vpop.f32.mrb[0].mxu0
  %v2867 = vadd.f32 0.0, %v2866
  %2868 = vmatprep.mubr.f32.mxu0 0.0
  %2869 = vmatmul.mubr.f32.gmra.mrb[0].mxu0 %v2640
  %v2870 = vpop.f32.mrb[0].mxu0
  %v2871 = vadd.f32 0.0, %v2870
  %v2872 = vpop.f32.mrb[0].mxu0
  %v2873 = vadd.f32 0.0, %v2872
  %2874 = vdwg.mxu0
  %v2875 = vadd.f32 %v2493, %v2709
  %v2876 = vadd.f32 %v2494, %v2711
  %v2877 = vadd.f32 %v2495, %v2715
  %v2878 = vadd.f32 %v2496, %v2717
  %v2879 = vadd.f32 %v2497, %v2721
  %v2880 = vadd.f32 %v2498, %v2723
  %v2881 = vadd.f32 %v2499, %v2727
  %v2882 = vadd.f32 %v2500, %v2729
  %v2883 = vadd.f32 %v2501, %v2733
  %v2884 = vadd.f32 %v2502, %v2735
  %v2885 = vadd.f32 %v2503, %v2739
  %v2886 = vadd.f32 %v2504, %v2741
  %v2887 = vadd.f32 %v2505, %v2745
  %v2888 = vadd.f32 %v2506, %v2747
  %v2889 = vadd.f32 %v2507, %v2751
  %v2890 = vadd.f32 %v2508, %v2753
  %v2891 = vadd.f32 %v2509, %v2757
  %v2892 = vadd.f32 %v2510, %v2759
  %v2893 = vadd.f32 %v2511, %v2763
  %v2894 = vadd.f32 %v2512, %v2765
  %v2895 = vadd.f32 %v2513, %v2769
  %v2896 = vadd.f32 %v2514, %v2771
  %v2897 = vadd.f32 %v2515, %v2775
  %v2898 = vadd.f32 %v2516, %v2777
  %v2899 = vadd.f32 %v2517, %v2781
  %v2900 = vadd.f32 %v2518, %v2783
  %v2901 = vadd.f32 %v2519, %v2787
  %v2902 = vadd.f32 %v2520, %v2789
  %v2903 = vadd.f32 %v2521, %v2793
  %v2904 = vadd.f32 %v2522, %v2795
  %v2905 = vadd.f32 %v2523, %v2799
  %v2906 = vadd.f32 %v2524, %v2801
  %v2907 = vadd.f32 %v2525, %v2805
  %v2908 = vadd.f32 %v2526, %v2807
  %v2909 = vadd.f32 %v2527, %v2811
  %v2910 = vadd.f32 %v2528, %v2813
  %v2911 = vadd.f32 %v2529, %v2817
  %v2912 = vadd.f32 %v2530, %v2819
  %v2913 = vadd.f32 %v2531, %v2823
  %v2914 = vadd.f32 %v2532, %v2825
  %v2915 = vadd.f32 %v2533, %v2829
  %v2916 = vadd.f32 %v2534, %v2831
  %v2917 = vadd.f32 %v2535, %v2835
  %v2918 = vadd.f32 %v2536, %v2837
  %v2919 = vadd.f32 %v2537, %v2841
  %v2920 = vadd.f32 %v2538, %v2843
  %v2921 = vadd.f32 %v2539, %v2847
  %v2922 = vadd.f32 %v2540, %v2849
  %v2923 = vadd.f32 %v2541, %v2853
  %v2924 = vadd.f32 %v2542, %v2855
  %v2925 = vadd.f32 %v2543, %v2859
  %v2926 = vadd.f32 %v2544, %v2861
  %v2927 = vadd.f32 %v2545, %v2865
  %v2928 = vadd.f32 %v2546, %v2867
  %v2929 = vadd.f32 %v2547, %v2871
  %v2930 = vadd.f32 %v2548, %v2873
  %v2931 = vld [vmem:[%s3] sm:$0x3]
  %v2933 = vlaneseq
  %v2934 = vshrl.u32 %v2933, 7
  %v2935 = vsub.s32 0, %v2934
  %v2936 = vrot.slane %v2931, %v2935
  %v2937 = vlaneseq
  %v2938 = vshrl.u32 %v2937, 7
  %v2939 = vsub.s32 1, %v2938
  %v2940 = vrot.slane %v2931, %v2939
  %v2943 = vadd.f32 %v2875, %v2936
  %v2944 = vadd.f32 %v2876, %v2940
  %v2945 = vadd.f32 %v2877, %v2936
  %v2946 = vadd.f32 %v2878, %v2940
  %v2947 = vadd.f32 %v2879, %v2936
  %v2948 = vadd.f32 %v2880, %v2940
  %v2949 = vadd.f32 %v2881, %v2936
  %v2950 = vadd.f32 %v2882, %v2940
  %v2951 = vadd.f32 %v2883, %v2936
  %v2952 = vadd.f32 %v2884, %v2940
  %v2953 = vadd.f32 %v2885, %v2936
  %v2954 = vadd.f32 %v2886, %v2940
  %v2955 = vadd.f32 %v2887, %v2936
  %v2956 = vadd.f32 %v2888, %v2940
  %v2957 = vadd.f32 %v2889, %v2936
  %v2958 = vadd.f32 %v2890, %v2940
  %v2959 = vadd.f32 %v2891, %v2936
  %v2960 = vadd.f32 %v2892, %v2940
  %v2961 = vadd.f32 %v2893, %v2936
  %v2962 = vadd.f32 %v2894, %v2940
  %v2963 = vadd.f32 %v2895, %v2936
  %v2964 = vadd.f32 %v2896, %v2940
  %v2965 = vadd.f32 %v2897, %v2936
  %v2966 = vadd.f32 %v2898, %v2940
  %v2967 = vadd.f32 %v2899, %v2936
  %v2968 = vadd.f32 %v2900, %v2940
  %v2969 = vadd.f32 %v2901, %v2936
  %v2970 = vadd.f32 %v2902, %v2940
  %v2971 = vadd.f32 %v2903, %v2936
  %v2972 = vadd.f32 %v2904, %v2940
  %v2973 = vadd.f32 %v2905, %v2936
  %v2974 = vadd.f32 %v2906, %v2940
  %v2975 = vadd.f32 %v2907, %v2936
  %v2976 = vadd.f32 %v2908, %v2940
  %v2977 = vadd.f32 %v2909, %v2936
  %v2978 = vadd.f32 %v2910, %v2940
  %v2979 = vadd.f32 %v2911, %v2936
  %v2980 = vadd.f32 %v2912, %v2940
  %v2981 = vadd.f32 %v2913, %v2936
  %v2982 = vadd.f32 %v2914, %v2940
  %v2983 = vadd.f32 %v2915, %v2936
  %v2984 = vadd.f32 %v2916, %v2940
  %v2985 = vadd.f32 %v2917, %v2936
  %v2986 = vadd.f32 %v2918, %v2940
  %v2987 = vadd.f32 %v2919, %v2936
  %v2988 = vadd.f32 %v2920, %v2940
  %v2989 = vadd.f32 %v2921, %v2936
  %v2990 = vadd.f32 %v2922, %v2940
  %v2991 = vadd.f32 %v2923, %v2936
  %v2992 = vadd.f32 %v2924, %v2940
  %v2993 = vadd.f32 %v2925, %v2936
  %v2994 = vadd.f32 %v2926, %v2940
  %v2995 = vadd.f32 %v2927, %v2936
  %v2996 = vadd.f32 %v2928, %v2940
  %v2997 = vadd.f32 %v2929, %v2936
  %v2998 = vadd.f32 %v2930, %v2940
  %v2999 = vmax.f32 %v2943, 0.0
  %v3000 = vmax.f32 %v2944, 0.0
  %v3001 = vmax.f32 %v2945, 0.0
  %v3002 = vmax.f32 %v2946, 0.0
  %v3003 = vmax.f32 %v2947, 0.0
  %v3004 = vmax.f32 %v2948, 0.0
  %v3005 = vmax.f32 %v2949, 0.0
  %v3006 = vmax.f32 %v2950, 0.0
  %v3007 = vmax.f32 %v2951, 0.0
  %v3008 = vmax.f32 %v2952, 0.0
  %v3009 = vmax.f32 %v2953, 0.0
  %v3010 = vmax.f32 %v2954, 0.0
  %v3011 = vmax.f32 %v2955, 0.0
  %v3012 = vmax.f32 %v2956, 0.0
  %v3013 = vmax.f32 %v2957, 0.0
  %v3014 = vmax.f32 %v2958, 0.0
  %v3015 = vmax.f32 %v2959, 0.0
  %v3016 = vmax.f32 %v2960, 0.0
  %v3017 = vmax.f32 %v2961, 0.0
  %v3018 = vmax.f32 %v2962, 0.0
  %v3019 = vmax.f32 %v2963, 0.0
  %v3020 = vmax.f32 %v2964, 0.0
  %v3021 = vmax.f32 %v2965, 0.0
  %v3022 = vmax.f32 %v2966, 0.0
  %v3023 = vmax.f32 %v2967, 0.0
  %v3024 = vmax.f32 %v2968, 0.0
  %v3025 = vmax.f32 %v2969, 0.0
  %v3026 = vmax.f32 %v2970, 0.0
  %v3027 = vmax.f32 %v2971, 0.0
  %v3028 = vmax.f32 %v2972, 0.0
  %v3029 = vmax.f32 %v2973, 0.0
  %v3030 = vmax.f32 %v2974, 0.0
  %v3031 = vmax.f32 %v2975, 0.0
  %v3032 = vmax.f32 %v2976, 0.0
  %v3033 = vmax.f32 %v2977, 0.0
  %v3034 = vmax.f32 %v2978, 0.0
  %v3035 = vmax.f32 %v2979, 0.0
  %v3036 = vmax.f32 %v2980, 0.0
  %v3037 = vmax.f32 %v2981, 0.0
  %v3038 = vmax.f32 %v2982, 0.0
  %v3039 = vmax.f32 %v2983, 0.0
  %v3040 = vmax.f32 %v2984, 0.0
  %v3041 = vmax.f32 %v2985, 0.0
  %v3042 = vmax.f32 %v2986, 0.0
  %v3043 = vmax.f32 %v2987, 0.0
  %v3044 = vmax.f32 %v2988, 0.0
  %v3045 = vmax.f32 %v2989, 0.0
  %v3046 = vmax.f32 %v2990, 0.0
  %v3047 = vmax.f32 %v2991, 0.0
  %v3048 = vmax.f32 %v2992, 0.0
  %v3049 = vmax.f32 %v2993, 0.0
  %v3050 = vmax.f32 %v2994, 0.0
  %v3051 = vmax.f32 %v2995, 0.0
  %v3052 = vmax.f32 %v2996, 0.0
  %v3053 = vmax.f32 %v2997, 0.0
  %v3054 = vmax.f32 %v2998, 0.0
  %v3055 = vld [vmem:[%s4] sm:$0xff]
  %v3056 = vld [vmem:[%s4 + $0x8] sm:$0xff]
  %v3057 = vld [vmem:[%s4 + $0x10] sm:$0xff]
  %v3058 = vld [vmem:[%s4 + $0x18] sm:$0xff]
  %v3059 = vld [vmem:[%s4 + $0x20] sm:$0xff]
  %v3060 = vld [vmem:[%s4 + $0x28] sm:$0xff]
  %v3061 = vld [vmem:[%s4 + $0x30] sm:$0xff]
  %v3062 = vld [vmem:[%s4 + $0x38] sm:$0xff]
  %v3063 = vld [vmem:[%s4 + $0x40] sm:$0xff]
  %v3064 = vld [vmem:[%s4 + $0x48] sm:$0xff]
  %v3065 = vld [vmem:[%s4 + $0x50] sm:$0xff]
  %v3066 = vld [vmem:[%s4 + $0x58] sm:$0xff]
  %v3067 = vld [vmem:[%s4 + $0x60] sm:$0xff]
  %v3068 = vld [vmem:[%s4 + $0x68] sm:$0xff]
  %v3069 = vld [vmem:[%s4 + $0x70] sm:$0xff]
  %v3070 = vld [vmem:[%s4 + $0x78] sm:$0xff]
  %v3071 = vld [vmem:[%s4 + $0x80] sm:$0xff]
  %v3072 = vld [vmem:[%s4 + $0x88] sm:$0xff]
  %v3073 = vld [vmem:[%s4 + $0x90] sm:$0xff]
  %v3074 = vld [vmem:[%s4 + $0x98] sm:$0xff]
  %v3075 = vld [vmem:[%s4 + $0xa0] sm:$0xff]
  %v3076 = vld [vmem:[%s4 + $0xa8] sm:$0xff]
  %v3077 = vld [vmem:[%s4 + $0xb0] sm:$0xff]
  %v3078 = vld [vmem:[%s4 + $0xb8] sm:$0xff]
  %v3079 = vld [vmem:[%s4 + $0xc0] sm:$0xff]
  %v3080 = vld [vmem:[%s4 + $0xc8] sm:$0xff]
  %v3081 = vld [vmem:[%s4 + $0xd0] sm:$0xff]
  %v3082 = vld [vmem:[%s4 + $0xd8] sm:$0xff]
  %v3083 = vld [vmem:[%s4 + $0xe0] sm:$0xff]
  %v3084 = vld [vmem:[%s4 + $0xe8] sm:$0xff]
  %v3085 = vld [vmem:[%s4 + $0xf0] sm:$0xff]
  %v3086 = vld [vmem:[%s4 + $0xf8] sm:$0xff]
  %v3087 = vld [vmem:[%s4 + $0x100] sm:$0xff]
  %v3088 = vld [vmem:[%s4 + $0x108] sm:$0xff]
  %v3089 = vld [vmem:[%s4 + $0x110] sm:$0xff]
  %v3090 = vld [vmem:[%s4 + $0x118] sm:$0xff]
  %v3091 = vld [vmem:[%s4 + $0x120] sm:$0xff]
  %v3092 = vld [vmem:[%s4 + $0x128] sm:$0xff]
  %v3093 = vld [vmem:[%s4 + $0x130] sm:$0xff]
  %v3094 = vld [vmem:[%s4 + $0x138] sm:$0xff]
  %v3095 = vld [vmem:[%s4 + $0x140] sm:$0xff]
  %v3096 = vld [vmem:[%s4 + $0x148] sm:$0xff]
  %v3097 = vld [vmem:[%s4 + $0x150] sm:$0xff]
  %v3098 = vld [vmem:[%s4 + $0x158] sm:$0xff]
  %v3099 = vld [vmem:[%s4 + $0x160] sm:$0xff]
  %v3100 = vld [vmem:[%s4 + $0x168] sm:$0xff]
  %v3101 = vld [vmem:[%s4 + $0x170] sm:$0xff]
  %v3102 = vld [vmem:[%s4 + $0x178] sm:$0xff]
  %v3103 = vld [vmem:[%s4 + $0x180] sm:$0xff]
  %v3104 = vld [vmem:[%s4 + $0x188] sm:$0xff]
  %v3105 = vld [vmem:[%s4 + $0x190] sm:$0xff]
  %v3106 = vld [vmem:[%s4 + $0x198] sm:$0xff]
  %v3107 = vld [vmem:[%s4 + $0x1a0] sm:$0xff]
  %v3108 = vld [vmem:[%s4 + $0x1a8] sm:$0xff]
  %v3109 = vld [vmem:[%s4 + $0x1b0] sm:$0xff]
  %v3110 = vld [vmem:[%s4 + $0x1b8] sm:$0xff]
  %vm3111 = vcmask 785408
  %v3113 = vsel %vm3111, %v3056, 0
  %v3116 = vsel %vm3111, %v3058, 0
  %v3119 = vsel %vm3111, %v3060, 0
  %v3122 = vsel %vm3111, %v3062, 0
  %v3125 = vsel %vm3111, %v3064, 0
  %v3128 = vsel %vm3111, %v3066, 0
  %v3131 = vsel %vm3111, %v3068, 0
  %v3134 = vsel %vm3111, %v3070, 0
  %v3137 = vsel %vm3111, %v3072, 0
  %v3140 = vsel %vm3111, %v3074, 0
  %v3143 = vsel %vm3111, %v3076, 0
  %v3146 = vsel %vm3111, %v3078, 0
  %v3149 = vsel %vm3111, %v3080, 0
  %v3152 = vsel %vm3111, %v3082, 0
  %v3155 = vsel %vm3111, %v3084, 0
  %v3158 = vsel %vm3111, %v3086, 0
  %v3161 = vsel %vm3111, %v3088, 0
  %v3164 = vsel %vm3111, %v3090, 0
  %v3167 = vsel %vm3111, %v3092, 0
  %v3170 = vsel %vm3111, %v3094, 0
  %v3173 = vsel %vm3111, %v3096, 0
  %v3176 = vsel %vm3111, %v3098, 0
  %v3179 = vsel %vm3111, %v3100, 0
  %v3182 = vsel %vm3111, %v3102, 0
  %v3185 = vsel %vm3111, %v3104, 0
  %v3188 = vsel %vm3111, %v3106, 0
  %v3191 = vsel %vm3111, %v3108, 0
  %v3194 = vsel %vm3111, %v3110, 0
  %3196 = vmatprep.subr.mxu0 %v3000
  %3197 = vmatpush1.msra.mxu0 %v2999
  %3198 = vmatprep.subr.mxu0 %v3002
  %3199 = vmatpush1.msra.mxu0 %v3001
  %3200 = vmatprep.subr.mxu0 %v3004
  %3201 = vmatpush1.msra.mxu0 %v3003
  %3202 = vmatprep.subr.mxu0 %v3006
  %3203 = vmatpush1.msra.mxu0 %v3005
  %3204 = vmatprep.subr.mxu0 %v3008
  %3205 = vmatpush1.msra.mxu0 %v3007
  %3206 = vmatprep.subr.mxu0 %v3010
  %3207 = vmatpush1.msra.mxu0 %v3009
  %3208 = vmatprep.subr.mxu0 %v3012
  %3209 = vmatpush1.msra.mxu0 %v3011
  %3210 = vmatprep.subr.mxu0 %v3014
  %3211 = vmatpush1.msra.mxu0 %v3013
  %3212 = vmatprep.subr.mxu0 %v3016
  %3213 = vmatpush1.msra.mxu0 %v3015
  %3214 = vmatprep.subr.mxu0 %v3018
  %3215 = vmatpush1.msra.mxu0 %v3017
  %3216 = vmatprep.subr.mxu0 %v3020
  %3217 = vmatpush1.msra.mxu0 %v3019
  %3218 = vmatprep.subr.mxu0 %v3022
  %3219 = vmatpush1.msra.mxu0 %v3021
  %3220 = vmatprep.subr.mxu0 %v3024
  %3221 = vmatpush1.msra.mxu0 %v3023
  %3222 = vmatprep.subr.mxu0 %v3026
  %3223 = vmatpush1.msra.mxu0 %v3025
  %3224 = vmatprep.subr.mxu0 %v3028
  %3225 = vmatpush1.msra.mxu0 %v3027
  %3226 = vmatprep.subr.mxu0 %v3030
  %3227 = vmatpush1.msra.mxu0 %v3029
  %3228 = vmatprep.subr.mxu0 %v3032
  %3229 = vmatpush1.msra.mxu0 %v3031
  %3230 = vmatprep.subr.mxu0 %v3034
  %3231 = vmatpush1.msra.mxu0 %v3033
  %3232 = vmatprep.subr.mxu0 %v3036
  %3233 = vmatpush1.msra.mxu0 %v3035
  %3234 = vmatprep.subr.mxu0 %v3038
  %3235 = vmatpush1.msra.mxu0 %v3037
  %3236 = vmatprep.subr.mxu0 %v3040
  %3237 = vmatpush1.msra.mxu0 %v3039
  %3238 = vmatprep.subr.mxu0 %v3042
  %3239 = vmatpush1.msra.mxu0 %v3041
  %3240 = vmatprep.subr.mxu0 %v3044
  %3241 = vmatpush1.msra.mxu0 %v3043
  %3242 = vmatprep.subr.mxu0 %v3046
  %3243 = vmatpush1.msra.mxu0 %v3045
  %3244 = vmatprep.subr.mxu0 %v3048
  %3245 = vmatpush1.msra.mxu0 %v3047
  %3246 = vmatprep.subr.mxu0 %v3050
  %3247 = vmatpush1.msra.mxu0 %v3049
  %3248 = vmatprep.subr.mxu0 %v3052
  %3249 = vmatpush1.msra.mxu0 %v3051
  %3250 = vmatprep.subr.mxu0 %v3054
  %3251 = vmatpush1.msra.mxu0 %v3053
  %3252 = vmatprep.subr.mxu0 0.0
  %3253 = vmatpush1.msra.mxu0 0.0
  %3254 = vmatprep.subr.mxu0 0.0
  %3255 = vmatpush1.msra.mxu0 0.0
  %3256 = vmatprep.subr.mxu0 0.0
  %3257 = vmatpush1.msra.mxu0 0.0
  %3258 = vmatprep.subr.mxu0 0.0
  %3259 = vmatpush1.msra.mxu0 0.0
  %3260 = vmatprep.mubr.f32.mxu0 %v3113
  %3261 = vmatmul.mubr.f32.gmra.mrb[0].mxu0 %v3055
  %v3262 = vpop.f32.mrb[0].mxu0
  %v3263 = vadd.f32 0.0, %v3262
  %v3264 = vpop.f32.mrb[0].mxu0
  %v3265 = vadd.f32 0.0, %v3264
  %3266 = vmatprep.mubr.f32.mxu0 %v3116
  %3267 = vmatmul.mubr.f32.gmra.mrb[0].mxu0 %v3057
  %v3268 = vpop.f32.mrb[0].mxu0
  %v3269 = vadd.f32 0.0, %v3268
  %v3270 = vpop.f32.mrb[0].mxu0
  %v3271 = vadd.f32 0.0, %v3270
  %3272 = vmatprep.mubr.f32.mxu0 %v3119
  %3273 = vmatmul.mubr.f32.gmra.mrb[0].mxu0 %v3059
  %v3274 = vpop.f32.mrb[0].mxu0
  %v3275 = vadd.f32 0.0, %v3274
  %v3276 = vpop.f32.mrb[0].mxu0
  %v3277 = vadd.f32 0.0, %v3276
  %3278 = vmatprep.mubr.f32.mxu0 %v3122
  %3279 = vmatmul.mubr.f32.gmra.mrb[0].mxu0 %v3061
  %v3280 = vpop.f32.mrb[0].mxu0
  %v3281 = vadd.f32 0.0, %v3280
  %v3282 = vpop.f32.mrb[0].mxu0
  %v3283 = vadd.f32 0.0, %v3282
  %3284 = vmatprep.mubr.f32.mxu0 %v3125
  %3285 = vmatmul.mubr.f32.gmra.mrb[0].mxu0 %v3063
  %v3286 = vpop.f32.mrb[0].mxu0
  %v3287 = vadd.f32 0.0, %v3286
  %v3288 = vpop.f32.mrb[0].mxu0
  %v3289 = vadd.f32 0.0, %v3288
  %3290 = vmatprep.mubr.f32.mxu0 %v3128
  %3291 = vmatmul.mubr.f32.gmra.mrb[0].mxu0 %v3065
  %v3292 = vpop.f32.mrb[0].mxu0
  %v3293 = vadd.f32 0.0, %v3292
  %v3294 = vpop.f32.mrb[0].mxu0
  %v3295 = vadd.f32 0.0, %v3294
  %3296 = vmatprep.mubr.f32.mxu0 %v3131
  %3297 = vmatmul.mubr.f32.gmra.mrb[0].mxu0 %v3067
  %v3298 = vpop.f32.mrb[0].mxu0
  %v3299 = vadd.f32 0.0, %v3298
  %v3300 = vpop.f32.mrb[0].mxu0
  %v3301 = vadd.f32 0.0, %v3300
  %3302 = vmatprep.mubr.f32.mxu0 %v3134
  %3303 = vmatmul.mubr.f32.gmra.mrb[0].mxu0 %v3069
  %v3304 = vpop.f32.mrb[0].mxu0
  %v3305 = vadd.f32 0.0, %v3304
  %v3306 = vpop.f32.mrb[0].mxu0
  %v3307 = vadd.f32 0.0, %v3306
  %3308 = vmatprep.mubr.f32.mxu0 %v3137
  %3309 = vmatmul.mubr.f32.gmra.mrb[0].mxu0 %v3071
  %v3310 = vpop.f32.mrb[0].mxu0
  %v3311 = vadd.f32 0.0, %v3310
  %v3312 = vpop.f32.mrb[0].mxu0
  %v3313 = vadd.f32 0.0, %v3312
  %3314 = vmatprep.mubr.f32.mxu0 %v3140
  %3315 = vmatmul.mubr.f32.gmra.mrb[0].mxu0 %v3073
  %v3316 = vpop.f32.mrb[0].mxu0
  %v3317 = vadd.f32 0.0, %v3316
  %v3318 = vpop.f32.mrb[0].mxu0
  %v3319 = vadd.f32 0.0, %v3318
  %3320 = vmatprep.mubr.f32.mxu0 %v3143
  %3321 = vmatmul.mubr.f32.gmra.mrb[0].mxu0 %v3075
  %v3322 = vpop.f32.mrb[0].mxu0
  %v3323 = vadd.f32 0.0, %v3322
  %v3324 = vpop.f32.mrb[0].mxu0
  %v3325 = vadd.f32 0.0, %v3324
  %3326 = vmatprep.mubr.f32.mxu0 %v3146
  %3327 = vmatmul.mubr.f32.gmra.mrb[0].mxu0 %v3077
  %v3328 = vpop.f32.mrb[0].mxu0
  %v3329 = vadd.f32 0.0, %v3328
  %v3330 = vpop.f32.mrb[0].mxu0
  %v3331 = vadd.f32 0.0, %v3330
  %3332 = vmatprep.mubr.f32.mxu0 %v3149
  %3333 = vmatmul.mubr.f32.gmra.mrb[0].mxu0 %v3079
  %v3334 = vpop.f32.mrb[0].mxu0
  %v3335 = vadd.f32 0.0, %v3334
  %v3336 = vpop.f32.mrb[0].mxu0
  %v3337 = vadd.f32 0.0, %v3336
  %3338 = vmatprep.mubr.f32.mxu0 %v3152
  %3339 = vmatmul.mubr.f32.gmra.mrb[0].mxu0 %v3081
  %v3340 = vpop.f32.mrb[0].mxu0
  %v3341 = vadd.f32 0.0, %v3340
  %v3342 = vpop.f32.mrb[0].mxu0
  %v3343 = vadd.f32 0.0, %v3342
  %3344 = vmatprep.mubr.f32.mxu0 %v3155
  %3345 = vmatmul.mubr.f32.gmra.mrb[0].mxu0 %v3083
  %v3346 = vpop.f32.mrb[0].mxu0
  %v3347 = vadd.f32 0.0, %v3346
  %v3348 = vpop.f32.mrb[0].mxu0
  %v3349 = vadd.f32 0.0, %v3348
  %3350 = vmatprep.mubr.f32.mxu0 %v3158
  %3351 = vmatmul.mubr.f32.gmra.mrb[0].mxu0 %v3085
  %v3352 = vpop.f32.mrb[0].mxu0
  %v3353 = vadd.f32 0.0, %v3352
  %v3354 = vpop.f32.mrb[0].mxu0
  %v3355 = vadd.f32 0.0, %v3354
  %3356 = vmatprep.mubr.f32.mxu0 %v3161
  %3357 = vmatmul.mubr.f32.gmra.mrb[0].mxu0 %v3087
  %v3358 = vpop.f32.mrb[0].mxu0
  %v3359 = vadd.f32 0.0, %v3358
  %v3360 = vpop.f32.mrb[0].mxu0
  %v3361 = vadd.f32 0.0, %v3360
  %3362 = vmatprep.mubr.f32.mxu0 %v3164
  %3363 = vmatmul.mubr.f32.gmra.mrb[0].mxu0 %v3089
  %v3364 = vpop.f32.mrb[0].mxu0
  %v3365 = vadd.f32 0.0, %v3364
  %v3366 = vpop.f32.mrb[0].mxu0
  %v3367 = vadd.f32 0.0, %v3366
  %3368 = vmatprep.mubr.f32.mxu0 %v3167
  %3369 = vmatmul.mubr.f32.gmra.mrb[0].mxu0 %v3091
  %v3370 = vpop.f32.mrb[0].mxu0
  %v3371 = vadd.f32 0.0, %v3370
  %v3372 = vpop.f32.mrb[0].mxu0
  %v3373 = vadd.f32 0.0, %v3372
  %3374 = vmatprep.mubr.f32.mxu0 %v3170
  %3375 = vmatmul.mubr.f32.gmra.mrb[0].mxu0 %v3093
  %v3376 = vpop.f32.mrb[0].mxu0
  %v3377 = vadd.f32 0.0, %v3376
  %v3378 = vpop.f32.mrb[0].mxu0
  %v3379 = vadd.f32 0.0, %v3378
  %3380 = vmatprep.mubr.f32.mxu0 %v3173
  %3381 = vmatmul.mubr.f32.gmra.mrb[0].mxu0 %v3095
  %v3382 = vpop.f32.mrb[0].mxu0
  %v3383 = vadd.f32 0.0, %v3382
  %v3384 = vpop.f32.mrb[0].mxu0
  %v3385 = vadd.f32 0.0, %v3384
  %3386 = vmatprep.mubr.f32.mxu0 %v3176
  %3387 = vmatmul.mubr.f32.gmra.mrb[0].mxu0 %v3097
  %v3388 = vpop.f32.mrb[0].mxu0
  %v3389 = vadd.f32 0.0, %v3388
  %v3390 = vpop.f32.mrb[0].mxu0
  %v3391 = vadd.f32 0.0, %v3390
  %3392 = vmatprep.mubr.f32.mxu0 %v3179
  %3393 = vmatmul.mubr.f32.gmra.mrb[0].mxu0 %v3099
  %v3394 = vpop.f32.mrb[0].mxu0
  %v3395 = vadd.f32 0.0, %v3394
  %v3396 = vpop.f32.mrb[0].mxu0
  %v3397 = vadd.f32 0.0, %v3396
  %3398 = vmatprep.mubr.f32.mxu0 %v3182
  %3399 = vmatmul.mubr.f32.gmra.mrb[0].mxu0 %v3101
  %v3400 = vpop.f32.mrb[0].mxu0
  %v3401 = vadd.f32 0.0, %v3400
  %v3402 = vpop.f32.mrb[0].mxu0
  %v3403 = vadd.f32 0.0, %v3402
  %3404 = vmatprep.mubr.f32.mxu0 %v3185
  %3405 = vmatmul.mubr.f32.gmra.mrb[0].mxu0 %v3103
  %v3406 = vpop.f32.mrb[0].mxu0
  %v3407 = vadd.f32 0.0, %v3406
  %v3408 = vpop.f32.mrb[0].mxu0
  %v3409 = vadd.f32 0.0, %v3408
  %3410 = vmatprep.mubr.f32.mxu0 %v3188
  %3411 = vmatmul.mubr.f32.gmra.mrb[0].mxu0 %v3105
  %v3412 = vpop.f32.mrb[0].mxu0
  %v3413 = vadd.f32 0.0, %v3412
  %v3414 = vpop.f32.mrb[0].mxu0
  %v3415 = vadd.f32 0.0, %v3414
  %3416 = vmatprep.mubr.f32.mxu0 %v3191
  %3417 = vmatmul.mubr.f32.gmra.mrb[0].mxu0 %v3107
  %v3418 = vpop.f32.mrb[0].mxu0
  %v3419 = vadd.f32 0.0, %v3418
  %v3420 = vpop.f32.mrb[0].mxu0
  %v3421 = vadd.f32 0.0, %v3420
  %3422 = vmatprep.mubr.f32.mxu0 %v3194
  %3423 = vmatmul.mubr.f32.gmra.mrb[0].mxu0 %v3109
  %v3424 = vpop.f32.mrb[0].mxu0
  %v3425 = vadd.f32 0.0, %v3424
  %v3426 = vpop.f32.mrb[0].mxu0
  %v3427 = vadd.f32 0.0, %v3426
  %3428 = vdwg.mxu0
  %v3429 = vmax.f32 %v3263, %v3347
  %v3430 = vmax.f32 %v3265, %v3349
  %v3431 = vmax.f32 %v3269, %v3353
  %v3432 = vmax.f32 %v3271, %v3355
  %v3433 = vmax.f32 %v3275, %v3359
  %v3434 = vmax.f32 %v3277, %v3361
  %v3435 = vmax.f32 %v3281, %v3365
  %v3436 = vmax.f32 %v3283, %v3367
  %v3437 = vmax.f32 %v3287, %v3371
  %v3438 = vmax.f32 %v3289, %v3373
  %v3439 = vmax.f32 %v3293, %v3377
  %v3440 = vmax.f32 %v3295, %v3379
  %v3441 = vmax.f32 %v3299, %v3383
  %v3442 = vmax.f32 %v3301, %v3385
  %v3443 = vmax.f32 %v3305, %v3389
  %v3444 = vmax.f32 %v3307, %v3391
  %v3445 = vmax.f32 %v3311, %v3395
  %v3446 = vmax.f32 %v3313, %v3397
  %v3447 = vmax.f32 %v3317, %v3401
  %v3448 = vmax.f32 %v3319, %v3403
  %v3449 = vmax.f32 %v3323, %v3407
  %v3450 = vmax.f32 %v3325, %v3409
  %v3451 = vmax.f32 %v3329, %v3413
  %v3452 = vmax.f32 %v3331, %v3415
  %v3453 = vmax.f32 %v3335, %v3419
  %v3454 = vmax.f32 %v3337, %v3421
  %v3455 = vmax.f32 %v3341, %v3425
  %v3456 = vmax.f32 %v3343, %v3427
  %v3457 = vld [vmem:[%s5] sm:$0xff]
  %v3458 = vld [vmem:[%s5 + $0x8] sm:$0xff]
  %v3459 = vld [vmem:[%s5 + $0x10] sm:$0xff]
  %v3460 = vld [vmem:[%s5 + $0x18] sm:$0xff]
  %v3461 = vld [vmem:[%s5 + $0x20] sm:$0xff]
  %v3462 = vld [vmem:[%s5 + $0x28] sm:$0xff]
  %v3463 = vld [vmem:[%s5 + $0x30] sm:$0xff]
  %v3464 = vld [vmem:[%s5 + $0x38] sm:$0xff]
  %v3465 = vld [vmem:[%s5 + $0x40] sm:$0xff]
  %v3466 = vld [vmem:[%s5 + $0x48] sm:$0xff]
  %v3467 = vld [vmem:[%s5 + $0x50] sm:$0xff]
  %v3468 = vld [vmem:[%s5 + $0x58] sm:$0xff]
  %v3469 = vld [vmem:[%s5 + $0x60] sm:$0xff]
  %v3470 = vld [vmem:[%s5 + $0x68] sm:$0xff]
  %v3471 = vld [vmem:[%s5 + $0x70] sm:$0xff]
  %v3472 = vld [vmem:[%s5 + $0x78] sm:$0xff]
  %v3473 = vld [vmem:[%s5 + $0x80] sm:$0xff]
  %v3474 = vld [vmem:[%s5 + $0x88] sm:$0xff]
  %v3475 = vld [vmem:[%s5 + $0x90] sm:$0xff]
  %v3476 = vld [vmem:[%s5 + $0x98] sm:$0xff]
  %v3477 = vld [vmem:[%s5 + $0xa0] sm:$0xff]
  %v3478 = vld [vmem:[%s5 + $0xa8] sm:$0xff]
  %v3479 = vld [vmem:[%s5 + $0xb0] sm:$0xff]
  %v3480 = vld [vmem:[%s5 + $0xb8] sm:$0xff]
  %v3481 = vld [vmem:[%s5 + $0xc0] sm:$0xff]
  %v3482 = vld [vmem:[%s5 + $0xc8] sm:$0xff]
  %v3483 = vld [vmem:[%s5 + $0xd0] sm:$0xff]
  %v3484 = vld [vmem:[%s5 + $0xd8] sm:$0xff]
  %v3485 = vld [vmem:[%s5 + $0xe0] sm:$0xff]
  %v3486 = vld [vmem:[%s5 + $0xe8] sm:$0xff]
  %v3487 = vld [vmem:[%s5 + $0xf0] sm:$0xff]
  %v3488 = vld [vmem:[%s5 + $0xf8] sm:$0xff]
  %v3489 = vld [vmem:[%s5 + $0x100] sm:$0xff]
  %v3490 = vld [vmem:[%s5 + $0x108] sm:$0xff]
  %v3491 = vld [vmem:[%s5 + $0x110] sm:$0xff]
  %v3492 = vld [vmem:[%s5 + $0x118] sm:$0xff]
  %v3493 = vld [vmem:[%s5 + $0x120] sm:$0xff]
  %v3494 = vld [vmem:[%s5 + $0x128] sm:$0xff]
  %v3495 = vld [vmem:[%s5 + $0x130] sm:$0xff]
  %v3496 = vld [vmem:[%s5 + $0x138] sm:$0xff]
  %v3497 = vld [vmem:[%s5 + $0x140] sm:$0xff]
  %v3498 = vld [vmem:[%s5 + $0x148] sm:$0xff]
  %v3499 = vld [vmem:[%s5 + $0x150] sm:$0xff]
  %v3500 = vld [vmem:[%s5 + $0x158] sm:$0xff]
  %v3501 = vld [vmem:[%s5 + $0x160] sm:$0xff]
  %v3502 = vld [vmem:[%s5 + $0x168] sm:$0xff]
  %v3503 = vld [vmem:[%s5 + $0x170] sm:$0xff]
  %v3504 = vld [vmem:[%s5 + $0x178] sm:$0xff]
  %v3505 = vld [vmem:[%s5 + $0x180] sm:$0xff]
  %v3506 = vld [vmem:[%s5 + $0x188] sm:$0xff]
  %v3507 = vld [vmem:[%s5 + $0x190] sm:$0xff]
  %v3508 = vld [vmem:[%s5 + $0x198] sm:$0xff]
  %v3509 = vld [vmem:[%s5 + $0x1a0] sm:$0xff]
  %v3510 = vld [vmem:[%s5 + $0x1a8] sm:$0xff]
  %v3511 = vld [vmem:[%s5 + $0x1b0] sm:$0xff]
  %v3512 = vld [vmem:[%s5 + $0x1b8] sm:$0xff]
  %v3514 = vsel %vm3111, %v3430, 0
  %v3517 = vsel %vm3111, %v3432, 0
  %v3520 = vsel %vm3111, %v3434, 0
  %v3523 = vsel %vm3111, %v3436, 0
  %v3526 = vsel %vm3111, %v3438, 0
  %v3529 = vsel %vm3111, %v3440, 0
  %v3532 = vsel %vm3111, %v3442, 0
  %v3535 = vsel %vm3111, %v3444, 0
  %v3538 = vsel %vm3111, %v3446, 0
  %v3541 = vsel %vm3111, %v3448, 0
  %v3544 = vsel %vm3111, %v3450, 0
  %v3547 = vsel %vm3111, %v3452, 0
  %v3550 = vsel %vm3111, %v3454, 0
  %v3553 = vsel %vm3111, %v3456, 0
  %3555 = vmatprep.subr.mxu0 %v3458
  %3556 = vmatpush1.msra.mxu0 %v3457
  %3557 = vmatprep.subr.mxu0 %v3460
  %3558 = vmatpush1.msra.mxu0 %v3459
  %3559 = vmatprep.subr.mxu0 %v3462
  %3560 = vmatpush1.msra.mxu0 %v3461
  %3561 = vmatprep.subr.mxu0 %v3464
  %3562 = vmatpush1.msra.mxu0 %v3463
  %3563 = vmatprep.subr.mxu0 %v3466
  %3564 = vmatpush1.msra.mxu0 %v3465
  %3565 = vmatprep.subr.mxu0 %v3468
  %3566 = vmatpush1.msra.mxu0 %v3467
  %3567 = vmatprep.subr.mxu0 %v3470
  %3568 = vmatpush1.msra.mxu0 %v3469
  %3569 = vmatprep.subr.mxu0 %v3472
  %3570 = vmatpush1.msra.mxu0 %v3471
  %3571 = vmatprep.subr.mxu0 %v3474
  %3572 = vmatpush1.msra.mxu0 %v3473
  %3573 = vmatprep.subr.mxu0 %v3476
  %3574 = vmatpush1.msra.mxu0 %v3475
  %3575 = vmatprep.subr.mxu0 %v3478
  %3576 = vmatpush1.msra.mxu0 %v3477
  %3577 = vmatprep.subr.mxu0 %v3480
  %3578 = vmatpush1.msra.mxu0 %v3479
  %3579 = vmatprep.subr.mxu0 %v3482
  %3580 = vmatpush1.msra.mxu0 %v3481
  %3581 = vmatprep.subr.mxu0 %v3484
  %3582 = vmatpush1.msra.mxu0 %v3483
  %3583 = vmatprep.subr.mxu0 %v3486
  %3584 = vmatpush1.msra.mxu0 %v3485
  %3585 = vmatprep.subr.mxu0 %v3488
  %3586 = vmatpush1.msra.mxu0 %v3487
  %3587 = vmatprep.subr.mxu0 %v3490
  %3588 = vmatpush1.msra.mxu0 %v3489
  %3589 = vmatprep.subr.mxu0 %v3492
  %3590 = vmatpush1.msra.mxu0 %v3491
  %3591 = vmatprep.subr.mxu0 %v3494
  %3592 = vmatpush1.msra.mxu0 %v3493
  %3593 = vmatprep.subr.mxu0 %v3496
  %3594 = vmatpush1.msra.mxu0 %v3495
  %3595 = vmatprep.subr.mxu0 %v3498
  %3596 = vmatpush1.msra.mxu0 %v3497
  %3597 = vmatprep.subr.mxu0 %v3500
  %3598 = vmatpush1.msra.mxu0 %v3499
  %3599 = vmatprep.subr.mxu0 %v3502
  %3600 = vmatpush1.msra.mxu0 %v3501
  %3601 = vmatprep.subr.mxu0 %v3504
  %3602 = vmatpush1.msra.mxu0 %v3503
  %3603 = vmatprep.subr.mxu0 %v3506
  %3604 = vmatpush1.msra.mxu0 %v3505
  %3605 = vmatprep.subr.mxu0 %v3508
  %3606 = vmatpush1.msra.mxu0 %v3507
  %3607 = vmatprep.subr.mxu0 %v3510
  %3608 = vmatpush1.msra.mxu0 %v3509
  %3609 = vmatprep.subr.mxu0 %v3512
  %3610 = vmatpush1.msra.mxu0 %v3511
  %3611 = vmatprep.subr.mxu0 0.0
  %3612 = vmatpush1.msra.mxu0 0.0
  %3613 = vmatprep.subr.mxu0 0.0
  %3614 = vmatpush1.msra.mxu0 0.0
  %3615 = vmatprep.subr.mxu0 0.0
  %3616 = vmatpush1.msra.mxu0 0.0
  %3617 = vmatprep.subr.mxu0 0.0
  %3618 = vmatpush1.msra.mxu0 0.0
  %3619 = vmatprep.mubr.f32.mxu0 %v3514
  %3620 = vmatmul.mubr.f32.gmra.mrb[0].mxu0 %v3429
  %v3621 = vpop.f32.mrb[0].mxu0
  %v3622 = vadd.f32 0.0, %v3621
  %v3623 = vpop.f32.mrb[0].mxu0
  %v3624 = vadd.f32 0.0, %v3623
  %3625 = vmatprep.mubr.f32.mxu0 %v3517
  %3626 = vmatmul.mubr.f32.gmra.mrb[0].mxu0 %v3431
  %v3627 = vpop.f32.mrb[0].mxu0
  %v3628 = vadd.f32 0.0, %v3627
  %v3629 = vpop.f32.mrb[0].mxu0
  %v3630 = vadd.f32 0.0, %v3629
  %3631 = vmatprep.mubr.f32.mxu0 %v3520
  %3632 = vmatmul.mubr.f32.gmra.mrb[0].mxu0 %v3433
  %v3633 = vpop.f32.mrb[0].mxu0
  %v3634 = vadd.f32 0.0, %v3633
  %v3635 = vpop.f32.mrb[0].mxu0
  %v3636 = vadd.f32 0.0, %v3635
  %3637 = vmatprep.mubr.f32.mxu0 %v3523
  %3638 = vmatmul.mubr.f32.gmra.mrb[0].mxu0 %v3435
  %v3639 = vpop.f32.mrb[0].mxu0
  %v3640 = vadd.f32 0.0, %v3639
  %v3641 = vpop.f32.mrb[0].mxu0
  %v3642 = vadd.f32 0.0, %v3641
  %3643 = vmatprep.mubr.f32.mxu0 %v3526
  %3644 = vmatmul.mubr.f32.gmra.mrb[0].mxu0 %v3437
  %v3645 = vpop.f32.mrb[0].mxu0
  %v3646 = vadd.f32 0.0, %v3645
  %v3647 = vpop.f32.mrb[0].mxu0
  %v3648 = vadd.f32 0.0, %v3647
  %3649 = vmatprep.mubr.f32.mxu0 %v3529
  %3650 = vmatmul.mubr.f32.gmra.mrb[0].mxu0 %v3439
  %v3651 = vpop.f32.mrb[0].mxu0
  %v3652 = vadd.f32 0.0, %v3651
  %v3653 = vpop.f32.mrb[0].mxu0
  %v3654 = vadd.f32 0.0, %v3653
  %3655 = vmatprep.mubr.f32.mxu0 %v3532
  %3656 = vmatmul.mubr.f32.gmra.mrb[0].mxu0 %v3441
  %v3657 = vpop.f32.mrb[0].mxu0
  %v3658 = vadd.f32 0.0, %v3657
  %v3659 = vpop.f32.mrb[0].mxu0
  %v3660 = vadd.f32 0.0, %v3659
  %3661 = vmatprep.mubr.f32.mxu0 %v3535
  %3662 = vmatmul.mubr.f32.gmra.mrb[0].mxu0 %v3443
  %v3663 = vpop.f32.mrb[0].mxu0
  %v3664 = vadd.f32 0.0, %v3663
  %v3665 = vpop.f32.mrb[0].mxu0
  %v3666 = vadd.f32 0.0, %v3665
  %3667 = vmatprep.mubr.f32.mxu0 %v3538
  %3668 = vmatmul.mubr.f32.gmra.mrb[0].mxu0 %v3445
  %v3669 = vpop.f32.mrb[0].mxu0
  %v3670 = vadd.f32 0.0, %v3669
  %v3671 = vpop.f32.mrb[0].mxu0
  %v3672 = vadd.f32 0.0, %v3671
  %3673 = vmatprep.mubr.f32.mxu0 %v3541
  %3674 = vmatmul.mubr.f32.gmra.mrb[0].mxu0 %v3447
  %v3675 = vpop.f32.mrb[0].mxu0
  %v3676 = vadd.f32 0.0, %v3675
  %v3677 = vpop.f32.mrb[0].mxu0
  %v3678 = vadd.f32 0.0, %v3677
  %3679 = vmatprep.mubr.f32.mxu0 %v3544
  %3680 = vmatmul.mubr.f32.gmra.mrb[0].mxu0 %v3449
  %v3681 = vpop.f32.mrb[0].mxu0
  %v3682 = vadd.f32 0.0, %v3681
  %v3683 = vpop.f32.mrb[0].mxu0
  %v3684 = vadd.f32 0.0, %v3683
  %3685 = vmatprep.mubr.f32.mxu0 %v3547
  %3686 = vmatmul.mubr.f32.gmra.mrb[0].mxu0 %v3451
  %v3687 = vpop.f32.mrb[0].mxu0
  %v3688 = vadd.f32 0.0, %v3687
  %v3689 = vpop.f32.mrb[0].mxu0
  %v3690 = vadd.f32 0.0, %v3689
  %3691 = vmatprep.mubr.f32.mxu0 %v3550
  %3692 = vmatmul.mubr.f32.gmra.mrb[0].mxu0 %v3453
  %v3693 = vpop.f32.mrb[0].mxu0
  %v3694 = vadd.f32 0.0, %v3693
  %v3695 = vpop.f32.mrb[0].mxu0
  %v3696 = vadd.f32 0.0, %v3695
  %3697 = vmatprep.mubr.f32.mxu0 %v3553
  %3698 = vmatmul.mubr.f32.gmra.mrb[0].mxu0 %v3455
  %v3699 = vpop.f32.mrb[0].mxu0
  %v3700 = vadd.f32 0.0, %v3699
  %v3701 = vpop.f32.mrb[0].mxu0
  %v3702 = vadd.f32 0.0, %v3701
  %3703 = vdwg.mxu0
  %3732 = vrot.lane.b32.xlu0 %v3622, 16
  %v3733 = vpop.permute.xlu0 %3732
  %3734 = vrot.lane.b32.xlu0 %v3624, 16
  %v3735 = vpop.permute.xlu0 %3734
  %3736 = vrot.lane.b32.xlu0 %v3628, 16
  %v3737 = vpop.permute.xlu0 %3736
  %3738 = vrot.lane.b32.xlu0 %v3630, 16
  %v3739 = vpop.permute.xlu0 %3738
  %3740 = vrot.lane.b32.xlu0 %v3634, 16
  %v3741 = vpop.permute.xlu0 %3740
  %3742 = vrot.lane.b32.xlu0 %v3636, 16
  %v3743 = vpop.permute.xlu0 %3742
  %3744 = vrot.lane.b32.xlu0 %v3640, 16
  %v3745 = vpop.permute.xlu0 %3744
  %3746 = vrot.lane.b32.xlu0 %v3642, 16
  %v3747 = vpop.permute.xlu0 %3746
  %3748 = vrot.lane.b32.xlu0 %v3646, 16
  %v3749 = vpop.permute.xlu0 %3748
  %3750 = vrot.lane.b32.xlu0 %v3648, 16
  %v3751 = vpop.permute.xlu0 %3750
  %3752 = vrot.lane.b32.xlu0 %v3652, 16
  %v3753 = vpop.permute.xlu0 %3752
  %3754 = vrot.lane.b32.xlu0 %v3654, 16
  %v3755 = vpop.permute.xlu0 %3754
  %3756 = vrot.lane.b32.xlu0 %v3658, 16
  %v3757 = vpop.permute.xlu0 %3756
  %3758 = vrot.lane.b32.xlu0 %v3660, 16
  %v3759 = vpop.permute.xlu0 %3758
  %3760 = vrot.lane.b32.xlu0 %v3664, 16
  %v3761 = vpop.permute.xlu0 %3760
  %3762 = vrot.lane.b32.xlu0 %v3666, 16
  %v3763 = vpop.permute.xlu0 %3762
  %3764 = vrot.lane.b32.xlu0 %v3670, 16
  %v3765 = vpop.permute.xlu0 %3764
  %3766 = vrot.lane.b32.xlu0 %v3672, 16
  %v3767 = vpop.permute.xlu0 %3766
  %3768 = vrot.lane.b32.xlu0 %v3676, 16
  %v3769 = vpop.permute.xlu0 %3768
  %3770 = vrot.lane.b32.xlu0 %v3678, 16
  %v3771 = vpop.permute.xlu0 %3770
  %3772 = vrot.lane.b32.xlu0 %v3682, 16
  %v3773 = vpop.permute.xlu0 %3772
  %3774 = vrot.lane.b32.xlu0 %v3684, 16
  %v3775 = vpop.permute.xlu0 %3774
  %3776 = vrot.lane.b32.xlu0 %v3688, 16
  %v3777 = vpop.permute.xlu0 %3776
  %3778 = vrot.lane.b32.xlu0 %v3690, 16
  %v3779 = vpop.permute.xlu0 %3778
  %3780 = vrot.lane.b32.xlu0 %v3694, 16
  %v3781 = vpop.permute.xlu0 %3780
  %3782 = vrot.lane.b32.xlu0 %v3696, 16
  %v3783 = vpop.permute.xlu0 %3782
  %3784 = vrot.lane.b32.xlu0 %v3700, 16
  %v3785 = vpop.permute.xlu0 %3784
  %3786 = vrot.lane.b32.xlu0 %v3702, 16
  %v3787 = vpop.permute.xlu0 %3786
  %vm3788 = vcmask 130048
  %v3789 = vsel %vm3788, %v3733, %v3735
  %v3790 = vsel %vm3788, %v3737, %v3739
  %v3791 = vsel %vm3788, %v3741, %v3743
  %v3792 = vsel %vm3788, %v3745, %v3747
  %v3793 = vsel %vm3788, %v3749, %v3751
  %v3794 = vsel %vm3788, %v3753, %v3755
  %v3795 = vsel %vm3788, %v3757, %v3759
  %v3796 = vsel %vm3788, %v3761, %v3763
  %v3797 = vsel %vm3788, %v3765, %v3767
  %v3798 = vsel %vm3788, %v3769, %v3771
  %v3799 = vsel %vm3788, %v3773, %v3775
  %v3800 = vsel %vm3788, %v3777, %v3779
  %v3801 = vsel %vm3788, %v3781, %v3783
  %v3802 = vsel %vm3788, %v3785, %v3787
  %v3817 = vmax.f32 %v3622, %v3789
  %v3818 = vmax.f32 %v3628, %v3790
  %v3819 = vmax.f32 %v3634, %v3791
  %v3820 = vmax.f32 %v3640, %v3792
  %v3821 = vmax.f32 %v3646, %v3793
  %v3822 = vmax.f32 %v3652, %v3794
  %v3823 = vmax.f32 %v3658, %v3795
  %v3824 = vmax.f32 %v3664, %v3796
  %v3825 = vmax.f32 %v3670, %v3797
  %v3826 = vmax.f32 %v3676, %v3798
  %v3827 = vmax.f32 %v3682, %v3799
  %v3828 = vmax.f32 %v3688, %v3800
  %v3829 = vmax.f32 %v3694, %v3801
  %v3830 = vmax.f32 %v3700, %v3802
  %v3831 = vld [vmem:[%s6] sm:$0xff]
  %v3832 = vld [vmem:[%s6 + $0x8] sm:$0xff]
  %v3833 = vld [vmem:[%s6 + $0x10] sm:$0xff]
  %v3834 = vld [vmem:[%s6 + $0x18] sm:$0xff]
  %v3835 = vld [vmem:[%s6 + $0x20] sm:$0xff]
  %v3836 = vld [vmem:[%s6 + $0x28] sm:$0xff]
  %v3837 = vld [vmem:[%s6 + $0x30] sm:$0xff]
  %v3838 = vld [vmem:[%s6 + $0x38] sm:$0xff]
  %v3839 = vld [vmem:[%s6 + $0x40] sm:$0xff]
  %v3840 = vld [vmem:[%s6 + $0x48] sm:$0xff]
  %v3841 = vld [vmem:[%s6 + $0x50] sm:$0xff]
  %v3842 = vld [vmem:[%s6 + $0x58] sm:$0xff]
  %v3843 = vld [vmem:[%s6 + $0x60] sm:$0xff]
  %v3844 = vld [vmem:[%s6 + $0x68] sm:$0xff]
  %v3845 = vld [vmem:[%s6 + $0x70] sm:$0xff]
  %v3846 = vld [vmem:[%s6 + $0x78] sm:$0xff]
  %v3847 = vld [vmem:[%s6 + $0x80] sm:$0xff]
  %v3848 = vld [vmem:[%s6 + $0x88] sm:$0xff]
  %v3849 = vld [vmem:[%s6 + $0x90] sm:$0xff]
  %v3850 = vld [vmem:[%s6 + $0x98] sm:$0xff]
  %v3851 = vld [vmem:[%s6 + $0xa0] sm:$0xff]
  %v3852 = vld [vmem:[%s6 + $0xa8] sm:$0xff]
  %v3853 = vld [vmem:[%s6 + $0xb0] sm:$0xff]
  %v3854 = vld [vmem:[%s6 + $0xb8] sm:$0xff]
  %v3855 = vld [vmem:[%s6 + $0xc0] sm:$0xff]
  %v3856 = vld [vmem:[%s6 + $0xc8] sm:$0xff]
  %v3857 = vld [vmem:[%s6 + $0xd0] sm:$0xff]
  %v3858 = vld [vmem:[%s6 + $0xd8] sm:$0xff]
  %v3859 = vld [vmem:[%s6 + $0xe0] sm:$0xff]
  %v3860 = vld [vmem:[%s6 + $0xe8] sm:$0xff]
  %v3861 = vld [vmem:[%s6 + $0xf0] sm:$0xff]
  %v3862 = vld [vmem:[%s6 + $0xf8] sm:$0xff]
  %v3863 = vld [vmem:[%s6 + $0x100] sm:$0xff]
  %v3864 = vld [vmem:[%s6 + $0x108] sm:$0xff]
  %v3865 = vld [vmem:[%s6 + $0x110] sm:$0xff]
  %v3866 = vld [vmem:[%s6 + $0x118] sm:$0xff]
  %v3867 = vld [vmem:[%s6 + $0x120] sm:$0xff]
  %v3868 = vld [vmem:[%s6 + $0x128] sm:$0xff]
  %v3869 = vld [vmem:[%s6 + $0x130] sm:$0xff]
  %v3870 = vld [vmem:[%s6 + $0x138] sm:$0xff]
  %v3871 = vld [vmem:[%s6 + $0x140] sm:$0xff]
  %v3872 = vld [vmem:[%s6 + $0x148] sm:$0xff]
  %v3873 = vld [vmem:[%s6 + $0x150] sm:$0xff]
  %v3874 = vld [vmem:[%s6 + $0x158] sm:$0xff]
  %v3875 = vld [vmem:[%s6 + $0x160] sm:$0xff]
  %v3876 = vld [vmem:[%s6 + $0x168] sm:$0xff]
  %v3877 = vld [vmem:[%s6 + $0x170] sm:$0xff]
  %v3878 = vld [vmem:[%s6 + $0x178] sm:$0xff]
  %v3879 = vld [vmem:[%s6 + $0x180] sm:$0xff]
  %v3880 = vld [vmem:[%s6 + $0x188] sm:$0xff]
  %v3881 = vld [vmem:[%s6 + $0x190] sm:$0xff]
  %v3882 = vld [vmem:[%s6 + $0x198] sm:$0xff]
  %v3883 = vld [vmem:[%s6 + $0x1a0] sm:$0xff]
  %v3884 = vld [vmem:[%s6 + $0x1a8] sm:$0xff]
  %v3885 = vld [vmem:[%s6 + $0x1b0] sm:$0xff]
  %v3886 = vld [vmem:[%s6 + $0x1b8] sm:$0xff]
  %v3887 = vld [vmem:[%s6 + $0x1c0] sm:$0xff]
  %v3888 = vld [vmem:[%s6 + $0x1c8] sm:$0xff]
  %v3889 = vld [vmem:[%s6 + $0x1d0] sm:$0xff]
  %v3890 = vld [vmem:[%s6 + $0x1d8] sm:$0xff]
  %v3891 = vld [vmem:[%s6 + $0x1e0] sm:$0xff]
  %v3892 = vld [vmem:[%s6 + $0x1e8] sm:$0xff]
  %v3893 = vld [vmem:[%s6 + $0x1f0] sm:$0xff]
  %v3894 = vld [vmem:[%s6 + $0x1f8] sm:$0xff]
  %v3895 = vld [vmem:[%s6 + $0x200] sm:$0xff]
  %v3896 = vld [vmem:[%s6 + $0x208] sm:$0xff]
  %v3897 = vld [vmem:[%s6 + $0x210] sm:$0xff]
  %v3898 = vld [vmem:[%s6 + $0x218] sm:$0xff]
  %v3899 = vld [vmem:[%s6 + $0x220] sm:$0xff]
  %v3900 = vld [vmem:[%s6 + $0x228] sm:$0xff]
  %vm3901 = vcmask 916480
  %v3903 = vsel %vm3901, %v3831, 0
  %v3906 = vsel %vm3901, %v3832, 0
  %v3909 = vsel %vm3901, %v3833, 0
  %v3912 = vsel %vm3901, %v3834, 0
  %v3915 = vsel %vm3901, %v3835, 0
  %v3918 = vsel %vm3901, %v3836, 0
  %v3921 = vsel %vm3901, %v3837, 0
  %v3924 = vsel %vm3901, %v3838, 0
  %v3927 = vsel %vm3901, %v3839, 0
  %v3930 = vsel %vm3901, %v3840, 0
  %v3933 = vsel %vm3901, %v3841, 0
  %v3936 = vsel %vm3901, %v3842, 0
  %v3939 = vsel %vm3901, %v3843, 0
  %v3942 = vsel %vm3901, %v3844, 0
  %v3945 = vsel %vm3901, %v3845, 0
  %v3948 = vsel %vm3901, %v3846, 0
  %v3951 = vsel %vm3901, %v3847, 0
  %v3954 = vsel %vm3901, %v3848, 0
  %v3957 = vsel %vm3901, %v3849, 0
  %v3960 = vsel %vm3901, %v3850, 0
  %v3963 = vsel %vm3901, %v3851, 0
  %v3966 = vsel %vm3901, %v3852, 0
  %v3969 = vsel %vm3901, %v3853, 0
  %v3972 = vsel %vm3901, %v3854, 0
  %v3975 = vsel %vm3901, %v3855, 0
  %v3978 = vsel %vm3901, %v3856, 0
  %v3981 = vsel %vm3901, %v3857, 0
  %v3984 = vsel %vm3901, %v3858, 0
  %v3987 = vsel %vm3901, %v3859, 0
  %v3990 = vsel %vm3901, %v3860, 0
  %v3993 = vsel %vm3901, %v3861, 0
  %v3996 = vsel %vm3901, %v3862, 0
  %v3999 = vsel %vm3901, %v3863, 0
  %v4002 = vsel %vm3901, %v3864, 0
  %v4005 = vsel %vm3901, %v3865, 0
  %v4008 = vsel %vm3901, %v3866, 0
  %v4011 = vsel %vm3901, %v3867, 0
  %v4014 = vsel %vm3901, %v3868, 0
  %v4017 = vsel %vm3901, %v3869, 0
  %v4020 = vsel %vm3901, %v3870, 0
  %v4023 = vsel %vm3901, %v3871, 0
  %v4026 = vsel %vm3901, %v3872, 0
  %v4029 = vsel %vm3901, %v3873, 0
  %v4032 = vsel %vm3901, %v3874, 0
  %v4035 = vsel %vm3901, %v3875, 0
  %v4038 = vsel %vm3901, %v3876, 0
  %v4041 = vsel %vm3901, %v3877, 0
  %v4044 = vsel %vm3901, %v3878, 0
  %v4047 = vsel %vm3901, %v3879, 0
  %v4050 = vsel %vm3901, %v3880, 0
  %v4053 = vsel %vm3901, %v3881, 0
  %v4056 = vsel %vm3901, %v3882, 0
  %v4059 = vsel %vm3901, %v3883, 0
  %v4062 = vsel %vm3901, %v3884, 0
  %v4065 = vsel %vm3901, %v3885, 0
  %v4068 = vsel %vm3901, %v3886, 0
  %v4071 = vsel %vm3901, %v3887, 0
  %v4074 = vsel %vm3901, %v3888, 0
  %v4077 = vsel %vm3901, %v3889, 0
  %v4080 = vsel %vm3901, %v3890, 0
  %v4083 = vsel %vm3901, %v3891, 0
  %v4086 = vsel %vm3901, %v3892, 0
  %v4089 = vsel %vm3901, %v3893, 0
  %v4092 = vsel %vm3901, %v3894, 0
  %v4095 = vsel %vm3901, %v3895, 0
  %v4098 = vsel %vm3901, %v3896, 0
  %v4101 = vsel %vm3901, %v3897, 0
  %v4104 = vsel %vm3901, %v3898, 0
  %v4107 = vsel %vm3901, %v3899, 0
  %v4110 = vsel %vm3901, %v3900, 0
  %4112 = vmatprep.subr.mxu0 0.0
  %4113 = vmatpush1.msra.mxu0 %v3817
  %4114 = vmatprep.subr.mxu0 0.0
  %4115 = vmatpush1.msra.mxu0 %v3818
  %4116 = vmatprep.subr.mxu0 0.0
  %4117 = vmatpush1.msra.mxu0 %v3819
  %4118 = vmatprep.subr.mxu0 0.0
  %4119 = vmatpush1.msra.mxu0 %v3820
  %4120 = vmatprep.subr.mxu0 0.0
  %4121 = vmatpush1.msra.mxu0 %v3821
  %4122 = vmatprep.subr.mxu0 0.0
  %4123 = vmatpush1.msra.mxu0 %v3822
  %4124 = vmatprep.subr.mxu0 0.0
  %4125 = vmatpush1.msra.mxu0 %v3823
  %4126 = vmatprep.subr.mxu0 0.0
  %4127 = vmatpush1.msra.mxu0 %v3824
  %4128 = vmatprep.subr.mxu0 0.0
  %4129 = vmatpush1.msra.mxu0 %v3825
  %4130 = vmatprep.subr.mxu0 0.0
  %4131 = vmatpush1.msra.mxu0 %v3826
  %4132 = vmatprep.subr.mxu0 0.0
  %4133 = vmatpush1.msra.mxu0 %v3827
  %4134 = vmatprep.subr.mxu0 0.0
  %4135 = vmatpush1.msra.mxu0 %v3828
  %4136 = vmatprep.subr.mxu0 0.0
  %4137 = vmatpush1.msra.mxu0 %v3829
  %4138 = vmatprep.subr.mxu0 0.0
  %4139 = vmatpush1.msra.mxu0 %v3830
  %4140 = vmatprep.subr.mxu0 0.0
  %4141 = vmatpush1.msra.mxu0 0.0
  %4142 = vmatprep.subr.mxu0 0.0
  %4143 = vmatpush1.msra.mxu0 0.0
  %4144 = vmatprep.subr.mxu0 0.0
  %4145 = vmatpush1.msra.mxu0 0.0
  %4146 = vmatprep.subr.mxu0 0.0
  %4147 = vmatpush1.msra.mxu0 0.0
  %4148 = vmatprep.subr.mxu0 0.0
  %4149 = vmatpush1.msra.mxu0 0.0
  %4150 = vmatprep.subr.mxu0 0.0
  %4151 = vmatpush1.msra.mxu0 0.0
  %4152 = vmatprep.subr.mxu0 0.0
  %4153 = vmatpush1.msra.mxu0 0.0
  %4154 = vmatprep.subr.mxu0 0.0
  %4155 = vmatpush1.msra.mxu0 0.0
  %4156 = vmatprep.subr.mxu0 0.0
  %4157 = vmatpush1.msra.mxu0 0.0
  %4158 = vmatprep.subr.mxu0 0.0
  %4159 = vmatpush1.msra.mxu0 0.0
  %4160 = vmatprep.subr.mxu0 0.0
  %4161 = vmatpush1.msra.mxu0 0.0
  %4162 = vmatprep.subr.mxu0 0.0
  %4163 = vmatpush1.msra.mxu0 0.0
  %4164 = vmatprep.subr.mxu0 0.0
  %4165 = vmatpush1.msra.mxu0 0.0
  %4166 = vmatprep.subr.mxu0 0.0
  %4167 = vmatpush1.msra.mxu0 0.0
  %4168 = vmatprep.subr.mxu0 0.0
  %4169 = vmatpush1.msra.mxu0 0.0
  %4170 = vmatprep.subr.mxu0 0.0
  %4171 = vmatpush1.msra.mxu0 0.0
  %4172 = vmatprep.subr.mxu0 0.0
  %4173 = vmatpush1.msra.mxu0 0.0
  %4174 = vmatprep.subr.mxu0 0.0
  %4175 = vmatpush1.msra.mxu0 0.0
  %4176 = vmatprep.mubr.f32.mxu0 0.0
  %4177 = vmatmul.mubr.f32.gmra.mrb[0].mxu0 %v3903
  %v4178 = vpop.f32.mrb[0].mxu0
  %v4179 = vadd.f32 0.0, %v4178
  %v4180 = vpop.f32.mrb[0].mxu0
  %4181 = vmatprep.mubr.f32.mxu0 0.0
  %4182 = vmatmul.mubr.f32.gmra.mrb[0].mxu0 %v3906
  %v4183 = vpop.f32.mrb[0].mxu0
  %v4184 = vadd.f32 0.0, %v4183
  %v4185 = vpop.f32.mrb[0].mxu0
  %4186 = vmatprep.mubr.f32.mxu0 0.0
  %4187 = vmatmul.mubr.f32.gmra.mrb[0].mxu0 %v3909
  %v4188 = vpop.f32.mrb[0].mxu0
  %v4189 = vadd.f32 0.0, %v4188
  %v4190 = vpop.f32.mrb[0].mxu0
  %4191 = vmatprep.mubr.f32.mxu0 0.0
  %4192 = vmatmul.mubr.f32.gmra.mrb[0].mxu0 %v3912
  %v4193 = vpop.f32.mrb[0].mxu0
  %v4194 = vadd.f32 0.0, %v4193
  %v4195 = vpop.f32.mrb[0].mxu0
  %4196 = vmatprep.mubr.f32.mxu0 0.0
  %4197 = vmatmul.mubr.f32.gmra.mrb[0].mxu0 %v3915
  %v4198 = vpop.f32.mrb[0].mxu0
  %v4199 = vadd.f32 0.0, %v4198
  %v4200 = vpop.f32.mrb[0].mxu0
  %4201 = vmatprep.mubr.f32.mxu0 0.0
  %4202 = vmatmul.mubr.f32.gmra.mrb[0].mxu0 %v3918
  %v4203 = vpop.f32.mrb[0].mxu0
  %v4204 = vadd.f32 0.0, %v4203
  %v4205 = vpop.f32.mrb[0].mxu0
  %4206 = vmatprep.mubr.f32.mxu0 0.0
  %4207 = vmatmul.mubr.f32.gmra.mrb[0].mxu0 %v3921
  %v4208 = vpop.f32.mrb[0].mxu0
  %v4209 = vadd.f32 0.0, %v4208
  %v4210 = vpop.f32.mrb[0].mxu0
  %4211 = vmatprep.mubr.f32.mxu0 0.0
  %4212 = vmatmul.mubr.f32.gmra.mrb[0].mxu0 %v3924
  %v4213 = vpop.f32.mrb[0].mxu0
  %v4214 = vadd.f32 0.0, %v4213
  %v4215 = vpop.f32.mrb[0].mxu0
  %4216 = vmatprep.mubr.f32.mxu0 0.0
  %4217 = vmatmul.mubr.f32.gmra.mrb[0].mxu0 %v3927
  %v4218 = vpop.f32.mrb[0].mxu0
  %v4219 = vadd.f32 0.0, %v4218
  %v4220 = vpop.f32.mrb[0].mxu0
  %4221 = vmatprep.mubr.f32.mxu0 0.0
  %4222 = vmatmul.mubr.f32.gmra.mrb[0].mxu0 %v3930
  %v4223 = vpop.f32.mrb[0].mxu0
  %v4224 = vadd.f32 0.0, %v4223
  %v4225 = vpop.f32.mrb[0].mxu0
  %4226 = vmatprep.mubr.f32.mxu0 0.0
  %4227 = vmatmul.mubr.f32.gmra.mrb[0].mxu0 %v3933
  %v4228 = vpop.f32.mrb[0].mxu0
  %v4229 = vadd.f32 0.0, %v4228
  %v4230 = vpop.f32.mrb[0].mxu0
  %4231 = vmatprep.mubr.f32.mxu0 0.0
  %4232 = vmatmul.mubr.f32.gmra.mrb[0].mxu0 %v3936
  %v4233 = vpop.f32.mrb[0].mxu0
  %v4234 = vadd.f32 0.0, %v4233
  %v4235 = vpop.f32.mrb[0].mxu0
  %4236 = vmatprep.mubr.f32.mxu0 0.0
  %4237 = vmatmul.mubr.f32.gmra.mrb[0].mxu0 %v3939
  %v4238 = vpop.f32.mrb[0].mxu0
  %v4239 = vadd.f32 0.0, %v4238
  %v4240 = vpop.f32.mrb[0].mxu0
  %4241 = vmatprep.mubr.f32.mxu0 0.0
  %4242 = vmatmul.mubr.f32.gmra.mrb[0].mxu0 %v3942
  %v4243 = vpop.f32.mrb[0].mxu0
  %v4244 = vadd.f32 0.0, %v4243
  %v4245 = vpop.f32.mrb[0].mxu0
  %4246 = vmatprep.mubr.f32.mxu0 0.0
  %4247 = vmatmul.mubr.f32.gmra.mrb[0].mxu0 %v3945
  %v4248 = vpop.f32.mrb[0].mxu0
  %v4249 = vadd.f32 0.0, %v4248
  %v4250 = vpop.f32.mrb[0].mxu0
  %4251 = vmatprep.mubr.f32.mxu0 0.0
  %4252 = vmatmul.mubr.f32.gmra.mrb[0].mxu0 %v3948
  %v4253 = vpop.f32.mrb[0].mxu0
  %v4254 = vadd.f32 0.0, %v4253
  %v4255 = vpop.f32.mrb[0].mxu0
  %4256 = vmatprep.mubr.f32.mxu0 0.0
  %4257 = vmatmul.mubr.f32.gmra.mrb[0].mxu0 %v3951
  %v4258 = vpop.f32.mrb[0].mxu0
  %v4259 = vadd.f32 0.0, %v4258
  %v4260 = vpop.f32.mrb[0].mxu0
  %4261 = vmatprep.mubr.f32.mxu0 0.0
  %4262 = vmatmul.mubr.f32.gmra.mrb[0].mxu0 %v3954
  %v4263 = vpop.f32.mrb[0].mxu0
  %v4264 = vadd.f32 0.0, %v4263
  %v4265 = vpop.f32.mrb[0].mxu0
  %4266 = vmatprep.mubr.f32.mxu0 0.0
  %4267 = vmatmul.mubr.f32.gmra.mrb[0].mxu0 %v3957
  %v4268 = vpop.f32.mrb[0].mxu0
  %v4269 = vadd.f32 0.0, %v4268
  %v4270 = vpop.f32.mrb[0].mxu0
  %4271 = vmatprep.mubr.f32.mxu0 0.0
  %4272 = vmatmul.mubr.f32.gmra.mrb[0].mxu0 %v3960
  %v4273 = vpop.f32.mrb[0].mxu0
  %v4274 = vadd.f32 0.0, %v4273
  %v4275 = vpop.f32.mrb[0].mxu0
  %4276 = vmatprep.mubr.f32.mxu0 0.0
  %4277 = vmatmul.mubr.f32.gmra.mrb[0].mxu0 %v3963
  %v4278 = vpop.f32.mrb[0].mxu0
  %v4279 = vadd.f32 0.0, %v4278
  %v4280 = vpop.f32.mrb[0].mxu0
  %4281 = vmatprep.mubr.f32.mxu0 0.0
  %4282 = vmatmul.mubr.f32.gmra.mrb[0].mxu0 %v3966
  %v4283 = vpop.f32.mrb[0].mxu0
  %v4284 = vadd.f32 0.0, %v4283
  %v4285 = vpop.f32.mrb[0].mxu0
  %4286 = vmatprep.mubr.f32.mxu0 0.0
  %4287 = vmatmul.mubr.f32.gmra.mrb[0].mxu0 %v3969
  %v4288 = vpop.f32.mrb[0].mxu0
  %v4289 = vadd.f32 0.0, %v4288
  %v4290 = vpop.f32.mrb[0].mxu0
  %4291 = vmatprep.mubr.f32.mxu0 0.0
  %4292 = vmatmul.mubr.f32.gmra.mrb[0].mxu0 %v3972
  %v4293 = vpop.f32.mrb[0].mxu0
  %v4294 = vadd.f32 0.0, %v4293
  %v4295 = vpop.f32.mrb[0].mxu0
  %4296 = vmatprep.mubr.f32.mxu0 0.0
  %4297 = vmatmul.mubr.f32.gmra.mrb[0].mxu0 %v3975
  %v4298 = vpop.f32.mrb[0].mxu0
  %v4299 = vadd.f32 0.0, %v4298
  %v4300 = vpop.f32.mrb[0].mxu0
  %4301 = vmatprep.mubr.f32.mxu0 0.0
  %4302 = vmatmul.mubr.f32.gmra.mrb[0].mxu0 %v3978
  %v4303 = vpop.f32.mrb[0].mxu0
  %v4304 = vadd.f32 0.0, %v4303
  %v4305 = vpop.f32.mrb[0].mxu0
  %4306 = vmatprep.mubr.f32.mxu0 0.0
  %4307 = vmatmul.mubr.f32.gmra.mrb[0].mxu0 %v3981
  %v4308 = vpop.f32.mrb[0].mxu0
  %v4309 = vadd.f32 0.0, %v4308
  %v4310 = vpop.f32.mrb[0].mxu0
  %4311 = vmatprep.mubr.f32.mxu0 0.0
  %4312 = vmatmul.mubr.f32.gmra.mrb[0].mxu0 %v3984
  %v4313 = vpop.f32.mrb[0].mxu0
  %v4314 = vadd.f32 0.0, %v4313
  %v4315 = vpop.f32.mrb[0].mxu0
  %4316 = vmatprep.mubr.f32.mxu0 0.0
  %4317 = vmatmul.mubr.f32.gmra.mrb[0].mxu0 %v3987
  %v4318 = vpop.f32.mrb[0].mxu0
  %v4319 = vadd.f32 0.0, %v4318
  %v4320 = vpop.f32.mrb[0].mxu0
  %4321 = vmatprep.mubr.f32.mxu0 0.0
  %4322 = vmatmul.mubr.f32.gmra.mrb[0].mxu0 %v3990
  %v4323 = vpop.f32.mrb[0].mxu0
  %v4324 = vadd.f32 0.0, %v4323
  %v4325 = vpop.f32.mrb[0].mxu0
  %4326 = vmatprep.mubr.f32.mxu0 0.0
  %4327 = vmatmul.mubr.f32.gmra.mrb[0].mxu0 %v3993
  %v4328 = vpop.f32.mrb[0].mxu0
  %v4329 = vadd.f32 0.0, %v4328
  %v4330 = vpop.f32.mrb[0].mxu0
  %4331 = vmatprep.mubr.f32.mxu0 0.0
  %4332 = vmatmul.mubr.f32.gmra.mrb[0].mxu0 %v3996
  %v4333 = vpop.f32.mrb[0].mxu0
  %v4334 = vadd.f32 0.0, %v4333
  %v4335 = vpop.f32.mrb[0].mxu0
  %4336 = vmatprep.mubr.f32.mxu0 0.0
  %4337 = vmatmul.mubr.f32.gmra.mrb[0].mxu0 %v3999
  %v4338 = vpop.f32.mrb[0].mxu0
  %v4339 = vadd.f32 0.0, %v4338
  %v4340 = vpop.f32.mrb[0].mxu0
  %4341 = vmatprep.mubr.f32.mxu0 0.0
  %4342 = vmatmul.mubr.f32.gmra.mrb[0].mxu0 %v4002
  %v4343 = vpop.f32.mrb[0].mxu0
  %v4344 = vadd.f32 0.0, %v4343
  %v4345 = vpop.f32.mrb[0].mxu0
  %4346 = vmatprep.mubr.f32.mxu0 0.0
  %4347 = vmatmul.mubr.f32.gmra.mrb[0].mxu0 %v4005
  %v4348 = vpop.f32.mrb[0].mxu0
  %v4349 = vadd.f32 0.0, %v4348
  %v4350 = vpop.f32.mrb[0].mxu0
  %4351 = vmatprep.mubr.f32.mxu0 0.0
  %4352 = vmatmul.mubr.f32.gmra.mrb[0].mxu0 %v4008
  %v4353 = vpop.f32.mrb[0].mxu0
  %v4354 = vadd.f32 0.0, %v4353
  %v4355 = vpop.f32.mrb[0].mxu0
  %4356 = vmatprep.mubr.f32.mxu0 0.0
  %4357 = vmatmul.mubr.f32.gmra.mrb[0].mxu0 %v4011
  %v4358 = vpop.f32.mrb[0].mxu0
  %v4359 = vadd.f32 0.0, %v4358
  %v4360 = vpop.f32.mrb[0].mxu0
  %4361 = vmatprep.mubr.f32.mxu0 0.0
  %4362 = vmatmul.mubr.f32.gmra.mrb[0].mxu0 %v4014
  %v4363 = vpop.f32.mrb[0].mxu0
  %v4364 = vadd.f32 0.0, %v4363
  %v4365 = vpop.f32.mrb[0].mxu0
  %4366 = vmatprep.mubr.f32.mxu0 0.0
  %4367 = vmatmul.mubr.f32.gmra.mrb[0].mxu0 %v4017
  %v4368 = vpop.f32.mrb[0].mxu0
  %v4369 = vadd.f32 0.0, %v4368
  %v4370 = vpop.f32.mrb[0].mxu0
  %4371 = vmatprep.mubr.f32.mxu0 0.0
  %4372 = vmatmul.mubr.f32.gmra.mrb[0].mxu0 %v4020
  %v4373 = vpop.f32.mrb[0].mxu0
  %v4374 = vadd.f32 0.0, %v4373
  %v4375 = vpop.f32.mrb[0].mxu0
  %4376 = vmatprep.mubr.f32.mxu0 0.0
  %4377 = vmatmul.mubr.f32.gmra.mrb[0].mxu0 %v4023
  %v4378 = vpop.f32.mrb[0].mxu0
  %v4379 = vadd.f32 0.0, %v4378
  %v4380 = vpop.f32.mrb[0].mxu0
  %4381 = vmatprep.mubr.f32.mxu0 0.0
  %4382 = vmatmul.mubr.f32.gmra.mrb[0].mxu0 %v4026
  %v4383 = vpop.f32.mrb[0].mxu0
  %v4384 = vadd.f32 0.0, %v4383
  %v4385 = vpop.f32.mrb[0].mxu0
  %4386 = vmatprep.mubr.f32.mxu0 0.0
  %4387 = vmatmul.mubr.f32.gmra.mrb[0].mxu0 %v4029
  %v4388 = vpop.f32.mrb[0].mxu0
  %v4389 = vadd.f32 0.0, %v4388
  %v4390 = vpop.f32.mrb[0].mxu0
  %4391 = vmatprep.mubr.f32.mxu0 0.0
  %4392 = vmatmul.mubr.f32.gmra.mrb[0].mxu0 %v4032
  %v4393 = vpop.f32.mrb[0].mxu0
  %v4394 = vadd.f32 0.0, %v4393
  %v4395 = vpop.f32.mrb[0].mxu0
  %4396 = vmatprep.mubr.f32.mxu0 0.0
  %4397 = vmatmul.mubr.f32.gmra.mrb[0].mxu0 %v4035
  %v4398 = vpop.f32.mrb[0].mxu0
  %v4399 = vadd.f32 0.0, %v4398
  %v4400 = vpop.f32.mrb[0].mxu0
  %4401 = vmatprep.mubr.f32.mxu0 0.0
  %4402 = vmatmul.mubr.f32.gmra.mrb[0].mxu0 %v4038
  %v4403 = vpop.f32.mrb[0].mxu0
  %v4404 = vadd.f32 0.0, %v4403
  %v4405 = vpop.f32.mrb[0].mxu0
  %4406 = vmatprep.mubr.f32.mxu0 0.0
  %4407 = vmatmul.mubr.f32.gmra.mrb[0].mxu0 %v4041
  %v4408 = vpop.f32.mrb[0].mxu0
  %v4409 = vadd.f32 0.0, %v4408
  %v4410 = vpop.f32.mrb[0].mxu0
  %4411 = vmatprep.mubr.f32.mxu0 0.0
  %4412 = vmatmul.mubr.f32.gmra.mrb[0].mxu0 %v4044
  %v4413 = vpop.f32.mrb[0].mxu0
  %v4414 = vadd.f32 0.0, %v4413
  %v4415 = vpop.f32.mrb[0].mxu0
  %4416 = vmatprep.mubr.f32.mxu0 0.0
  %4417 = vmatmul.mubr.f32.gmra.mrb[0].mxu0 %v4047
  %v4418 = vpop.f32.mrb[0].mxu0
  %v4419 = vadd.f32 0.0, %v4418
  %v4420 = vpop.f32.mrb[0].mxu0
  %4421 = vmatprep.mubr.f32.mxu0 0.0
  %4422 = vmatmul.mubr.f32.gmra.mrb[0].mxu0 %v4050
  %v4423 = vpop.f32.mrb[0].mxu0
  %v4424 = vadd.f32 0.0, %v4423
  %v4425 = vpop.f32.mrb[0].mxu0
  %4426 = vmatprep.mubr.f32.mxu0 0.0
  %4427 = vmatmul.mubr.f32.gmra.mrb[0].mxu0 %v4053
  %v4428 = vpop.f32.mrb[0].mxu0
  %v4429 = vadd.f32 0.0, %v4428
  %v4430 = vpop.f32.mrb[0].mxu0
  %4431 = vmatprep.mubr.f32.mxu0 0.0
  %4432 = vmatmul.mubr.f32.gmra.mrb[0].mxu0 %v4056
  %v4433 = vpop.f32.mrb[0].mxu0
  %v4434 = vadd.f32 0.0, %v4433
  %v4435 = vpop.f32.mrb[0].mxu0
  %4436 = vmatprep.mubr.f32.mxu0 0.0
  %4437 = vmatmul.mubr.f32.gmra.mrb[0].mxu0 %v4059
  %v4438 = vpop.f32.mrb[0].mxu0
  %v4439 = vadd.f32 0.0, %v4438
  %v4440 = vpop.f32.mrb[0].mxu0
  %4441 = vmatprep.mubr.f32.mxu0 0.0
  %4442 = vmatmul.mubr.f32.gmra.mrb[0].mxu0 %v4062
  %v4443 = vpop.f32.mrb[0].mxu0
  %v4444 = vadd.f32 0.0, %v4443
  %v4445 = vpop.f32.mrb[0].mxu0
  %4446 = vmatprep.mubr.f32.mxu0 0.0
  %4447 = vmatmul.mubr.f32.gmra.mrb[0].mxu0 %v4065
  %v4448 = vpop.f32.mrb[0].mxu0
  %v4449 = vadd.f32 0.0, %v4448
  %v4450 = vpop.f32.mrb[0].mxu0
  %4451 = vmatprep.mubr.f32.mxu0 0.0
  %4452 = vmatmul.mubr.f32.gmra.mrb[0].mxu0 %v4068
  %v4453 = vpop.f32.mrb[0].mxu0
  %v4454 = vadd.f32 0.0, %v4453
  %v4455 = vpop.f32.mrb[0].mxu0
  %4456 = vmatprep.mubr.f32.mxu0 0.0
  %4457 = vmatmul.mubr.f32.gmra.mrb[0].mxu0 %v4071
  %v4458 = vpop.f32.mrb[0].mxu0
  %v4459 = vadd.f32 0.0, %v4458
  %v4460 = vpop.f32.mrb[0].mxu0
  %4461 = vmatprep.mubr.f32.mxu0 0.0
  %4462 = vmatmul.mubr.f32.gmra.mrb[0].mxu0 %v4074
  %v4463 = vpop.f32.mrb[0].mxu0
  %v4464 = vadd.f32 0.0, %v4463
  %v4465 = vpop.f32.mrb[0].mxu0
  %4466 = vmatprep.mubr.f32.mxu0 0.0
  %4467 = vmatmul.mubr.f32.gmra.mrb[0].mxu0 %v4077
  %v4468 = vpop.f32.mrb[0].mxu0
  %v4469 = vadd.f32 0.0, %v4468
  %v4470 = vpop.f32.mrb[0].mxu0
  %4471 = vmatprep.mubr.f32.mxu0 0.0
  %4472 = vmatmul.mubr.f32.gmra.mrb[0].mxu0 %v4080
  %v4473 = vpop.f32.mrb[0].mxu0
  %v4474 = vadd.f32 0.0, %v4473
  %v4475 = vpop.f32.mrb[0].mxu0
  %4476 = vmatprep.mubr.f32.mxu0 0.0
  %4477 = vmatmul.mubr.f32.gmra.mrb[0].mxu0 %v4083
  %v4478 = vpop.f32.mrb[0].mxu0
  %v4479 = vadd.f32 0.0, %v4478
  %v4480 = vpop.f32.mrb[0].mxu0
  %4481 = vmatprep.mubr.f32.mxu0 0.0
  %4482 = vmatmul.mubr.f32.gmra.mrb[0].mxu0 %v4086
  %v4483 = vpop.f32.mrb[0].mxu0
  %v4484 = vadd.f32 0.0, %v4483
  %v4485 = vpop.f32.mrb[0].mxu0
  %4486 = vmatprep.mubr.f32.mxu0 0.0
  %4487 = vmatmul.mubr.f32.gmra.mrb[0].mxu0 %v4089
  %v4488 = vpop.f32.mrb[0].mxu0
  %v4489 = vadd.f32 0.0, %v4488
  %v4490 = vpop.f32.mrb[0].mxu0
  %4491 = vmatprep.mubr.f32.mxu0 0.0
  %4492 = vmatmul.mubr.f32.gmra.mrb[0].mxu0 %v4092
  %v4493 = vpop.f32.mrb[0].mxu0
  %v4494 = vadd.f32 0.0, %v4493
  %v4495 = vpop.f32.mrb[0].mxu0
  %4496 = vmatprep.mubr.f32.mxu0 0.0
  %4497 = vmatmul.mubr.f32.gmra.mrb[0].mxu0 %v4095
  %v4498 = vpop.f32.mrb[0].mxu0
  %v4499 = vadd.f32 0.0, %v4498
  %v4500 = vpop.f32.mrb[0].mxu0
  %4501 = vmatprep.mubr.f32.mxu0 0.0
  %4502 = vmatmul.mubr.f32.gmra.mrb[0].mxu0 %v4098
  %v4503 = vpop.f32.mrb[0].mxu0
  %v4504 = vadd.f32 0.0, %v4503
  %v4505 = vpop.f32.mrb[0].mxu0
  %4506 = vmatprep.mubr.f32.mxu0 0.0
  %4507 = vmatmul.mubr.f32.gmra.mrb[0].mxu0 %v4101
  %v4508 = vpop.f32.mrb[0].mxu0
  %v4509 = vadd.f32 0.0, %v4508
  %v4510 = vpop.f32.mrb[0].mxu0
  %4511 = vmatprep.mubr.f32.mxu0 0.0
  %4512 = vmatmul.mubr.f32.gmra.mrb[0].mxu0 %v4104
  %v4513 = vpop.f32.mrb[0].mxu0
  %v4514 = vadd.f32 0.0, %v4513
  %v4515 = vpop.f32.mrb[0].mxu0
  %4516 = vmatprep.mubr.f32.mxu0 0.0
  %4517 = vmatmul.mubr.f32.gmra.mrb[0].mxu0 %v4107
  %v4518 = vpop.f32.mrb[0].mxu0
  %v4519 = vadd.f32 0.0, %v4518
  %v4520 = vpop.f32.mrb[0].mxu0
  %4521 = vmatprep.mubr.f32.mxu0 0.0
  %4522 = vmatmul.mubr.f32.gmra.mrb[0].mxu0 %v4110
  %v4523 = vpop.f32.mrb[0].mxu0
  %v4524 = vadd.f32 0.0, %v4523
  %v4525 = vpop.f32.mrb[0].mxu0
  %4526 = vdwg.mxu0
  %v4527 = vld [vmem:[%s7] sm:$0xff]
  %v4528 = vld [vmem:[%s7 + $0x8] sm:$0xff]
  %v4529 = vld [vmem:[%s7 + $0x10] sm:$0xff]
  %v4530 = vld [vmem:[%s7 + $0x18] sm:$0xff]
  %v4531 = vld [vmem:[%s7 + $0x20] sm:$0xff]
  %v4532 = vld [vmem:[%s7 + $0x28] sm:$0xff]
  %v4533 = vld [vmem:[%s7 + $0x30] sm:$0xff]
  %v4534 = vld [vmem:[%s7 + $0x38] sm:$0xff]
  %v4535 = vld [vmem:[%s7 + $0x40] sm:$0xff]
  %v4536 = vld [vmem:[%s7 + $0x48] sm:$0xff]
  %v4537 = vld [vmem:[%s7 + $0x50] sm:$0xff]
  %v4538 = vld [vmem:[%s7 + $0x58] sm:$0xff]
  %v4539 = vld [vmem:[%s7 + $0x60] sm:$0xff]
  %v4540 = vld [vmem:[%s7 + $0x68] sm:$0xff]
  %v4541 = vld [vmem:[%s7 + $0x70] sm:$0xff]
  %v4542 = vld [vmem:[%s7 + $0x78] sm:$0xff]
  %v4543 = vld [vmem:[%s7 + $0x80] sm:$0xff]
  %v4544 = vld [vmem:[%s7 + $0x88] sm:$0xff]
  %v4545 = vld [vmem:[%s7 + $0x90] sm:$0xff]
  %v4546 = vld [vmem:[%s7 + $0x98] sm:$0xff]
  %v4547 = vld [vmem:[%s7 + $0xa0] sm:$0xff]
  %v4548 = vld [vmem:[%s7 + $0xa8] sm:$0xff]
  %v4549 = vld [vmem:[%s7 + $0xb0] sm:$0xff]
  %v4550 = vld [vmem:[%s7 + $0xb8] sm:$0xff]
  %v4551 = vld [vmem:[%s7 + $0xc0] sm:$0xff]
  %v4552 = vld [vmem:[%s7 + $0xc8] sm:$0xff]
  %v4553 = vld [vmem:[%s7 + $0xd0] sm:$0xff]
  %v4554 = vld [vmem:[%s7 + $0xd8] sm:$0xff]
  %s4555 = scalar_lea.vmem %s7, 224
  %v4556 = vld [vmem:[%s4555] sm:$0xff]
  %v4557 = vld [vmem:[%s4555 + $0x8] sm:$0xff]
  %v4558 = vld [vmem:[%s4555 + $0x10] sm:$0xff]
  %v4559 = vld [vmem:[%s4555 + $0x18] sm:$0xff]
  %v4560 = vld [vmem:[%s4555 + $0x20] sm:$0xff]
  %v4561 = vld [vmem:[%s4555 + $0x28] sm:$0xff]
  %v4562 = vld [vmem:[%s4555 + $0x30] sm:$0xff]
  %v4563 = vld [vmem:[%s4555 + $0x38] sm:$0xff]
  %v4564 = vld [vmem:[%s4555 + $0x40] sm:$0xff]
  %v4565 = vld [vmem:[%s4555 + $0x48] sm:$0xff]
  %v4566 = vld [vmem:[%s4555 + $0x50] sm:$0xff]
  %v4567 = vld [vmem:[%s4555 + $0x58] sm:$0xff]
  %v4568 = vld [vmem:[%s4555 + $0x60] sm:$0xff]
  %v4569 = vld [vmem:[%s4555 + $0x68] sm:$0xff]
  %v4570 = vld [vmem:[%s4555 + $0x70] sm:$0xff]
  %v4571 = vld [vmem:[%s4555 + $0x78] sm:$0xff]
  %v4572 = vld [vmem:[%s4555 + $0x80] sm:$0xff]
  %v4573 = vld [vmem:[%s4555 + $0x88] sm:$0xff]
  %v4574 = vld [vmem:[%s4555 + $0x90] sm:$0xff]
  %v4575 = vld [vmem:[%s4555 + $0x98] sm:$0xff]
  %v4576 = vld [vmem:[%s4555 + $0xa0] sm:$0xff]
  %v4577 = vld [vmem:[%s4555 + $0xa8] sm:$0xff]
  %v4578 = vld [vmem:[%s4555 + $0xb0] sm:$0xff]
  %v4579 = vld [vmem:[%s4555 + $0xb8] sm:$0xff]
  %v4580 = vld [vmem:[%s4555 + $0xc0] sm:$0xff]
  %v4581 = vld [vmem:[%s4555 + $0xc8] sm:$0xff]
  %v4582 = vld [vmem:[%s4555 + $0xd0] sm:$0xff]
  %v4583 = vld [vmem:[%s4555 + $0xd8] sm:$0xff]
  %v4585 = vsel %vm3901, %v4249, 0
  %v4588 = vsel %vm3901, %v4254, 0
  %v4591 = vsel %vm3901, %v4259, 0
  %v4594 = vsel %vm3901, %v4264, 0
  %v4597 = vsel %vm3901, %v4269, 0
  %v4600 = vsel %vm3901, %v4274, 0
  %v4603 = vsel %vm3901, %v4279, 0
  %v4606 = vsel %vm3901, %v4284, 0
  %v4609 = vsel %vm3901, %v4289, 0
  %v4612 = vsel %vm3901, %v4294, 0
  %v4615 = vsel %vm3901, %v4299, 0
  %v4618 = vsel %vm3901, %v4304, 0
  %v4621 = vsel %vm3901, %v4309, 0
  %v4624 = vsel %vm3901, %v4314, 0
  %4626 = vmatprep.subr.mxu0 %v4557
  %4627 = vmatpush1.msra.mxu0 %v4556
  %4628 = vmatprep.subr.mxu0 %v4559
  %4629 = vmatpush1.msra.mxu0 %v4558
  %4630 = vmatprep.subr.mxu0 %v4561
  %4631 = vmatpush1.msra.mxu0 %v4560
  %4632 = vmatprep.subr.mxu0 %v4563
  %4633 = vmatpush1.msra.mxu0 %v4562
  %4634 = vmatprep.subr.mxu0 %v4565
  %4635 = vmatpush1.msra.mxu0 %v4564
  %4636 = vmatprep.subr.mxu0 %v4567
  %4637 = vmatpush1.msra.mxu0 %v4566
  %4638 = vmatprep.subr.mxu0 %v4569
  %4639 = vmatpush1.msra.mxu0 %v4568
  %4640 = vmatprep.subr.mxu0 %v4571
  %4641 = vmatpush1.msra.mxu0 %v4570
  %4642 = vmatprep.subr.mxu0 %v4573
  %4643 = vmatpush1.msra.mxu0 %v4572
  %4644 = vmatprep.subr.mxu0 %v4575
  %4645 = vmatpush1.msra.mxu0 %v4574
  %4646 = vmatprep.subr.mxu0 %v4577
  %4647 = vmatpush1.msra.mxu0 %v4576
  %4648 = vmatprep.subr.mxu0 %v4579
  %4649 = vmatpush1.msra.mxu0 %v4578
  %4650 = vmatprep.subr.mxu0 %v4581
  %4651 = vmatpush1.msra.mxu0 %v4580
  %4652 = vmatprep.subr.mxu0 %v4583
  %4653 = vmatpush1.msra.mxu0 %v4582
  %4654 = vmatprep.subr.mxu0 0.0
  %4655 = vmatpush1.msra.mxu0 0.0
  %4656 = vmatprep.subr.mxu0 0.0
  %4657 = vmatpush1.msra.mxu0 0.0
  %4658 = vmatprep.subr.mxu0 0.0
  %4659 = vmatpush1.msra.mxu0 0.0
  %4660 = vmatprep.subr.mxu0 0.0
  %4661 = vmatpush1.msra.mxu0 0.0
  %4662 = vmatprep.subr.mxu0 0.0
  %4663 = vmatpush1.msra.mxu0 0.0
  %4664 = vmatprep.subr.mxu0 0.0
  %4665 = vmatpush1.msra.mxu0 0.0
  %4666 = vmatprep.subr.mxu0 0.0
  %4667 = vmatpush1.msra.mxu0 0.0
  %4668 = vmatprep.subr.mxu0 0.0
  %4669 = vmatpush1.msra.mxu0 0.0
  %4670 = vmatprep.subr.mxu0 0.0
  %4671 = vmatpush1.msra.mxu0 0.0
  %4672 = vmatprep.subr.mxu0 0.0
  %4673 = vmatpush1.msra.mxu0 0.0
  %4674 = vmatprep.subr.mxu0 0.0
  %4675 = vmatpush1.msra.mxu0 0.0
  %4676 = vmatprep.subr.mxu0 0.0
  %4677 = vmatpush1.msra.mxu0 0.0
  %4678 = vmatprep.subr.mxu0 0.0
  %4679 = vmatpush1.msra.mxu0 0.0
  %4680 = vmatprep.subr.mxu0 0.0
  %4681 = vmatpush1.msra.mxu0 0.0
  %4682 = vmatprep.subr.mxu0 0.0
  %4683 = vmatpush1.msra.mxu0 0.0
  %4684 = vmatprep.subr.mxu0 0.0
  %4685 = vmatpush1.msra.mxu0 0.0
  %4686 = vmatprep.subr.mxu0 0.0
  %4687 = vmatpush1.msra.mxu0 0.0
  %4688 = vmatprep.subr.mxu0 0.0
  %4689 = vmatpush1.msra.mxu0 0.0
  %4690 = vmatprep.mubr.f32.mxu0 0.0
  %4691 = vmatmul.mubr.f32.gmra.mrb[0].mxu0 %v4585
  %v4692 = vpop.f32.mrb[0].mxu0
  %v4693 = vadd.f32 0.0, %v4692
  %v4694 = vpop.f32.mrb[0].mxu0
  %v4695 = vadd.f32 0.0, %v4694
  %4696 = vmatprep.mubr.f32.mxu0 0.0
  %4697 = vmatmul.mubr.f32.gmra.mrb[0].mxu0 %v4588
  %v4698 = vpop.f32.mrb[0].mxu0
  %v4699 = vadd.f32 0.0, %v4698
  %v4700 = vpop.f32.mrb[0].mxu0
  %v4701 = vadd.f32 0.0, %v4700
  %4702 = vmatprep.mubr.f32.mxu0 0.0
  %4703 = vmatmul.mubr.f32.gmra.mrb[0].mxu0 %v4591
  %v4704 = vpop.f32.mrb[0].mxu0
  %v4705 = vadd.f32 0.0, %v4704
  %v4706 = vpop.f32.mrb[0].mxu0
  %v4707 = vadd.f32 0.0, %v4706
  %4708 = vmatprep.mubr.f32.mxu0 0.0
  %4709 = vmatmul.mubr.f32.gmra.mrb[0].mxu0 %v4594
  %v4710 = vpop.f32.mrb[0].mxu0
  %v4711 = vadd.f32 0.0, %v4710
  %v4712 = vpop.f32.mrb[0].mxu0
  %v4713 = vadd.f32 0.0, %v4712
  %4714 = vmatprep.mubr.f32.mxu0 0.0
  %4715 = vmatmul.mubr.f32.gmra.mrb[0].mxu0 %v4597
  %v4716 = vpop.f32.mrb[0].mxu0
  %v4717 = vadd.f32 0.0, %v4716
  %v4718 = vpop.f32.mrb[0].mxu0
  %v4719 = vadd.f32 0.0, %v4718
  %4720 = vmatprep.mubr.f32.mxu0 0.0
  %4721 = vmatmul.mubr.f32.gmra.mrb[0].mxu0 %v4600
  %v4722 = vpop.f32.mrb[0].mxu0
  %v4723 = vadd.f32 0.0, %v4722
  %v4724 = vpop.f32.mrb[0].mxu0
  %v4725 = vadd.f32 0.0, %v4724
  %4726 = vmatprep.mubr.f32.mxu0 0.0
  %4727 = vmatmul.mubr.f32.gmra.mrb[0].mxu0 %v4603
  %v4728 = vpop.f32.mrb[0].mxu0
  %v4729 = vadd.f32 0.0, %v4728
  %v4730 = vpop.f32.mrb[0].mxu0
  %v4731 = vadd.f32 0.0, %v4730
  %4732 = vmatprep.mubr.f32.mxu0 0.0
  %4733 = vmatmul.mubr.f32.gmra.mrb[0].mxu0 %v4606
  %v4734 = vpop.f32.mrb[0].mxu0
  %v4735 = vadd.f32 0.0, %v4734
  %v4736 = vpop.f32.mrb[0].mxu0
  %v4737 = vadd.f32 0.0, %v4736
  %4738 = vmatprep.mubr.f32.mxu0 0.0
  %4739 = vmatmul.mubr.f32.gmra.mrb[0].mxu0 %v4609
  %v4740 = vpop.f32.mrb[0].mxu0
  %v4741 = vadd.f32 0.0, %v4740
  %v4742 = vpop.f32.mrb[0].mxu0
  %v4743 = vadd.f32 0.0, %v4742
  %4744 = vmatprep.mubr.f32.mxu0 0.0
  %4745 = vmatmul.mubr.f32.gmra.mrb[0].mxu0 %v4612
  %v4746 = vpop.f32.mrb[0].mxu0
  %v4747 = vadd.f32 0.0, %v4746
  %v4748 = vpop.f32.mrb[0].mxu0
  %v4749 = vadd.f32 0.0, %v4748
  %4750 = vmatprep.mubr.f32.mxu0 0.0
  %4751 = vmatmul.mubr.f32.gmra.mrb[0].mxu0 %v4615
  %v4752 = vpop.f32.mrb[0].mxu0
  %v4753 = vadd.f32 0.0, %v4752
  %v4754 = vpop.f32.mrb[0].mxu0
  %v4755 = vadd.f32 0.0, %v4754
  %4756 = vmatprep.mubr.f32.mxu0 0.0
  %4757 = vmatmul.mubr.f32.gmra.mrb[0].mxu0 %v4618
  %v4758 = vpop.f32.mrb[0].mxu0
  %v4759 = vadd.f32 0.0, %v4758
  %v4760 = vpop.f32.mrb[0].mxu0
  %v4761 = vadd.f32 0.0, %v4760
  %4762 = vmatprep.mubr.f32.mxu0 0.0
  %4763 = vmatmul.mubr.f32.gmra.mrb[0].mxu0 %v4621
  %v4764 = vpop.f32.mrb[0].mxu0
  %v4765 = vadd.f32 0.0, %v4764
  %v4766 = vpop.f32.mrb[0].mxu0
  %v4767 = vadd.f32 0.0, %v4766
  %4768 = vmatprep.mubr.f32.mxu0 0.0
  %4769 = vmatmul.mubr.f32.gmra.mrb[0].mxu0 %v4624
  %v4770 = vpop.f32.mrb[0].mxu0
  %v4771 = vadd.f32 0.0, %v4770
  %v4772 = vpop.f32.mrb[0].mxu0
  %v4773 = vadd.f32 0.0, %v4772
  %4774 = vdwg.mxu0
  %v4776 = vsel %vm3901, %v4179, 0
  %v4779 = vsel %vm3901, %v4184, 0
  %v4782 = vsel %vm3901, %v4189, 0
  %v4785 = vsel %vm3901, %v4194, 0
  %v4788 = vsel %vm3901, %v4199, 0
  %v4791 = vsel %vm3901, %v4204, 0
  %v4794 = vsel %vm3901, %v4209, 0
  %v4797 = vsel %vm3901, %v4214, 0
  %v4800 = vsel %vm3901, %v4219, 0
  %v4803 = vsel %vm3901, %v4224, 0
  %v4806 = vsel %vm3901, %v4229, 0
  %v4809 = vsel %vm3901, %v4234, 0
  %v4812 = vsel %vm3901, %v4239, 0
  %v4815 = vsel %vm3901, %v4244, 0
  %4817 = vmatprep.subr.mxu0 %v4528
  %4818 = vmatpush1.msra.mxu0 %v4527
  %4819 = vmatprep.subr.mxu0 %v4530
  %4820 = vmatpush1.msra.mxu0 %v4529
  %4821 = vmatprep.subr.mxu0 %v4532
  %4822 = vmatpush1.msra.mxu0 %v4531
  %4823 = vmatprep.subr.mxu0 %v4534
  %4824 = vmatpush1.msra.mxu0 %v4533
  %4825 = vmatprep.subr.mxu0 %v4536
  %4826 = vmatpush1.msra.mxu0 %v4535
  %4827 = vmatprep.subr.mxu0 %v4538
  %4828 = vmatpush1.msra.mxu0 %v4537
  %4829 = vmatprep.subr.mxu0 %v4540
  %4830 = vmatpush1.msra.mxu0 %v4539
  %4831 = vmatprep.subr.mxu0 %v4542
  %4832 = vmatpush1.msra.mxu0 %v4541
  %4833 = vmatprep.subr.mxu0 %v4544
  %4834 = vmatpush1.msra.mxu0 %v4543
  %4835 = vmatprep.subr.mxu0 %v4546
  %4836 = vmatpush1.msra.mxu0 %v4545
  %4837 = vmatprep.subr.mxu0 %v4548
  %4838 = vmatpush1.msra.mxu0 %v4547
  %4839 = vmatprep.subr.mxu0 %v4550
  %4840 = vmatpush1.msra.mxu0 %v4549
  %4841 = vmatprep.subr.mxu0 %v4552
  %4842 = vmatpush1.msra.mxu0 %v4551
  %4843 = vmatprep.subr.mxu0 %v4554
  %4844 = vmatpush1.msra.mxu0 %v4553
  %4845 = vmatprep.subr.mxu0 0.0
  %4846 = vmatpush1.msra.mxu0 0.0
  %4847 = vmatprep.subr.mxu0 0.0
  %4848 = vmatpush1.msra.mxu0 0.0
  %4849 = vmatprep.subr.mxu0 0.0
  %4850 = vmatpush1.msra.mxu0 0.0
  %4851 = vmatprep.subr.mxu0 0.0
  %4852 = vmatpush1.msra.mxu0 0.0
  %4853 = vmatprep.subr.mxu0 0.0
  %4854 = vmatpush1.msra.mxu0 0.0
  %4855 = vmatprep.subr.mxu0 0.0
  %4856 = vmatpush1.msra.mxu0 0.0
  %4857 = vmatprep.subr.mxu0 0.0
  %4858 = vmatpush1.msra.mxu0 0.0
  %4859 = vmatprep.subr.mxu0 0.0
  %4860 = vmatpush1.msra.mxu0 0.0
  %4861 = vmatprep.subr.mxu0 0.0
  %4862 = vmatpush1.msra.mxu0 0.0
  %4863 = vmatprep.subr.mxu0 0.0
  %4864 = vmatpush1.msra.mxu0 0.0
  %4865 = vmatprep.subr.mxu0 0.0
  %4866 = vmatpush1.msra.mxu0 0.0
  %4867 = vmatprep.subr.mxu0 0.0
  %4868 = vmatpush1.msra.mxu0 0.0
  %4869 = vmatprep.subr.mxu0 0.0
  %4870 = vmatpush1.msra.mxu0 0.0
  %4871 = vmatprep.subr.mxu0 0.0
  %4872 = vmatpush1.msra.mxu0 0.0
  %4873 = vmatprep.subr.mxu0 0.0
  %4874 = vmatpush1.msra.mxu0 0.0
  %4875 = vmatprep.subr.mxu0 0.0
  %4876 = vmatpush1.msra.mxu0 0.0
  %4877 = vmatprep.subr.mxu0 0.0
  %4878 = vmatpush1.msra.mxu0 0.0
  %4879 = vmatprep.subr.mxu0 0.0
  %4880 = vmatpush1.msra.mxu0 0.0
  %4881 = vmatprep.mubr.f32.mxu0 0.0
  %4882 = vmatmul.mubr.f32.gmra.mrb[0].mxu0 %v4776
  %v4883 = vpop.f32.mrb[0].mxu0
  %v4884 = vadd.f32 %v4693, %v4883
  %v4885 = vpop.f32.mrb[0].mxu0
  %v4886 = vadd.f32 %v4695, %v4885
  %4887 = vmatprep.mubr.f32.mxu0 0.0
  %4888 = vmatmul.mubr.f32.gmra.mrb[0].mxu0 %v4779
  %v4889 = vpop.f32.mrb[0].mxu0
  %v4890 = vadd.f32 %v4699, %v4889
  %v4891 = vpop.f32.mrb[0].mxu0
  %v4892 = vadd.f32 %v4701, %v4891
  %4893 = vmatprep.mubr.f32.mxu0 0.0
  %4894 = vmatmul.mubr.f32.gmra.mrb[0].mxu0 %v4782
  %v4895 = vpop.f32.mrb[0].mxu0
  %v4896 = vadd.f32 %v4705, %v4895
  %v4897 = vpop.f32.mrb[0].mxu0
  %v4898 = vadd.f32 %v4707, %v4897
  %4899 = vmatprep.mubr.f32.mxu0 0.0
  %4900 = vmatmul.mubr.f32.gmra.mrb[0].mxu0 %v4785
  %v4901 = vpop.f32.mrb[0].mxu0
  %v4902 = vadd.f32 %v4711, %v4901
  %v4903 = vpop.f32.mrb[0].mxu0
  %v4904 = vadd.f32 %v4713, %v4903
  %4905 = vmatprep.mubr.f32.mxu0 0.0
  %4906 = vmatmul.mubr.f32.gmra.mrb[0].mxu0 %v4788
  %v4907 = vpop.f32.mrb[0].mxu0
  %v4908 = vadd.f32 %v4717, %v4907
  %v4909 = vpop.f32.mrb[0].mxu0
  %v4910 = vadd.f32 %v4719, %v4909
  %4911 = vmatprep.mubr.f32.mxu0 0.0
  %4912 = vmatmul.mubr.f32.gmra.mrb[0].mxu0 %v4791
  %v4913 = vpop.f32.mrb[0].mxu0
  %v4914 = vadd.f32 %v4723, %v4913
  %v4915 = vpop.f32.mrb[0].mxu0
  %v4916 = vadd.f32 %v4725, %v4915
  %4917 = vmatprep.mubr.f32.mxu0 0.0
  %4918 = vmatmul.mubr.f32.gmra.mrb[0].mxu0 %v4794
  %v4919 = vpop.f32.mrb[0].mxu0
  %v4920 = vadd.f32 %v4729, %v4919
  %v4921 = vpop.f32.mrb[0].mxu0
  %v4922 = vadd.f32 %v4731, %v4921
  %4923 = vmatprep.mubr.f32.mxu0 0.0
  %4924 = vmatmul.mubr.f32.gmra.mrb[0].mxu0 %v4797
  %v4925 = vpop.f32.mrb[0].mxu0
  %v4926 = vadd.f32 %v4735, %v4925
  %v4927 = vpop.f32.mrb[0].mxu0
  %v4928 = vadd.f32 %v4737, %v4927
  %4929 = vmatprep.mubr.f32.mxu0 0.0
  %4930 = vmatmul.mubr.f32.gmra.mrb[0].mxu0 %v4800
  %v4931 = vpop.f32.mrb[0].mxu0
  %v4932 = vadd.f32 %v4741, %v4931
  %v4933 = vpop.f32.mrb[0].mxu0
  %v4934 = vadd.f32 %v4743, %v4933
  %4935 = vmatprep.mubr.f32.mxu0 0.0
  %4936 = vmatmul.mubr.f32.gmra.mrb[0].mxu0 %v4803
  %v4937 = vpop.f32.mrb[0].mxu0
  %v4938 = vadd.f32 %v4747, %v4937
  %v4939 = vpop.f32.mrb[0].mxu0
  %v4940 = vadd.f32 %v4749, %v4939
  %4941 = vmatprep.mubr.f32.mxu0 0.0
  %4942 = vmatmul.mubr.f32.gmra.mrb[0].mxu0 %v4806
  %v4943 = vpop.f32.mrb[0].mxu0
  %v4944 = vadd.f32 %v4753, %v4943
  %v4945 = vpop.f32.mrb[0].mxu0
  %v4946 = vadd.f32 %v4755, %v4945
  %4947 = vmatprep.mubr.f32.mxu0 0.0
  %4948 = vmatmul.mubr.f32.gmra.mrb[0].mxu0 %v4809
  %v4949 = vpop.f32.mrb[0].mxu0
  %v4950 = vadd.f32 %v4759, %v4949
  %v4951 = vpop.f32.mrb[0].mxu0
  %v4952 = vadd.f32 %v4761, %v4951
  %4953 = vmatprep.mubr.f32.mxu0 0.0
  %4954 = vmatmul.mubr.f32.gmra.mrb[0].mxu0 %v4812
  %v4955 = vpop.f32.mrb[0].mxu0
  %v4956 = vadd.f32 %v4765, %v4955
  %v4957 = vpop.f32.mrb[0].mxu0
  %v4958 = vadd.f32 %v4767, %v4957
  %4959 = vmatprep.mubr.f32.mxu0 0.0
  %4960 = vmatmul.mubr.f32.gmra.mrb[0].mxu0 %v4815
  %v4961 = vpop.f32.mrb[0].mxu0
  %v4962 = vadd.f32 %v4771, %v4961
  %v4963 = vpop.f32.mrb[0].mxu0
  %v4964 = vadd.f32 %v4773, %v4963
  %4965 = vdwg.mxu0
  %s4966 = scalar_lea.vmem %s7, 448
  %v4967 = vld [vmem:[%s4966] sm:$0xff]
  %v4968 = vld [vmem:[%s4966 + $0x8] sm:$0xff]
  %v4969 = vld [vmem:[%s4966 + $0x10] sm:$0xff]
  %v4970 = vld [vmem:[%s4966 + $0x18] sm:$0xff]
  %v4971 = vld [vmem:[%s4966 + $0x20] sm:$0xff]
  %v4972 = vld [vmem:[%s4966 + $0x28] sm:$0xff]
  %v4973 = vld [vmem:[%s4966 + $0x30] sm:$0xff]
  %v4974 = vld [vmem:[%s4966 + $0x38] sm:$0xff]
  %v4975 = vld [vmem:[%s4966 + $0x40] sm:$0xff]
  %v4976 = vld [vmem:[%s4966 + $0x48] sm:$0xff]
  %v4977 = vld [vmem:[%s4966 + $0x50] sm:$0xff]
  %v4978 = vld [vmem:[%s4966 + $0x58] sm:$0xff]
  %v4979 = vld [vmem:[%s4966 + $0x60] sm:$0xff]
  %v4980 = vld [vmem:[%s4966 + $0x68] sm:$0xff]
  %v4981 = vld [vmem:[%s4966 + $0x70] sm:$0xff]
  %v4982 = vld [vmem:[%s4966 + $0x78] sm:$0xff]
  %v4983 = vld [vmem:[%s4966 + $0x80] sm:$0xff]
  %v4984 = vld [vmem:[%s4966 + $0x88] sm:$0xff]
  %v4985 = vld [vmem:[%s4966 + $0x90] sm:$0xff]
  %v4986 = vld [vmem:[%s4966 + $0x98] sm:$0xff]
  %v4987 = vld [vmem:[%s4966 + $0xa0] sm:$0xff]
  %v4988 = vld [vmem:[%s4966 + $0xa8] sm:$0xff]
  %v4989 = vld [vmem:[%s4966 + $0xb0] sm:$0xff]
  %v4990 = vld [vmem:[%s4966 + $0xb8] sm:$0xff]
  %v4991 = vld [vmem:[%s4966 + $0xc0] sm:$0xff]
  %v4992 = vld [vmem:[%s4966 + $0xc8] sm:$0xff]
  %v4993 = vld [vmem:[%s4966 + $0xd0] sm:$0xff]
  %v4994 = vld [vmem:[%s4966 + $0xd8] sm:$0xff]
  %v4996 = vsel %vm3901, %v4319, 0
  %v4999 = vsel %vm3901, %v4324, 0
  %v5002 = vsel %vm3901, %v4329, 0
  %v5005 = vsel %vm3901, %v4334, 0
  %v5008 = vsel %vm3901, %v4339, 0
  %v5011 = vsel %vm3901, %v4344, 0
  %v5014 = vsel %vm3901, %v4349, 0
  %v5017 = vsel %vm3901, %v4354, 0
  %v5020 = vsel %vm3901, %v4359, 0
  %v5023 = vsel %vm3901, %v4364, 0
  %v5026 = vsel %vm3901, %v4369, 0
  %v5029 = vsel %vm3901, %v4374, 0
  %v5032 = vsel %vm3901, %v4379, 0
  %v5035 = vsel %vm3901, %v4384, 0
  %5037 = vmatprep.subr.mxu0 %v4968
  %5038 = vmatpush1.msra.mxu0 %v4967
  %5039 = vmatprep.subr.mxu0 %v4970
  %5040 = vmatpush1.msra.mxu0 %v4969
  %5041 = vmatprep.subr.mxu0 %v4972
  %5042 = vmatpush1.msra.mxu0 %v4971
  %5043 = vmatprep.subr.mxu0 %v4974
  %5044 = vmatpush1.msra.mxu0 %v4973
  %5045 = vmatprep.subr.mxu0 %v4976
  %5046 = vmatpush1.msra.mxu0 %v4975
  %5047 = vmatprep.subr.mxu0 %v4978
  %5048 = vmatpush1.msra.mxu0 %v4977
  %5049 = vmatprep.subr.mxu0 %v4980
  %5050 = vmatpush1.msra.mxu0 %v4979
  %5051 = vmatprep.subr.mxu0 %v4982
  %5052 = vmatpush1.msra.mxu0 %v4981
  %5053 = vmatprep.subr.mxu0 %v4984
  %5054 = vmatpush1.msra.mxu0 %v4983
  %5055 = vmatprep.subr.mxu0 %v4986
  %5056 = vmatpush1.msra.mxu0 %v4985
  %5057 = vmatprep.subr.mxu0 %v4988
  %5058 = vmatpush1.msra.mxu0 %v4987
  %5059 = vmatprep.subr.mxu0 %v4990
  %5060 = vmatpush1.msra.mxu0 %v4989
  %5061 = vmatprep.subr.mxu0 %v4992
  %5062 = vmatpush1.msra.mxu0 %v4991
  %5063 = vmatprep.subr.mxu0 %v4994
  %5064 = vmatpush1.msra.mxu0 %v4993
  %5065 = vmatprep.subr.mxu0 0.0
  %5066 = vmatpush1.msra.mxu0 0.0
  %5067 = vmatprep.subr.mxu0 0.0
  %5068 = vmatpush1.msra.mxu0 0.0
  %5069 = vmatprep.subr.mxu0 0.0
  %5070 = vmatpush1.msra.mxu0 0.0
  %5071 = vmatprep.subr.mxu0 0.0
  %5072 = vmatpush1.msra.mxu0 0.0
  %5073 = vmatprep.subr.mxu0 0.0
  %5074 = vmatpush1.msra.mxu0 0.0
  %5075 = vmatprep.subr.mxu0 0.0
  %5076 = vmatpush1.msra.mxu0 0.0
  %5077 = vmatprep.subr.mxu0 0.0
  %5078 = vmatpush1.msra.mxu0 0.0
  %5079 = vmatprep.subr.mxu0 0.0
  %5080 = vmatpush1.msra.mxu0 0.0
  %5081 = vmatprep.subr.mxu0 0.0
  %5082 = vmatpush1.msra.mxu0 0.0
  %5083 = vmatprep.subr.mxu0 0.0
  %5084 = vmatpush1.msra.mxu0 0.0
  %5085 = vmatprep.subr.mxu0 0.0
  %5086 = vmatpush1.msra.mxu0 0.0
  %5087 = vmatprep.subr.mxu0 0.0
  %5088 = vmatpush1.msra.mxu0 0.0
  %5089 = vmatprep.subr.mxu0 0.0
  %5090 = vmatpush1.msra.mxu0 0.0
  %5091 = vmatprep.subr.mxu0 0.0
  %5092 = vmatpush1.msra.mxu0 0.0
  %5093 = vmatprep.subr.mxu0 0.0
  %5094 = vmatpush1.msra.mxu0 0.0
  %5095 = vmatprep.subr.mxu0 0.0
  %5096 = vmatpush1.msra.mxu0 0.0
  %5097 = vmatprep.subr.mxu0 0.0
  %5098 = vmatpush1.msra.mxu0 0.0
  %5099 = vmatprep.subr.mxu0 0.0
  %5100 = vmatpush1.msra.mxu0 0.0
  %5101 = vmatprep.mubr.f32.mxu0 0.0
  %5102 = vmatmul.mubr.f32.gmra.mrb[0].mxu0 %v4996
  %v5103 = vpop.f32.mrb[0].mxu0
  %v5104 = vadd.f32 0.0, %v5103
  %v5105 = vpop.f32.mrb[0].mxu0
  %v5106 = vadd.f32 0.0, %v5105
  %5107 = vmatprep.mubr.f32.mxu0 0.0
  %5108 = vmatmul.mubr.f32.gmra.mrb[0].mxu0 %v4999
  %v5109 = vpop.f32.mrb[0].mxu0
  %v5110 = vadd.f32 0.0, %v5109
  %v5111 = vpop.f32.mrb[0].mxu0
  %v5112 = vadd.f32 0.0, %v5111
  %5113 = vmatprep.mubr.f32.mxu0 0.0
  %5114 = vmatmul.mubr.f32.gmra.mrb[0].mxu0 %v5002
  %v5115 = vpop.f32.mrb[0].mxu0
  %v5116 = vadd.f32 0.0, %v5115
  %v5117 = vpop.f32.mrb[0].mxu0
  %v5118 = vadd.f32 0.0, %v5117
  %5119 = vmatprep.mubr.f32.mxu0 0.0
  %5120 = vmatmul.mubr.f32.gmra.mrb[0].mxu0 %v5005
  %v5121 = vpop.f32.mrb[0].mxu0
  %v5122 = vadd.f32 0.0, %v5121
  %v5123 = vpop.f32.mrb[0].mxu0
  %v5124 = vadd.f32 0.0, %v5123
  %5125 = vmatprep.mubr.f32.mxu0 0.0
  %5126 = vmatmul.mubr.f32.gmra.mrb[0].mxu0 %v5008
  %v5127 = vpop.f32.mrb[0].mxu0
  %v5128 = vadd.f32 0.0, %v5127
  %v5129 = vpop.f32.mrb[0].mxu0
  %v5130 = vadd.f32 0.0, %v5129
  %5131 = vmatprep.mubr.f32.mxu0 0.0
  %5132 = vmatmul.mubr.f32.gmra.mrb[0].mxu0 %v5011
  %v5133 = vpop.f32.mrb[0].mxu0
  %v5134 = vadd.f32 0.0, %v5133
  %v5135 = vpop.f32.mrb[0].mxu0
  %v5136 = vadd.f32 0.0, %v5135
  %5137 = vmatprep.mubr.f32.mxu0 0.0
  %5138 = vmatmul.mubr.f32.gmra.mrb[0].mxu0 %v5014
  %v5139 = vpop.f32.mrb[0].mxu0
  %v5140 = vadd.f32 0.0, %v5139
  %v5141 = vpop.f32.mrb[0].mxu0
  %v5142 = vadd.f32 0.0, %v5141
  %5143 = vmatprep.mubr.f32.mxu0 0.0
  %5144 = vmatmul.mubr.f32.gmra.mrb[0].mxu0 %v5017
  %v5145 = vpop.f32.mrb[0].mxu0
  %v5146 = vadd.f32 0.0, %v5145
  %v5147 = vpop.f32.mrb[0].mxu0
  %v5148 = vadd.f32 0.0, %v5147
  %5149 = vmatprep.mubr.f32.mxu0 0.0
  %5150 = vmatmul.mubr.f32.gmra.mrb[0].mxu0 %v5020
  %v5151 = vpop.f32.mrb[0].mxu0
  %v5152 = vadd.f32 0.0, %v5151
  %v5153 = vpop.f32.mrb[0].mxu0
  %v5154 = vadd.f32 0.0, %v5153
  %5155 = vmatprep.mubr.f32.mxu0 0.0
  %5156 = vmatmul.mubr.f32.gmra.mrb[0].mxu0 %v5023
  %v5157 = vpop.f32.mrb[0].mxu0
  %v5158 = vadd.f32 0.0, %v5157
  %v5159 = vpop.f32.mrb[0].mxu0
  %v5160 = vadd.f32 0.0, %v5159
  %5161 = vmatprep.mubr.f32.mxu0 0.0
  %5162 = vmatmul.mubr.f32.gmra.mrb[0].mxu0 %v5026
  %v5163 = vpop.f32.mrb[0].mxu0
  %v5164 = vadd.f32 0.0, %v5163
  %v5165 = vpop.f32.mrb[0].mxu0
  %v5166 = vadd.f32 0.0, %v5165
  %5167 = vmatprep.mubr.f32.mxu0 0.0
  %5168 = vmatmul.mubr.f32.gmra.mrb[0].mxu0 %v5029
  %v5169 = vpop.f32.mrb[0].mxu0
  %v5170 = vadd.f32 0.0, %v5169
  %v5171 = vpop.f32.mrb[0].mxu0
  %v5172 = vadd.f32 0.0, %v5171
  %5173 = vmatprep.mubr.f32.mxu0 0.0
  %5174 = vmatmul.mubr.f32.gmra.mrb[0].mxu0 %v5032
  %v5175 = vpop.f32.mrb[0].mxu0
  %v5176 = vadd.f32 0.0, %v5175
  %v5177 = vpop.f32.mrb[0].mxu0
  %v5178 = vadd.f32 0.0, %v5177
  %5179 = vmatprep.mubr.f32.mxu0 0.0
  %5180 = vmatmul.mubr.f32.gmra.mrb[0].mxu0 %v5035
  %v5181 = vpop.f32.mrb[0].mxu0
  %v5182 = vadd.f32 0.0, %v5181
  %v5183 = vpop.f32.mrb[0].mxu0
  %v5184 = vadd.f32 0.0, %v5183
  %5185 = vdwg.mxu0
  %v5186 = vadd.f32 %v4884, %v5104
  %v5187 = vadd.f32 %v4886, %v5106
  %v5188 = vadd.f32 %v4890, %v5110
  %v5189 = vadd.f32 %v4892, %v5112
  %v5190 = vadd.f32 %v4896, %v5116
  %v5191 = vadd.f32 %v4898, %v5118
  %v5192 = vadd.f32 %v4902, %v5122
  %v5193 = vadd.f32 %v4904, %v5124
  %v5194 = vadd.f32 %v4908, %v5128
  %v5195 = vadd.f32 %v4910, %v5130
  %v5196 = vadd.f32 %v4914, %v5134
  %v5197 = vadd.f32 %v4916, %v5136
  %v5198 = vadd.f32 %v4920, %v5140
  %v5199 = vadd.f32 %v4922, %v5142
  %v5200 = vadd.f32 %v4926, %v5146
  %v5201 = vadd.f32 %v4928, %v5148
  %v5202 = vadd.f32 %v4932, %v5152
  %v5203 = vadd.f32 %v4934, %v5154
  %v5204 = vadd.f32 %v4938, %v5158
  %v5205 = vadd.f32 %v4940, %v5160
  %v5206 = vadd.f32 %v4944, %v5164
  %v5207 = vadd.f32 %v4946, %v5166
  %v5208 = vadd.f32 %v4950, %v5170
  %v5209 = vadd.f32 %v4952, %v5172
  %v5210 = vadd.f32 %v4956, %v5176
  %v5211 = vadd.f32 %v4958, %v5178
  %v5212 = vadd.f32 %v4962, %v5182
  %v5213 = vadd.f32 %v4964, %v5184
  %s5214 = scalar_lea.vmem %s7, 672
  %v5215 = vld [vmem:[%s5214] sm:$0xff]
  %v5216 = vld [vmem:[%s5214 + $0x8] sm:$0xff]
  %v5217 = vld [vmem:[%s5214 + $0x10] sm:$0xff]
  %v5218 = vld [vmem:[%s5214 + $0x18] sm:$0xff]
  %v5219 = vld [vmem:[%s5214 + $0x20] sm:$0xff]
  %v5220 = vld [vmem:[%s5214 + $0x28] sm:$0xff]
  %v5221 = vld [vmem:[%s5214 + $0x30] sm:$0xff]
  %v5222 = vld [vmem:[%s5214 + $0x38] sm:$0xff]
  %v5223 = vld [vmem:[%s5214 + $0x40] sm:$0xff]
  %v5224 = vld [vmem:[%s5214 + $0x48] sm:$0xff]
  %v5225 = vld [vmem:[%s5214 + $0x50] sm:$0xff]
  %v5226 = vld [vmem:[%s5214 + $0x58] sm:$0xff]
  %v5227 = vld [vmem:[%s5214 + $0x60] sm:$0xff]
  %v5228 = vld [vmem:[%s5214 + $0x68] sm:$0xff]
  %v5229 = vld [vmem:[%s5214 + $0x70] sm:$0xff]
  %v5230 = vld [vmem:[%s5214 + $0x78] sm:$0xff]
  %v5231 = vld [vmem:[%s5214 + $0x80] sm:$0xff]
  %v5232 = vld [vmem:[%s5214 + $0x88] sm:$0xff]
  %v5233 = vld [vmem:[%s5214 + $0x90] sm:$0xff]
  %v5234 = vld [vmem:[%s5214 + $0x98] sm:$0xff]
  %v5235 = vld [vmem:[%s5214 + $0xa0] sm:$0xff]
  %v5236 = vld [vmem:[%s5214 + $0xa8] sm:$0xff]
  %v5237 = vld [vmem:[%s5214 + $0xb0] sm:$0xff]
  %v5238 = vld [vmem:[%s5214 + $0xb8] sm:$0xff]
  %v5239 = vld [vmem:[%s5214 + $0xc0] sm:$0xff]
  %v5240 = vld [vmem:[%s5214 + $0xc8] sm:$0xff]
  %v5241 = vld [vmem:[%s5214 + $0xd0] sm:$0xff]
  %v5242 = vld [vmem:[%s5214 + $0xd8] sm:$0xff]
  %v5244 = vsel %vm3901, %v4389, 0
  %v5247 = vsel %vm3901, %v4394, 0
  %v5250 = vsel %vm3901, %v4399, 0
  %v5253 = vsel %vm3901, %v4404, 0
  %v5256 = vsel %vm3901, %v4409, 0
  %v5259 = vsel %vm3901, %v4414, 0
  %v5262 = vsel %vm3901, %v4419, 0
  %v5265 = vsel %vm3901, %v4424, 0
  %v5268 = vsel %vm3901, %v4429, 0
  %v5271 = vsel %vm3901, %v4434, 0
  %v5274 = vsel %vm3901, %v4439, 0
  %v5277 = vsel %vm3901, %v4444, 0
  %v5280 = vsel %vm3901, %v4449, 0
  %v5283 = vsel %vm3901, %v4454, 0
  %5285 = vmatprep.subr.mxu0 %v5216
  %5286 = vmatpush1.msra.mxu0 %v5215
  %5287 = vmatprep.subr.mxu0 %v5218
  %5288 = vmatpush1.msra.mxu0 %v5217
  %5289 = vmatprep.subr.mxu0 %v5220
  %5290 = vmatpush1.msra.mxu0 %v5219
  %5291 = vmatprep.subr.mxu0 %v5222
  %5292 = vmatpush1.msra.mxu0 %v5221
  %5293 = vmatprep.subr.mxu0 %v5224
  %5294 = vmatpush1.msra.mxu0 %v5223
  %5295 = vmatprep.subr.mxu0 %v5226
  %5296 = vmatpush1.msra.mxu0 %v5225
  %5297 = vmatprep.subr.mxu0 %v5228
  %5298 = vmatpush1.msra.mxu0 %v5227
  %5299 = vmatprep.subr.mxu0 %v5230
  %5300 = vmatpush1.msra.mxu0 %v5229
  %5301 = vmatprep.subr.mxu0 %v5232
  %5302 = vmatpush1.msra.mxu0 %v5231
  %5303 = vmatprep.subr.mxu0 %v5234
  %5304 = vmatpush1.msra.mxu0 %v5233
  %5305 = vmatprep.subr.mxu0 %v5236
  %5306 = vmatpush1.msra.mxu0 %v5235
  %5307 = vmatprep.subr.mxu0 %v5238
  %5308 = vmatpush1.msra.mxu0 %v5237
  %5309 = vmatprep.subr.mxu0 %v5240
  %5310 = vmatpush1.msra.mxu0 %v5239
  %5311 = vmatprep.subr.mxu0 %v5242
  %5312 = vmatpush1.msra.mxu0 %v5241
  %5313 = vmatprep.subr.mxu0 0.0
  %5314 = vmatpush1.msra.mxu0 0.0
  %5315 = vmatprep.subr.mxu0 0.0
  %5316 = vmatpush1.msra.mxu0 0.0
  %5317 = vmatprep.subr.mxu0 0.0
  %5318 = vmatpush1.msra.mxu0 0.0
  %5319 = vmatprep.subr.mxu0 0.0
  %5320 = vmatpush1.msra.mxu0 0.0
  %5321 = vmatprep.subr.mxu0 0.0
  %5322 = vmatpush1.msra.mxu0 0.0
  %5323 = vmatprep.subr.mxu0 0.0
  %5324 = vmatpush1.msra.mxu0 0.0
  %5325 = vmatprep.subr.mxu0 0.0
  %5326 = vmatpush1.msra.mxu0 0.0
  %5327 = vmatprep.subr.mxu0 0.0
  %5328 = vmatpush1.msra.mxu0 0.0
  %5329 = vmatprep.subr.mxu0 0.0
  %5330 = vmatpush1.msra.mxu0 0.0
  %5331 = vmatprep.subr.mxu0 0.0
  %5332 = vmatpush1.msra.mxu0 0.0
  %5333 = vmatprep.subr.mxu0 0.0
  %5334 = vmatpush1.msra.mxu0 0.0
  %5335 = vmatprep.subr.mxu0 0.0
  %5336 = vmatpush1.msra.mxu0 0.0
  %5337 = vmatprep.subr.mxu0 0.0
  %5338 = vmatpush1.msra.mxu0 0.0
  %5339 = vmatprep.subr.mxu0 0.0
  %5340 = vmatpush1.msra.mxu0 0.0
  %5341 = vmatprep.subr.mxu0 0.0
  %5342 = vmatpush1.msra.mxu0 0.0
  %5343 = vmatprep.subr.mxu0 0.0
  %5344 = vmatpush1.msra.mxu0 0.0
  %5345 = vmatprep.subr.mxu0 0.0
  %5346 = vmatpush1.msra.mxu0 0.0
  %5347 = vmatprep.subr.mxu0 0.0
  %5348 = vmatpush1.msra.mxu0 0.0
  %5349 = vmatprep.mubr.f32.mxu0 0.0
  %5350 = vmatmul.mubr.f32.gmra.mrb[0].mxu0 %v5244
  %v5351 = vpop.f32.mrb[0].mxu0
  %v5352 = vadd.f32 0.0, %v5351
  %v5353 = vpop.f32.mrb[0].mxu0
  %v5354 = vadd.f32 0.0, %v5353
  %5355 = vmatprep.mubr.f32.mxu0 0.0
  %5356 = vmatmul.mubr.f32.gmra.mrb[0].mxu0 %v5247
  %v5357 = vpop.f32.mrb[0].mxu0
  %v5358 = vadd.f32 0.0, %v5357
  %v5359 = vpop.f32.mrb[0].mxu0
  %v5360 = vadd.f32 0.0, %v5359
  %5361 = vmatprep.mubr.f32.mxu0 0.0
  %5362 = vmatmul.mubr.f32.gmra.mrb[0].mxu0 %v5250
  %v5363 = vpop.f32.mrb[0].mxu0
  %v5364 = vadd.f32 0.0, %v5363
  %v5365 = vpop.f32.mrb[0].mxu0
  %v5366 = vadd.f32 0.0, %v5365
  %5367 = vmatprep.mubr.f32.mxu0 0.0
  %5368 = vmatmul.mubr.f32.gmra.mrb[0].mxu0 %v5253
  %v5369 = vpop.f32.mrb[0].mxu0
  %v5370 = vadd.f32 0.0, %v5369
  %v5371 = vpop.f32.mrb[0].mxu0
  %v5372 = vadd.f32 0.0, %v5371
  %5373 = vmatprep.mubr.f32.mxu0 0.0
  %5374 = vmatmul.mubr.f32.gmra.mrb[0].mxu0 %v5256
  %v5375 = vpop.f32.mrb[0].mxu0
  %v5376 = vadd.f32 0.0, %v5375
  %v5377 = vpop.f32.mrb[0].mxu0
  %v5378 = vadd.f32 0.0, %v5377
  %5379 = vmatprep.mubr.f32.mxu0 0.0
  %5380 = vmatmul.mubr.f32.gmra.mrb[0].mxu0 %v5259
  %v5381 = vpop.f32.mrb[0].mxu0
  %v5382 = vadd.f32 0.0, %v5381
  %v5383 = vpop.f32.mrb[0].mxu0
  %v5384 = vadd.f32 0.0, %v5383
  %5385 = vmatprep.mubr.f32.mxu0 0.0
  %5386 = vmatmul.mubr.f32.gmra.mrb[0].mxu0 %v5262
  %v5387 = vpop.f32.mrb[0].mxu0
  %v5388 = vadd.f32 0.0, %v5387
  %v5389 = vpop.f32.mrb[0].mxu0
  %v5390 = vadd.f32 0.0, %v5389
  %5391 = vmatprep.mubr.f32.mxu0 0.0
  %5392 = vmatmul.mubr.f32.gmra.mrb[0].mxu0 %v5265
  %v5393 = vpop.f32.mrb[0].mxu0
  %v5394 = vadd.f32 0.0, %v5393
  %v5395 = vpop.f32.mrb[0].mxu0
  %v5396 = vadd.f32 0.0, %v5395
  %5397 = vmatprep.mubr.f32.mxu0 0.0
  %5398 = vmatmul.mubr.f32.gmra.mrb[0].mxu0 %v5268
  %v5399 = vpop.f32.mrb[0].mxu0
  %v5400 = vadd.f32 0.0, %v5399
  %v5401 = vpop.f32.mrb[0].mxu0
  %v5402 = vadd.f32 0.0, %v5401
  %5403 = vmatprep.mubr.f32.mxu0 0.0
  %5404 = vmatmul.mubr.f32.gmra.mrb[0].mxu0 %v5271
  %v5405 = vpop.f32.mrb[0].mxu0
  %v5406 = vadd.f32 0.0, %v5405
  %v5407 = vpop.f32.mrb[0].mxu0
  %v5408 = vadd.f32 0.0, %v5407
  %5409 = vmatprep.mubr.f32.mxu0 0.0
  %5410 = vmatmul.mubr.f32.gmra.mrb[0].mxu0 %v5274
  %v5411 = vpop.f32.mrb[0].mxu0
  %v5412 = vadd.f32 0.0, %v5411
  %v5413 = vpop.f32.mrb[0].mxu0
  %v5414 = vadd.f32 0.0, %v5413
  %5415 = vmatprep.mubr.f32.mxu0 0.0
  %5416 = vmatmul.mubr.f32.gmra.mrb[0].mxu0 %v5277
  %v5417 = vpop.f32.mrb[0].mxu0
  %v5418 = vadd.f32 0.0, %v5417
  %v5419 = vpop.f32.mrb[0].mxu0
  %v5420 = vadd.f32 0.0, %v5419
  %5421 = vmatprep.mubr.f32.mxu0 0.0
  %5422 = vmatmul.mubr.f32.gmra.mrb[0].mxu0 %v5280
  %v5423 = vpop.f32.mrb[0].mxu0
  %v5424 = vadd.f32 0.0, %v5423
  %v5425 = vpop.f32.mrb[0].mxu0
  %v5426 = vadd.f32 0.0, %v5425
  %5427 = vmatprep.mubr.f32.mxu0 0.0
  %5428 = vmatmul.mubr.f32.gmra.mrb[0].mxu0 %v5283
  %v5429 = vpop.f32.mrb[0].mxu0
  %v5430 = vadd.f32 0.0, %v5429
  %v5431 = vpop.f32.mrb[0].mxu0
  %v5432 = vadd.f32 0.0, %v5431
  %5433 = vdwg.mxu0
  %v5434 = vadd.f32 %v5186, %v5352
  %v5435 = vadd.f32 %v5187, %v5354
  %v5436 = vadd.f32 %v5188, %v5358
  %v5437 = vadd.f32 %v5189, %v5360
  %v5438 = vadd.f32 %v5190, %v5364
  %v5439 = vadd.f32 %v5191, %v5366
  %v5440 = vadd.f32 %v5192, %v5370
  %v5441 = vadd.f32 %v5193, %v5372
  %v5442 = vadd.f32 %v5194, %v5376
  %v5443 = vadd.f32 %v5195, %v5378
  %v5444 = vadd.f32 %v5196, %v5382
  %v5445 = vadd.f32 %v5197, %v5384
  %v5446 = vadd.f32 %v5198, %v5388
  %v5447 = vadd.f32 %v5199, %v5390
  %v5448 = vadd.f32 %v5200, %v5394
  %v5449 = vadd.f32 %v5201, %v5396
  %v5450 = vadd.f32 %v5202, %v5400
  %v5451 = vadd.f32 %v5203, %v5402
  %v5452 = vadd.f32 %v5204, %v5406
  %v5453 = vadd.f32 %v5205, %v5408
  %v5454 = vadd.f32 %v5206, %v5412
  %v5455 = vadd.f32 %v5207, %v5414
  %v5456 = vadd.f32 %v5208, %v5418
  %v5457 = vadd.f32 %v5209, %v5420
  %v5458 = vadd.f32 %v5210, %v5424
  %v5459 = vadd.f32 %v5211, %v5426
  %v5460 = vadd.f32 %v5212, %v5430
  %v5461 = vadd.f32 %v5213, %v5432
  %s5462 = scalar_lea.vmem %s7, 896
  %v5463 = vld [vmem:[%s5462] sm:$0xff]
  %v5464 = vld [vmem:[%s5462 + $0x8] sm:$0xff]
  %v5465 = vld [vmem:[%s5462 + $0x10] sm:$0xff]
  %v5466 = vld [vmem:[%s5462 + $0x18] sm:$0xff]
  %v5467 = vld [vmem:[%s5462 + $0x20] sm:$0xff]
  %v5468 = vld [vmem:[%s5462 + $0x28] sm:$0xff]
  %v5469 = vld [vmem:[%s5462 + $0x30] sm:$0xff]
  %v5470 = vld [vmem:[%s5462 + $0x38] sm:$0xff]
  %v5471 = vld [vmem:[%s5462 + $0x40] sm:$0xff]
  %v5472 = vld [vmem:[%s5462 + $0x48] sm:$0xff]
  %v5473 = vld [vmem:[%s5462 + $0x50] sm:$0xff]
  %v5474 = vld [vmem:[%s5462 + $0x58] sm:$0xff]
  %v5475 = vld [vmem:[%s5462 + $0x60] sm:$0xff]
  %v5476 = vld [vmem:[%s5462 + $0x68] sm:$0xff]
  %v5477 = vld [vmem:[%s5462 + $0x70] sm:$0xff]
  %v5478 = vld [vmem:[%s5462 + $0x78] sm:$0xff]
  %v5479 = vld [vmem:[%s5462 + $0x80] sm:$0xff]
  %v5480 = vld [vmem:[%s5462 + $0x88] sm:$0xff]
  %v5481 = vld [vmem:[%s5462 + $0x90] sm:$0xff]
  %v5482 = vld [vmem:[%s5462 + $0x98] sm:$0xff]
  %v5483 = vld [vmem:[%s5462 + $0xa0] sm:$0xff]
  %v5484 = vld [vmem:[%s5462 + $0xa8] sm:$0xff]
  %v5485 = vld [vmem:[%s5462 + $0xb0] sm:$0xff]
  %v5486 = vld [vmem:[%s5462 + $0xb8] sm:$0xff]
  %v5487 = vld [vmem:[%s5462 + $0xc0] sm:$0xff]
  %v5488 = vld [vmem:[%s5462 + $0xc8] sm:$0xff]
  %v5489 = vld [vmem:[%s5462 + $0xd0] sm:$0xff]
  %v5490 = vld [vmem:[%s5462 + $0xd8] sm:$0xff]
  %v5492 = vsel %vm3901, %v4459, 0
  %v5495 = vsel %vm3901, %v4464, 0
  %v5498 = vsel %vm3901, %v4469, 0
  %v5501 = vsel %vm3901, %v4474, 0
  %v5504 = vsel %vm3901, %v4479, 0
  %v5507 = vsel %vm3901, %v4484, 0
  %v5510 = vsel %vm3901, %v4489, 0
  %v5513 = vsel %vm3901, %v4494, 0
  %v5516 = vsel %vm3901, %v4499, 0
  %v5519 = vsel %vm3901, %v4504, 0
  %v5522 = vsel %vm3901, %v4509, 0
  %v5525 = vsel %vm3901, %v4514, 0
  %v5528 = vsel %vm3901, %v4519, 0
  %v5531 = vsel %vm3901, %v4524, 0
  %5533 = vmatprep.subr.mxu0 %v5464
  %5534 = vmatpush1.msra.mxu0 %v5463
  %5535 = vmatprep.subr.mxu0 %v5466
  %5536 = vmatpush1.msra.mxu0 %v5465
  %5537 = vmatprep.subr.mxu0 %v5468
  %5538 = vmatpush1.msra.mxu0 %v5467
  %5539 = vmatprep.subr.mxu0 %v5470
  %5540 = vmatpush1.msra.mxu0 %v5469
  %5541 = vmatprep.subr.mxu0 %v5472
  %5542 = vmatpush1.msra.mxu0 %v5471
  %5543 = vmatprep.subr.mxu0 %v5474
  %5544 = vmatpush1.msra.mxu0 %v5473
  %5545 = vmatprep.subr.mxu0 %v5476
  %5546 = vmatpush1.msra.mxu0 %v5475
  %5547 = vmatprep.subr.mxu0 %v5478
  %5548 = vmatpush1.msra.mxu0 %v5477
  %5549 = vmatprep.subr.mxu0 %v5480
  %5550 = vmatpush1.msra.mxu0 %v5479
  %5551 = vmatprep.subr.mxu0 %v5482
  %5552 = vmatpush1.msra.mxu0 %v5481
  %5553 = vmatprep.subr.mxu0 %v5484
  %5554 = vmatpush1.msra.mxu0 %v5483
  %5555 = vmatprep.subr.mxu0 %v5486
  %5556 = vmatpush1.msra.mxu0 %v5485
  %5557 = vmatprep.subr.mxu0 %v5488
  %5558 = vmatpush1.msra.mxu0 %v5487
  %5559 = vmatprep.subr.mxu0 %v5490
  %5560 = vmatpush1.msra.mxu0 %v5489
  %5561 = vmatprep.subr.mxu0 0.0
  %5562 = vmatpush1.msra.mxu0 0.0
  %5563 = vmatprep.subr.mxu0 0.0
  %5564 = vmatpush1.msra.mxu0 0.0
  %5565 = vmatprep.subr.mxu0 0.0
  %5566 = vmatpush1.msra.mxu0 0.0
  %5567 = vmatprep.subr.mxu0 0.0
  %5568 = vmatpush1.msra.mxu0 0.0
  %5569 = vmatprep.subr.mxu0 0.0
  %5570 = vmatpush1.msra.mxu0 0.0
  %5571 = vmatprep.subr.mxu0 0.0
  %5572 = vmatpush1.msra.mxu0 0.0
  %5573 = vmatprep.subr.mxu0 0.0
  %5574 = vmatpush1.msra.mxu0 0.0
  %5575 = vmatprep.subr.mxu0 0.0
  %5576 = vmatpush1.msra.mxu0 0.0
  %5577 = vmatprep.subr.mxu0 0.0
  %5578 = vmatpush1.msra.mxu0 0.0
  %5579 = vmatprep.subr.mxu0 0.0
  %5580 = vmatpush1.msra.mxu0 0.0
  %5581 = vmatprep.subr.mxu0 0.0
  %5582 = vmatpush1.msra.mxu0 0.0
  %5583 = vmatprep.subr.mxu0 0.0
  %5584 = vmatpush1.msra.mxu0 0.0
  %5585 = vmatprep.subr.mxu0 0.0
  %5586 = vmatpush1.msra.mxu0 0.0
  %5587 = vmatprep.subr.mxu0 0.0
  %5588 = vmatpush1.msra.mxu0 0.0
  %5589 = vmatprep.subr.mxu0 0.0
  %5590 = vmatpush1.msra.mxu0 0.0
  %5591 = vmatprep.subr.mxu0 0.0
  %5592 = vmatpush1.msra.mxu0 0.0
  %5593 = vmatprep.subr.mxu0 0.0
  %5594 = vmatpush1.msra.mxu0 0.0
  %5595 = vmatprep.subr.mxu0 0.0
  %5596 = vmatpush1.msra.mxu0 0.0
  %5597 = vmatprep.mubr.f32.mxu0 0.0
  %5598 = vmatmul.mubr.f32.gmra.mrb[0].mxu0 %v5492
  %v5599 = vpop.f32.mrb[0].mxu0
  %v5600 = vadd.f32 0.0, %v5599
  %v5601 = vpop.f32.mrb[0].mxu0
  %v5602 = vadd.f32 0.0, %v5601
  %5603 = vmatprep.mubr.f32.mxu0 0.0
  %5604 = vmatmul.mubr.f32.gmra.mrb[0].mxu0 %v5495
  %v5605 = vpop.f32.mrb[0].mxu0
  %v5606 = vadd.f32 0.0, %v5605
  %v5607 = vpop.f32.mrb[0].mxu0
  %v5608 = vadd.f32 0.0, %v5607
  %5609 = vmatprep.mubr.f32.mxu0 0.0
  %5610 = vmatmul.mubr.f32.gmra.mrb[0].mxu0 %v5498
  %v5611 = vpop.f32.mrb[0].mxu0
  %v5612 = vadd.f32 0.0, %v5611
  %v5613 = vpop.f32.mrb[0].mxu0
  %v5614 = vadd.f32 0.0, %v5613
  %5615 = vmatprep.mubr.f32.mxu0 0.0
  %5616 = vmatmul.mubr.f32.gmra.mrb[0].mxu0 %v5501
  %v5617 = vpop.f32.mrb[0].mxu0
  %v5618 = vadd.f32 0.0, %v5617
  %v5619 = vpop.f32.mrb[0].mxu0
  %v5620 = vadd.f32 0.0, %v5619
  %5621 = vmatprep.mubr.f32.mxu0 0.0
  %5622 = vmatmul.mubr.f32.gmra.mrb[0].mxu0 %v5504
  %v5623 = vpop.f32.mrb[0].mxu0
  %v5624 = vadd.f32 0.0, %v5623
  %v5625 = vpop.f32.mrb[0].mxu0
  %v5626 = vadd.f32 0.0, %v5625
  %5627 = vmatprep.mubr.f32.mxu0 0.0
  %5628 = vmatmul.mubr.f32.gmra.mrb[0].mxu0 %v5507
  %v5629 = vpop.f32.mrb[0].mxu0
  %v5630 = vadd.f32 0.0, %v5629
  %v5631 = vpop.f32.mrb[0].mxu0
  %v5632 = vadd.f32 0.0, %v5631
  %5633 = vmatprep.mubr.f32.mxu0 0.0
  %5634 = vmatmul.mubr.f32.gmra.mrb[0].mxu0 %v5510
  %v5635 = vpop.f32.mrb[0].mxu0
  %v5636 = vadd.f32 0.0, %v5635
  %v5637 = vpop.f32.mrb[0].mxu0
  %v5638 = vadd.f32 0.0, %v5637
  %5639 = vmatprep.mubr.f32.mxu0 0.0
  %5640 = vmatmul.mubr.f32.gmra.mrb[0].mxu0 %v5513
  %v5641 = vpop.f32.mrb[0].mxu0
  %v5642 = vadd.f32 0.0, %v5641
  %v5643 = vpop.f32.mrb[0].mxu0
  %v5644 = vadd.f32 0.0, %v5643
  %5645 = vmatprep.mubr.f32.mxu0 0.0
  %5646 = vmatmul.mubr.f32.gmra.mrb[0].mxu0 %v5516
  %v5647 = vpop.f32.mrb[0].mxu0
  %v5648 = vadd.f32 0.0, %v5647
  %v5649 = vpop.f32.mrb[0].mxu0
  %v5650 = vadd.f32 0.0, %v5649
  %5651 = vmatprep.mubr.f32.mxu0 0.0
  %5652 = vmatmul.mubr.f32.gmra.mrb[0].mxu0 %v5519
  %v5653 = vpop.f32.mrb[0].mxu0
  %v5654 = vadd.f32 0.0, %v5653
  %v5655 = vpop.f32.mrb[0].mxu0
  %v5656 = vadd.f32 0.0, %v5655
  %5657 = vmatprep.mubr.f32.mxu0 0.0
  %5658 = vmatmul.mubr.f32.gmra.mrb[0].mxu0 %v5522
  %v5659 = vpop.f32.mrb[0].mxu0
  %v5660 = vadd.f32 0.0, %v5659
  %v5661 = vpop.f32.mrb[0].mxu0
  %v5662 = vadd.f32 0.0, %v5661
  %5663 = vmatprep.mubr.f32.mxu0 0.0
  %5664 = vmatmul.mubr.f32.gmra.mrb[0].mxu0 %v5525
  %v5665 = vpop.f32.mrb[0].mxu0
  %v5666 = vadd.f32 0.0, %v5665
  %v5667 = vpop.f32.mrb[0].mxu0
  %v5668 = vadd.f32 0.0, %v5667
  %5669 = vmatprep.mubr.f32.mxu0 0.0
  %5670 = vmatmul.mubr.f32.gmra.mrb[0].mxu0 %v5528
  %v5671 = vpop.f32.mrb[0].mxu0
  %v5672 = vadd.f32 0.0, %v5671
  %v5673 = vpop.f32.mrb[0].mxu0
  %v5674 = vadd.f32 0.0, %v5673
  %5675 = vmatprep.mubr.f32.mxu0 0.0
  %5676 = vmatmul.mubr.f32.gmra.mrb[0].mxu0 %v5531
  %v5677 = vpop.f32.mrb[0].mxu0
  %v5678 = vadd.f32 0.0, %v5677
  %v5679 = vpop.f32.mrb[0].mxu0
  %v5680 = vadd.f32 0.0, %v5679
  %5681 = vdwg.mxu0
  %v5682 = vadd.f32 %v5434, %v5600
  %v5683 = vadd.f32 %v5435, %v5602
  %v5684 = vadd.f32 %v5436, %v5606
  %v5685 = vadd.f32 %v5437, %v5608
  %v5686 = vadd.f32 %v5438, %v5612
  %v5687 = vadd.f32 %v5439, %v5614
  %v5688 = vadd.f32 %v5440, %v5618
  %v5689 = vadd.f32 %v5441, %v5620
  %v5690 = vadd.f32 %v5442, %v5624
  %v5691 = vadd.f32 %v5443, %v5626
  %v5692 = vadd.f32 %v5444, %v5630
  %v5693 = vadd.f32 %v5445, %v5632
  %v5694 = vadd.f32 %v5446, %v5636
  %v5695 = vadd.f32 %v5447, %v5638
  %v5696 = vadd.f32 %v5448, %v5642
  %v5697 = vadd.f32 %v5449, %v5644
  %v5698 = vadd.f32 %v5450, %v5648
  %v5699 = vadd.f32 %v5451, %v5650
  %v5700 = vadd.f32 %v5452, %v5654
  %v5701 = vadd.f32 %v5453, %v5656
  %v5702 = vadd.f32 %v5454, %v5660
  %v5703 = vadd.f32 %v5455, %v5662
  %v5704 = vadd.f32 %v5456, %v5666
  %v5705 = vadd.f32 %v5457, %v5668
  %v5706 = vadd.f32 %v5458, %v5672
  %v5707 = vadd.f32 %v5459, %v5674
  %v5708 = vadd.f32 %v5460, %v5678
  %v5709 = vadd.f32 %v5461, %v5680
  %v5710 = vld [vmem:[%s8] sm:$0x3]
  %v5712 = vlaneseq
  %v5713 = vshrl.u32 %v5712, 7
  %v5714 = vsub.s32 0, %v5713
  %v5715 = vrot.slane %v5710, %v5714
  %v5716 = vlaneseq
  %v5717 = vshrl.u32 %v5716, 7
  %v5718 = vsub.s32 1, %v5717
  %v5719 = vrot.slane %v5710, %v5718
  %v5722 = vadd.f32 %v5682, %v5715
  %v5723 = vadd.f32 %v5683, %v5719
  %v5724 = vadd.f32 %v5684, %v5715
  %v5725 = vadd.f32 %v5685, %v5719
  %v5726 = vadd.f32 %v5686, %v5715
  %v5727 = vadd.f32 %v5687, %v5719
  %v5728 = vadd.f32 %v5688, %v5715
  %v5729 = vadd.f32 %v5689, %v5719
  %v5730 = vadd.f32 %v5690, %v5715
  %v5731 = vadd.f32 %v5691, %v5719
  %v5732 = vadd.f32 %v5692, %v5715
  %v5733 = vadd.f32 %v5693, %v5719
  %v5734 = vadd.f32 %v5694, %v5715
  %v5735 = vadd.f32 %v5695, %v5719
  %v5736 = vadd.f32 %v5696, %v5715
  %v5737 = vadd.f32 %v5697, %v5719
  %v5738 = vadd.f32 %v5698, %v5715
  %v5739 = vadd.f32 %v5699, %v5719
  %v5740 = vadd.f32 %v5700, %v5715
  %v5741 = vadd.f32 %v5701, %v5719
  %v5742 = vadd.f32 %v5702, %v5715
  %v5743 = vadd.f32 %v5703, %v5719
  %v5744 = vadd.f32 %v5704, %v5715
  %v5745 = vadd.f32 %v5705, %v5719
  %v5746 = vadd.f32 %v5706, %v5715
  %v5747 = vadd.f32 %v5707, %v5719
  %v5748 = vadd.f32 %v5708, %v5715
  %v5749 = vadd.f32 %v5709, %v5719
  %v5750 = vmax.f32 %v5722, 0.0
  %v5751 = vmax.f32 %v5723, 0.0
  %v5752 = vmax.f32 %v5724, 0.0
  %v5753 = vmax.f32 %v5725, 0.0
  %v5754 = vmax.f32 %v5726, 0.0
  %v5755 = vmax.f32 %v5727, 0.0
  %v5756 = vmax.f32 %v5728, 0.0
  %v5757 = vmax.f32 %v5729, 0.0
  %v5758 = vmax.f32 %v5730, 0.0
  %v5759 = vmax.f32 %v5731, 0.0
  %v5760 = vmax.f32 %v5732, 0.0
  %v5761 = vmax.f32 %v5733, 0.0
  %v5762 = vmax.f32 %v5734, 0.0
  %v5763 = vmax.f32 %v5735, 0.0
  %v5764 = vmax.f32 %v5736, 0.0
  %v5765 = vmax.f32 %v5737, 0.0
  %v5766 = vmax.f32 %v5738, 0.0
  %v5767 = vmax.f32 %v5739, 0.0
  %v5768 = vmax.f32 %v5740, 0.0
  %v5769 = vmax.f32 %v5741, 0.0
  %v5770 = vmax.f32 %v5742, 0.0
  %v5771 = vmax.f32 %v5743, 0.0
  %v5772 = vmax.f32 %v5744, 0.0
  %v5773 = vmax.f32 %v5745, 0.0
  %v5774 = vmax.f32 %v5746, 0.0
  %v5775 = vmax.f32 %v5747, 0.0
  %v5776 = vmax.f32 %v5748, 0.0
  %v5777 = vmax.f32 %v5749, 0.0
  %v5778 = vld [vmem:[%s9] sm:$0xff]
  %v5779 = vld [vmem:[%s9 + $0x8] sm:$0xff]
  %v5780 = vld [vmem:[%s9 + $0x10] sm:$0xff]
  %v5781 = vld [vmem:[%s9 + $0x18] sm:$0xff]
  %v5782 = vld [vmem:[%s9 + $0x20] sm:$0xff]
  %v5783 = vld [vmem:[%s9 + $0x28] sm:$0xff]
  %v5784 = vld [vmem:[%s9 + $0x30] sm:$0xff]
  %v5785 = vld [vmem:[%s9 + $0x38] sm:$0xff]
  %v5786 = vld [vmem:[%s9 + $0x40] sm:$0xff]
  %v5787 = vld [vmem:[%s9 + $0x48] sm:$0xff]
  %v5788 = vld [vmem:[%s9 + $0x50] sm:$0xff]
  %v5789 = vld [vmem:[%s9 + $0x58] sm:$0xff]
  %v5790 = vld [vmem:[%s9 + $0x60] sm:$0xff]
  %v5791 = vld [vmem:[%s9 + $0x68] sm:$0xff]
  %v5793 = vsel %vm3901, %v5778, 0
  %v5796 = vsel %vm3901, %v5779, 0
  %v5799 = vsel %vm3901, %v5780, 0
  %v5802 = vsel %vm3901, %v5781, 0
  %v5805 = vsel %vm3901, %v5782, 0
  %v5808 = vsel %vm3901, %v5783, 0
  %v5811 = vsel %vm3901, %v5784, 0
  %v5814 = vsel %vm3901, %v5785, 0
  %v5817 = vsel %vm3901, %v5786, 0
  %v5820 = vsel %vm3901, %v5787, 0
  %v5823 = vsel %vm3901, %v5788, 0
  %v5826 = vsel %vm3901, %v5789, 0
  %v5829 = vsel %vm3901, %v5790, 0
  %v5832 = vsel %vm3901, %v5791, 0
  %5834 = vmatprep.subr.mxu0 %v5751
  %5835 = vmatpush1.msra.mxu0 %v5750
  %5836 = vmatprep.subr.mxu0 %v5753
  %5837 = vmatpush1.msra.mxu0 %v5752
  %5838 = vmatprep.subr.mxu0 %v5755
  %5839 = vmatpush1.msra.mxu0 %v5754
  %5840 = vmatprep.subr.mxu0 %v5757
  %5841 = vmatpush1.msra.mxu0 %v5756
  %5842 = vmatprep.subr.mxu0 %v5759
  %5843 = vmatpush1.msra.mxu0 %v5758
  %5844 = vmatprep.subr.mxu0 %v5761
  %5845 = vmatpush1.msra.mxu0 %v5760
  %5846 = vmatprep.subr.mxu0 %v5763
  %5847 = vmatpush1.msra.mxu0 %v5762
  %5848 = vmatprep.subr.mxu0 %v5765
  %5849 = vmatpush1.msra.mxu0 %v5764
  %5850 = vmatprep.subr.mxu0 %v5767
  %5851 = vmatpush1.msra.mxu0 %v5766
  %5852 = vmatprep.subr.mxu0 %v5769
  %5853 = vmatpush1.msra.mxu0 %v5768
  %5854 = vmatprep.subr.mxu0 %v5771
  %5855 = vmatpush1.msra.mxu0 %v5770
  %5856 = vmatprep.subr.mxu0 %v5773
  %5857 = vmatpush1.msra.mxu0 %v5772
  %5858 = vmatprep.subr.mxu0 %v5775
  %5859 = vmatpush1.msra.mxu0 %v5774
  %5860 = vmatprep.subr.mxu0 %v5777
  %5861 = vmatpush1.msra.mxu0 %v5776
  %5862 = vmatprep.subr.mxu0 0.0
  %5863 = vmatpush1.msra.mxu0 0.0
  %5864 = vmatprep.subr.mxu0 0.0
  %5865 = vmatpush1.msra.mxu0 0.0
  %5866 = vmatprep.subr.mxu0 0.0
  %5867 = vmatpush1.msra.mxu0 0.0
  %5868 = vmatprep.subr.mxu0 0.0
  %5869 = vmatpush1.msra.mxu0 0.0
  %5870 = vmatprep.subr.mxu0 0.0
  %5871 = vmatpush1.msra.mxu0 0.0
  %5872 = vmatprep.subr.mxu0 0.0
  %5873 = vmatpush1.msra.mxu0 0.0
  %5874 = vmatprep.subr.mxu0 0.0
  %5875 = vmatpush1.msra.mxu0 0.0
  %5876 = vmatprep.subr.mxu0 0.0
  %5877 = vmatpush1.msra.mxu0 0.0
  %5878 = vmatprep.subr.mxu0 0.0
  %5879 = vmatpush1.msra.mxu0 0.0
  %5880 = vmatprep.subr.mxu0 0.0
  %5881 = vmatpush1.msra.mxu0 0.0
  %5882 = vmatprep.subr.mxu0 0.0
  %5883 = vmatpush1.msra.mxu0 0.0
  %5884 = vmatprep.subr.mxu0 0.0
  %5885 = vmatpush1.msra.mxu0 0.0
  %5886 = vmatprep.subr.mxu0 0.0
  %5887 = vmatpush1.msra.mxu0 0.0
  %5888 = vmatprep.subr.mxu0 0.0
  %5889 = vmatpush1.msra.mxu0 0.0
  %5890 = vmatprep.subr.mxu0 0.0
  %5891 = vmatpush1.msra.mxu0 0.0
  %5892 = vmatprep.subr.mxu0 0.0
  %5893 = vmatpush1.msra.mxu0 0.0
  %5894 = vmatprep.subr.mxu0 0.0
  %5895 = vmatpush1.msra.mxu0 0.0
  %5896 = vmatprep.subr.mxu0 0.0
  %5897 = vmatpush1.msra.mxu0 0.0
  %5898 = vmatprep.mubr.f32.mxu0 0.0
  %5899 = vmatmul.mubr.f32.gmra.mrb[0].mxu0 %v5793
  %v5900 = vpop.f32.mrb[0].mxu0
  %v5901 = vadd.f32 0.0, %v5900
  %v5902 = vpop.f32.mrb[0].mxu0
  %v5903 = vadd.f32 0.0, %v5902
  %5904 = vmatprep.mubr.f32.mxu0 0.0
  %5905 = vmatmul.mubr.f32.gmra.mrb[0].mxu0 %v5796
  %v5906 = vpop.f32.mrb[0].mxu0
  %v5907 = vadd.f32 0.0, %v5906
  %v5908 = vpop.f32.mrb[0].mxu0
  %v5909 = vadd.f32 0.0, %v5908
  %5910 = vmatprep.mubr.f32.mxu0 0.0
  %5911 = vmatmul.mubr.f32.gmra.mrb[0].mxu0 %v5799
  %v5912 = vpop.f32.mrb[0].mxu0
  %v5913 = vadd.f32 0.0, %v5912
  %v5914 = vpop.f32.mrb[0].mxu0
  %v5915 = vadd.f32 0.0, %v5914
  %5916 = vmatprep.mubr.f32.mxu0 0.0
  %5917 = vmatmul.mubr.f32.gmra.mrb[0].mxu0 %v5802
  %v5918 = vpop.f32.mrb[0].mxu0
  %v5919 = vadd.f32 0.0, %v5918
  %v5920 = vpop.f32.mrb[0].mxu0
  %v5921 = vadd.f32 0.0, %v5920
  %5922 = vmatprep.mubr.f32.mxu0 0.0
  %5923 = vmatmul.mubr.f32.gmra.mrb[0].mxu0 %v5805
  %v5924 = vpop.f32.mrb[0].mxu0
  %v5925 = vadd.f32 0.0, %v5924
  %v5926 = vpop.f32.mrb[0].mxu0
  %v5927 = vadd.f32 0.0, %v5926
  %5928 = vmatprep.mubr.f32.mxu0 0.0
  %5929 = vmatmul.mubr.f32.gmra.mrb[0].mxu0 %v5808
  %v5930 = vpop.f32.mrb[0].mxu0
  %v5931 = vadd.f32 0.0, %v5930
  %v5932 = vpop.f32.mrb[0].mxu0
  %v5933 = vadd.f32 0.0, %v5932
  %5934 = vmatprep.mubr.f32.mxu0 0.0
  %5935 = vmatmul.mubr.f32.gmra.mrb[0].mxu0 %v5811
  %v5936 = vpop.f32.mrb[0].mxu0
  %v5937 = vadd.f32 0.0, %v5936
  %v5938 = vpop.f32.mrb[0].mxu0
  %v5939 = vadd.f32 0.0, %v5938
  %5940 = vmatprep.mubr.f32.mxu0 0.0
  %5941 = vmatmul.mubr.f32.gmra.mrb[0].mxu0 %v5814
  %v5942 = vpop.f32.mrb[0].mxu0
  %v5943 = vadd.f32 0.0, %v5942
  %v5944 = vpop.f32.mrb[0].mxu0
  %v5945 = vadd.f32 0.0, %v5944
  %5946 = vmatprep.mubr.f32.mxu0 0.0
  %5947 = vmatmul.mubr.f32.gmra.mrb[0].mxu0 %v5817
  %v5948 = vpop.f32.mrb[0].mxu0
  %v5949 = vadd.f32 0.0, %v5948
  %v5950 = vpop.f32.mrb[0].mxu0
  %v5951 = vadd.f32 0.0, %v5950
  %5952 = vmatprep.mubr.f32.mxu0 0.0
  %5953 = vmatmul.mubr.f32.gmra.mrb[0].mxu0 %v5820
  %v5954 = vpop.f32.mrb[0].mxu0
  %v5955 = vadd.f32 0.0, %v5954
  %v5956 = vpop.f32.mrb[0].mxu0
  %v5957 = vadd.f32 0.0, %v5956
  %5958 = vmatprep.mubr.f32.mxu0 0.0
  %5959 = vmatmul.mubr.f32.gmra.mrb[0].mxu0 %v5823
  %v5960 = vpop.f32.mrb[0].mxu0
  %v5961 = vadd.f32 0.0, %v5960
  %v5962 = vpop.f32.mrb[0].mxu0
  %v5963 = vadd.f32 0.0, %v5962
  %5964 = vmatprep.mubr.f32.mxu0 0.0
  %5965 = vmatmul.mubr.f32.gmra.mrb[0].mxu0 %v5826
  %v5966 = vpop.f32.mrb[0].mxu0
  %v5967 = vadd.f32 0.0, %v5966
  %v5968 = vpop.f32.mrb[0].mxu0
  %v5969 = vadd.f32 0.0, %v5968
  %5970 = vmatprep.mubr.f32.mxu0 0.0
  %5971 = vmatmul.mubr.f32.gmra.mrb[0].mxu0 %v5829
  %v5972 = vpop.f32.mrb[0].mxu0
  %v5973 = vadd.f32 0.0, %v5972
  %v5974 = vpop.f32.mrb[0].mxu0
  %v5975 = vadd.f32 0.0, %v5974
  %5976 = vmatprep.mubr.f32.mxu0 0.0
  %5977 = vmatmul.mubr.f32.gmra.mrb[0].mxu0 %v5832
  %v5978 = vpop.f32.mrb[0].mxu0
  %v5979 = vadd.f32 0.0, %v5978
  %v5980 = vpop.f32.mrb[0].mxu0
  %v5981 = vadd.f32 0.0, %v5980
  %5982 = vdwg.mxu0
  %v5983 = vmax.f32 %v5901, %v5943
  %v5984 = vmax.f32 %v5903, %v5945
  %v5985 = vmax.f32 %v5907, %v5949
  %v5986 = vmax.f32 %v5909, %v5951
  %v5987 = vmax.f32 %v5913, %v5955
  %v5988 = vmax.f32 %v5915, %v5957
  %v5989 = vmax.f32 %v5919, %v5961
  %v5990 = vmax.f32 %v5921, %v5963
  %v5991 = vmax.f32 %v5925, %v5967
  %v5992 = vmax.f32 %v5927, %v5969
  %v5993 = vmax.f32 %v5931, %v5973
  %v5994 = vmax.f32 %v5933, %v5975
  %v5995 = vmax.f32 %v5937, %v5979
  %v5996 = vmax.f32 %v5939, %v5981
  %v5997 = vld [vmem:[%s10] sm:$0xff]
  %v5998 = vld [vmem:[%s10 + $0x8] sm:$0xff]
  %v5999 = vld [vmem:[%s10 + $0x10] sm:$0xff]
  %v6000 = vld [vmem:[%s10 + $0x18] sm:$0xff]
  %v6001 = vld [vmem:[%s10 + $0x20] sm:$0xff]
  %v6002 = vld [vmem:[%s10 + $0x28] sm:$0xff]
  %v6003 = vld [vmem:[%s10 + $0x30] sm:$0xff]
  %v6004 = vld [vmem:[%s10 + $0x38] sm:$0xff]
  %v6005 = vld [vmem:[%s10 + $0x40] sm:$0xff]
  %v6006 = vld [vmem:[%s10 + $0x48] sm:$0xff]
  %v6007 = vld [vmem:[%s10 + $0x50] sm:$0xff]
  %v6008 = vld [vmem:[%s10 + $0x58] sm:$0xff]
  %v6009 = vld [vmem:[%s10 + $0x60] sm:$0xff]
  %v6010 = vld [vmem:[%s10 + $0x68] sm:$0xff]
  %v6011 = vld [vmem:[%s10 + $0x70] sm:$0xff]
  %v6012 = vld [vmem:[%s10 + $0x78] sm:$0xff]
  %v6013 = vld [vmem:[%s10 + $0x80] sm:$0xff]
  %v6014 = vld [vmem:[%s10 + $0x88] sm:$0xff]
  %v6015 = vld [vmem:[%s10 + $0x90] sm:$0xff]
  %v6016 = vld [vmem:[%s10 + $0x98] sm:$0xff]
  %v6017 = vld [vmem:[%s10 + $0xa0] sm:$0xff]
  %v6018 = vld [vmem:[%s10 + $0xa8] sm:$0xff]
  %v6019 = vld [vmem:[%s10 + $0xb0] sm:$0xff]
  %v6020 = vld [vmem:[%s10 + $0xb8] sm:$0xff]
  %v6021 = vld [vmem:[%s10 + $0xc0] sm:$0xff]
  %v6022 = vld [vmem:[%s10 + $0xc8] sm:$0xff]
  %v6023 = vld [vmem:[%s10 + $0xd0] sm:$0xff]
  %v6024 = vld [vmem:[%s10 + $0xd8] sm:$0xff]
  %v6025 = vld [vmem:[%s10 + $0xe0] sm:$0xff]
  %v6026 = vld [vmem:[%s10 + $0xe8] sm:$0xff]
  %v6027 = vld [vmem:[%s10 + $0xf0] sm:$0xff]
  %v6028 = vld [vmem:[%s10 + $0xf8] sm:$0xff]
  %v6029 = vld [vmem:[%s10 + $0x100] sm:$0xff]
  %v6030 = vld [vmem:[%s10 + $0x108] sm:$0xff]
  %v6031 = vld [vmem:[%s10 + $0x110] sm:$0xff]
  %v6032 = vld [vmem:[%s10 + $0x118] sm:$0xff]
  %v6033 = vld [vmem:[%s10 + $0x120] sm:$0xff]
  %v6034 = vld [vmem:[%s10 + $0x128] sm:$0xff]
  %v6035 = vld [vmem:[%s10 + $0x130] sm:$0xff]
  %v6036 = vld [vmem:[%s10 + $0x138] sm:$0xff]
  %v6037 = vld [vmem:[%s10 + $0x140] sm:$0xff]
  %v6038 = vld [vmem:[%s10 + $0x148] sm:$0xff]
  %v6039 = vld [vmem:[%s10 + $0x150] sm:$0xff]
  %v6040 = vld [vmem:[%s10 + $0x158] sm:$0xff]
  %v6041 = vld [vmem:[%s10 + $0x160] sm:$0xff]
  %v6042 = vld [vmem:[%s10 + $0x168] sm:$0xff]
  %v6043 = vld [vmem:[%s10 + $0x170] sm:$0xff]
  %v6044 = vld [vmem:[%s10 + $0x178] sm:$0xff]
  %v6045 = vld [vmem:[%s10 + $0x180] sm:$0xff]
  %v6046 = vld [vmem:[%s10 + $0x188] sm:$0xff]
  %v6047 = vld [vmem:[%s10 + $0x190] sm:$0xff]
  %v6048 = vld [vmem:[%s10 + $0x198] sm:$0xff]
  %v6049 = vld [vmem:[%s10 + $0x1a0] sm:$0xff]
  %v6050 = vld [vmem:[%s10 + $0x1a8] sm:$0xff]
  %v6051 = vld [vmem:[%s10 + $0x1b0] sm:$0xff]
  %v6052 = vld [vmem:[%s10 + $0x1b8] sm:$0xff]
  %v6054 = vsel %vm3111, %v5984, 0
  %v6057 = vsel %vm3111, %v5986, 0
  %v6060 = vsel %vm3111, %v5988, 0
  %v6063 = vsel %vm3111, %v5990, 0
  %v6066 = vsel %vm3111, %v5992, 0
  %v6069 = vsel %vm3111, %v5994, 0
  %v6072 = vsel %vm3111, %v5996, 0
  %6074 = vmatprep.subr.mxu0 %v5998
  %6075 = vmatpush1.msra.mxu0 %v5997
  %6076 = vmatprep.subr.mxu0 %v6000
  %6077 = vmatpush1.msra.mxu0 %v5999
  %6078 = vmatprep.subr.mxu0 %v6002
  %6079 = vmatpush1.msra.mxu0 %v6001
  %6080 = vmatprep.subr.mxu0 %v6004
  %6081 = vmatpush1.msra.mxu0 %v6003
  %6082 = vmatprep.subr.mxu0 %v6006
  %6083 = vmatpush1.msra.mxu0 %v6005
  %6084 = vmatprep.subr.mxu0 %v6008
  %6085 = vmatpush1.msra.mxu0 %v6007
  %6086 = vmatprep.subr.mxu0 %v6010
  %6087 = vmatpush1.msra.mxu0 %v6009
  %6088 = vmatprep.subr.mxu0 %v6012
  %6089 = vmatpush1.msra.mxu0 %v6011
  %6090 = vmatprep.subr.mxu0 %v6014
  %6091 = vmatpush1.msra.mxu0 %v6013
  %6092 = vmatprep.subr.mxu0 %v6016
  %6093 = vmatpush1.msra.mxu0 %v6015
  %6094 = vmatprep.subr.mxu0 %v6018
  %6095 = vmatpush1.msra.mxu0 %v6017
  %6096 = vmatprep.subr.mxu0 %v6020
  %6097 = vmatpush1.msra.mxu0 %v6019
  %6098 = vmatprep.subr.mxu0 %v6022
  %6099 = vmatpush1.msra.mxu0 %v6021
  %6100 = vmatprep.subr.mxu0 %v6024
  %6101 = vmatpush1.msra.mxu0 %v6023
  %6102 = vmatprep.subr.mxu0 %v6026
  %6103 = vmatpush1.msra.mxu0 %v6025
  %6104 = vmatprep.subr.mxu0 %v6028
  %6105 = vmatpush1.msra.mxu0 %v6027
  %6106 = vmatprep.subr.mxu0 %v6030
  %6107 = vmatpush1.msra.mxu0 %v6029
  %6108 = vmatprep.subr.mxu0 %v6032
  %6109 = vmatpush1.msra.mxu0 %v6031
  %6110 = vmatprep.subr.mxu0 %v6034
  %6111 = vmatpush1.msra.mxu0 %v6033
  %6112 = vmatprep.subr.mxu0 %v6036
  %6113 = vmatpush1.msra.mxu0 %v6035
  %6114 = vmatprep.subr.mxu0 %v6038
  %6115 = vmatpush1.msra.mxu0 %v6037
  %6116 = vmatprep.subr.mxu0 %v6040
  %6117 = vmatpush1.msra.mxu0 %v6039
  %6118 = vmatprep.subr.mxu0 %v6042
  %6119 = vmatpush1.msra.mxu0 %v6041
  %6120 = vmatprep.subr.mxu0 %v6044
  %6121 = vmatpush1.msra.mxu0 %v6043
  %6122 = vmatprep.subr.mxu0 %v6046
  %6123 = vmatpush1.msra.mxu0 %v6045
  %6124 = vmatprep.subr.mxu0 %v6048
  %6125 = vmatpush1.msra.mxu0 %v6047
  %6126 = vmatprep.subr.mxu0 %v6050
  %6127 = vmatpush1.msra.mxu0 %v6049
  %6128 = vmatprep.subr.mxu0 %v6052
  %6129 = vmatpush1.msra.mxu0 %v6051
  %6130 = vmatprep.subr.mxu0 0.0
  %6131 = vmatpush1.msra.mxu0 0.0
  %6132 = vmatprep.subr.mxu0 0.0
  %6133 = vmatpush1.msra.mxu0 0.0
  %6134 = vmatprep.subr.mxu0 0.0
  %6135 = vmatpush1.msra.mxu0 0.0
  %6136 = vmatprep.subr.mxu0 0.0
  %6137 = vmatpush1.msra.mxu0 0.0
  %6138 = vmatprep.mubr.f32.mxu0 %v6054
  %6139 = vmatmul.mubr.f32.gmra.mrb[0].mxu0 %v5983
  %v6140 = vpop.f32.mrb[0].mxu0
  %v6141 = vadd.f32 0.0, %v6140
  %v6142 = vpop.f32.mrb[0].mxu0
  %v6143 = vadd.f32 0.0, %v6142
  %6144 = vmatprep.mubr.f32.mxu0 %v6057
  %6145 = vmatmul.mubr.f32.gmra.mrb[0].mxu0 %v5985
  %v6146 = vpop.f32.mrb[0].mxu0
  %v6147 = vadd.f32 0.0, %v6146
  %v6148 = vpop.f32.mrb[0].mxu0
  %v6149 = vadd.f32 0.0, %v6148
  %6150 = vmatprep.mubr.f32.mxu0 %v6060
  %6151 = vmatmul.mubr.f32.gmra.mrb[0].mxu0 %v5987
  %v6152 = vpop.f32.mrb[0].mxu0
  %v6153 = vadd.f32 0.0, %v6152
  %v6154 = vpop.f32.mrb[0].mxu0
  %v6155 = vadd.f32 0.0, %v6154
  %6156 = vmatprep.mubr.f32.mxu0 %v6063
  %6157 = vmatmul.mubr.f32.gmra.mrb[0].mxu0 %v5989
  %v6158 = vpop.f32.mrb[0].mxu0
  %v6159 = vadd.f32 0.0, %v6158
  %v6160 = vpop.f32.mrb[0].mxu0
  %v6161 = vadd.f32 0.0, %v6160
  %6162 = vmatprep.mubr.f32.mxu0 %v6066
  %6163 = vmatmul.mubr.f32.gmra.mrb[0].mxu0 %v5991
  %v6164 = vpop.f32.mrb[0].mxu0
  %v6165 = vadd.f32 0.0, %v6164
  %v6166 = vpop.f32.mrb[0].mxu0
  %v6167 = vadd.f32 0.0, %v6166
  %6168 = vmatprep.mubr.f32.mxu0 %v6069
  %6169 = vmatmul.mubr.f32.gmra.mrb[0].mxu0 %v5993
  %v6170 = vpop.f32.mrb[0].mxu0
  %v6171 = vadd.f32 0.0, %v6170
  %v6172 = vpop.f32.mrb[0].mxu0
  %v6173 = vadd.f32 0.0, %v6172
  %6174 = vmatprep.mubr.f32.mxu0 %v6072
  %6175 = vmatmul.mubr.f32.gmra.mrb[0].mxu0 %v5995
  %v6176 = vpop.f32.mrb[0].mxu0
  %v6177 = vadd.f32 0.0, %v6176
  %v6178 = vpop.f32.mrb[0].mxu0
  %v6179 = vadd.f32 0.0, %v6178
  %6180 = vdwg.mxu0
  %6195 = vrot.lane.b32.xlu0 %v6141, 16
  %v6196 = vpop.permute.xlu0 %6195
  %6197 = vrot.lane.b32.xlu0 %v6143, 16
  %v6198 = vpop.permute.xlu0 %6197
  %6199 = vrot.lane.b32.xlu0 %v6147, 16
  %v6200 = vpop.permute.xlu0 %6199
  %6201 = vrot.lane.b32.xlu0 %v6149, 16
  %v6202 = vpop.permute.xlu0 %6201
  %6203 = vrot.lane.b32.xlu0 %v6153, 16
  %v6204 = vpop.permute.xlu0 %6203
  %6205 = vrot.lane.b32.xlu0 %v6155, 16
  %v6206 = vpop.permute.xlu0 %6205
  %6207 = vrot.lane.b32.xlu0 %v6159, 16
  %v6208 = vpop.permute.xlu0 %6207
  %6209 = vrot.lane.b32.xlu0 %v6161, 16
  %v6210 = vpop.permute.xlu0 %6209
  %6211 = vrot.lane.b32.xlu0 %v6165, 16
  %v6212 = vpop.permute.xlu0 %6211
  %6213 = vrot.lane.b32.xlu0 %v6167, 16
  %v6214 = vpop.permute.xlu0 %6213
  %6215 = vrot.lane.b32.xlu0 %v6171, 16
  %v6216 = vpop.permute.xlu0 %6215
  %6217 = vrot.lane.b32.xlu0 %v6173, 16
  %v6218 = vpop.permute.xlu0 %6217
  %6219 = vrot.lane.b32.xlu0 %v6177, 16
  %v6220 = vpop.permute.xlu0 %6219
  %6221 = vrot.lane.b32.xlu0 %v6179, 16
  %v6222 = vpop.permute.xlu0 %6221
  %v6223 = vsel %vm3788, %v6196, %v6198
  %v6224 = vsel %vm3788, %v6200, %v6202
  %v6225 = vsel %vm3788, %v6204, %v6206
  %v6226 = vsel %vm3788, %v6208, %v6210
  %v6227 = vsel %vm3788, %v6212, %v6214
  %v6228 = vsel %vm3788, %v6216, %v6218
  %v6229 = vsel %vm3788, %v6220, %v6222
  %v6237 = vmax.f32 %v6141, %v6223
  %v6238 = vmax.f32 %v6147, %v6224
  %v6239 = vmax.f32 %v6153, %v6225
  %v6240 = vmax.f32 %v6159, %v6226
  %v6241 = vmax.f32 %v6165, %v6227
  %v6242 = vmax.f32 %v6171, %v6228
  %v6243 = vmax.f32 %v6177, %v6229
  %v6244 = vld [vmem:[%s11] sm:$0xff]
  %v6245 = vld [vmem:[%s11 + $0x8] sm:$0xff]
  %v6246 = vld [vmem:[%s11 + $0x10] sm:$0xff]
  %v6247 = vld [vmem:[%s11 + $0x18] sm:$0xff]
  %v6248 = vld [vmem:[%s11 + $0x20] sm:$0xff]
  %v6249 = vld [vmem:[%s11 + $0x28] sm:$0xff]
  %v6250 = vld [vmem:[%s11 + $0x30] sm:$0xff]
  %v6251 = vld [vmem:[%s11 + $0x38] sm:$0xff]
  %v6252 = vld [vmem:[%s11 + $0x40] sm:$0xff]
  %v6253 = vld [vmem:[%s11 + $0x48] sm:$0xff]
  %v6254 = vld [vmem:[%s11 + $0x50] sm:$0xff]
  %v6255 = vld [vmem:[%s11 + $0x58] sm:$0xff]
  %v6256 = vld [vmem:[%s11 + $0x60] sm:$0xff]
  %v6257 = vld [vmem:[%s11 + $0x68] sm:$0xff]
  %s6258 = scalar_lea.vmem %s11, 112
  %v6259 = vld [vmem:[%s6258] sm:$0xff]
  %v6260 = vld [vmem:[%s6258 + $0x8] sm:$0xff]
  %v6261 = vld [vmem:[%s6258 + $0x10] sm:$0xff]
  %v6262 = vld [vmem:[%s6258 + $0x18] sm:$0xff]
  %v6263 = vld [vmem:[%s6258 + $0x20] sm:$0xff]
  %v6264 = vld [vmem:[%s6258 + $0x28] sm:$0xff]
  %v6265 = vld [vmem:[%s6258 + $0x30] sm:$0xff]
  %v6266 = vld [vmem:[%s6258 + $0x38] sm:$0xff]
  %v6267 = vld [vmem:[%s6258 + $0x40] sm:$0xff]
  %v6268 = vld [vmem:[%s6258 + $0x48] sm:$0xff]
  %v6269 = vld [vmem:[%s6258 + $0x50] sm:$0xff]
  %v6270 = vld [vmem:[%s6258 + $0x58] sm:$0xff]
  %v6271 = vld [vmem:[%s6258 + $0x60] sm:$0xff]
  %v6272 = vld [vmem:[%s6258 + $0x68] sm:$0xff]
  %v6274 = vsel %vm3901, %v6238, 0
  %6276 = vmatprep.subr.mxu0 0.0
  %6277 = vmatpush1.msra.mxu0 %v6259
  %6278 = vmatprep.subr.mxu0 0.0
  %6279 = vmatpush1.msra.mxu0 %v6260
  %6280 = vmatprep.subr.mxu0 0.0
  %6281 = vmatpush1.msra.mxu0 %v6261
  %6282 = vmatprep.subr.mxu0 0.0
  %6283 = vmatpush1.msra.mxu0 %v6262
  %6284 = vmatprep.subr.mxu0 0.0
  %6285 = vmatpush1.msra.mxu0 %v6263
  %6286 = vmatprep.subr.mxu0 0.0
  %6287 = vmatpush1.msra.mxu0 %v6264
  %6288 = vmatprep.subr.mxu0 0.0
  %6289 = vmatpush1.msra.mxu0 %v6265
  %6290 = vmatprep.subr.mxu0 0.0
  %6291 = vmatpush1.msra.mxu0 %v6266
  %6292 = vmatprep.subr.mxu0 0.0
  %6293 = vmatpush1.msra.mxu0 %v6267
  %6294 = vmatprep.subr.mxu0 0.0
  %6295 = vmatpush1.msra.mxu0 %v6268
  %6296 = vmatprep.subr.mxu0 0.0
  %6297 = vmatpush1.msra.mxu0 %v6269
  %6298 = vmatprep.subr.mxu0 0.0
  %6299 = vmatpush1.msra.mxu0 %v6270
  %6300 = vmatprep.subr.mxu0 0.0
  %6301 = vmatpush1.msra.mxu0 %v6271
  %6302 = vmatprep.subr.mxu0 0.0
  %6303 = vmatpush1.msra.mxu0 %v6272
  %6304 = vmatprep.subr.mxu0 0.0
  %6305 = vmatpush1.msra.mxu0 0.0
  %6306 = vmatprep.subr.mxu0 0.0
  %6307 = vmatpush1.msra.mxu0 0.0
  %6308 = vmatprep.subr.mxu0 0.0
  %6309 = vmatpush1.msra.mxu0 0.0
  %6310 = vmatprep.subr.mxu0 0.0
  %6311 = vmatpush1.msra.mxu0 0.0
  %6312 = vmatprep.subr.mxu0 0.0
  %6313 = vmatpush1.msra.mxu0 0.0
  %6314 = vmatprep.subr.mxu0 0.0
  %6315 = vmatpush1.msra.mxu0 0.0
  %6316 = vmatprep.subr.mxu0 0.0
  %6317 = vmatpush1.msra.mxu0 0.0
  %6318 = vmatprep.subr.mxu0 0.0
  %6319 = vmatpush1.msra.mxu0 0.0
  %6320 = vmatprep.subr.mxu0 0.0
  %6321 = vmatpush1.msra.mxu0 0.0
  %6322 = vmatprep.subr.mxu0 0.0
  %6323 = vmatpush1.msra.mxu0 0.0
  %6324 = vmatprep.subr.mxu0 0.0
  %6325 = vmatpush1.msra.mxu0 0.0
  %6326 = vmatprep.subr.mxu0 0.0
  %6327 = vmatpush1.msra.mxu0 0.0
  %6328 = vmatprep.subr.mxu0 0.0
  %6329 = vmatpush1.msra.mxu0 0.0
  %6330 = vmatprep.subr.mxu0 0.0
  %6331 = vmatpush1.msra.mxu0 0.0
  %6332 = vmatprep.subr.mxu0 0.0
  %6333 = vmatpush1.msra.mxu0 0.0
  %6334 = vmatprep.subr.mxu0 0.0
  %6335 = vmatpush1.msra.mxu0 0.0
  %6336 = vmatprep.subr.mxu0 0.0
  %6337 = vmatpush1.msra.mxu0 0.0
  %6338 = vmatprep.subr.mxu0 0.0
  %6339 = vmatpush1.msra.mxu0 0.0
  %6340 = vmatprep.mubr.f32.mxu0 0.0
  %6341 = vmatmul.mubr.f32.gmra.mrb[0].mxu0 %v6274
  %v6342 = vpop.f32.mrb[0].mxu0
  %v6343 = vadd.f32 0.0, %v6342
  %v6344 = vpop.f32.mrb[0].mxu0
  %6345 = vdwg.mxu0
  %v6347 = vsel %vm3901, %v6237, 0
  %6349 = vmatprep.subr.mxu0 0.0
  %6350 = vmatpush1.msra.mxu0 %v6244
  %6351 = vmatprep.subr.mxu0 0.0
  %6352 = vmatpush1.msra.mxu0 %v6245
  %6353 = vmatprep.subr.mxu0 0.0
  %6354 = vmatpush1.msra.mxu0 %v6246
  %6355 = vmatprep.subr.mxu0 0.0
  %6356 = vmatpush1.msra.mxu0 %v6247
  %6357 = vmatprep.subr.mxu0 0.0
  %6358 = vmatpush1.msra.mxu0 %v6248
  %6359 = vmatprep.subr.mxu0 0.0
  %6360 = vmatpush1.msra.mxu0 %v6249
  %6361 = vmatprep.subr.mxu0 0.0
  %6362 = vmatpush1.msra.mxu0 %v6250
  %6363 = vmatprep.subr.mxu0 0.0
  %6364 = vmatpush1.msra.mxu0 %v6251
  %6365 = vmatprep.subr.mxu0 0.0
  %6366 = vmatpush1.msra.mxu0 %v6252
  %6367 = vmatprep.subr.mxu0 0.0
  %6368 = vmatpush1.msra.mxu0 %v6253
  %6369 = vmatprep.subr.mxu0 0.0
  %6370 = vmatpush1.msra.mxu0 %v6254
  %6371 = vmatprep.subr.mxu0 0.0
  %6372 = vmatpush1.msra.mxu0 %v6255
  %6373 = vmatprep.subr.mxu0 0.0
  %6374 = vmatpush1.msra.mxu0 %v6256
  %6375 = vmatprep.subr.mxu0 0.0
  %6376 = vmatpush1.msra.mxu0 %v6257
  %6377 = vmatprep.subr.mxu0 0.0
  %6378 = vmatpush1.msra.mxu0 0.0
  %6379 = vmatprep.subr.mxu0 0.0
  %6380 = vmatpush1.msra.mxu0 0.0
  %6381 = vmatprep.subr.mxu0 0.0
  %6382 = vmatpush1.msra.mxu0 0.0
  %6383 = vmatprep.subr.mxu0 0.0
  %6384 = vmatpush1.msra.mxu0 0.0
  %6385 = vmatprep.subr.mxu0 0.0
  %6386 = vmatpush1.msra.mxu0 0.0
  %6387 = vmatprep.subr.mxu0 0.0
  %6388 = vmatpush1.msra.mxu0 0.0
  %6389 = vmatprep.subr.mxu0 0.0
  %6390 = vmatpush1.msra.mxu0 0.0
  %6391 = vmatprep.subr.mxu0 0.0
  %6392 = vmatpush1.msra.mxu0 0.0
  %6393 = vmatprep.subr.mxu0 0.0
  %6394 = vmatpush1.msra.mxu0 0.0
  %6395 = vmatprep.subr.mxu0 0.0
  %6396 = vmatpush1.msra.mxu0 0.0
  %6397 = vmatprep.subr.mxu0 0.0
  %6398 = vmatpush1.msra.mxu0 0.0
  %6399 = vmatprep.subr.mxu0 0.0
  %6400 = vmatpush1.msra.mxu0 0.0
  %6401 = vmatprep.subr.mxu0 0.0
  %6402 = vmatpush1.msra.mxu0 0.0
  %6403 = vmatprep.subr.mxu0 0.0
  %6404 = vmatpush1.msra.mxu0 0.0
  %6405 = vmatprep.subr.mxu0 0.0
  %6406 = vmatpush1.msra.mxu0 0.0
  %6407 = vmatprep.subr.mxu0 0.0
  %6408 = vmatpush1.msra.mxu0 0.0
  %6409 = vmatprep.subr.mxu0 0.0
  %6410 = vmatpush1.msra.mxu0 0.0
  %6411 = vmatprep.subr.mxu0 0.0
  %6412 = vmatpush1.msra.mxu0 0.0
  %6413 = vmatprep.mubr.f32.mxu0 0.0
  %6414 = vmatmul.mubr.f32.gmra.mrb[0].mxu0 %v6347
  %v6415 = vpop.f32.mrb[0].mxu0
  %v6416 = vadd.f32 %v6343, %v6415
  %v6417 = vpop.f32.mrb[0].mxu0
  %6418 = vdwg.mxu0
  %s6419 = scalar_lea.vmem %s11, 224
  %v6420 = vld [vmem:[%s6419] sm:$0xff]
  %v6421 = vld [vmem:[%s6419 + $0x8] sm:$0xff]
  %v6422 = vld [vmem:[%s6419 + $0x10] sm:$0xff]
  %v6423 = vld [vmem:[%s6419 + $0x18] sm:$0xff]
  %v6424 = vld [vmem:[%s6419 + $0x20] sm:$0xff]
  %v6425 = vld [vmem:[%s6419 + $0x28] sm:$0xff]
  %v6426 = vld [vmem:[%s6419 + $0x30] sm:$0xff]
  %v6427 = vld [vmem:[%s6419 + $0x38] sm:$0xff]
  %v6428 = vld [vmem:[%s6419 + $0x40] sm:$0xff]
  %v6429 = vld [vmem:[%s6419 + $0x48] sm:$0xff]
  %v6430 = vld [vmem:[%s6419 + $0x50] sm:$0xff]
  %v6431 = vld [vmem:[%s6419 + $0x58] sm:$0xff]
  %v6432 = vld [vmem:[%s6419 + $0x60] sm:$0xff]
  %v6433 = vld [vmem:[%s6419 + $0x68] sm:$0xff]
  %v6435 = vsel %vm3901, %v6239, 0
  %6437 = vmatprep.subr.mxu0 0.0
  %6438 = vmatpush1.msra.mxu0 %v6420
  %6439 = vmatprep.subr.mxu0 0.0
  %6440 = vmatpush1.msra.mxu0 %v6421
  %6441 = vmatprep.subr.mxu0 0.0
  %6442 = vmatpush1.msra.mxu0 %v6422
  %6443 = vmatprep.subr.mxu0 0.0
  %6444 = vmatpush1.msra.mxu0 %v6423
  %6445 = vmatprep.subr.mxu0 0.0
  %6446 = vmatpush1.msra.mxu0 %v6424
  %6447 = vmatprep.subr.mxu0 0.0
  %6448 = vmatpush1.msra.mxu0 %v6425
  %6449 = vmatprep.subr.mxu0 0.0
  %6450 = vmatpush1.msra.mxu0 %v6426
  %6451 = vmatprep.subr.mxu0 0.0
  %6452 = vmatpush1.msra.mxu0 %v6427
  %6453 = vmatprep.subr.mxu0 0.0
  %6454 = vmatpush1.msra.mxu0 %v6428
  %6455 = vmatprep.subr.mxu0 0.0
  %6456 = vmatpush1.msra.mxu0 %v6429
  %6457 = vmatprep.subr.mxu0 0.0
  %6458 = vmatpush1.msra.mxu0 %v6430
  %6459 = vmatprep.subr.mxu0 0.0
  %6460 = vmatpush1.msra.mxu0 %v6431
  %6461 = vmatprep.subr.mxu0 0.0
  %6462 = vmatpush1.msra.mxu0 %v6432
  %6463 = vmatprep.subr.mxu0 0.0
  %6464 = vmatpush1.msra.mxu0 %v6433
  %6465 = vmatprep.subr.mxu0 0.0
  %6466 = vmatpush1.msra.mxu0 0.0
  %6467 = vmatprep.subr.mxu0 0.0
  %6468 = vmatpush1.msra.mxu0 0.0
  %6469 = vmatprep.subr.mxu0 0.0
  %6470 = vmatpush1.msra.mxu0 0.0
  %6471 = vmatprep.subr.mxu0 0.0
  %6472 = vmatpush1.msra.mxu0 0.0
  %6473 = vmatprep.subr.mxu0 0.0
  %6474 = vmatpush1.msra.mxu0 0.0
  %6475 = vmatprep.subr.mxu0 0.0
  %6476 = vmatpush1.msra.mxu0 0.0
  %6477 = vmatprep.subr.mxu0 0.0
  %6478 = vmatpush1.msra.mxu0 0.0
  %6479 = vmatprep.subr.mxu0 0.0
  %6480 = vmatpush1.msra.mxu0 0.0
  %6481 = vmatprep.subr.mxu0 0.0
  %6482 = vmatpush1.msra.mxu0 0.0
  %6483 = vmatprep.subr.mxu0 0.0
  %6484 = vmatpush1.msra.mxu0 0.0
  %6485 = vmatprep.subr.mxu0 0.0
  %6486 = vmatpush1.msra.mxu0 0.0
  %6487 = vmatprep.subr.mxu0 0.0
  %6488 = vmatpush1.msra.mxu0 0.0
  %6489 = vmatprep.subr.mxu0 0.0
  %6490 = vmatpush1.msra.mxu0 0.0
  %6491 = vmatprep.subr.mxu0 0.0
  %6492 = vmatpush1.msra.mxu0 0.0
  %6493 = vmatprep.subr.mxu0 0.0
  %6494 = vmatpush1.msra.mxu0 0.0
  %6495 = vmatprep.subr.mxu0 0.0
  %6496 = vmatpush1.msra.mxu0 0.0
  %6497 = vmatprep.subr.mxu0 0.0
  %6498 = vmatpush1.msra.mxu0 0.0
  %6499 = vmatprep.subr.mxu0 0.0
  %6500 = vmatpush1.msra.mxu0 0.0
  %6501 = vmatprep.mubr.f32.mxu0 0.0
  %6502 = vmatmul.mubr.f32.gmra.mrb[0].mxu0 %v6435
  %v6503 = vpop.f32.mrb[0].mxu0
  %v6504 = vadd.f32 0.0, %v6503
  %v6505 = vpop.f32.mrb[0].mxu0
  %6506 = vdwg.mxu0
  %v6507 = vadd.f32 %v6416, %v6504
  %s6508 = scalar_lea.vmem %s11, 336
  %v6509 = vld [vmem:[%s6508] sm:$0xff]
  %v6510 = vld [vmem:[%s6508 + $0x8] sm:$0xff]
  %v6511 = vld [vmem:[%s6508 + $0x10] sm:$0xff]
  %v6512 = vld [vmem:[%s6508 + $0x18] sm:$0xff]
  %v6513 = vld [vmem:[%s6508 + $0x20] sm:$0xff]
  %v6514 = vld [vmem:[%s6508 + $0x28] sm:$0xff]
  %v6515 = vld [vmem:[%s6508 + $0x30] sm:$0xff]
  %v6516 = vld [vmem:[%s6508 + $0x38] sm:$0xff]
  %v6517 = vld [vmem:[%s6508 + $0x40] sm:$0xff]
  %v6518 = vld [vmem:[%s6508 + $0x48] sm:$0xff]
  %v6519 = vld [vmem:[%s6508 + $0x50] sm:$0xff]
  %v6520 = vld [vmem:[%s6508 + $0x58] sm:$0xff]
  %v6521 = vld [vmem:[%s6508 + $0x60] sm:$0xff]
  %v6522 = vld [vmem:[%s6508 + $0x68] sm:$0xff]
  %v6524 = vsel %vm3901, %v6240, 0
  %6526 = vmatprep.subr.mxu0 0.0
  %6527 = vmatpush1.msra.mxu0 %v6509
  %6528 = vmatprep.subr.mxu0 0.0
  %6529 = vmatpush1.msra.mxu0 %v6510
  %6530 = vmatprep.subr.mxu0 0.0
  %6531 = vmatpush1.msra.mxu0 %v6511
  %6532 = vmatprep.subr.mxu0 0.0
  %6533 = vmatpush1.msra.mxu0 %v6512
  %6534 = vmatprep.subr.mxu0 0.0
  %6535 = vmatpush1.msra.mxu0 %v6513
  %6536 = vmatprep.subr.mxu0 0.0
  %6537 = vmatpush1.msra.mxu0 %v6514
  %6538 = vmatprep.subr.mxu0 0.0
  %6539 = vmatpush1.msra.mxu0 %v6515
  %6540 = vmatprep.subr.mxu0 0.0
  %6541 = vmatpush1.msra.mxu0 %v6516
  %6542 = vmatprep.subr.mxu0 0.0
  %6543 = vmatpush1.msra.mxu0 %v6517
  %6544 = vmatprep.subr.mxu0 0.0
  %6545 = vmatpush1.msra.mxu0 %v6518
  %6546 = vmatprep.subr.mxu0 0.0
  %6547 = vmatpush1.msra.mxu0 %v6519
  %6548 = vmatprep.subr.mxu0 0.0
  %6549 = vmatpush1.msra.mxu0 %v6520
  %6550 = vmatprep.subr.mxu0 0.0
  %6551 = vmatpush1.msra.mxu0 %v6521
  %6552 = vmatprep.subr.mxu0 0.0
  %6553 = vmatpush1.msra.mxu0 %v6522
  %6554 = vmatprep.subr.mxu0 0.0
  %6555 = vmatpush1.msra.mxu0 0.0
  %6556 = vmatprep.subr.mxu0 0.0
  %6557 = vmatpush1.msra.mxu0 0.0
  %6558 = vmatprep.subr.mxu0 0.0
  %6559 = vmatpush1.msra.mxu0 0.0
  %6560 = vmatprep.subr.mxu0 0.0
  %6561 = vmatpush1.msra.mxu0 0.0
  %6562 = vmatprep.subr.mxu0 0.0
  %6563 = vmatpush1.msra.mxu0 0.0
  %6564 = vmatprep.subr.mxu0 0.0
  %6565 = vmatpush1.msra.mxu0 0.0
  %6566 = vmatprep.subr.mxu0 0.0
  %6567 = vmatpush1.msra.mxu0 0.0
  %6568 = vmatprep.subr.mxu0 0.0
  %6569 = vmatpush1.msra.mxu0 0.0
  %6570 = vmatprep.subr.mxu0 0.0
  %6571 = vmatpush1.msra.mxu0 0.0
  %6572 = vmatprep.subr.mxu0 0.0
  %6573 = vmatpush1.msra.mxu0 0.0
  %6574 = vmatprep.subr.mxu0 0.0
  %6575 = vmatpush1.msra.mxu0 0.0
  %6576 = vmatprep.subr.mxu0 0.0
  %6577 = vmatpush1.msra.mxu0 0.0
  %6578 = vmatprep.subr.mxu0 0.0
  %6579 = vmatpush1.msra.mxu0 0.0
  %6580 = vmatprep.subr.mxu0 0.0
  %6581 = vmatpush1.msra.mxu0 0.0
  %6582 = vmatprep.subr.mxu0 0.0
  %6583 = vmatpush1.msra.mxu0 0.0
  %6584 = vmatprep.subr.mxu0 0.0
  %6585 = vmatpush1.msra.mxu0 0.0
  %6586 = vmatprep.subr.mxu0 0.0
  %6587 = vmatpush1.msra.mxu0 0.0
  %6588 = vmatprep.subr.mxu0 0.0
  %6589 = vmatpush1.msra.mxu0 0.0
  %6590 = vmatprep.mubr.f32.mxu0 0.0
  %6591 = vmatmul.mubr.f32.gmra.mrb[0].mxu0 %v6524
  %v6592 = vpop.f32.mrb[0].mxu0
  %v6593 = vadd.f32 0.0, %v6592
  %v6594 = vpop.f32.mrb[0].mxu0
  %6595 = vdwg.mxu0
  %v6596 = vadd.f32 %v6507, %v6593
  %s6597 = scalar_lea.vmem %s11, 448
  %v6598 = vld [vmem:[%s6597] sm:$0xff]
  %v6599 = vld [vmem:[%s6597 + $0x8] sm:$0xff]
  %v6600 = vld [vmem:[%s6597 + $0x10] sm:$0xff]
  %v6601 = vld [vmem:[%s6597 + $0x18] sm:$0xff]
  %v6602 = vld [vmem:[%s6597 + $0x20] sm:$0xff]
  %v6603 = vld [vmem:[%s6597 + $0x28] sm:$0xff]
  %v6604 = vld [vmem:[%s6597 + $0x30] sm:$0xff]
  %v6605 = vld [vmem:[%s6597 + $0x38] sm:$0xff]
  %v6606 = vld [vmem:[%s6597 + $0x40] sm:$0xff]
  %v6607 = vld [vmem:[%s6597 + $0x48] sm:$0xff]
  %v6608 = vld [vmem:[%s6597 + $0x50] sm:$0xff]
  %v6609 = vld [vmem:[%s6597 + $0x58] sm:$0xff]
  %v6610 = vld [vmem:[%s6597 + $0x60] sm:$0xff]
  %v6611 = vld [vmem:[%s6597 + $0x68] sm:$0xff]
  %v6613 = vsel %vm3901, %v6241, 0
  %6615 = vmatprep.subr.mxu0 0.0
  %6616 = vmatpush1.msra.mxu0 %v6598
  %6617 = vmatprep.subr.mxu0 0.0
  %6618 = vmatpush1.msra.mxu0 %v6599
  %6619 = vmatprep.subr.mxu0 0.0
  %6620 = vmatpush1.msra.mxu0 %v6600
  %6621 = vmatprep.subr.mxu0 0.0
  %6622 = vmatpush1.msra.mxu0 %v6601
  %6623 = vmatprep.subr.mxu0 0.0
  %6624 = vmatpush1.msra.mxu0 %v6602
  %6625 = vmatprep.subr.mxu0 0.0
  %6626 = vmatpush1.msra.mxu0 %v6603
  %6627 = vmatprep.subr.mxu0 0.0
  %6628 = vmatpush1.msra.mxu0 %v6604
  %6629 = vmatprep.subr.mxu0 0.0
  %6630 = vmatpush1.msra.mxu0 %v6605
  %6631 = vmatprep.subr.mxu0 0.0
  %6632 = vmatpush1.msra.mxu0 %v6606
  %6633 = vmatprep.subr.mxu0 0.0
  %6634 = vmatpush1.msra.mxu0 %v6607
  %6635 = vmatprep.subr.mxu0 0.0
  %6636 = vmatpush1.msra.mxu0 %v6608
  %6637 = vmatprep.subr.mxu0 0.0
  %6638 = vmatpush1.msra.mxu0 %v6609
  %6639 = vmatprep.subr.mxu0 0.0
  %6640 = vmatpush1.msra.mxu0 %v6610
  %6641 = vmatprep.subr.mxu0 0.0
  %6642 = vmatpush1.msra.mxu0 %v6611
  %6643 = vmatprep.subr.mxu0 0.0
  %6644 = vmatpush1.msra.mxu0 0.0
  %6645 = vmatprep.subr.mxu0 0.0
  %6646 = vmatpush1.msra.mxu0 0.0
  %6647 = vmatprep.subr.mxu0 0.0
  %6648 = vmatpush1.msra.mxu0 0.0
  %6649 = vmatprep.subr.mxu0 0.0
  %6650 = vmatpush1.msra.mxu0 0.0
  %6651 = vmatprep.subr.mxu0 0.0
  %6652 = vmatpush1.msra.mxu0 0.0
  %6653 = vmatprep.subr.mxu0 0.0
  %6654 = vmatpush1.msra.mxu0 0.0
  %6655 = vmatprep.subr.mxu0 0.0
  %6656 = vmatpush1.msra.mxu0 0.0
  %6657 = vmatprep.subr.mxu0 0.0
  %6658 = vmatpush1.msra.mxu0 0.0
  %6659 = vmatprep.subr.mxu0 0.0
  %6660 = vmatpush1.msra.mxu0 0.0
  %6661 = vmatprep.subr.mxu0 0.0
  %6662 = vmatpush1.msra.mxu0 0.0
  %6663 = vmatprep.subr.mxu0 0.0
  %6664 = vmatpush1.msra.mxu0 0.0
  %6665 = vmatprep.subr.mxu0 0.0
  %6666 = vmatpush1.msra.mxu0 0.0
  %6667 = vmatprep.subr.mxu0 0.0
  %6668 = vmatpush1.msra.mxu0 0.0
  %6669 = vmatprep.subr.mxu0 0.0
  %6670 = vmatpush1.msra.mxu0 0.0
  %6671 = vmatprep.subr.mxu0 0.0
  %6672 = vmatpush1.msra.mxu0 0.0
  %6673 = vmatprep.subr.mxu0 0.0
  %6674 = vmatpush1.msra.mxu0 0.0
  %6675 = vmatprep.subr.mxu0 0.0
  %6676 = vmatpush1.msra.mxu0 0.0
  %6677 = vmatprep.subr.mxu0 0.0
  %6678 = vmatpush1.msra.mxu0 0.0
  %6679 = vmatprep.mubr.f32.mxu0 0.0
  %6680 = vmatmul.mubr.f32.gmra.mrb[0].mxu0 %v6613
  %v6681 = vpop.f32.mrb[0].mxu0
  %v6682 = vadd.f32 0.0, %v6681
  %v6683 = vpop.f32.mrb[0].mxu0
  %6684 = vdwg.mxu0
  %v6685 = vadd.f32 %v6596, %v6682
  %s6686 = scalar_lea.vmem %s11, 560
  %v6687 = vld [vmem:[%s6686] sm:$0xff]
  %v6688 = vld [vmem:[%s6686 + $0x8] sm:$0xff]
  %v6689 = vld [vmem:[%s6686 + $0x10] sm:$0xff]
  %v6690 = vld [vmem:[%s6686 + $0x18] sm:$0xff]
  %v6691 = vld [vmem:[%s6686 + $0x20] sm:$0xff]
  %v6692 = vld [vmem:[%s6686 + $0x28] sm:$0xff]
  %v6693 = vld [vmem:[%s6686 + $0x30] sm:$0xff]
  %v6694 = vld [vmem:[%s6686 + $0x38] sm:$0xff]
  %v6695 = vld [vmem:[%s6686 + $0x40] sm:$0xff]
  %v6696 = vld [vmem:[%s6686 + $0x48] sm:$0xff]
  %v6697 = vld [vmem:[%s6686 + $0x50] sm:$0xff]
  %v6698 = vld [vmem:[%s6686 + $0x58] sm:$0xff]
  %v6699 = vld [vmem:[%s6686 + $0x60] sm:$0xff]
  %v6700 = vld [vmem:[%s6686 + $0x68] sm:$0xff]
  %v6702 = vsel %vm3901, %v6242, 0
  %6704 = vmatprep.subr.mxu0 0.0
  %6705 = vmatpush1.msra.mxu0 %v6687
  %6706 = vmatprep.subr.mxu0 0.0
  %6707 = vmatpush1.msra.mxu0 %v6688
  %6708 = vmatprep.subr.mxu0 0.0
  %6709 = vmatpush1.msra.mxu0 %v6689
  %6710 = vmatprep.subr.mxu0 0.0
  %6711 = vmatpush1.msra.mxu0 %v6690
  %6712 = vmatprep.subr.mxu0 0.0
  %6713 = vmatpush1.msra.mxu0 %v6691
  %6714 = vmatprep.subr.mxu0 0.0
  %6715 = vmatpush1.msra.mxu0 %v6692
  %6716 = vmatprep.subr.mxu0 0.0
  %6717 = vmatpush1.msra.mxu0 %v6693
  %6718 = vmatprep.subr.mxu0 0.0
  %6719 = vmatpush1.msra.mxu0 %v6694
  %6720 = vmatprep.subr.mxu0 0.0
  %6721 = vmatpush1.msra.mxu0 %v6695
  %6722 = vmatprep.subr.mxu0 0.0
  %6723 = vmatpush1.msra.mxu0 %v6696
  %6724 = vmatprep.subr.mxu0 0.0
  %6725 = vmatpush1.msra.mxu0 %v6697
  %6726 = vmatprep.subr.mxu0 0.0
  %6727 = vmatpush1.msra.mxu0 %v6698
  %6728 = vmatprep.subr.mxu0 0.0
  %6729 = vmatpush1.msra.mxu0 %v6699
  %6730 = vmatprep.subr.mxu0 0.0
  %6731 = vmatpush1.msra.mxu0 %v6700
  %6732 = vmatprep.subr.mxu0 0.0
  %6733 = vmatpush1.msra.mxu0 0.0
  %6734 = vmatprep.subr.mxu0 0.0
  %6735 = vmatpush1.msra.mxu0 0.0
  %6736 = vmatprep.subr.mxu0 0.0
  %6737 = vmatpush1.msra.mxu0 0.0
  %6738 = vmatprep.subr.mxu0 0.0
  %6739 = vmatpush1.msra.mxu0 0.0
  %6740 = vmatprep.subr.mxu0 0.0
  %6741 = vmatpush1.msra.mxu0 0.0
  %6742 = vmatprep.subr.mxu0 0.0
  %6743 = vmatpush1.msra.mxu0 0.0
  %6744 = vmatprep.subr.mxu0 0.0
  %6745 = vmatpush1.msra.mxu0 0.0
  %6746 = vmatprep.subr.mxu0 0.0
  %6747 = vmatpush1.msra.mxu0 0.0
  %6748 = vmatprep.subr.mxu0 0.0
  %6749 = vmatpush1.msra.mxu0 0.0
  %6750 = vmatprep.subr.mxu0 0.0
  %6751 = vmatpush1.msra.mxu0 0.0
  %6752 = vmatprep.subr.mxu0 0.0
  %6753 = vmatpush1.msra.mxu0 0.0
  %6754 = vmatprep.subr.mxu0 0.0
  %6755 = vmatpush1.msra.mxu0 0.0
  %6756 = vmatprep.subr.mxu0 0.0
  %6757 = vmatpush1.msra.mxu0 0.0
  %6758 = vmatprep.subr.mxu0 0.0
  %6759 = vmatpush1.msra.mxu0 0.0
  %6760 = vmatprep.subr.mxu0 0.0
  %6761 = vmatpush1.msra.mxu0 0.0
  %6762 = vmatprep.subr.mxu0 0.0
  %6763 = vmatpush1.msra.mxu0 0.0
  %6764 = vmatprep.subr.mxu0 0.0
  %6765 = vmatpush1.msra.mxu0 0.0
  %6766 = vmatprep.subr.mxu0 0.0
  %6767 = vmatpush1.msra.mxu0 0.0
  %6768 = vmatprep.mubr.f32.mxu0 0.0
  %6769 = vmatmul.mubr.f32.gmra.mrb[0].mxu0 %v6702
  %v6770 = vpop.f32.mrb[0].mxu0
  %v6771 = vadd.f32 0.0, %v6770
  %v6772 = vpop.f32.mrb[0].mxu0
  %6773 = vdwg.mxu0
  %v6774 = vadd.f32 %v6685, %v6771
  %s6775 = scalar_lea.vmem %s11, 672
  %v6776 = vld [vmem:[%s6775] sm:$0xff]
  %v6777 = vld [vmem:[%s6775 + $0x8] sm:$0xff]
  %v6778 = vld [vmem:[%s6775 + $0x10] sm:$0xff]
  %v6779 = vld [vmem:[%s6775 + $0x18] sm:$0xff]
  %v6780 = vld [vmem:[%s6775 + $0x20] sm:$0xff]
  %v6781 = vld [vmem:[%s6775 + $0x28] sm:$0xff]
  %v6782 = vld [vmem:[%s6775 + $0x30] sm:$0xff]
  %v6783 = vld [vmem:[%s6775 + $0x38] sm:$0xff]
  %v6784 = vld [vmem:[%s6775 + $0x40] sm:$0xff]
  %v6785 = vld [vmem:[%s6775 + $0x48] sm:$0xff]
  %v6786 = vld [vmem:[%s6775 + $0x50] sm:$0xff]
  %v6787 = vld [vmem:[%s6775 + $0x58] sm:$0xff]
  %v6788 = vld [vmem:[%s6775 + $0x60] sm:$0xff]
  %v6789 = vld [vmem:[%s6775 + $0x68] sm:$0xff]
  %v6791 = vsel %vm3901, %v6243, 0
  %6793 = vmatprep.subr.mxu0 0.0
  %6794 = vmatpush1.msra.mxu0 %v6776
  %6795 = vmatprep.subr.mxu0 0.0
  %6796 = vmatpush1.msra.mxu0 %v6777
  %6797 = vmatprep.subr.mxu0 0.0
  %6798 = vmatpush1.msra.mxu0 %v6778
  %6799 = vmatprep.subr.mxu0 0.0
  %6800 = vmatpush1.msra.mxu0 %v6779
  %6801 = vmatprep.subr.mxu0 0.0
  %6802 = vmatpush1.msra.mxu0 %v6780
  %6803 = vmatprep.subr.mxu0 0.0
  %6804 = vmatpush1.msra.mxu0 %v6781
  %6805 = vmatprep.subr.mxu0 0.0
  %6806 = vmatpush1.msra.mxu0 %v6782
  %6807 = vmatprep.subr.mxu0 0.0
  %6808 = vmatpush1.msra.mxu0 %v6783
  %6809 = vmatprep.subr.mxu0 0.0
  %6810 = vmatpush1.msra.mxu0 %v6784
  %6811 = vmatprep.subr.mxu0 0.0
  %6812 = vmatpush1.msra.mxu0 %v6785
  %6813 = vmatprep.subr.mxu0 0.0
  %6814 = vmatpush1.msra.mxu0 %v6786
  %6815 = vmatprep.subr.mxu0 0.0
  %6816 = vmatpush1.msra.mxu0 %v6787
  %6817 = vmatprep.subr.mxu0 0.0
  %6818 = vmatpush1.msra.mxu0 %v6788
  %6819 = vmatprep.subr.mxu0 0.0
  %6820 = vmatpush1.msra.mxu0 %v6789
  %6821 = vmatprep.subr.mxu0 0.0
  %6822 = vmatpush1.msra.mxu0 0.0
  %6823 = vmatprep.subr.mxu0 0.0
  %6824 = vmatpush1.msra.mxu0 0.0
  %6825 = vmatprep.subr.mxu0 0.0
  %6826 = vmatpush1.msra.mxu0 0.0
  %6827 = vmatprep.subr.mxu0 0.0
  %6828 = vmatpush1.msra.mxu0 0.0
  %6829 = vmatprep.subr.mxu0 0.0
  %6830 = vmatpush1.msra.mxu0 0.0
  %6831 = vmatprep.subr.mxu0 0.0
  %6832 = vmatpush1.msra.mxu0 0.0
  %6833 = vmatprep.subr.mxu0 0.0
  %6834 = vmatpush1.msra.mxu0 0.0
  %6835 = vmatprep.subr.mxu0 0.0
  %6836 = vmatpush1.msra.mxu0 0.0
  %6837 = vmatprep.subr.mxu0 0.0
  %6838 = vmatpush1.msra.mxu0 0.0
  %6839 = vmatprep.subr.mxu0 0.0
  %6840 = vmatpush1.msra.mxu0 0.0
  %6841 = vmatprep.subr.mxu0 0.0
  %6842 = vmatpush1.msra.mxu0 0.0
  %6843 = vmatprep.subr.mxu0 0.0
  %6844 = vmatpush1.msra.mxu0 0.0
  %6845 = vmatprep.subr.mxu0 0.0
  %6846 = vmatpush1.msra.mxu0 0.0
  %6847 = vmatprep.subr.mxu0 0.0
  %6848 = vmatpush1.msra.mxu0 0.0
  %6849 = vmatprep.subr.mxu0 0.0
  %6850 = vmatpush1.msra.mxu0 0.0
  %6851 = vmatprep.subr.mxu0 0.0
  %6852 = vmatpush1.msra.mxu0 0.0
  %6853 = vmatprep.subr.mxu0 0.0
  %6854 = vmatpush1.msra.mxu0 0.0
  %6855 = vmatprep.subr.mxu0 0.0
  %6856 = vmatpush1.msra.mxu0 0.0
  %6857 = vmatprep.mubr.f32.mxu0 0.0
  %6858 = vmatmul.mubr.f32.gmra.mrb[0].mxu0 %v6791
  %v6859 = vpop.f32.mrb[0].mxu0
  %v6860 = vadd.f32 0.0, %v6859
  %v6861 = vpop.f32.mrb[0].mxu0
  %6862 = vdwg.mxu0
  %v6863 = vadd.f32 %v6774, %v6860
  %v6864 = vld [vmem:[%s12] sm:$0x1]
  %v6866 = vlaneseq
  %v6867 = vshrl.u32 %v6866, 7
  %v6868 = vsub.s32 0, %v6867
  %v6869 = vrot.slane %v6864, %v6868
  %v6871 = vadd.f32 %v6863, %v6869
  %v6872 = vmax.f32 %v6871, 0.0
  %v6873 = vld [vmem:[%s13] sm:$0xff]
  %v6874 = vld [vmem:[%s13 + $0x8] sm:$0xff]
  %v6875 = vld [vmem:[%s13 + $0x10] sm:$0xff]
  %v6876 = vld [vmem:[%s13 + $0x18] sm:$0xff]
  %v6877 = vld [vmem:[%s13 + $0x20] sm:$0xff]
  %v6878 = vld [vmem:[%s13 + $0x28] sm:$0xff]
  %v6879 = vld [vmem:[%s13 + $0x30] sm:$0xff]
  %v6880 = vld [vmem:[%s13 + $0x38] sm:$0xff]
  %v6881 = vld [vmem:[%s13 + $0x40] sm:$0xff]
  %v6882 = vld [vmem:[%s13 + $0x48] sm:$0xff]
  %v6883 = vld [vmem:[%s13 + $0x50] sm:$0xff]
  %v6884 = vld [vmem:[%s13 + $0x58] sm:$0xff]
  %v6885 = vld [vmem:[%s13 + $0x60] sm:$0xff]
  %v6886 = vld [vmem:[%s13 + $0x68] sm:$0xff]
  %v6887 = vld [vmem:[%s13 + $0x70] sm:$0xff]
  %v6888 = vld [vmem:[%s14] sm:$0x1]
  %v6890 = vlaneseq
  %v6891 = vshrl.u32 %v6890, 7
  %v6892 = vsub.s32 0, %v6891
  %v6893 = vrot.slane %v6888, %v6892
  %vm6895 = vcmask 982016
  %v6897 = vsel %vm6895, %v6872, 0
  %6899 = vmatprep.subr.mxu0 0.0
  %6900 = vmatpush1.msra.mxu0 %v6873
  %6901 = vmatprep.subr.mxu0 0.0
  %6902 = vmatpush1.msra.mxu0 %v6874
  %6903 = vmatprep.subr.mxu0 0.0
  %6904 = vmatpush1.msra.mxu0 %v6875
  %6905 = vmatprep.subr.mxu0 0.0
  %6906 = vmatpush1.msra.mxu0 %v6876
  %6907 = vmatprep.subr.mxu0 0.0
  %6908 = vmatpush1.msra.mxu0 %v6877
  %6909 = vmatprep.subr.mxu0 0.0
  %6910 = vmatpush1.msra.mxu0 %v6878
  %6911 = vmatprep.subr.mxu0 0.0
  %6912 = vmatpush1.msra.mxu0 %v6879
  %6913 = vmatprep.subr.mxu0 0.0
  %6914 = vmatpush1.msra.mxu0 %v6880
  %6915 = vmatprep.subr.mxu0 0.0
  %6916 = vmatpush1.msra.mxu0 %v6881
  %6917 = vmatprep.subr.mxu0 0.0
  %6918 = vmatpush1.msra.mxu0 %v6882
  %6919 = vmatprep.subr.mxu0 0.0
  %6920 = vmatpush1.msra.mxu0 %v6883
  %6921 = vmatprep.subr.mxu0 0.0
  %6922 = vmatpush1.msra.mxu0 %v6884
  %6923 = vmatprep.subr.mxu0 0.0
  %6924 = vmatpush1.msra.mxu0 %v6885
  %6925 = vmatprep.subr.mxu0 0.0
  %6926 = vmatpush1.msra.mxu0 %v6886
  %6927 = vmatprep.subr.mxu0 0.0
  %6928 = vmatpush1.msra.mxu0 %v6887
  %6929 = vmatprep.subr.mxu0 0.0
  %6930 = vmatpush1.msra.mxu0 0.0
  %6931 = vmatprep.subr.mxu0 0.0
  %6932 = vmatpush1.msra.mxu0 0.0
  %6933 = vmatprep.subr.mxu0 0.0
  %6934 = vmatpush1.msra.mxu0 0.0
  %6935 = vmatprep.subr.mxu0 0.0
  %6936 = vmatpush1.msra.mxu0 0.0
  %6937 = vmatprep.subr.mxu0 0.0
  %6938 = vmatpush1.msra.mxu0 0.0
  %6939 = vmatprep.subr.mxu0 0.0
  %6940 = vmatpush1.msra.mxu0 0.0
  %6941 = vmatprep.subr.mxu0 0.0
  %6942 = vmatpush1.msra.mxu0 0.0
  %6943 = vmatprep.subr.mxu0 0.0
  %6944 = vmatpush1.msra.mxu0 0.0
  %6945 = vmatprep.subr.mxu0 0.0
  %6946 = vmatpush1.msra.mxu0 0.0
  %6947 = vmatprep.subr.mxu0 0.0
  %6948 = vmatpush1.msra.mxu0 0.0
  %6949 = vmatprep.subr.mxu0 0.0
  %6950 = vmatpush1.msra.mxu0 0.0
  %6951 = vmatprep.subr.mxu0 0.0
  %6952 = vmatpush1.msra.mxu0 0.0
  %6953 = vmatprep.subr.mxu0 0.0
  %6954 = vmatpush1.msra.mxu0 0.0
  %6955 = vmatprep.subr.mxu0 0.0
  %6956 = vmatpush1.msra.mxu0 0.0
  %6957 = vmatprep.subr.mxu0 0.0
  %6958 = vmatpush1.msra.mxu0 0.0
  %6959 = vmatprep.subr.mxu0 0.0
  %6960 = vmatpush1.msra.mxu0 0.0
  %6961 = vmatprep.subr.mxu0 0.0
  %6962 = vmatpush1.msra.mxu0 0.0
  %6963 = vmatprep.mubr.f32.mxu0 0.0
  %6964 = vmatmul.mubr.f32.gmra.mrb[0].mxu0 %v6897
  %v6965 = vpop.f32.mrb[0].mxu0
  %v6966 = vadd.f32 %v6893, %v6965
  %v6967 = vpop.f32.mrb[0].mxu0
  %6968 = vdwg.mxu0
  %v6969 = vmax.f32 %v6966, 0.0
  %v6970 = vld [vmem:[%s15] sm:$0xff]
  %v6971 = vld [vmem:[%s15 + $0x8] sm:$0xff]
  %v6972 = vld [vmem:[%s15 + $0x10] sm:$0xff]
  %v6973 = vld [vmem:[%s15 + $0x18] sm:$0xff]
  %v6974 = vld [vmem:[%s15 + $0x20] sm:$0xff]
  %v6975 = vld [vmem:[%s15 + $0x28] sm:$0xff]
  %v6976 = vld [vmem:[%s15 + $0x30] sm:$0xff]
  %v6977 = vld [vmem:[%s15 + $0x38] sm:$0xff]
  %v6978 = vld [vmem:[%s15 + $0x40] sm:$0xff]
  %v6979 = vld [vmem:[%s15 + $0x48] sm:$0xff]
  %v6980 = vld [vmem:[%s15 + $0x50] sm:$0xf]
  %v6981 = vld [vmem:[%s16] sm:$0x1]
  %v6983 = vlaneseq
  %v6984 = vshrl.u32 %v6983, 7
  %v6985 = vsub.s32 0, %v6984
  %v6986 = vrot.slane %v6981, %v6985
  %vm6988 = vcmask 687104
  %v6990 = vsel %vm6988, %v6969, 0
  %vm6992 = vcmask 1043456
  %v6994 = vsel %vm6992, %v6980, 0
  %6996 = vmatprep.subr.mxu0 0.0
  %6997 = vmatpush1.msra.mxu0 %v6970
  %6998 = vmatprep.subr.mxu0 0.0
  %6999 = vmatpush1.msra.mxu0 %v6971
  %7000 = vmatprep.subr.mxu0 0.0
  %7001 = vmatpush1.msra.mxu0 %v6972
  %7002 = vmatprep.subr.mxu0 0.0
  %7003 = vmatpush1.msra.mxu0 %v6973
  %7004 = vmatprep.subr.mxu0 0.0
  %7005 = vmatpush1.msra.mxu0 %v6974
  %7006 = vmatprep.subr.mxu0 0.0
  %7007 = vmatpush1.msra.mxu0 %v6975
  %7008 = vmatprep.subr.mxu0 0.0
  %7009 = vmatpush1.msra.mxu0 %v6976
  %7010 = vmatprep.subr.mxu0 0.0
  %7011 = vmatpush1.msra.mxu0 %v6977
  %7012 = vmatprep.subr.mxu0 0.0
  %7013 = vmatpush1.msra.mxu0 %v6978
  %7014 = vmatprep.subr.mxu0 0.0
  %7015 = vmatpush1.msra.mxu0 %v6979
  %7016 = vmatprep.subr.mxu0 0.0
  %7017 = vmatpush1.msra.mxu0 %v6994
  %7018 = vmatprep.subr.mxu0 0.0
  %7019 = vmatpush1.msra.mxu0 0.0
  %7020 = vmatprep.subr.mxu0 0.0
  %7021 = vmatpush1.msra.mxu0 0.0
  %7022 = vmatprep.subr.mxu0 0.0
  %7023 = vmatpush1.msra.mxu0 0.0
  %7024 = vmatprep.subr.mxu0 0.0
  %7025 = vmatpush1.msra.mxu0 0.0
  %7026 = vmatprep.subr.mxu0 0.0
  %7027 = vmatpush1.msra.mxu0 0.0
  %7028 = vmatprep.subr.mxu0 0.0
  %7029 = vmatpush1.msra.mxu0 0.0
  %7030 = vmatprep.subr.mxu0 0.0
  %7031 = vmatpush1.msra.mxu0 0.0
  %7032 = vmatprep.subr.mxu0 0.0
  %7033 = vmatpush1.msra.mxu0 0.0
  %7034 = vmatprep.subr.mxu0 0.0
  %7035 = vmatpush1.msra.mxu0 0.0
  %7036 = vmatprep.subr.mxu0 0.0
  %7037 = vmatpush1.msra.mxu0 0.0
  %7038 = vmatprep.subr.mxu0 0.0
  %7039 = vmatpush1.msra.mxu0 0.0
  %7040 = vmatprep.subr.mxu0 0.0
  %7041 = vmatpush1.msra.mxu0 0.0
  %7042 = vmatprep.subr.mxu0 0.0
  %7043 = vmatpush1.msra.mxu0 0.0
  %7044 = vmatprep.subr.mxu0 0.0
  %7045 = vmatpush1.msra.mxu0 0.0
  %7046 = vmatprep.subr.mxu0 0.0
  %7047 = vmatpush1.msra.mxu0 0.0
  %7048 = vmatprep.subr.mxu0 0.0
  %7049 = vmatpush1.msra.mxu0 0.0
  %7050 = vmatprep.subr.mxu0 0.0
  %7051 = vmatpush1.msra.mxu0 0.0
  %7052 = vmatprep.subr.mxu0 0.0
  %7053 = vmatpush1.msra.mxu0 0.0
  %7054 = vmatprep.subr.mxu0 0.0
  %7055 = vmatpush1.msra.mxu0 0.0
  %7056 = vmatprep.subr.mxu0 0.0
  %7057 = vmatpush1.msra.mxu0 0.0
  %7058 = vmatprep.subr.mxu0 0.0
  %7059 = vmatpush1.msra.mxu0 0.0
  %7060 = vmatprep.mubr.f32.mxu0 0.0
  %7061 = vmatmul.mubr.f32.gmra.mrb[0].mxu0 %v6990
  %v7062 = vpop.f32.mrb[0].mxu0
  %v7063 = vadd.f32 %v6986, %v7062
  %v7064 = vpop.f32.mrb[0].mxu0
  %7065 = vdwg.mxu0
  %vm7066 = vcmask 80896
  %7067 = vst.msk [vmem:[%s17] sm:$0xff] %vm7066, %v7063
  // Predicated region
  $region70: #{fashion_mnist_cnn_forward.1} parent=0 // pred_check
    _
  $region71: #{fashion_mnist_cnn_forward.1} parent=0 // pred_check_branch
    %7069 = sbr.rel (0) target = $region73
  $region72: #{fashion_mnist_cnn_forward.1} parent=0 // pred_region
    _
  $region73: #{fashion_mnist_cnn_forward.1} parent=0 // pred_fallthru
    _
  // Predicated region
  $region74: #{fashion_mnist_cnn_forward.1} parent=0 // pred_check
    _
  $region75: #{fashion_mnist_cnn_forward.1} parent=0 // pred_check_branch
    %7071 = sbr.rel (0) target = $region77
  $region76: #{fashion_mnist_cnn_forward.1} parent=0 // pred_region
    _
  $region77: #{fashion_mnist_cnn_forward.1} parent=0 // pred_fallthru
    _

</llo_original>
